<compile_context>
chip_gen: v7x
topology: tpu7x:2x2x1
jax: 0.10.0
libtpu: 0.0.40
codegen_flags: <defaults>
</compile_context>

<pallas_src>
import functools
import numpy as np

import jax
import jax.numpy as jnp
from jax.experimental import pallas as pl
from jax.experimental.pallas import tpu as pltpu


_VMEM_LIMIT = 64 * 1024 * 1024  # valid on v5e/v6e (128 MiB phys) and v7x (64 MiB)


def _cparams(sem):
    return pltpu.CompilerParams(dimension_semantics=sem,
                                vmem_limit_bytes=_VMEM_LIMIT)


# ----------------------------------------------------------------------------
# In-kernel math helpers
# ----------------------------------------------------------------------------
def _gelu(x):
    # tanh-approximate GELU: transcendental lands on the EUP slot.
    c = 0.7978845608028654  # sqrt(2/pi)
    return 0.5 * x * (1.0 + jnp.tanh(c * (x + 0.044715 * x * x * x)))


def _fit_tile(dim, target, align):
    """Largest tile <= target that divides `dim` and is a multiple of `align`;
    falls back to the full dim (always a legal block).
    NOTE: for awkward dims (e.g. a prime-ish vocab size) this falls back to one
    huge block; pad such dims to a multiple of `align` upstream if needed."""
    if dim <= target:
        return dim
    t = (target // align) * align
    while t >= align:
        if dim % t == 0:
            return t
        t -= align
    return dim


# ----------------------------------------------------------------------------
# Tiled linear kernel: y = act(LN?(x) @ W (+ b)) (+ residual)
# ----------------------------------------------------------------------------
def _matmul_kernel(*refs, has_bias, has_res, has_ln, act, eps, single_k):
    it = iter(refs)
    x_ref = next(it)
    w_ref = next(it)
    b_ref = next(it) if has_bias else None
    r_ref = next(it) if has_res else None
    g_ref = next(it) if has_ln else None
    beta_ref = next(it) if has_ln else None
    o_ref = next(it)
    acc_ref = None if single_k else next(it)

    def partial_product():
        x = x_ref[...].astype(jnp.float32)
        if has_ln:
            # LN fused into the matmul: wrapper forces the full K dim into this
            # block, so row statistics are exact.
            mu = jnp.mean(x, axis=-1, keepdims=True)
            xc = x - mu
            var = jnp.mean(xc * xc, axis=-1, keepdims=True)
            x = xc * jax.lax.rsqrt(var + eps) * g_ref[...] + beta_ref[...]
        # bf16 operands on the MXU, f32 accumulation.
        xb = x.astype(jnp.bfloat16)
        wb = w_ref[...].astype(jnp.bfloat16)
        return jnp.dot(xb, wb, preferred_element_type=jnp.float32)

    def epilogue(y):
        if has_bias:
            y = y + b_ref[...]
        if act == "gelu":
            y = _gelu(y)
        if has_res:
            y = y + r_ref[...]
        return y.astype(o_ref.dtype)

    if single_k:
        # No accumulator scratch: compute, apply epilogue, store directly.
        o_ref[...] = epilogue(partial_product())
    else:
        k = pl.program_id(2)

        @pl.when(k == 0)
        def _init():
            acc_ref[...] = jnp.zeros_like(acc_ref)

        acc_ref[...] += partial_product()

        @pl.when(k == pl.num_programs(2) - 1)
        def _finalize():
            o_ref[...] = epilogue(acc_ref[...])


def pallas_linear(x, w, b=None, *, act=None, residual=None, ln=None,
                  tm=256, tn=512, tk=1024, eps=1e-5):
    """y = act(LN?(x) @ W (+ b)) (+ residual).

    x: (M, K); w: (K, N); b: (N,) or None; residual: (M, N) or None;
    ln: (gamma, beta) each (K,) or None.
    """
    M, K = x.shape
    Kw, N = w.shape
    assert K == Kw

    tm = _fit_tile(M, tm, 8)
    tn = _fit_tile(N, tn, 128)
    tk = K if ln is not None else _fit_tile(K, tk, 128)
    gm, gn, gk = M // tm, N // tn, K // tk
    single_k = gk == 1

    in_specs = [
        pl.BlockSpec((tm, tk), lambda i, j, k: (i, k)),
        pl.BlockSpec((tk, tn), lambda i, j, k: (k, j)),
    ]
    args = [x, w]
    if b is not None:
        in_specs.append(pl.BlockSpec((1, tn), lambda i, j, k: (0, j)))
        args.append(b.reshape(1, N))
    if residual is not None:
        in_specs.append(pl.BlockSpec((tm, tn), lambda i, j, k: (i, j)))
        args.append(residual)
    if ln is not None:
        g, beta = ln
        in_specs.append(pl.BlockSpec((1, tk), lambda i, j, k: (0, k)))
        in_specs.append(pl.BlockSpec((1, tk), lambda i, j, k: (0, k)))
        args.extend([g.reshape(1, K), beta.reshape(1, K)])

    kernel = functools.partial(
        _matmul_kernel, has_bias=b is not None, has_res=residual is not None,
        has_ln=ln is not None, act=act, eps=eps, single_k=single_k)

    scratch = [] if single_k else [pltpu.VMEM((tm, tn), jnp.float32)]

    return pl.pallas_call(
        kernel,
        grid=(gm, gn, gk),
        in_specs=in_specs,
        out_specs=pl.BlockSpec((tm, tn), lambda i, j, k: (i, j)),
        out_shape=jax.ShapeDtypeStruct((M, N), jnp.float32),
        scratch_shapes=scratch,
        compiler_params=_cparams(("parallel", "parallel", "arbitrary")),
    )(*args)


# ----------------------------------------------------------------------------
# Attention kernels: grid over (batch, query tile); all heads per step.
# ----------------------------------------------------------------------------
def _attn_core(q, k, v, *, n_heads, qscale, causal, q_start):
    # q: (tq, D), k/v: (Tk, D).  Per-head lane slices, bf16 MXU matmuls,
    # post-PV normalization, one lane-dense concatenated output.
    Tq, D = q.shape
    Tk = k.shape[0]
    Dh = D // n_heads
    if causal:
        row = jax.lax.broadcasted_iota(jnp.int32, (Tq, Tk), 0) + q_start
        col = jax.lax.broadcasted_iota(jnp.int32, (Tq, Tk), 1)
        mask = col <= row
    outs = []
    for h in range(n_heads):
        sl = slice(h * Dh, (h + 1) * Dh)
        qh = (q[:, sl].astype(jnp.float32) * qscale).astype(jnp.bfloat16)
        kh = k[:, sl].astype(jnp.bfloat16)
        vh = v[:, sl].astype(jnp.bfloat16)
        s = jax.lax.dot_general(qh, kh, (((1,), (1,)), ((), ())),
                                preferred_element_type=jnp.float32)   # (tq, Tk) f32
        if causal:
            s = jnp.where(mask, s, -1e30)
        m = jnp.max(s, axis=-1, keepdims=True)
        p = jnp.exp(s - m)
        denom = jnp.sum(p, axis=-1, keepdims=True)
        oh = jnp.dot(p.astype(jnp.bfloat16), vh,
                     preferred_element_type=jnp.float32)              # (tq, Dh)
        outs.append(oh * pl.reciprocal(denom, approx=True))           # EUP recip
    return jnp.concatenate(outs, axis=-1)                             # (tq, D)


def _attn_self_kernel(qkv_ref, o_ref, *, n_heads, d_model, qscale, causal,
                      tq, tiled):
    x = qkv_ref[...]                          # (T, 3D) packed q|k|v
    k = x[:, d_model:2 * d_model]
    v = x[:, 2 * d_model:3 * d_model]
    if tiled:
        q0 = pl.program_id(1) * tq
        q = qkv_ref[pl.ds(q0, tq), :][:, 0:d_model]
    else:
        q0 = 0
        q = x[:, 0:d_model]
    out = _attn_core(q, k, v, n_heads=n_heads, qscale=qscale,
                     causal=causal, q_start=q0)
    o_ref[...] = out.astype(o_ref.dtype)


def _attn_cross_kernel(q_ref, kv_ref, o_ref, *, n_heads, d_model, qscale):
    kv = kv_ref[...]                          # (Tk, 2D) packed k|v
    out = _attn_core(q_ref[...], kv[:, 0:d_model], kv[:, d_model:2 * d_model],
                     n_heads=n_heads, qscale=qscale, causal=False, q_start=0)
    o_ref[...] = out.astype(o_ref.dtype)


def pallas_self_attention(qkv, n_heads, qscale, causal, tq_target=256):
    B, T, D3 = qkv.shape
    D = D3 // 3
    tq = _fit_tile(T, tq_target, 8)
    nq = T // tq
    kernel = functools.partial(_attn_self_kernel, n_heads=n_heads, d_model=D,
                               qscale=qscale, causal=causal, tq=tq,
                               tiled=nq > 1)
    return pl.pallas_call(
        kernel,
        grid=(B, nq),
        in_specs=[pl.BlockSpec((None, T, D3), lambda b, qi: (b, 0, 0))],
        out_specs=pl.BlockSpec((None, tq, D), lambda b, qi: (b, qi, 0)),
        out_shape=jax.ShapeDtypeStruct((B, T, D), jnp.float32),
        compiler_params=_cparams(("parallel", "parallel")),
    )(qkv)


def pallas_cross_attention(q, kv, n_heads, qscale, tq_target=256):
    B, Tq, D = q.shape
    Tk = kv.shape[1]
    tq = _fit_tile(Tq, tq_target, 8)
    nq = Tq // tq
    return pl.pallas_call(
        functools.partial(_attn_cross_kernel, n_heads=n_heads, d_model=D,
                          qscale=qscale),
        grid=(B, nq),
        in_specs=[pl.BlockSpec((None, tq, D), lambda b, qi: (b, qi, 0)),
                  pl.BlockSpec((None, Tk, 2 * D), lambda b, qi: (b, 0, 0))],
        out_specs=pl.BlockSpec((None, tq, D), lambda b, qi: (b, qi, 0)),
        out_shape=jax.ShapeDtypeStruct((B, Tq, D), jnp.float32),
        compiler_params=_cparams(("parallel", "parallel")),
    )(q, kv)


# ----------------------------------------------------------------------------
# Grouped Conv1d kernels (kernel=3, pad=1), taps packed into one contraction.
# ----------------------------------------------------------------------------
def _conv1_kernel(x_ref, w_ref, b_ref, o_ref, *, t_out):
    # stride-1 conv; output stays channel-major (Cout, T) to feed conv2.
    x = x_ref[...]                                    # (Cin, T+2)
    win = jnp.concatenate(
        [x[:, 0:t_out], x[:, 1:t_out + 1], x[:, 2:t_out + 2]], axis=0)  # (3Cin, T)
    y = jax.lax.dot_general(w_ref[...].astype(jnp.bfloat16),
                            win.astype(jnp.bfloat16),
                            (((1,), (0,)), ((), ())),
                            preferred_element_type=jnp.float32)         # (Cout, T)
    o_ref[...] = _gelu(y + b_ref[...]).astype(o_ref.dtype)


def _conv2_kernel(xe_ref, xo_ref, w_ref, b_ref, pos_ref, elec_ref, o_ref, *, t_out):
    # stride-2 conv; output token-major (T_out, Cout); GELU + positional and
    # electrode embedding adds fused into the epilogue.
    xe = xe_ref[...]                                  # (Cin, T//2+1) even cols
    xo = xo_ref[...]                                  # (Cin, T//2+1) odd cols
    win = jnp.concatenate(
        [xe[:, 0:t_out], xo[:, 0:t_out], xe[:, 1:t_out + 1]], axis=0)   # (3Cin, T_out)
    y = jax.lax.dot_general(win.astype(jnp.bfloat16),
                            w_ref[...].astype(jnp.bfloat16),
                            (((0,), (0,)), ((), ())),
                            preferred_element_type=jnp.float32)         # (T_out, Cout)
    y = _gelu(y + b_ref[...])
    o_ref[...] = (y + pos_ref[...] + elec_ref[...]).astype(o_ref.dtype)


def pallas_grouped_conv1(x, w_packed, bias):
    """x: (B, G, Cin, T); w_packed: (G, Cout, 3*Cin); bias: (G, Cout, 1)
       -> (B, G, Cout, T)."""
    B, G, Cin, T = x.shape
    Cout = w_packed.shape[1]
    xp = jnp.pad(x, ((0, 0), (0, 0), (0, 0), (1, 1)))
    return pl.pallas_call(
        functools.partial(_conv1_kernel, t_out=T),
        grid=(B, G),
        in_specs=[
            pl.BlockSpec((None, None, Cin, T + 2), lambda b, g: (b, g, 0, 0)),
            pl.BlockSpec((None, Cout, 3 * Cin), lambda b, g: (g, 0, 0)),
            pl.BlockSpec((None, Cout, 1), lambda b, g: (g, 0, 0)),
        ],
        out_specs=pl.BlockSpec((None, None, Cout, T), lambda b, g: (b, g, 0, 0)),
        out_shape=jax.ShapeDtypeStruct((B, G, Cout, T), jnp.float32),
        compiler_params=_cparams(("parallel", "parallel")),
    )(xp, w_packed, bias)


def pallas_grouped_conv2(x, w_packed, bias, pos, elec):
    """x: (B, G, Cin, T); w_packed: (G, 3*Cin, Cout); bias: (G, 1, Cout);
       pos: (T//2, Cout); elec: (G, 1, Cout) -> (B, G, T//2, Cout)."""
    B, G, Cin, T = x.shape
    assert T % 2 == 0
    Cout = w_packed.shape[2]
    t_out = T // 2
    # TODO(synk): even/odd de-interleave still done host-side (one extra HBM
    # pass over the conv1 activation); could move to in-kernel strided reads.
    xp = jnp.pad(x, ((0, 0), (0, 0), (0, 0), (1, 1)))
    xe = xp[..., 0::2]   # even padded columns
    xo = xp[..., 1::2]   # odd padded columns
    P = xe.shape[-1]
    return pl.pallas_call(
        functools.partial(_conv2_kernel, t_out=t_out),
        grid=(B, G),
        in_specs=[
            pl.BlockSpec((None, None, Cin, P), lambda b, g: (b, g, 0, 0)),
            pl.BlockSpec((None, None, Cin, P), lambda b, g: (b, g, 0, 0)),
            pl.BlockSpec((None, 3 * Cin, Cout), lambda b, g: (g, 0, 0)),
            pl.BlockSpec((None, 1, Cout), lambda b, g: (g, 0, 0)),
            pl.BlockSpec((t_out, Cout), lambda b, g: (0, 0)),
            pl.BlockSpec((None, 1, Cout), lambda b, g: (g, 0, 0)),
        ],
        out_specs=pl.BlockSpec((None, None, t_out, Cout), lambda b, g: (b, g, 0, 0)),
        out_shape=jax.ShapeDtypeStruct((B, G, t_out, Cout), jnp.float32),
        compiler_params=_cparams(("parallel", "parallel")),
    )(xe, xo, w_packed, bias, pos, elec)


# ----------------------------------------------------------------------------
# Model glue (only embedding gathers / cheap reshapes in plain JAX)
# ----------------------------------------------------------------------------
def residual_block(x, p, n_heads, scale, causal, xc=None):
    B, T, D = x.shape
    qscale = scale * scale          # fold both q- and k-side scales onto q
    x2 = x.reshape(B * T, D)

    # self attention: LN fused into the fused QKV projection
    qkv = pallas_linear(x2, p["attn"]["qkv_w"], p["attn"]["qkv_b"],
                        ln=(p["attn_ln_g"], p["attn_ln_b"]))
    a = pallas_self_attention(qkv.reshape(B, T, 3 * D), n_heads, qscale, causal)
    # output projection with the residual add fused into the epilogue
    x2 = pallas_linear(a.reshape(B * T, D), p["attn"]["o_w"], p["attn"]["o_b"],
                       residual=x2)

    if xc is not None:
        Tk = xc.shape[1]
        q = pallas_linear(x2, p["cross"]["q_w"], p["cross"]["q_b"],
                          ln=(p["cross_ln_g"], p["cross_ln_b"]))
        kv = pallas_linear(xc.reshape(B * Tk, D), p["cross"]["kv_w"],
                           p["cross"]["kv_b"])
        c = pallas_cross_attention(q.reshape(B, T, D),
                                   kv.reshape(B, Tk, 2 * D), n_heads, qscale)
        x2 = pallas_linear(c.reshape(B * T, D), p["cross"]["o_w"],
                           p["cross"]["o_b"], residual=x2)

    # MLP: LN fused into fc1 (+GELU); residual fused into fc2 epilogue
    h = pallas_linear(x2, p["fc1_w"], p["fc1_b"], act="gelu",
                      ln=(p["mlp_ln_g"], p["mlp_ln_b"]))
    x2 = pallas_linear(h, p["fc2_w"], p["fc2_b"], residual=x2)
    return x2.reshape(B, T, D)


def encoder_forward(p, eeg, n_heads, scale):
    B, N_C, N_F, T = eeg.shape
    G = N_C
    D = p["embed_electrodes"].shape[1]
    assert p["embed_positions"].shape[0] == T // 2

    # rearrange PyTorch-layout conv params to packed-tap layout (tiny)
    w1 = (p["conv1_w"].reshape(G, D, N_F, 3)
          .transpose(0, 1, 3, 2).reshape(G, D, 3 * N_F))     # (G, Cout, 3*Cin)
    b1 = p["conv1_b"].reshape(G, D, 1)
    w2 = (p["conv2_w"].reshape(G, D, D, 3)
          .transpose(0, 3, 2, 1).reshape(G, 3 * D, D))       # (G, 3*Cin, Cout)
    b2 = p["conv2_b"].reshape(G, 1, D)
    elec = p["embed_electrodes"].reshape(G, 1, D)

    h1 = pallas_grouped_conv1(eeg, w1, b1)                              # (B,G,D,T)
    h2 = pallas_grouped_conv2(h1, w2, b2, p["embed_positions"], elec)   # (B,G,T//2,D)

    # sequence order matches PyTorch reshape: index = t * N_C + c
    # TODO(synk): this transpose is one extra HBM pass over the encoder input
    # activation; could be folded into conv2's out_specs.
    x = h2.transpose(0, 2, 1, 3).reshape(B, (T // 2) * G, D)
    for bp in p["blocks"]:
        x = residual_block(x, bp, n_heads, scale, causal=False)
    return x   # note: encoder.ln_post exists in the module but is NOT applied in forward


def decoder_forward(p, input_ids, enc, n_heads, scale):
    B, S = input_ids.shape
    V, D = p["embed_tokens"].shape
    # TODO(synk): token-embedding gather kept in plain JAX (no clean Pallas gather).
    x = p["embed_tokens"][input_ids] + p["embed_positions"][:S][None, :, :]
    for bp in p["blocks"]:
        x = residual_block(x, bp, n_heads, scale, causal=True, xc=enc)
    # final LN fused into the vocab projection; embedding matrix pre-transposed
    # once at init (no per-tile transposed contraction).
    logits = pallas_linear(x.reshape(B * S, D), p["embed_tokens_t"], None,
                           ln=(p["ln_post_g"], p["ln_post_b"]))
    return logits.reshape(B, S, V)


def telepath_forward(params, eeg, input_ids, *, n_heads, scale):
    enc = encoder_forward(params["encoder"], eeg, n_heads, scale)
    logits = decoder_forward(params["decoder"], input_ids, enc, n_heads, scale)
    return enc, logits


# ----------------------------------------------------------------------------
# Deterministic parameter init (synthetic, no checkpoint)
# ----------------------------------------------------------------------------
def sinusoids(length, channels, max_timescale=1000):
    assert channels % 2 == 0
    log_timescale_increment = np.log(max_timescale) / (channels // 2 - 1)
    inv_timescales = np.exp(-log_timescale_increment * np.arange(channels // 2))
    scaled_time = np.arange(length)[:, None] * inv_timescales[None, :]
    return jnp.asarray(np.concatenate([np.sin(scaled_time), np.cos(scaled_time)],
                                      axis=1), dtype=jnp.float32)


def init_params(key, *, n_channels, n_freqs, d_model, enc_block, dec_block,
                enc_layers, dec_layers, n_vocab):
    keys = iter(jax.random.split(key, 1024))

    def nrm(shape, std=0.02):
        return jax.random.normal(next(keys), shape, jnp.float32) * std

    def self_attn_params(D):
        # fused QKV weights (equivalent to concatenated q/k/v projections);
        # k projection has no bias (Whisper convention)
        qkv_b = jnp.concatenate([nrm((D,)), jnp.zeros((D,), jnp.float32), nrm((D,))])
        return {"qkv_w": nrm((D, 3 * D)), "qkv_b": qkv_b,
                "o_w": nrm((D, D)), "o_b": nrm((D,))}

    def cross_attn_params(D):
        return {"q_w": nrm((D, D)), "q_b": nrm((D,)),
                "kv_w": nrm((D, 2 * D)), "kv_b": nrm((2 * D,)),   # k_bias=True
                "o_w": nrm((D, D)), "o_b": nrm((D,))}

    def block_params(D, cross):
        d_mlp = 4 * D
        p = {"attn": self_attn_params(D),
             "attn_ln_g": jnp.ones((D,), jnp.float32),
             "attn_ln_b": jnp.zeros((D,), jnp.float32),
             "mlp_ln_g": jnp.ones((D,), jnp.float32),
             "mlp_ln_b": jnp.zeros((D,), jnp.float32),
             "fc1_w": nrm((D, d_mlp)), "fc1_b": nrm((d_mlp,)),
             "fc2_w": nrm((d_mlp, D)), "fc2_b": nrm((D,))}
        if cross:
            p["cross"] = cross_attn_params(D)
            p["cross_ln_g"] = jnp.ones((D,), jnp.float32)
            p["cross_ln_b"] = jnp.zeros((D,), jnp.float32)
        return p

    encoder = {
        "conv1_w": nrm((d_model * n_channels, n_freqs, 3)),
        "conv1_b": nrm((d_model * n_channels,)),
        "conv2_w": nrm((d_model * n_channels, d_model, 3)),
        "conv2_b": nrm((d_model * n_channels,)),
        "embed_positions": sinusoids(enc_block, d_model),
        "embed_electrodes": nrm((n_channels, d_model)),
        "blocks": [block_params(d_model, cross=False) for _ in range(enc_layers)],
        # present in the module, unused in its forward
        "ln_post_g": jnp.ones((d_model,), jnp.float32),
        "ln_post_b": jnp.zeros((d_model,), jnp.float32),
    }
    emb = nrm((n_vocab, d_model))
    decoder = {
        "embed_tokens": emb,
        "embed_tokens_t": emb.T,        # pre-transposed once for the vocab GEMM
        "embed_positions": nrm((dec_block, d_model)),
        "blocks": [block_params(d_model, cross=True) for _ in range(dec_layers)],
        "ln_post_g": jnp.ones((d_model,), jnp.float32),
        "ln_post_b": jnp.zeros((d_model,), jnp.float32),
    }
    return {"encoder": encoder, "decoder": decoder}


# ----------------------------------------------------------------------------
if __name__ == "__main__":
    # small config consistent with the module's forward
    B, N_C, N_F, T = 2, 2, 8, 16        # eeg: (B, n_channels, n_freqs, T)
    D, H = 32, 4                        # d_model, n_heads
    ENC_LAYERS, DEC_LAYERS = 2, 2
    N_VOCAB, DEC_BLOCK = 64, 8
    S = 6                               # decoder sequence length
    ENC_BLOCK = T // 2                  # required for positional-embedding broadcast
    scale = float((D // H) ** (-0.25))

    key = jax.random.PRNGKey(0)
    kp, kx, kt = jax.random.split(key, 3)
    params = init_params(kp, n_channels=N_C, n_freqs=N_F, d_model=D,
                         enc_block=ENC_BLOCK, dec_block=DEC_BLOCK,
                         enc_layers=ENC_LAYERS, dec_layers=DEC_LAYERS,
                         n_vocab=N_VOCAB)

    eeg = jax.random.normal(kx, (B, N_C, N_F, T), jnp.float32)
    input_ids = jax.random.randint(kt, (B, S), 0, N_VOCAB, dtype=jnp.int32)

    fwd = jax.jit(functools.partial(telepath_forward, n_heads=H, scale=scale))
    enc, logits = fwd(params, eeg, input_ids)
    jax.block_until_ready((enc, logits))

    assert enc.shape == (B, N_C * (T // 2), D), enc.shape
    assert logits.shape == (B, S, N_VOCAB), logits.shape
    assert bool(jnp.all(jnp.isfinite(enc))) and bool(jnp.all(jnp.isfinite(logits)))
    print("KERNEL_OK")
</pallas_src>

<mosaic_0001>
module attributes {stable_mosaic.version = 11 : i64} {
  func.func @_conv1_kernel(%arg0: i32, %arg1: i32, %arg2: memref<1x1x8x18xf32, #tpu.memory_space<vmem>>, %arg3: memref<1x32x24xf32, #tpu.memory_space<vmem>>, %arg4: memref<1x32x1xf32, #tpu.memory_space<vmem>>, %arg5: memref<1x1x32x16xf32, #tpu.memory_space<vmem>>) attributes {dimension_semantics = [#tpu.dimension_semantics<parallel>, #tpu.dimension_semantics<parallel>], iteration_bounds = array<i64: 2, 2>, scalar_prefetch = 0 : i64, scratch_operands = 0 : i64, tpu.core_type = #tpu.core_type<tc>, window_params = [{transform_indices = @transform_0, window_bounds = array<i64: 1, 1, 8, 18>}, {transform_indices = @transform_1, window_bounds = array<i64: 1, 32, 24>}, {transform_indices = @transform_2, window_bounds = array<i64: 1, 32, 1>}, {transform_indices = @transform_3, window_bounds = array<i64: 1, 1, 32, 16>}]} {
    %c0 = arith.constant 0 : index
    %c0_0 = arith.constant 0 : index
    %c0_1 = arith.constant 0 : index
    %c0_2 = arith.constant 0 : index
    %0 = vector.load %arg2[%c0, %c0_0, %c0_1, %c0_2] : memref<1x1x8x18xf32, #tpu.memory_space<vmem>>, vector<1x1x8x18xf32>
    %1 = vector.shape_cast %0 : vector<1x1x8x18xf32> to vector<8x18xf32>
    %2 = vector.extract_strided_slice %1 {offsets = [0, 0], sizes = [8, 16], strides = [1, 1]} : vector<8x18xf32> to vector<8x16xf32>
    %3 = vector.extract_strided_slice %1 {offsets = [0, 1], sizes = [8, 16], strides = [1, 1]} : vector<8x18xf32> to vector<8x16xf32>
    %4 = vector.extract_strided_slice %1 {offsets = [0, 2], sizes = [8, 16], strides = [1, 1]} : vector<8x18xf32> to vector<8x16xf32>
    %5 = tpu.concatenate %2, %3, %4 in 0 : vector<8x16xf32>, vector<8x16xf32>, vector<8x16xf32> -> vector<24x16xf32>
    %c0_3 = arith.constant 0 : index
    %c0_4 = arith.constant 0 : index
    %c0_5 = arith.constant 0 : index
    %6 = vector.load %arg3[%c0_3, %c0_4, %c0_5] : memref<1x32x24xf32, #tpu.memory_space<vmem>>, vector<1x32x24xf32>
    %7 = vector.shape_cast %6 : vector<1x32x24xf32> to vector<32x24xf32>
    %8 = arith.truncf %7 : vector<32x24xf32> to vector<32x24xbf16>
    %9 = arith.truncf %5 : vector<24x16xf32> to vector<24x16xbf16>
    %cst = arith.constant dense<0.000000e+00> : vector<32x16xf32>
    %10 = tpu.matmul %8, %9, %cst {dimension_numbers = #tpu.dot_dimension_numbers<[1], [0], [0], [1], [0, 0, 1, 1], [], []>} : vector<32x24xbf16>, vector<24x16xbf16>, vector<32x16xf32> -> vector<32x16xf32>
    %c0_6 = arith.constant 0 : index
    %c0_7 = arith.constant 0 : index
    %c0_8 = arith.constant 0 : index
    %11 = vector.load %arg4[%c0_6, %c0_7, %c0_8] : memref<1x32x1xf32, #tpu.memory_space<vmem>>, vector<1x32x1xf32>
    %12 = vector.shape_cast %11 : vector<1x32x1xf32> to vector<32x1xf32>
    %13 = vector.broadcast %12 : vector<32x1xf32> to vector<32x16xf32>
    %14 = arith.addf %10, %13 : vector<32x16xf32>
    %cst_9 = arith.constant 5.000000e-01 : f32
    %15 = vector.broadcast %cst_9 : f32 to vector<32x16xf32>
    %16 = arith.mulf %15, %14 : vector<32x16xf32>
    %cst_10 = arith.constant 4.471500e-02 : f32
    %17 = vector.broadcast %cst_10 : f32 to vector<32x16xf32>
    %18 = arith.mulf %17, %14 : vector<32x16xf32>
    %19 = arith.mulf %18, %14 : vector<32x16xf32>
    %20 = arith.mulf %19, %14 : vector<32x16xf32>
    %21 = arith.addf %14, %20 : vector<32x16xf32>
    %cst_11 = arith.constant 0.797884583 : f32
    %22 = vector.broadcast %cst_11 : f32 to vector<32x16xf32>
    %23 = arith.mulf %22, %21 : vector<32x16xf32>
    %24 = math.tanh %23 : vector<32x16xf32>
    %cst_12 = arith.constant 1.000000e+00 : f32
    %25 = vector.broadcast %cst_12 : f32 to vector<32x16xf32>
    %26 = arith.addf %25, %24 : vector<32x16xf32>
    %27 = arith.mulf %16, %26 : vector<32x16xf32>
    %c0_13 = arith.constant 0 : index
    %c0_14 = arith.constant 0 : index
    %c0_15 = arith.constant 0 : index
    %c0_16 = arith.constant 0 : index
    %28 = vector.load %arg5[%c0_13, %c0_14, %c0_15, %c0_16] : memref<1x1x32x16xf32, #tpu.memory_space<vmem>>, vector<1x1x32x16xf32>
    %29 = vector.shape_cast %28 : vector<1x1x32x16xf32> to vector<32x16xf32>
    %30 = vector.shape_cast %27 : vector<32x16xf32> to vector<1x1x32x16xf32>
    tpu.vector_store %arg5[%c0_13, %c0_14, %c0_15, %c0_16], %30 {strides = array<i32>} : memref<1x1x32x16xf32, #tpu.memory_space<vmem>>, vector<1x1x32x16xf32>,
    return
  }
  func.func @transform_0(%arg0: i32, %arg1: i32) -> (i32, i32, i32, i32) {
    %c0_i32 = arith.constant 0 : i32
    %c0_i32_0 = arith.constant 0 : i32
    %c0_i32_1 = arith.constant 0 : i32
    return %arg0, %arg1, %c0_i32, %c0_i32_0 : i32, i32, i32, i32
  }
  func.func @transform_1(%arg0: i32, %arg1: i32) -> (i32, i32, i32) {
    %c0_i32 = arith.constant 0 : i32
    %c0_i32_0 = arith.constant 0 : i32
    %c0_i32_1 = arith.constant 0 : i32
    return %arg1, %c0_i32, %c0_i32_0 : i32, i32, i32
  }
  func.func @transform_2(%arg0: i32, %arg1: i32) -> (i32, i32, i32) {
    %c0_i32 = arith.constant 0 : i32
    %c0_i32_0 = arith.constant 0 : i32
    %c0_i32_1 = arith.constant 0 : i32
    return %arg1, %c0_i32, %c0_i32_0 : i32, i32, i32
  }
  func.func @transform_3(%arg0: i32, %arg1: i32) -> (i32, i32, i32, i32) {
    %c0_i32 = arith.constant 0 : i32
    %c0_i32_0 = arith.constant 0 : i32
    %c0_i32_1 = arith.constant 0 : i32
    return %arg0, %arg1, %c0_i32, %c0_i32_0 : i32, i32, i32, i32
  }
}

module attributes {stable_mosaic.version = 11 : i64} {
  func.func @_conv2_kernel(%arg0: i32, %arg1: i32, %arg2: memref<1x1x32x9xf32, #tpu.memory_space<vmem>>, %arg3: memref<1x1x32x9xf32, #tpu.memory_space<vmem>>, %arg4: memref<1x96x32xf32, #tpu.memory_space<vmem>>, %arg5: memref<1x1x32xf32, #tpu.memory_space<vmem>>, %arg6: memref<8x32xf32, #tpu.memory_space<vmem>>, %arg7: memref<1x1x32xf32, #tpu.memory_space<vmem>>, %arg8: memref<1x1x8x32xf32, #tpu.memory_space<vmem>>) attributes {dimension_semantics = [#tpu.dimension_semantics<parallel>, #tpu.dimension_semantics<parallel>], iteration_bounds = array<i64: 2, 2>, scalar_prefetch = 0 : i64, scratch_operands = 0 : i64, tpu.core_type = #tpu.core_type<tc>, window_params = [{transform_indices = @transform_0, window_bounds = array<i64: 1, 1, 32, 9>}, {transform_indices = @transform_1, window_bounds = array<i64: 1, 1, 32, 9>}, {transform_indices = @transform_2, window_bounds = array<i64: 1, 96, 32>}, {transform_indices = @transform_3, window_bounds = array<i64: 1, 1, 32>}, {pipeline_mode = #tpu.pipeline_mode<synchronous>, transform_indices = @transform_4, window_bounds = array<i64: 8, 32>}, {transform_indices = @transform_5, window_bounds = array<i64: 1, 1, 32>}, {transform_indices = @transform_6, window_bounds = array<i64: 1, 1, 8, 32>}]} {
    %c0 = arith.constant 0 : index
    %c0_0 = arith.constant 0 : index
    %c0_1 = arith.constant 0 : index
    %c0_2 = arith.constant 0 : index
    %0 = vector.load %arg2[%c0, %c0_0, %c0_1, %c0_2] : memref<1x1x32x9xf32, #tpu.memory_space<vmem>>, vector<1x1x32x9xf32>
    %1 = vector.shape_cast %0 : vector<1x1x32x9xf32> to vector<32x9xf32>
    %c0_3 = arith.constant 0 : index
    %c0_4 = arith.constant 0 : index
    %c0_5 = arith.constant 0 : index
    %c0_6 = arith.constant 0 : index
    %2 = vector.load %arg3[%c0_3, %c0_4, %c0_5, %c0_6] : memref<1x1x32x9xf32, #tpu.memory_space<vmem>>, vector<1x1x32x9xf32>
    %3 = vector.shape_cast %2 : vector<1x1x32x9xf32> to vector<32x9xf32>
    %4 = vector.extract_strided_slice %1 {offsets = [0, 0], sizes = [32, 8], strides = [1, 1]} : vector<32x9xf32> to vector<32x8xf32>
    %5 = vector.extract_strided_slice %3 {offsets = [0, 0], sizes = [32, 8], strides = [1, 1]} : vector<32x9xf32> to vector<32x8xf32>
    %6 = vector.extract_strided_slice %1 {offsets = [0, 1], sizes = [32, 8], strides = [1, 1]} : vector<32x9xf32> to vector<32x8xf32>
    %7 = tpu.concatenate %4, %5, %6 in 0 : vector<32x8xf32>, vector<32x8xf32>, vector<32x8xf32> -> vector<96x8xf32>
    %8 = arith.truncf %7 : vector<96x8xf32> to vector<96x8xbf16>
    %c0_7 = arith.constant 0 : index
    %c0_8 = arith.constant 0 : index
    %c0_9 = arith.constant 0 : index
    %9 = vector.load %arg4[%c0_7, %c0_8, %c0_9] : memref<1x96x32xf32, #tpu.memory_space<vmem>>, vector<1x96x32xf32>
    %10 = vector.shape_cast %9 : vector<1x96x32xf32> to vector<96x32xf32>
    %11 = arith.truncf %10 : vector<96x32xf32> to vector<96x32xbf16>
    %cst = arith.constant dense<0.000000e+00> : vector<8x32xf32>
    %12 = tpu.matmul %8, %11, %cst {dimension_numbers = #tpu.dot_dimension_numbers<[0], [0], [1], [1], [0, 1, 1, 1], [], []>} : vector<96x8xbf16>, vector<96x32xbf16>, vector<8x32xf32> -> vector<8x32xf32>
    %c0_10 = arith.constant 0 : index
    %c0_11 = arith.constant 0 : index
    %c0_12 = arith.constant 0 : index
    %13 = vector.load %arg5[%c0_10, %c0_11, %c0_12] : memref<1x1x32xf32, #tpu.memory_space<vmem>>, vector<1x1x32xf32>
    %14 = vector.shape_cast %13 : vector<1x1x32xf32> to vector<1x32xf32>
    %15 = vector.broadcast %14 : vector<1x32xf32> to vector<8x32xf32>
    %16 = arith.addf %12, %15 : vector<8x32xf32>
    %cst_13 = arith.constant 5.000000e-01 : f32
    %17 = vector.broadcast %cst_13 : f32 to vector<8x32xf32>
    %18 = arith.mulf %17, %16 : vector<8x32xf32>
    %cst_14 = arith.constant 4.471500e-02 : f32
    %19 = vector.broadcast %cst_14 : f32 to vector<8x32xf32>
    %20 = arith.mulf %19, %16 : vector<8x32xf32>
    %21 = arith.mulf %20, %16 : vector<8x32xf32>
    %22 = arith.mulf %21, %16 : vector<8x32xf32>
    %23 = arith.addf %16, %22 : vector<8x32xf32>
    %cst_15 = arith.constant 0.797884583 : f32
    %24 = vector.broadcast %cst_15 : f32 to vector<8x32xf32>
    %25 = arith.mulf %24, %23 : vector<8x32xf32>
    %26 = math.tanh %25 : vector<8x32xf32>
    %cst_16 = arith.constant 1.000000e+00 : f32
    %27 = vector.broadcast %cst_16 : f32 to vector<8x32xf32>
    %28 = arith.addf %27, %26 : vector<8x32xf32>
    %29 = arith.mulf %18, %28 : vector<8x32xf32>
    %c0_17 = arith.constant 0 : index
    %c0_18 = arith.constant 0 : index
    %30 = vector.load %arg6[%c0_17, %c0_18] : memref<8x32xf32, #tpu.memory_space<vmem>>, vector<8x32xf32>
    %31 = arith.addf %29, %30 : vector<8x32xf32>
    %c0_19 = arith.constant 0 : index
    %c0_20 = arith.constant 0 : index
    %c0_21 = arith.constant 0 : index
    %32 = vector.load %arg7[%c0_19, %c0_20, %c0_21] : memref<1x1x32xf32, #tpu.memory_space<vmem>>, vector<1x1x32xf32>
    %33 = vector.shape_cast %32 : vector<1x1x32xf32> to vector<1x32xf32>
    %34 = vector.broadcast %33 : vector<1x32xf32> to vector<8x32xf32>
    %35 = arith.addf %31, %34 : vector<8x32xf32>
    %c0_22 = arith.constant 0 : index
    %c0_23 = arith.constant 0 : index
    %c0_24 = arith.constant 0 : index
    %c0_25 = arith.constant 0 : index
    %36 = vector.load %arg8[%c0_22, %c0_23, %c0_24, %c0_25] : memref<1x1x8x32xf32, #tpu.memory_space<vmem>>, vector<1x1x8x32xf32>
    %37 = vector.shape_cast %36 : vector<1x1x8x32xf32> to vector<8x32xf32>
    %38 = vector.shape_cast %35 : vector<8x32xf32> to vector<1x1x8x32xf32>
    tpu.vector_store %arg8[%c0_22, %c0_23, %c0_24, %c0_25], %38 {strides = array<i32>} : memref<1x1x8x32xf32, #tpu.memory_space<vmem>>, vector<1x1x8x32xf32>,
    return
  }
  func.func @transform_0(%arg0: i32, %arg1: i32) -> (i32, i32, i32, i32) {
    %c0_i32 = arith.constant 0 : i32
    %c0_i32_0 = arith.constant 0 : i32
    %c0_i32_1 = arith.constant 0 : i32
    return %arg0, %arg1, %c0_i32, %c0_i32_0 : i32, i32, i32, i32
  }
  func.func @transform_1(%arg0: i32, %arg1: i32) -> (i32, i32, i32, i32) {
    %c0_i32 = arith.constant 0 : i32
    %c0_i32_0 = arith.constant 0 : i32
    %c0_i32_1 = arith.constant 0 : i32
    return %arg0, %arg1, %c0_i32, %c0_i32_0 : i32, i32, i32, i32
  }
  func.func @transform_2(%arg0: i32, %arg1: i32) -> (i32, i32, i32) {
    %c0_i32 = arith.constant 0 : i32
    %c0_i32_0 = arith.constant 0 : i32
    %c0_i32_1 = arith.constant 0 : i32
    return %arg1, %c0_i32, %c0_i32_0 : i32, i32, i32
  }
  func.func @transform_3(%arg0: i32, %arg1: i32) -> (i32, i32, i32) {
    %c0_i32 = arith.constant 0 : i32
    %c0_i32_0 = arith.constant 0 : i32
    %c0_i32_1 = arith.constant 0 : i32
    return %arg1, %c0_i32, %c0_i32_0 : i32, i32, i32
  }
  func.func @transform_4(%arg0: i32, %arg1: i32) -> (i32, i32) {
    %c0_i32 = arith.constant 0 : i32
    %c0_i32_0 = arith.constant 0 : i32
    %c0_i32_1 = arith.constant 0 : i32
    return %c0_i32, %c0_i32_0 : i32, i32
  }
  func.func @transform_5(%arg0: i32, %arg1: i32) -> (i32, i32, i32) {
    %c0_i32 = arith.constant 0 : i32
    %c0_i32_0 = arith.constant 0 : i32
    %c0_i32_1 = arith.constant 0 : i32
    return %arg1, %c0_i32, %c0_i32_0 : i32, i32, i32
  }
  func.func @transform_6(%arg0: i32, %arg1: i32) -> (i32, i32, i32, i32) {
    %c0_i32 = arith.constant 0 : i32
    %c0_i32_0 = arith.constant 0 : i32
    %c0_i32_1 = arith.constant 0 : i32
    return %arg0, %arg1, %c0_i32, %c0_i32_0 : i32, i32, i32, i32
  }
}

module attributes {stable_mosaic.version = 11 : i64} {
  func.func @_attn_self_kernel(%arg0: i32, %arg1: i32, %arg2: memref<1x16x96xf32, #tpu.memory_space<vmem>>, %arg3: memref<1x16x32xf32, #tpu.memory_space<vmem>>) attributes {dimension_semantics = [#tpu.dimension_semantics<parallel>, #tpu.dimension_semantics<parallel>], iteration_bounds = array<i64: 2, 1>, scalar_prefetch = 0 : i64, scratch_operands = 0 : i64, tpu.core_type = #tpu.core_type<tc>, window_params = [{transform_indices = @transform_0, window_bounds = array<i64: 1, 16, 96>}, {transform_indices = @transform_1, window_bounds = array<i64: 1, 16, 32>}]} {
    %c0 = arith.constant 0 : index
    %c0_0 = arith.constant 0 : index
    %c0_1 = arith.constant 0 : index
    %0 = vector.load %arg2[%c0, %c0_0, %c0_1] : memref<1x16x96xf32, #tpu.memory_space<vmem>>, vector<1x16x96xf32>
    %1 = vector.shape_cast %0 : vector<1x16x96xf32> to vector<16x96xf32>
    %2 = vector.extract_strided_slice %1 {offsets = [0, 32], sizes = [16, 32], strides = [1, 1]} : vector<16x96xf32> to vector<16x32xf32>
    %3 = vector.extract_strided_slice %1 {offsets = [0, 64], sizes = [16, 32], strides = [1, 1]} : vector<16x96xf32> to vector<16x32xf32>
    %4 = vector.extract_strided_slice %1 {offsets = [0, 0], sizes = [16, 32], strides = [1, 1]} : vector<16x96xf32> to vector<16x32xf32>
    %5 = vector.extract_strided_slice %4 {offsets = [0, 0], sizes = [16, 8], strides = [1, 1]} : vector<16x32xf32> to vector<16x8xf32>
    %cst = arith.constant 0.353553385 : f32
    %6 = vector.broadcast %cst : f32 to vector<16x8xf32>
    %7 = arith.mulf %5, %6 : vector<16x8xf32>
    %8 = arith.truncf %7 : vector<16x8xf32> to vector<16x8xbf16>
    %9 = vector.extract_strided_slice %2 {offsets = [0, 0], sizes = [16, 8], strides = [1, 1]} : vector<16x32xf32> to vector<16x8xf32>
    %10 = arith.truncf %9 : vector<16x8xf32> to vector<16x8xbf16>
    %11 = vector.extract_strided_slice %3 {offsets = [0, 0], sizes = [16, 8], strides = [1, 1]} : vector<16x32xf32> to vector<16x8xf32>
    %12 = arith.truncf %11 : vector<16x8xf32> to vector<16x8xbf16>
    %cst_2 = arith.constant dense<0.000000e+00> : vector<16x16xf32>
    %13 = tpu.matmul %8, %10, %cst_2 {dimension_numbers = #tpu.dot_dimension_numbers<[1], [1], [0], [0], [0, 0, 1, 0], [], []>} : vector<16x8xbf16>, vector<16x8xbf16>, vector<16x16xf32> -> vector<16x16xf32>
    %cst_3 = arith.constant dense<0xFF800000> : vector<16xf32>
    %14 = vector.multi_reduction <maximumf>, %13, %cst_3 [1] : vector<16x16xf32> to vector<16xf32>
    %15 = vector.shape_cast %14 : vector<16xf32> to vector<16x1xf32>
    %16 = vector.broadcast %15 : vector<16x1xf32> to vector<16x16xf32>
    %17 = arith.subf %13, %16 : vector<16x16xf32>
    %18 = math.exp %17 : vector<16x16xf32>
    %cst_4 = arith.constant dense<0.000000e+00> : vector<16xf32>
    %19 = vector.multi_reduction <add>, %18, %cst_4 [1] : vector<16x16xf32> to vector<16xf32>
    %20 = vector.shape_cast %19 : vector<16xf32> to vector<16x1xf32>
    %21 = arith.truncf %18 : vector<16x16xf32> to vector<16x16xbf16>
    %cst_5 = arith.constant dense<0.000000e+00> : vector<16x8xf32>
    %22 = tpu.matmul %21, %12, %cst_5 {dimension_numbers = #tpu.dot_dimension_numbers<[1], [0], [0], [1], [0, 0, 1, 1], [], []>} : vector<16x16xbf16>, vector<16x8xbf16>, vector<16x8xf32> -> vector<16x8xf32>
    %23 = tpu.reciprocal %20 {approx = true} : vector<16x1xf32> -> vector<16x1xf32>
    %24 = vector.broadcast %23 : vector<16x1xf32> to vector<16x8xf32>
    %25 = arith.mulf %22, %24 : vector<16x8xf32>
    %26 = vector.extract_strided_slice %4 {offsets = [0, 8], sizes = [16, 8], strides = [1, 1]} : vector<16x32xf32> to vector<16x8xf32>
    %cst_6 = arith.constant 0.353553385 : f32
    %27 = vector.broadcast %cst_6 : f32 to vector<16x8xf32>
    %28 = arith.mulf %26, %27 : vector<16x8xf32>
    %29 = arith.truncf %28 : vector<16x8xf32> to vector<16x8xbf16>
    %30 = vector.extract_strided_slice %2 {offsets = [0, 8], sizes = [16, 8], strides = [1, 1]} : vector<16x32xf32> to vector<16x8xf32>
    %31 = arith.truncf %30 : vector<16x8xf32> to vector<16x8xbf16>
    %32 = vector.extract_strided_slice %3 {offsets = [0, 8], sizes = [16, 8], strides = [1, 1]} : vector<16x32xf32> to vector<16x8xf32>
    %33 = arith.truncf %32 : vector<16x8xf32> to vector<16x8xbf16>
    %cst_7 = arith.constant dense<0.000000e+00> : vector<16x16xf32>
    %34 = tpu.matmul %29, %31, %cst_7 {dimension_numbers = #tpu.dot_dimension_numbers<[1], [1], [0], [0], [0, 0, 1, 0], [], []>} : vector<16x8xbf16>, vector<16x8xbf16>, vector<16x16xf32> -> vector<16x16xf32>
    %cst_8 = arith.constant dense<0xFF800000> : vector<16xf32>
    %35 = vector.multi_reduction <maximumf>, %34, %cst_8 [1] : vector<16x16xf32> to vector<16xf32>
    %36 = vector.shape_cast %35 : vector<16xf32> to vector<16x1xf32>
    %37 = vector.broadcast %36 : vector<16x1xf32> to vector<16x16xf32>
    %38 = arith.subf %34, %37 : vector<16x16xf32>
    %39 = math.exp %38 : vector<16x16xf32>
    %cst_9 = arith.constant dense<0.000000e+00> : vector<16xf32>
    %40 = vector.multi_reduction <add>, %39, %cst_9 [1] : vector<16x16xf32> to vector<16xf32>
    %41 = vector.shape_cast %40 : vector<16xf32> to vector<16x1xf32>
    %42 = arith.truncf %39 : vector<16x16xf32> to vector<16x16xbf16>
    %cst_10 = arith.constant dense<0.000000e+00> : vector<16x8xf32>
    %43 = tpu.matmul %42, %33, %cst_10 {dimension_numbers = #tpu.dot_dimension_numbers<[1], [0], [0], [1], [0, 0, 1, 1], [], []>} : vector<16x16xbf16>, vector<16x8xbf16>, vector<16x8xf32> -> vector<16x8xf32>
    %44 = tpu.reciprocal %41 {approx = true} : vector<16x1xf32> -> vector<16x1xf32>
    %45 = vector.broadcast %44 : vector<16x1xf32> to vector<16x8xf32>
    %46 = arith.mulf %43, %45 : vector<16x8xf32>
    %47 = vector.extract_strided_slice %4 {offsets = [0, 16], sizes = [16, 8], strides = [1, 1]} : vector<16x32xf32> to vector<16x8xf32>
    %cst_11 = arith.constant 0.353553385 : f32
    %48 = vector.broadcast %cst_11 : f32 to vector<16x8xf32>
    %49 = arith.mulf %47, %48 : vector<16x8xf32>
    %50 = arith.truncf %49 : vector<16x8xf32> to vector<16x8xbf16>
    %51 = vector.extract_strided_slice %2 {offsets = [0, 16], sizes = [16, 8], strides = [1, 1]} : vector<16x32xf32> to vector<16x8xf32>
    %52 = arith.truncf %51 : vector<16x8xf32> to vector<16x8xbf16>
    %53 = vector.extract_strided_slice %3 {offsets = [0, 16], sizes = [16, 8], strides = [1, 1]} : vector<16x32xf32> to vector<16x8xf32>
    %54 = arith.truncf %53 : vector<16x8xf32> to vector<16x8xbf16>
    %cst_12 = arith.constant dense<0.000000e+00> : vector<16x16xf32>
    %55 = tpu.matmul %50, %52, %cst_12 {dimension_numbers = #tpu.dot_dimension_numbers<[1], [1], [0], [0], [0, 0, 1, 0], [], []>} : vector<16x8xbf16>, vector<16x8xbf16>, vector<16x16xf32> -> vector<16x16xf32>
    %cst_13 = arith.constant dense<0xFF800000> : vector<16xf32>
    %56 = vector.multi_reduction <maximumf>, %55, %cst_13 [1] : vector<16x16xf32> to vector<16xf32>
    %57 = vector.shape_cast %56 : vector<16xf32> to vector<16x1xf32>
    %58 = vector.broadcast %57 : vector<16x1xf32> to vector<16x16xf32>
    %59 = arith.subf %55, %58 : vector<16x16xf32>
    %60 = math.exp %59 : vector<16x16xf32>
    %cst_14 = arith.constant dense<0.000000e+00> : vector<16xf32>
    %61 = vector.multi_reduction <add>, %60, %cst_14 [1] : vector<16x16xf32> to vector<16xf32>
    %62 = vector.shape_cast %61 : vector<16xf32> to vector<16x1xf32>
    %63 = arith.truncf %60 : vector<16x16xf32> to vector<16x16xbf16>
    %cst_15 = arith.constant dense<0.000000e+00> : vector<16x8xf32>
    %64 = tpu.matmul %63, %54, %cst_15 {dimension_numbers = #tpu.dot_dimension_numbers<[1], [0], [0], [1], [0, 0, 1, 1], [], []>} : vector<16x16xbf16>, vector<16x8xbf16>, vector<16x8xf32> -> vector<16x8xf32>
    %65 = tpu.reciprocal %62 {approx = true} : vector<16x1xf32> -> vector<16x1xf32>
    %66 = vector.broadcast %65 : vector<16x1xf32> to vector<16x8xf32>
    %67 = arith.mulf %64, %66 : vector<16x8xf32>
    %68 = vector.extract_strided_slice %4 {offsets = [0, 24], sizes = [16, 8], strides = [1, 1]} : vector<16x32xf32> to vector<16x8xf32>
    %cst_16 = arith.constant 0.353553385 : f32
    %69 = vector.broadcast %cst_16 : f32 to vector<16x8xf32>
    %70 = arith.mulf %68, %69 : vector<16x8xf32>
    %71 = arith.truncf %70 : vector<16x8xf32> to vector<16x8xbf16>
    %72 = vector.extract_strided_slice %2 {offsets = [0, 24], sizes = [16, 8], strides = [1, 1]} : vector<16x32xf32> to vector<16x8xf32>
    %73 = arith.truncf %72 : vector<16x8xf32> to vector<16x8xbf16>
    %74 = vector.extract_strided_slice %3 {offsets = [0, 24], sizes = [16, 8], strides = [1, 1]} : vector<16x32xf32> to vector<16x8xf32>
    %75 = arith.truncf %74 : vector<16x8xf32> to vector<16x8xbf16>
    %cst_17 = arith.constant dense<0.000000e+00> : vector<16x16xf32>
    %76 = tpu.matmul %71, %73, %cst_17 {dimension_numbers = #tpu.dot_dimension_numbers<[1], [1], [0], [0], [0, 0, 1, 0], [], []>} : vector<16x8xbf16>, vector<16x8xbf16>, vector<16x16xf32> -> vector<16x16xf32>
    %cst_18 = arith.constant dense<0xFF800000> : vector<16xf32>
    %77 = vector.multi_reduction <maximumf>, %76, %cst_18 [1] : vector<16x16xf32> to vector<16xf32>
    %78 = vector.shape_cast %77 : vector<16xf32> to vector<16x1xf32>
    %79 = vector.broadcast %78 : vector<16x1xf32> to vector<16x16xf32>
    %80 = arith.subf %76, %79 : vector<16x16xf32>
    %81 = math.exp %80 : vector<16x16xf32>
    %cst_19 = arith.constant dense<0.000000e+00> : vector<16xf32>
    %82 = vector.multi_reduction <add>, %81, %cst_19 [1] : vector<16x16xf32> to vector<16xf32>
    %83 = vector.shape_cast %82 : vector<16xf32> to vector<16x1xf32>
    %84 = arith.truncf %81 : vector<16x16xf32> to vector<16x16xbf16>
    %cst_20 = arith.constant dense<0.000000e+00> : vector<16x8xf32>
    %85 = tpu.matmul %84, %75, %cst_20 {dimension_numbers = #tpu.dot_dimension_numbers<[1], [0], [0], [1], [0, 0, 1, 1], [], []>} : vector<16x16xbf16>, vector<16x8xbf16>, vector<16x8xf32> -> vector<16x8xf32>
    %86 = tpu.reciprocal %83 {approx = true} : vector<16x1xf32> -> vector<16x1xf32>
    %87 = vector.broadcast %86 : vector<16x1xf32> to vector<16x8xf32>
    %88 = arith.mulf %85, %87 : vector<16x8xf32>
    %89 = tpu.concatenate %25, %46, %67, %88 in 1 : vector<16x8xf32>, vector<16x8xf32>, vector<16x8xf32>, vector<16x8xf32> -> vector<16x32xf32>
    %c0_21 = arith.constant 0 : index
    %c0_22 = arith.constant 0 : index
    %c0_23 = arith.constant 0 : index
    %90 = vector.load %arg3[%c0_21, %c0_22, %c0_23] : memref<1x16x32xf32, #tpu.memory_space<vmem>>, vector<1x16x32xf32>
    %91 = vector.shape_cast %90 : vector<1x16x32xf32> to vector<16x32xf32>
    %92 = vector.shape_cast %89 : vector<16x32xf32> to vector<1x16x32xf32>
    tpu.vector_store %arg3[%c0_21, %c0_22, %c0_23], %92 {strides = array<i32>} : memref<1x16x32xf32, #tpu.memory_space<vmem>>, vector<1x16x32xf32>,
    return
  }
  func.func @transform_0(%arg0: i32, %arg1: i32) -> (i32, i32, i32) {
    %c0_i32 = arith.constant 0 : i32
    %c0_i32_0 = arith.constant 0 : i32
    %c0_i32_1 = arith.constant 0 : i32
    return %arg0, %c0_i32, %c0_i32_0 : i32, i32, i32
  }
  func.func @transform_1(%arg0: i32, %arg1: i32) -> (i32, i32, i32) {
    %c0_i32 = arith.constant 0 : i32
    %c0_i32_0 = arith.constant 0 : i32
    return %arg0, %arg1, %c0_i32 : i32, i32, i32
  }
}

module attributes {stable_mosaic.version = 11 : i64} {
  func.func @_matmul_kernel(%arg0: i32, %arg1: i32, %arg2: i32, %arg3: memref<32x32xf32, #tpu.memory_space<vmem>>, %arg4: memref<32x96xf32, #tpu.memory_space<vmem>>, %arg5: memref<1x96xf32, #tpu.memory_space<vmem>>, %arg6: memref<1x32xf32, #tpu.memory_space<vmem>>, %arg7: memref<1x32xf32, #tpu.memory_space<vmem>>, %arg8: memref<32x96xf32, #tpu.memory_space<vmem>>) attributes {dimension_semantics = [#tpu.dimension_semantics<parallel>, #tpu.dimension_semantics<parallel>, #tpu.dimension_semantics<arbitrary>], iteration_bounds = array<i64: 1, 1, 1>, scalar_prefetch = 0 : i64, scratch_operands = 0 : i64, tpu.core_type = #tpu.core_type<tc>, window_params = [{transform_indices = @transform_0, window_bounds = array<i64: 32, 32>}, {transform_indices = @transform_1, window_bounds = array<i64: 32, 96>}, {transform_indices = @transform_2, window_bounds = array<i64: 1, 96>}, {transform_indices = @transform_3, window_bounds = array<i64: 1, 32>}, {transform_indices = @transform_4, window_bounds = array<i64: 1, 32>}, {transform_indices = @transform_5, window_bounds = array<i64: 32, 96>}]} {
    %c0 = arith.constant 0 : index
    %c0_0 = arith.constant 0 : index
    %0 = vector.load %arg3[%c0, %c0_0] : memref<32x32xf32, #tpu.memory_space<vmem>>, vector<32x32xf32>
    %cst = arith.constant dense<0.000000e+00> : vector<32xf32>
    %1 = vector.multi_reduction <add>, %0, %cst [1] : vector<32x32xf32> to vector<32xf32>
    %2 = vector.shape_cast %1 : vector<32xf32> to vector<32x1xf32>
    %cst_1 = arith.constant 3.200000e+01 : f32
    %3 = vector.broadcast %cst_1 : f32 to vector<32x1xf32>
    %4 = arith.divf %2, %3 : vector<32x1xf32>
    %5 = vector.broadcast %4 : vector<32x1xf32> to vector<32x32xf32>
    %6 = arith.subf %0, %5 : vector<32x32xf32>
    %7 = arith.mulf %6, %6 : vector<32x32xf32>
    %cst_2 = arith.constant dense<0.000000e+00> : vector<32xf32>
    %8 = vector.multi_reduction <add>, %7, %cst_2 [1] : vector<32x32xf32> to vector<32xf32>
    %9 = vector.shape_cast %8 : vector<32xf32> to vector<32x1xf32>
    %cst_3 = arith.constant 3.200000e+01 : f32
    %10 = vector.broadcast %cst_3 : f32 to vector<32x1xf32>
    %11 = arith.divf %9, %10 : vector<32x1xf32>
    %cst_4 = arith.constant 9.99999974E-6 : f32
    %12 = vector.broadcast %cst_4 : f32 to vector<32x1xf32>
    %13 = arith.addf %11, %12 : vector<32x1xf32>
    %14 = math.rsqrt %13 : vector<32x1xf32>
    %15 = vector.broadcast %14 : vector<32x1xf32> to vector<32x32xf32>
    %16 = arith.mulf %6, %15 : vector<32x32xf32>
    %c0_5 = arith.constant 0 : index
    %c0_6 = arith.constant 0 : index
    %17 = vector.load %arg6[%c0_5, %c0_6] : memref<1x32xf32, #tpu.memory_space<vmem>>, vector<1x32xf32>
    %18 = vector.broadcast %17 : vector<1x32xf32> to vector<32x32xf32>
    %19 = arith.mulf %16, %18 : vector<32x32xf32>
    %c0_7 = arith.constant 0 : index
    %c0_8 = arith.constant 0 : index
    %20 = vector.load %arg7[%c0_7, %c0_8] : memref<1x32xf32, #tpu.memory_space<vmem>>, vector<1x32xf32>
    %21 = vector.broadcast %20 : vector<1x32xf32> to vector<32x32xf32>
    %22 = arith.addf %19, %21 : vector<32x32xf32>
    %23 = arith.truncf %22 : vector<32x32xf32> to vector<32x32xbf16>
    %c0_9 = arith.constant 0 : index
    %c0_10 = arith.constant 0 : index
    %24 = vector.load %arg4[%c0_9, %c0_10] : memref<32x96xf32, #tpu.memory_space<vmem>>, vector<32x96xf32>
    %25 = arith.truncf %24 : vector<32x96xf32> to vector<32x96xbf16>
    %cst_11 = arith.constant dense<0.000000e+00> : vector<32x96xf32>
    %26 = tpu.matmul %23, %25, %cst_11 {dimension_numbers = #tpu.dot_dimension_numbers<[1], [0], [0], [1], [0, 0, 1, 1], [], []>} : vector<32x32xbf16>, vector<32x96xbf16>, vector<32x96xf32> -> vector<32x96xf32>
    %c0_12 = arith.constant 0 : index
    %c0_13 = arith.constant 0 : index
    %27 = vector.load %arg5[%c0_12, %c0_13] : memref<1x96xf32, #tpu.memory_space<vmem>>, vector<1x96xf32>
    %28 = vector.broadcast %27 : vector<1x96xf32> to vector<32x96xf32>
    %29 = arith.addf %26, %28 : vector<32x96xf32>
    %c0_14 = arith.constant 0 : index
    %c0_15 = arith.constant 0 : index
    %30 = vector.load %arg8[%c0_14, %c0_15] : memref<32x96xf32, #tpu.memory_space<vmem>>, vector<32x96xf32>
    tpu.vector_store %arg8[%c0_14, %c0_15], %29 {strides = array<i32>} : memref<32x96xf32, #tpu.memory_space<vmem>>, vector<32x96xf32>,
    return
  }
  func.func @transform_0(%arg0: i32, %arg1: i32, %arg2: i32) -> (i32, i32) {
    %c0_i32 = arith.constant 0 : i32
    return %arg0, %arg2 : i32, i32
  }
  func.func @transform_1(%arg0: i32, %arg1: i32, %arg2: i32) -> (i32, i32) {
    %c0_i32 = arith.constant 0 : i32
    return %arg2, %arg1 : i32, i32
  }
  func.func @transform_2(%arg0: i32, %arg1: i32, %arg2: i32) -> (i32, i32) {
    %c0_i32 = arith.constant 0 : i32
    %c0_i32_0 = arith.constant 0 : i32
    return %c0_i32, %arg1 : i32, i32
  }
  func.func @transform_3(%arg0: i32, %arg1: i32, %arg2: i32) -> (i32, i32) {
    %c0_i32 = arith.constant 0 : i32
    %c0_i32_0 = arith.constant 0 : i32
    return %c0_i32, %arg2 : i32, i32
  }
  func.func @transform_4(%arg0: i32, %arg1: i32, %arg2: i32) -> (i32, i32) {
    %c0_i32 = arith.constant 0 : i32
    %c0_i32_0 = arith.constant 0 : i32
    return %c0_i32, %arg2 : i32, i32
  }
  func.func @transform_5(%arg0: i32, %arg1: i32, %arg2: i32) -> (i32, i32) {
    %c0_i32 = arith.constant 0 : i32
    return %arg0, %arg1 : i32, i32
  }
}

module attributes {stable_mosaic.version = 11 : i64} {
  func.func @_matmul_kernel(%arg0: i32, %arg1: i32, %arg2: i32, %arg3: memref<32x32xf32, #tpu.memory_space<vmem>>, %arg4: memref<32x128xf32, #tpu.memory_space<vmem>>, %arg5: memref<1x128xf32, #tpu.memory_space<vmem>>, %arg6: memref<1x32xf32, #tpu.memory_space<vmem>>, %arg7: memref<1x32xf32, #tpu.memory_space<vmem>>, %arg8: memref<32x128xf32, #tpu.memory_space<vmem>>) attributes {dimension_semantics = [#tpu.dimension_semantics<parallel>, #tpu.dimension_semantics<parallel>, #tpu.dimension_semantics<arbitrary>], iteration_bounds = array<i64: 1, 1, 1>, scalar_prefetch = 0 : i64, scratch_operands = 0 : i64, tpu.core_type = #tpu.core_type<tc>, window_params = [{transform_indices = @transform_0, window_bounds = array<i64: 32, 32>}, {transform_indices = @transform_1, window_bounds = array<i64: 32, 128>}, {transform_indices = @transform_2, window_bounds = array<i64: 1, 128>}, {transform_indices = @transform_3, window_bounds = array<i64: 1, 32>}, {transform_indices = @transform_4, window_bounds = array<i64: 1, 32>}, {transform_indices = @transform_5, window_bounds = array<i64: 32, 128>}]} {
    %c0 = arith.constant 0 : index
    %c0_0 = arith.constant 0 : index
    %0 = vector.load %arg3[%c0, %c0_0] : memref<32x32xf32, #tpu.memory_space<vmem>>, vector<32x32xf32>
    %cst = arith.constant dense<0.000000e+00> : vector<32xf32>
    %1 = vector.multi_reduction <add>, %0, %cst [1] : vector<32x32xf32> to vector<32xf32>
    %2 = vector.shape_cast %1 : vector<32xf32> to vector<32x1xf32>
    %cst_1 = arith.constant 3.200000e+01 : f32
    %3 = vector.broadcast %cst_1 : f32 to vector<32x1xf32>
    %4 = arith.divf %2, %3 : vector<32x1xf32>
    %5 = vector.broadcast %4 : vector<32x1xf32> to vector<32x32xf32>
    %6 = arith.subf %0, %5 : vector<32x32xf32>
    %7 = arith.mulf %6, %6 : vector<32x32xf32>
    %cst_2 = arith.constant dense<0.000000e+00> : vector<32xf32>
    %8 = vector.multi_reduction <add>, %7, %cst_2 [1] : vector<32x32xf32> to vector<32xf32>
    %9 = vector.shape_cast %8 : vector<32xf32> to vector<32x1xf32>
    %cst_3 = arith.constant 3.200000e+01 : f32
    %10 = vector.broadcast %cst_3 : f32 to vector<32x1xf32>
    %11 = arith.divf %9, %10 : vector<32x1xf32>
    %cst_4 = arith.constant 9.99999974E-6 : f32
    %12 = vector.broadcast %cst_4 : f32 to vector<32x1xf32>
    %13 = arith.addf %11, %12 : vector<32x1xf32>
    %14 = math.rsqrt %13 : vector<32x1xf32>
    %15 = vector.broadcast %14 : vector<32x1xf32> to vector<32x32xf32>
    %16 = arith.mulf %6, %15 : vector<32x32xf32>
    %c0_5 = arith.constant 0 : index
    %c0_6 = arith.constant 0 : index
    %17 = vector.load %arg6[%c0_5, %c0_6] : memref<1x32xf32, #tpu.memory_space<vmem>>, vector<1x32xf32>
    %18 = vector.broadcast %17 : vector<1x32xf32> to vector<32x32xf32>
    %19 = arith.mulf %16, %18 : vector<32x32xf32>
    %c0_7 = arith.constant 0 : index
    %c0_8 = arith.constant 0 : index
    %20 = vector.load %arg7[%c0_7, %c0_8] : memref<1x32xf32, #tpu.memory_space<vmem>>, vector<1x32xf32>
    %21 = vector.broadcast %20 : vector<1x32xf32> to vector<32x32xf32>
    %22 = arith.addf %19, %21 : vector<32x32xf32>
    %23 = arith.truncf %22 : vector<32x32xf32> to vector<32x32xbf16>
    %c0_9 = arith.constant 0 : index
    %c0_10 = arith.constant 0 : index
    %24 = vector.load %arg4[%c0_9, %c0_10] : memref<32x128xf32, #tpu.memory_space<vmem>>, vector<32x128xf32>
    %25 = arith.truncf %24 : vector<32x128xf32> to vector<32x128xbf16>
    %cst_11 = arith.constant dense<0.000000e+00> : vector<32x128xf32>
    %26 = tpu.matmul %23, %25, %cst_11 {dimension_numbers = #tpu.dot_dimension_numbers<[1], [0], [0], [1], [0, 0, 1, 1], [], []>} : vector<32x32xbf16>, vector<32x128xbf16>, vector<32x128xf32> -> vector<32x128xf32>
    %c0_12 = arith.constant 0 : index
    %c0_13 = arith.constant 0 : index
    %27 = vector.load %arg5[%c0_12, %c0_13] : memref<1x128xf32, #tpu.memory_space<vmem>>, vector<1x128xf32>
    %28 = vector.broadcast %27 : vector<1x128xf32> to vector<32x128xf32>
    %29 = arith.addf %26, %28 : vector<32x128xf32>
    %cst_14 = arith.constant 5.000000e-01 : f32
    %30 = vector.broadcast %cst_14 : f32 to vector<32x128xf32>
    %31 = arith.mulf %30, %29 : vector<32x128xf32>
    %cst_15 = arith.constant 4.471500e-02 : f32
    %32 = vector.broadcast %cst_15 : f32 to vector<32x128xf32>
    %33 = arith.mulf %32, %29 : vector<32x128xf32>
    %34 = arith.mulf %33, %29 : vector<32x128xf32>
    %35 = arith.mulf %34, %29 : vector<32x128xf32>
    %36 = arith.addf %29, %35 : vector<32x128xf32>
    %cst_16 = arith.constant 0.797884583 : f32
    %37 = vector.broadcast %cst_16 : f32 to vector<32x128xf32>
    %38 = arith.mulf %37, %36 : vector<32x128xf32>
    %39 = math.tanh %38 : vector<32x128xf32>
    %cst_17 = arith.constant 1.000000e+00 : f32
    %40 = vector.broadcast %cst_17 : f32 to vector<32x128xf32>
    %41 = arith.addf %40, %39 : vector<32x128xf32>
    %42 = arith.mulf %31, %41 : vector<32x128xf32>
    %c0_18 = arith.constant 0 : index
    %c0_19 = arith.constant 0 : index
    %43 = vector.load %arg8[%c0_18, %c0_19] : memref<32x128xf32, #tpu.memory_space<vmem>>, vector<32x128xf32>
    tpu.vector_store %arg8[%c0_18, %c0_19], %42 {strides = array<i32>} : memref<32x128xf32, #tpu.memory_space<vmem>>, vector<32x128xf32>,
    return
  }
  func.func @transform_0(%arg0: i32, %arg1: i32, %arg2: i32) -> (i32, i32) {
    %c0_i32 = arith.constant 0 : i32
    return %arg0, %arg2 : i32, i32
  }
  func.func @transform_1(%arg0: i32, %arg1: i32, %arg2: i32) -> (i32, i32) {
    %c0_i32 = arith.constant 0 : i32
    return %arg2, %arg1 : i32, i32
  }
  func.func @transform_2(%arg0: i32, %arg1: i32, %arg2: i32) -> (i32, i32) {
    %c0_i32 = arith.constant 0 : i32
    %c0_i32_0 = arith.constant 0 : i32
    return %c0_i32, %arg1 : i32, i32
  }
  func.func @transform_3(%arg0: i32, %arg1: i32, %arg2: i32) -> (i32, i32) {
    %c0_i32 = arith.constant 0 : i32
    %c0_i32_0 = arith.constant 0 : i32
    return %c0_i32, %arg2 : i32, i32
  }
  func.func @transform_4(%arg0: i32, %arg1: i32, %arg2: i32) -> (i32, i32) {
    %c0_i32 = arith.constant 0 : i32
    %c0_i32_0 = arith.constant 0 : i32
    return %c0_i32, %arg2 : i32, i32
  }
  func.func @transform_5(%arg0: i32, %arg1: i32, %arg2: i32) -> (i32, i32) {
    %c0_i32 = arith.constant 0 : i32
    return %arg0, %arg1 : i32, i32
  }
}

module attributes {stable_mosaic.version = 11 : i64} {
  func.func @_matmul_kernel(%arg0: i32, %arg1: i32, %arg2: i32, %arg3: memref<32x32xf32, #tpu.memory_space<vmem>>, %arg4: memref<32x32xf32, #tpu.memory_space<vmem>>, %arg5: memref<1x32xf32, #tpu.memory_space<vmem>>, %arg6: memref<32x32xf32, #tpu.memory_space<vmem>>, %arg7: memref<32x32xf32, #tpu.memory_space<vmem>>) attributes {dimension_semantics = [#tpu.dimension_semantics<parallel>, #tpu.dimension_semantics<parallel>, #tpu.dimension_semantics<arbitrary>], iteration_bounds = array<i64: 1, 1, 1>, scalar_prefetch = 0 : i64, scratch_operands = 0 : i64, tpu.core_type = #tpu.core_type<tc>, window_params = [{transform_indices = @transform_0, window_bounds = array<i64: 32, 32>}, {transform_indices = @transform_1, window_bounds = array<i64: 32, 32>}, {transform_indices = @transform_2, window_bounds = array<i64: 1, 32>}, {transform_indices = @transform_3, window_bounds = array<i64: 32, 32>}, {transform_indices = @transform_4, window_bounds = array<i64: 32, 32>}]} {
    %c0 = arith.constant 0 : index
    %c0_0 = arith.constant 0 : index
    %0 = vector.load %arg3[%c0, %c0_0] : memref<32x32xf32, #tpu.memory_space<vmem>>, vector<32x32xf32>
    %1 = arith.truncf %0 : vector<32x32xf32> to vector<32x32xbf16>
    %c0_1 = arith.constant 0 : index
    %c0_2 = arith.constant 0 : index
    %2 = vector.load %arg4[%c0_1, %c0_2] : memref<32x32xf32, #tpu.memory_space<vmem>>, vector<32x32xf32>
    %3 = arith.truncf %2 : vector<32x32xf32> to vector<32x32xbf16>
    %cst = arith.constant dense<0.000000e+00> : vector<32x32xf32>
    %4 = tpu.matmul %1, %3, %cst {dimension_numbers = #tpu.dot_dimension_numbers<[1], [0], [0], [1], [0, 0, 1, 1], [], []>} : vector<32x32xbf16>, vector<32x32xbf16>, vector<32x32xf32> -> vector<32x32xf32>
    %c0_3 = arith.constant 0 : index
    %c0_4 = arith.constant 0 : index
    %5 = vector.load %arg5[%c0_3, %c0_4] : memref<1x32xf32, #tpu.memory_space<vmem>>, vector<1x32xf32>
    %6 = vector.broadcast %5 : vector<1x32xf32> to vector<32x32xf32>
    %7 = arith.addf %4, %6 : vector<32x32xf32>
    %c0_5 = arith.constant 0 : index
    %c0_6 = arith.constant 0 : index
    %8 = vector.load %arg6[%c0_5, %c0_6] : memref<32x32xf32, #tpu.memory_space<vmem>>, vector<32x32xf32>
    %9 = arith.addf %7, %8 : vector<32x32xf32>
    %c0_7 = arith.constant 0 : index
    %c0_8 = arith.constant 0 : index
    %10 = vector.load %arg7[%c0_7, %c0_8] : memref<32x32xf32, #tpu.memory_space<vmem>>, vector<32x32xf32>
    tpu.vector_store %arg7[%c0_7, %c0_8], %9 {strides = array<i32>} : memref<32x32xf32, #tpu.memory_space<vmem>>, vector<32x32xf32>,
    return
  }
  func.func @transform_0(%arg0: i32, %arg1: i32, %arg2: i32) -> (i32, i32) {
    %c0_i32 = arith.constant 0 : i32
    return %arg0, %arg2 : i32, i32
  }
  func.func @transform_1(%arg0: i32, %arg1: i32, %arg2: i32) -> (i32, i32) {
    %c0_i32 = arith.constant 0 : i32
    return %arg2, %arg1 : i32, i32
  }
  func.func @transform_2(%arg0: i32, %arg1: i32, %arg2: i32) -> (i32, i32) {
    %c0_i32 = arith.constant 0 : i32
    %c0_i32_0 = arith.constant 0 : i32
    return %c0_i32, %arg1 : i32, i32
  }
  func.func @transform_3(%arg0: i32, %arg1: i32, %arg2: i32) -> (i32, i32) {
    %c0_i32 = arith.constant 0 : i32
    return %arg0, %arg1 : i32, i32
  }
  func.func @transform_4(%arg0: i32, %arg1: i32, %arg2: i32) -> (i32, i32) {
    %c0_i32 = arith.constant 0 : i32
    return %arg0, %arg1 : i32, i32
  }
}

module attributes {stable_mosaic.version = 11 : i64} {
  func.func @_matmul_kernel(%arg0: i32, %arg1: i32, %arg2: i32, %arg3: memref<32x128xf32, #tpu.memory_space<vmem>>, %arg4: memref<128x32xf32, #tpu.memory_space<vmem>>, %arg5: memref<1x32xf32, #tpu.memory_space<vmem>>, %arg6: memref<32x32xf32, #tpu.memory_space<vmem>>, %arg7: memref<32x32xf32, #tpu.memory_space<vmem>>) attributes {dimension_semantics = [#tpu.dimension_semantics<parallel>, #tpu.dimension_semantics<parallel>, #tpu.dimension_semantics<arbitrary>], iteration_bounds = array<i64: 1, 1, 1>, scalar_prefetch = 0 : i64, scratch_operands = 0 : i64, tpu.core_type = #tpu.core_type<tc>, window_params = [{transform_indices = @transform_0, window_bounds = array<i64: 32, 128>}, {transform_indices = @transform_1, window_bounds = array<i64: 128, 32>}, {transform_indices = @transform_2, window_bounds = array<i64: 1, 32>}, {transform_indices = @transform_3, window_bounds = array<i64: 32, 32>}, {transform_indices = @transform_4, window_bounds = array<i64: 32, 32>}]} {
    %c0 = arith.constant 0 : index
    %c0_0 = arith.constant 0 : index
    %0 = vector.load %arg3[%c0, %c0_0] : memref<32x128xf32, #tpu.memory_space<vmem>>, vector<32x128xf32>
    %1 = arith.truncf %0 : vector<32x128xf32> to vector<32x128xbf16>
    %c0_1 = arith.constant 0 : index
    %c0_2 = arith.constant 0 : index
    %2 = vector.load %arg4[%c0_1, %c0_2] : memref<128x32xf32, #tpu.memory_space<vmem>>, vector<128x32xf32>
    %3 = arith.truncf %2 : vector<128x32xf32> to vector<128x32xbf16>
    %cst = arith.constant dense<0.000000e+00> : vector<32x32xf32>
    %4 = tpu.matmul %1, %3, %cst {dimension_numbers = #tpu.dot_dimension_numbers<[1], [0], [0], [1], [0, 0, 1, 1], [], []>} : vector<32x128xbf16>, vector<128x32xbf16>, vector<32x32xf32> -> vector<32x32xf32>
    %c0_3 = arith.constant 0 : index
    %c0_4 = arith.constant 0 : index
    %5 = vector.load %arg5[%c0_3, %c0_4] : memref<1x32xf32, #tpu.memory_space<vmem>>, vector<1x32xf32>
    %6 = vector.broadcast %5 : vector<1x32xf32> to vector<32x32xf32>
    %7 = arith.addf %4, %6 : vector<32x32xf32>
    %c0_5 = arith.constant 0 : index
    %c0_6 = arith.constant 0 : index
    %8 = vector.load %arg6[%c0_5, %c0_6] : memref<32x32xf32, #tpu.memory_space<vmem>>, vector<32x32xf32>
    %9 = arith.addf %7, %8 : vector<32x32xf32>
    %c0_7 = arith.constant 0 : index
    %c0_8 = arith.constant 0 : index
    %10 = vector.load %arg7[%c0_7, %c0_8] : memref<32x32xf32, #tpu.memory_space<vmem>>, vector<32x32xf32>
    tpu.vector_store %arg7[%c0_7, %c0_8], %9 {strides = array<i32>} : memref<32x32xf32, #tpu.memory_space<vmem>>, vector<32x32xf32>,
    return
  }
  func.func @transform_0(%arg0: i32, %arg1: i32, %arg2: i32) -> (i32, i32) {
    %c0_i32 = arith.constant 0 : i32
    return %arg0, %arg2 : i32, i32
  }
  func.func @transform_1(%arg0: i32, %arg1: i32, %arg2: i32) -> (i32, i32) {
    %c0_i32 = arith.constant 0 : i32
    return %arg2, %arg1 : i32, i32
  }
  func.func @transform_2(%arg0: i32, %arg1: i32, %arg2: i32) -> (i32, i32) {
    %c0_i32 = arith.constant 0 : i32
    %c0_i32_0 = arith.constant 0 : i32
    return %c0_i32, %arg1 : i32, i32
  }
  func.func @transform_3(%arg0: i32, %arg1: i32, %arg2: i32) -> (i32, i32) {
    %c0_i32 = arith.constant 0 : i32
    return %arg0, %arg1 : i32, i32
  }
  func.func @transform_4(%arg0: i32, %arg1: i32, %arg2: i32) -> (i32, i32) {
    %c0_i32 = arith.constant 0 : i32
    return %arg0, %arg1 : i32, i32
  }
}

module attributes {stable_mosaic.version = 11 : i64} {
  func.func @_matmul_kernel(%arg0: i32, %arg1: i32, %arg2: i32, %arg3: memref<32x32xf32, #tpu.memory_space<vmem>>, %arg4: memref<32x64xf32, #tpu.memory_space<vmem>>, %arg5: memref<1x64xf32, #tpu.memory_space<vmem>>, %arg6: memref<32x64xf32, #tpu.memory_space<vmem>>) attributes {dimension_semantics = [#tpu.dimension_semantics<parallel>, #tpu.dimension_semantics<parallel>, #tpu.dimension_semantics<arbitrary>], iteration_bounds = array<i64: 1, 1, 1>, scalar_prefetch = 0 : i64, scratch_operands = 0 : i64, tpu.core_type = #tpu.core_type<tc>, window_params = [{transform_indices = @transform_0, window_bounds = array<i64: 32, 32>}, {transform_indices = @transform_1, window_bounds = array<i64: 32, 64>}, {transform_indices = @transform_2, window_bounds = array<i64: 1, 64>}, {transform_indices = @transform_3, window_bounds = array<i64: 32, 64>}]} {
    %c0 = arith.constant 0 : index
    %c0_0 = arith.constant 0 : index
    %0 = vector.load %arg3[%c0, %c0_0] : memref<32x32xf32, #tpu.memory_space<vmem>>, vector<32x32xf32>
    %1 = arith.truncf %0 : vector<32x32xf32> to vector<32x32xbf16>
    %c0_1 = arith.constant 0 : index
    %c0_2 = arith.constant 0 : index
    %2 = vector.load %arg4[%c0_1, %c0_2] : memref<32x64xf32, #tpu.memory_space<vmem>>, vector<32x64xf32>
    %3 = arith.truncf %2 : vector<32x64xf32> to vector<32x64xbf16>
    %cst = arith.constant dense<0.000000e+00> : vector<32x64xf32>
    %4 = tpu.matmul %1, %3, %cst {dimension_numbers = #tpu.dot_dimension_numbers<[1], [0], [0], [1], [0, 0, 1, 1], [], []>} : vector<32x32xbf16>, vector<32x64xbf16>, vector<32x64xf32> -> vector<32x64xf32>
    %c0_3 = arith.constant 0 : index
    %c0_4 = arith.constant 0 : index
    %5 = vector.load %arg5[%c0_3, %c0_4] : memref<1x64xf32, #tpu.memory_space<vmem>>, vector<1x64xf32>
    %6 = vector.broadcast %5 : vector<1x64xf32> to vector<32x64xf32>
    %7 = arith.addf %4, %6 : vector<32x64xf32>
    %c0_5 = arith.constant 0 : index
    %c0_6 = arith.constant 0 : index
    %8 = vector.load %arg6[%c0_5, %c0_6] : memref<32x64xf32, #tpu.memory_space<vmem>>, vector<32x64xf32>
    tpu.vector_store %arg6[%c0_5, %c0_6], %7 {strides = array<i32>} : memref<32x64xf32, #tpu.memory_space<vmem>>, vector<32x64xf32>,
    return
  }
  func.func @transform_0(%arg0: i32, %arg1: i32, %arg2: i32) -> (i32, i32) {
    %c0_i32 = arith.constant 0 : i32
    return %arg0, %arg2 : i32, i32
  }
  func.func @transform_1(%arg0: i32, %arg1: i32, %arg2: i32) -> (i32, i32) {
    %c0_i32 = arith.constant 0 : i32
    return %arg2, %arg1 : i32, i32
  }
  func.func @transform_2(%arg0: i32, %arg1: i32, %arg2: i32) -> (i32, i32) {
    %c0_i32 = arith.constant 0 : i32
    %c0_i32_0 = arith.constant 0 : i32
    return %c0_i32, %arg1 : i32, i32
  }
  func.func @transform_3(%arg0: i32, %arg1: i32, %arg2: i32) -> (i32, i32) {
    %c0_i32 = arith.constant 0 : i32
    return %arg0, %arg1 : i32, i32
  }
}

module attributes {stable_mosaic.version = 11 : i64} {
  func.func @_matmul_kernel(%arg0: i32, %arg1: i32, %arg2: i32, %arg3: memref<12x32xf32, #tpu.memory_space<vmem>>, %arg4: memref<32x96xf32, #tpu.memory_space<vmem>>, %arg5: memref<1x96xf32, #tpu.memory_space<vmem>>, %arg6: memref<1x32xf32, #tpu.memory_space<vmem>>, %arg7: memref<1x32xf32, #tpu.memory_space<vmem>>, %arg8: memref<12x96xf32, #tpu.memory_space<vmem>>) attributes {dimension_semantics = [#tpu.dimension_semantics<parallel>, #tpu.dimension_semantics<parallel>, #tpu.dimension_semantics<arbitrary>], iteration_bounds = array<i64: 1, 1, 1>, scalar_prefetch = 0 : i64, scratch_operands = 0 : i64, tpu.core_type = #tpu.core_type<tc>, window_params = [{transform_indices = @transform_0, window_bounds = array<i64: 12, 32>}, {transform_indices = @transform_1, window_bounds = array<i64: 32, 96>}, {transform_indices = @transform_2, window_bounds = array<i64: 1, 96>}, {transform_indices = @transform_3, window_bounds = array<i64: 1, 32>}, {transform_indices = @transform_4, window_bounds = array<i64: 1, 32>}, {transform_indices = @transform_5, window_bounds = array<i64: 12, 96>}]} {
    %c0 = arith.constant 0 : index
    %c0_0 = arith.constant 0 : index
    %0 = vector.load %arg3[%c0, %c0_0] : memref<12x32xf32, #tpu.memory_space<vmem>>, vector<12x32xf32>
    %cst = arith.constant dense<0.000000e+00> : vector<12xf32>
    %1 = vector.multi_reduction <add>, %0, %cst [1] : vector<12x32xf32> to vector<12xf32>
    %2 = vector.shape_cast %1 : vector<12xf32> to vector<12x1xf32>
    %cst_1 = arith.constant 3.200000e+01 : f32
    %3 = vector.broadcast %cst_1 : f32 to vector<12x1xf32>
    %4 = arith.divf %2, %3 : vector<12x1xf32>
    %5 = vector.broadcast %4 : vector<12x1xf32> to vector<12x32xf32>
    %6 = arith.subf %0, %5 : vector<12x32xf32>
    %7 = arith.mulf %6, %6 : vector<12x32xf32>
    %cst_2 = arith.constant dense<0.000000e+00> : vector<12xf32>
    %8 = vector.multi_reduction <add>, %7, %cst_2 [1] : vector<12x32xf32> to vector<12xf32>
    %9 = vector.shape_cast %8 : vector<12xf32> to vector<12x1xf32>
    %cst_3 = arith.constant 3.200000e+01 : f32
    %10 = vector.broadcast %cst_3 : f32 to vector<12x1xf32>
    %11 = arith.divf %9, %10 : vector<12x1xf32>
    %cst_4 = arith.constant 9.99999974E-6 : f32
    %12 = vector.broadcast %cst_4 : f32 to vector<12x1xf32>
    %13 = arith.addf %11, %12 : vector<12x1xf32>
    %14 = math.rsqrt %13 : vector<12x1xf32>
    %15 = vector.broadcast %14 : vector<12x1xf32> to vector<12x32xf32>
    %16 = arith.mulf %6, %15 : vector<12x32xf32>
    %c0_5 = arith.constant 0 : index
    %c0_6 = arith.constant 0 : index
    %17 = vector.load %arg6[%c0_5, %c0_6] : memref<1x32xf32, #tpu.memory_space<vmem>>, vector<1x32xf32>
    %18 = vector.broadcast %17 : vector<1x32xf32> to vector<12x32xf32>
    %19 = arith.mulf %16, %18 : vector<12x32xf32>
    %c0_7 = arith.constant 0 : index
    %c0_8 = arith.constant 0 : index
    %20 = vector.load %arg7[%c0_7, %c0_8] : memref<1x32xf32, #tpu.memory_space<vmem>>, vector<1x32xf32>
    %21 = vector.broadcast %20 : vector<1x32xf32> to vector<12x32xf32>
    %22 = arith.addf %19, %21 : vector<12x32xf32>
    %23 = arith.truncf %22 : vector<12x32xf32> to vector<12x32xbf16>
    %c0_9 = arith.constant 0 : index
    %c0_10 = arith.constant 0 : index
    %24 = vector.load %arg4[%c0_9, %c0_10] : memref<32x96xf32, #tpu.memory_space<vmem>>, vector<32x96xf32>
    %25 = arith.truncf %24 : vector<32x96xf32> to vector<32x96xbf16>
    %cst_11 = arith.constant dense<0.000000e+00> : vector<12x96xf32>
    %26 = tpu.matmul %23, %25, %cst_11 {dimension_numbers = #tpu.dot_dimension_numbers<[1], [0], [0], [1], [0, 0, 1, 1], [], []>} : vector<12x32xbf16>, vector<32x96xbf16>, vector<12x96xf32> -> vector<12x96xf32>
    %c0_12 = arith.constant 0 : index
    %c0_13 = arith.constant 0 : index
    %27 = vector.load %arg5[%c0_12, %c0_13] : memref<1x96xf32, #tpu.memory_space<vmem>>, vector<1x96xf32>
    %28 = vector.broadcast %27 : vector<1x96xf32> to vector<12x96xf32>
    %29 = arith.addf %26, %28 : vector<12x96xf32>
    %c0_14 = arith.constant 0 : index
    %c0_15 = arith.constant 0 : index
    %30 = vector.load %arg8[%c0_14, %c0_15] : memref<12x96xf32, #tpu.memory_space<vmem>>, vector<12x96xf32>
    tpu.vector_store %arg8[%c0_14, %c0_15], %29 {strides = array<i32>} : memref<12x96xf32, #tpu.memory_space<vmem>>, vector<12x96xf32>,
    return
  }
  func.func @transform_0(%arg0: i32, %arg1: i32, %arg2: i32) -> (i32, i32) {
    %c0_i32 = arith.constant 0 : i32
    return %arg0, %arg2 : i32, i32
  }
  func.func @transform_1(%arg0: i32, %arg1: i32, %arg2: i32) -> (i32, i32) {
    %c0_i32 = arith.constant 0 : i32
    return %arg2, %arg1 : i32, i32
  }
  func.func @transform_2(%arg0: i32, %arg1: i32, %arg2: i32) -> (i32, i32) {
    %c0_i32 = arith.constant 0 : i32
    %c0_i32_0 = arith.constant 0 : i32
    return %c0_i32, %arg1 : i32, i32
  }
  func.func @transform_3(%arg0: i32, %arg1: i32, %arg2: i32) -> (i32, i32) {
    %c0_i32 = arith.constant 0 : i32
    %c0_i32_0 = arith.constant 0 : i32
    return %c0_i32, %arg2 : i32, i32
  }
  func.func @transform_4(%arg0: i32, %arg1: i32, %arg2: i32) -> (i32, i32) {
    %c0_i32 = arith.constant 0 : i32
    %c0_i32_0 = arith.constant 0 : i32
    return %c0_i32, %arg2 : i32, i32
  }
  func.func @transform_5(%arg0: i32, %arg1: i32, %arg2: i32) -> (i32, i32) {
    %c0_i32 = arith.constant 0 : i32
    return %arg0, %arg1 : i32, i32
  }
}

module attributes {stable_mosaic.version = 11 : i64} {
  func.func @_matmul_kernel(%arg0: i32, %arg1: i32, %arg2: i32, %arg3: memref<12x32xf32, #tpu.memory_space<vmem>>, %arg4: memref<32x32xf32, #tpu.memory_space<vmem>>, %arg5: memref<1x32xf32, #tpu.memory_space<vmem>>, %arg6: memref<1x32xf32, #tpu.memory_space<vmem>>, %arg7: memref<1x32xf32, #tpu.memory_space<vmem>>, %arg8: memref<12x32xf32, #tpu.memory_space<vmem>>) attributes {dimension_semantics = [#tpu.dimension_semantics<parallel>, #tpu.dimension_semantics<parallel>, #tpu.dimension_semantics<arbitrary>], iteration_bounds = array<i64: 1, 1, 1>, scalar_prefetch = 0 : i64, scratch_operands = 0 : i64, tpu.core_type = #tpu.core_type<tc>, window_params = [{transform_indices = @transform_0, window_bounds = array<i64: 12, 32>}, {transform_indices = @transform_1, window_bounds = array<i64: 32, 32>}, {transform_indices = @transform_2, window_bounds = array<i64: 1, 32>}, {transform_indices = @transform_3, window_bounds = array<i64: 1, 32>}, {transform_indices = @transform_4, window_bounds = array<i64: 1, 32>}, {transform_indices = @transform_5, window_bounds = array<i64: 12, 32>}]} {
    %c0 = arith.constant 0 : index
    %c0_0 = arith.constant 0 : index
    %0 = vector.load %arg3[%c0, %c0_0] : memref<12x32xf32, #tpu.memory_space<vmem>>, vector<12x32xf32>
    %cst = arith.constant dense<0.000000e+00> : vector<12xf32>
    %1 = vector.multi_reduction <add>, %0, %cst [1] : vector<12x32xf32> to vector<12xf32>
    %2 = vector.shape_cast %1 : vector<12xf32> to vector<12x1xf32>
    %cst_1 = arith.constant 3.200000e+01 : f32
    %3 = vector.broadcast %cst_1 : f32 to vector<12x1xf32>
    %4 = arith.divf %2, %3 : vector<12x1xf32>
    %5 = vector.broadcast %4 : vector<12x1xf32> to vector<12x32xf32>
    %6 = arith.subf %0, %5 : vector<12x32xf32>
    %7 = arith.mulf %6, %6 : vector<12x32xf32>
    %cst_2 = arith.constant dense<0.000000e+00> : vector<12xf32>
    %8 = vector.multi_reduction <add>, %7, %cst_2 [1] : vector<12x32xf32> to vector<12xf32>
    %9 = vector.shape_cast %8 : vector<12xf32> to vector<12x1xf32>
    %cst_3 = arith.constant 3.200000e+01 : f32
    %10 = vector.broadcast %cst_3 : f32 to vector<12x1xf32>
    %11 = arith.divf %9, %10 : vector<12x1xf32>
    %cst_4 = arith.constant 9.99999974E-6 : f32
    %12 = vector.broadcast %cst_4 : f32 to vector<12x1xf32>
    %13 = arith.addf %11, %12 : vector<12x1xf32>
    %14 = math.rsqrt %13 : vector<12x1xf32>
    %15 = vector.broadcast %14 : vector<12x1xf32> to vector<12x32xf32>
    %16 = arith.mulf %6, %15 : vector<12x32xf32>
    %c0_5 = arith.constant 0 : index
    %c0_6 = arith.constant 0 : index
    %17 = vector.load %arg6[%c0_5, %c0_6] : memref<1x32xf32, #tpu.memory_space<vmem>>, vector<1x32xf32>
    %18 = vector.broadcast %17 : vector<1x32xf32> to vector<12x32xf32>
    %19 = arith.mulf %16, %18 : vector<12x32xf32>
    %c0_7 = arith.constant 0 : index
    %c0_8 = arith.constant 0 : index
    %20 = vector.load %arg7[%c0_7, %c0_8] : memref<1x32xf32, #tpu.memory_space<vmem>>, vector<1x32xf32>
    %21 = vector.broadcast %20 : vector<1x32xf32> to vector<12x32xf32>
    %22 = arith.addf %19, %21 : vector<12x32xf32>
    %23 = arith.truncf %22 : vector<12x32xf32> to vector<12x32xbf16>
    %c0_9 = arith.constant 0 : index
    %c0_10 = arith.constant 0 : index
    %24 = vector.load %arg4[%c0_9, %c0_10] : memref<32x32xf32, #tpu.memory_space<vmem>>, vector<32x32xf32>
    %25 = arith.truncf %24 : vector<32x32xf32> to vector<32x32xbf16>
    %cst_11 = arith.constant dense<0.000000e+00> : vector<12x32xf32>
    %26 = tpu.matmul %23, %25, %cst_11 {dimension_numbers = #tpu.dot_dimension_numbers<[1], [0], [0], [1], [0, 0, 1, 1], [], []>} : vector<12x32xbf16>, vector<32x32xbf16>, vector<12x32xf32> -> vector<12x32xf32>
    %c0_12 = arith.constant 0 : index
    %c0_13 = arith.constant 0 : index
    %27 = vector.load %arg5[%c0_12, %c0_13] : memref<1x32xf32, #tpu.memory_space<vmem>>, vector<1x32xf32>
    %28 = vector.broadcast %27 : vector<1x32xf32> to vector<12x32xf32>
    %29 = arith.addf %26, %28 : vector<12x32xf32>
    %c0_14 = arith.constant 0 : index
    %c0_15 = arith.constant 0 : index
    %30 = vector.load %arg8[%c0_14, %c0_15] : memref<12x32xf32, #tpu.memory_space<vmem>>, vector<12x32xf32>
    tpu.vector_store %arg8[%c0_14, %c0_15], %29 {strides = array<i32>} : memref<12x32xf32, #tpu.memory_space<vmem>>, vector<12x32xf32>,
    return
  }
  func.func @transform_0(%arg0: i32, %arg1: i32, %arg2: i32) -> (i32, i32) {
    %c0_i32 = arith.constant 0 : i32
    return %arg0, %arg2 : i32, i32
  }
  func.func @transform_1(%arg0: i32, %arg1: i32, %arg2: i32) -> (i32, i32) {
    %c0_i32 = arith.constant 0 : i32
    return %arg2, %arg1 : i32, i32
  }
  func.func @transform_2(%arg0: i32, %arg1: i32, %arg2: i32) -> (i32, i32) {
    %c0_i32 = arith.constant 0 : i32
    %c0_i32_0 = arith.constant 0 : i32
    return %c0_i32, %arg1 : i32, i32
  }
  func.func @transform_3(%arg0: i32, %arg1: i32, %arg2: i32) -> (i32, i32) {
    %c0_i32 = arith.constant 0 : i32
    %c0_i32_0 = arith.constant 0 : i32
    return %c0_i32, %arg2 : i32, i32
  }
  func.func @transform_4(%arg0: i32, %arg1: i32, %arg2: i32) -> (i32, i32) {
    %c0_i32 = arith.constant 0 : i32
    %c0_i32_0 = arith.constant 0 : i32
    return %c0_i32, %arg2 : i32, i32
  }
  func.func @transform_5(%arg0: i32, %arg1: i32, %arg2: i32) -> (i32, i32) {
    %c0_i32 = arith.constant 0 : i32
    return %arg0, %arg1 : i32, i32
  }
}

module attributes {stable_mosaic.version = 11 : i64} {
  func.func @_attn_self_kernel(%arg0: i32, %arg1: i32, %arg2: memref<1x6x96xf32, #tpu.memory_space<vmem>>, %arg3: memref<1x6x32xf32, #tpu.memory_space<vmem>>) attributes {dimension_semantics = [#tpu.dimension_semantics<parallel>, #tpu.dimension_semantics<parallel>], iteration_bounds = array<i64: 2, 1>, scalar_prefetch = 0 : i64, scratch_operands = 0 : i64, tpu.core_type = #tpu.core_type<tc>, window_params = [{transform_indices = @transform_0, window_bounds = array<i64: 1, 6, 96>}, {transform_indices = @transform_1, window_bounds = array<i64: 1, 6, 32>}]} {
    %c0 = arith.constant 0 : index
    %c0_0 = arith.constant 0 : index
    %c0_1 = arith.constant 0 : index
    %0 = vector.load %arg2[%c0, %c0_0, %c0_1] : memref<1x6x96xf32, #tpu.memory_space<vmem>>, vector<1x6x96xf32>
    %1 = vector.shape_cast %0 : vector<1x6x96xf32> to vector<6x96xf32>
    %2 = vector.extract_strided_slice %1 {offsets = [0, 32], sizes = [6, 32], strides = [1, 1]} : vector<6x96xf32> to vector<6x32xf32>
    %3 = vector.extract_strided_slice %1 {offsets = [0, 64], sizes = [6, 32], strides = [1, 1]} : vector<6x96xf32> to vector<6x32xf32>
    %4 = vector.extract_strided_slice %1 {offsets = [0, 0], sizes = [6, 32], strides = [1, 1]} : vector<6x96xf32> to vector<6x32xf32>
    %5 = tpu.iota {dimensions = array<i32: 0>} : vector<6x6xi32>
    %c0_i32 = arith.constant 0 : i32
    %6 = vector.broadcast %c0_i32 : i32 to vector<6x6xi32>
    %7 = arith.addi %5, %6 : vector<6x6xi32>
    %8 = tpu.iota {dimensions = array<i32: 1>} : vector<6x6xi32>
    %9 = arith.cmpi sle, %8, %7 : vector<6x6xi32>
    %10 = vector.extract_strided_slice %4 {offsets = [0, 0], sizes = [6, 8], strides = [1, 1]} : vector<6x32xf32> to vector<6x8xf32>
    %cst = arith.constant 0.353553385 : f32
    %11 = vector.broadcast %cst : f32 to vector<6x8xf32>
    %12 = arith.mulf %10, %11 : vector<6x8xf32>
    %13 = arith.truncf %12 : vector<6x8xf32> to vector<6x8xbf16>
    %14 = vector.extract_strided_slice %2 {offsets = [0, 0], sizes = [6, 8], strides = [1, 1]} : vector<6x32xf32> to vector<6x8xf32>
    %15 = arith.truncf %14 : vector<6x8xf32> to vector<6x8xbf16>
    %16 = vector.extract_strided_slice %3 {offsets = [0, 0], sizes = [6, 8], strides = [1, 1]} : vector<6x32xf32> to vector<6x8xf32>
    %17 = arith.truncf %16 : vector<6x8xf32> to vector<6x8xbf16>
    %cst_2 = arith.constant dense<0.000000e+00> : vector<6x6xf32>
    %18 = tpu.matmul %13, %15, %cst_2 {dimension_numbers = #tpu.dot_dimension_numbers<[1], [1], [0], [0], [0, 0, 1, 0], [], []>} : vector<6x8xbf16>, vector<6x8xbf16>, vector<6x6xf32> -> vector<6x6xf32>
    %cst_3 = arith.constant -1.000000e+30 : f32
    %19 = vector.broadcast %cst_3 : f32 to vector<6x6xf32>
    %20 = arith.select %9, %18, %19 : vector<6x6xi1>, vector<6x6xf32>
    %cst_4 = arith.constant dense<0xFF800000> : vector<6xf32>
    %21 = vector.multi_reduction <maximumf>, %20, %cst_4 [1] : vector<6x6xf32> to vector<6xf32>
    %22 = vector.shape_cast %21 : vector<6xf32> to vector<6x1xf32>
    %23 = vector.broadcast %22 : vector<6x1xf32> to vector<6x6xf32>
    %24 = arith.subf %20, %23 : vector<6x6xf32>
    %25 = math.exp %24 : vector<6x6xf32>
    %cst_5 = arith.constant dense<0.000000e+00> : vector<6xf32>
    %26 = vector.multi_reduction <add>, %25, %cst_5 [1] : vector<6x6xf32> to vector<6xf32>
    %27 = vector.shape_cast %26 : vector<6xf32> to vector<6x1xf32>
    %28 = arith.truncf %25 : vector<6x6xf32> to vector<6x6xbf16>
    %cst_6 = arith.constant dense<0.000000e+00> : vector<6x8xf32>
    %29 = tpu.matmul %28, %17, %cst_6 {dimension_numbers = #tpu.dot_dimension_numbers<[1], [0], [0], [1], [0, 0, 1, 1], [], []>} : vector<6x6xbf16>, vector<6x8xbf16>, vector<6x8xf32> -> vector<6x8xf32>
    %30 = tpu.reciprocal %27 {approx = true} : vector<6x1xf32> -> vector<6x1xf32>
    %31 = vector.broadcast %30 : vector<6x1xf32> to vector<6x8xf32>
    %32 = arith.mulf %29, %31 : vector<6x8xf32>
    %33 = vector.extract_strided_slice %4 {offsets = [0, 8], sizes = [6, 8], strides = [1, 1]} : vector<6x32xf32> to vector<6x8xf32>
    %cst_7 = arith.constant 0.353553385 : f32
    %34 = vector.broadcast %cst_7 : f32 to vector<6x8xf32>
    %35 = arith.mulf %33, %34 : vector<6x8xf32>
    %36 = arith.truncf %35 : vector<6x8xf32> to vector<6x8xbf16>
    %37 = vector.extract_strided_slice %2 {offsets = [0, 8], sizes = [6, 8], strides = [1, 1]} : vector<6x32xf32> to vector<6x8xf32>
    %38 = arith.truncf %37 : vector<6x8xf32> to vector<6x8xbf16>
    %39 = vector.extract_strided_slice %3 {offsets = [0, 8], sizes = [6, 8], strides = [1, 1]} : vector<6x32xf32> to vector<6x8xf32>
    %40 = arith.truncf %39 : vector<6x8xf32> to vector<6x8xbf16>
    %cst_8 = arith.constant dense<0.000000e+00> : vector<6x6xf32>
    %41 = tpu.matmul %36, %38, %cst_8 {dimension_numbers = #tpu.dot_dimension_numbers<[1], [1], [0], [0], [0, 0, 1, 0], [], []>} : vector<6x8xbf16>, vector<6x8xbf16>, vector<6x6xf32> -> vector<6x6xf32>
    %cst_9 = arith.constant -1.000000e+30 : f32
    %42 = vector.broadcast %cst_9 : f32 to vector<6x6xf32>
    %43 = arith.select %9, %41, %42 : vector<6x6xi1>, vector<6x6xf32>
    %cst_10 = arith.constant dense<0xFF800000> : vector<6xf32>
    %44 = vector.multi_reduction <maximumf>, %43, %cst_10 [1] : vector<6x6xf32> to vector<6xf32>
    %45 = vector.shape_cast %44 : vector<6xf32> to vector<6x1xf32>
    %46 = vector.broadcast %45 : vector<6x1xf32> to vector<6x6xf32>
    %47 = arith.subf %43, %46 : vector<6x6xf32>
    %48 = math.exp %47 : vector<6x6xf32>
    %cst_11 = arith.constant dense<0.000000e+00> : vector<6xf32>
    %49 = vector.multi_reduction <add>, %48, %cst_11 [1] : vector<6x6xf32> to vector<6xf32>
    %50 = vector.shape_cast %49 : vector<6xf32> to vector<6x1xf32>
    %51 = arith.truncf %48 : vector<6x6xf32> to vector<6x6xbf16>
    %cst_12 = arith.constant dense<0.000000e+00> : vector<6x8xf32>
    %52 = tpu.matmul %51, %40, %cst_12 {dimension_numbers = #tpu.dot_dimension_numbers<[1], [0], [0], [1], [0, 0, 1, 1], [], []>} : vector<6x6xbf16>, vector<6x8xbf16>, vector<6x8xf32> -> vector<6x8xf32>
    %53 = tpu.reciprocal %50 {approx = true} : vector<6x1xf32> -> vector<6x1xf32>
    %54 = vector.broadcast %53 : vector<6x1xf32> to vector<6x8xf32>
    %55 = arith.mulf %52, %54 : vector<6x8xf32>
    %56 = vector.extract_strided_slice %4 {offsets = [0, 16], sizes = [6, 8], strides = [1, 1]} : vector<6x32xf32> to vector<6x8xf32>
    %cst_13 = arith.constant 0.353553385 : f32
    %57 = vector.broadcast %cst_13 : f32 to vector<6x8xf32>
    %58 = arith.mulf %56, %57 : vector<6x8xf32>
    %59 = arith.truncf %58 : vector<6x8xf32> to vector<6x8xbf16>
    %60 = vector.extract_strided_slice %2 {offsets = [0, 16], sizes = [6, 8], strides = [1, 1]} : vector<6x32xf32> to vector<6x8xf32>
    %61 = arith.truncf %60 : vector<6x8xf32> to vector<6x8xbf16>
    %62 = vector.extract_strided_slice %3 {offsets = [0, 16], sizes = [6, 8], strides = [1, 1]} : vector<6x32xf32> to vector<6x8xf32>
    %63 = arith.truncf %62 : vector<6x8xf32> to vector<6x8xbf16>
    %cst_14 = arith.constant dense<0.000000e+00> : vector<6x6xf32>
    %64 = tpu.matmul %59, %61, %cst_14 {dimension_numbers = #tpu.dot_dimension_numbers<[1], [1], [0], [0], [0, 0, 1, 0], [], []>} : vector<6x8xbf16>, vector<6x8xbf16>, vector<6x6xf32> -> vector<6x6xf32>
    %cst_15 = arith.constant -1.000000e+30 : f32
    %65 = vector.broadcast %cst_15 : f32 to vector<6x6xf32>
    %66 = arith.select %9, %64, %65 : vector<6x6xi1>, vector<6x6xf32>
    %cst_16 = arith.constant dense<0xFF800000> : vector<6xf32>
    %67 = vector.multi_reduction <maximumf>, %66, %cst_16 [1] : vector<6x6xf32> to vector<6xf32>
    %68 = vector.shape_cast %67 : vector<6xf32> to vector<6x1xf32>
    %69 = vector.broadcast %68 : vector<6x1xf32> to vector<6x6xf32>
    %70 = arith.subf %66, %69 : vector<6x6xf32>
    %71 = math.exp %70 : vector<6x6xf32>
    %cst_17 = arith.constant dense<0.000000e+00> : vector<6xf32>
    %72 = vector.multi_reduction <add>, %71, %cst_17 [1] : vector<6x6xf32> to vector<6xf32>
    %73 = vector.shape_cast %72 : vector<6xf32> to vector<6x1xf32>
    %74 = arith.truncf %71 : vector<6x6xf32> to vector<6x6xbf16>
    %cst_18 = arith.constant dense<0.000000e+00> : vector<6x8xf32>
    %75 = tpu.matmul %74, %63, %cst_18 {dimension_numbers = #tpu.dot_dimension_numbers<[1], [0], [0], [1], [0, 0, 1, 1], [], []>} : vector<6x6xbf16>, vector<6x8xbf16>, vector<6x8xf32> -> vector<6x8xf32>
    %76 = tpu.reciprocal %73 {approx = true} : vector<6x1xf32> -> vector<6x1xf32>
    %77 = vector.broadcast %76 : vector<6x1xf32> to vector<6x8xf32>
    %78 = arith.mulf %75, %77 : vector<6x8xf32>
    %79 = vector.extract_strided_slice %4 {offsets = [0, 24], sizes = [6, 8], strides = [1, 1]} : vector<6x32xf32> to vector<6x8xf32>
    %cst_19 = arith.constant 0.353553385 : f32
    %80 = vector.broadcast %cst_19 : f32 to vector<6x8xf32>
    %81 = arith.mulf %79, %80 : vector<6x8xf32>
    %82 = arith.truncf %81 : vector<6x8xf32> to vector<6x8xbf16>
    %83 = vector.extract_strided_slice %2 {offsets = [0, 24], sizes = [6, 8], strides = [1, 1]} : vector<6x32xf32> to vector<6x8xf32>
    %84 = arith.truncf %83 : vector<6x8xf32> to vector<6x8xbf16>
    %85 = vector.extract_strided_slice %3 {offsets = [0, 24], sizes = [6, 8], strides = [1, 1]} : vector<6x32xf32> to vector<6x8xf32>
    %86 = arith.truncf %85 : vector<6x8xf32> to vector<6x8xbf16>
    %cst_20 = arith.constant dense<0.000000e+00> : vector<6x6xf32>
    %87 = tpu.matmul %82, %84, %cst_20 {dimension_numbers = #tpu.dot_dimension_numbers<[1], [1], [0], [0], [0, 0, 1, 0], [], []>} : vector<6x8xbf16>, vector<6x8xbf16>, vector<6x6xf32> -> vector<6x6xf32>
    %cst_21 = arith.constant -1.000000e+30 : f32
    %88 = vector.broadcast %cst_21 : f32 to vector<6x6xf32>
    %89 = arith.select %9, %87, %88 : vector<6x6xi1>, vector<6x6xf32>
    %cst_22 = arith.constant dense<0xFF800000> : vector<6xf32>
    %90 = vector.multi_reduction <maximumf>, %89, %cst_22 [1] : vector<6x6xf32> to vector<6xf32>
    %91 = vector.shape_cast %90 : vector<6xf32> to vector<6x1xf32>
    %92 = vector.broadcast %91 : vector<6x1xf32> to vector<6x6xf32>
    %93 = arith.subf %89, %92 : vector<6x6xf32>
    %94 = math.exp %93 : vector<6x6xf32>
    %cst_23 = arith.constant dense<0.000000e+00> : vector<6xf32>
    %95 = vector.multi_reduction <add>, %94, %cst_23 [1] : vector<6x6xf32> to vector<6xf32>
    %96 = vector.shape_cast %95 : vector<6xf32> to vector<6x1xf32>
    %97 = arith.truncf %94 : vector<6x6xf32> to vector<6x6xbf16>
    %cst_24 = arith.constant dense<0.000000e+00> : vector<6x8xf32>
    %98 = tpu.matmul %97, %86, %cst_24 {dimension_numbers = #tpu.dot_dimension_numbers<[1], [0], [0], [1], [0, 0, 1, 1], [], []>} : vector<6x6xbf16>, vector<6x8xbf16>, vector<6x8xf32> -> vector<6x8xf32>
    %99 = tpu.reciprocal %96 {approx = true} : vector<6x1xf32> -> vector<6x1xf32>
    %100 = vector.broadcast %99 : vector<6x1xf32> to vector<6x8xf32>
    %101 = arith.mulf %98, %100 : vector<6x8xf32>
    %102 = tpu.concatenate %32, %55, %78, %101 in 1 : vector<6x8xf32>, vector<6x8xf32>, vector<6x8xf32>, vector<6x8xf32> -> vector<6x32xf32>
    %c0_25 = arith.constant 0 : index
    %c0_26 = arith.constant 0 : index
    %c0_27 = arith.constant 0 : index
    %103 = vector.load %arg3[%c0_25, %c0_26, %c0_27] : memref<1x6x32xf32, #tpu.memory_space<vmem>>, vector<1x6x32xf32>
    %104 = vector.shape_cast %103 : vector<1x6x32xf32> to vector<6x32xf32>
    %105 = vector.shape_cast %102 : vector<6x32xf32> to vector<1x6x32xf32>
    tpu.vector_store %arg3[%c0_25, %c0_26, %c0_27], %105 {strides = array<i32>} : memref<1x6x32xf32, #tpu.memory_space<vmem>>, vector<1x6x32xf32>,
    return
  }
  func.func @transform_0(%arg0: i32, %arg1: i32) -> (i32, i32, i32) {
    %c0_i32 = arith.constant 0 : i32
    %c0_i32_0 = arith.constant 0 : i32
    %c0_i32_1 = arith.constant 0 : i32
    return %arg0, %c0_i32, %c0_i32_0 : i32, i32, i32
  }
  func.func @transform_1(%arg0: i32, %arg1: i32) -> (i32, i32, i32) {
    %c0_i32 = arith.constant 0 : i32
    %c0_i32_0 = arith.constant 0 : i32
    return %arg0, %arg1, %c0_i32 : i32, i32, i32
  }
}

module attributes {stable_mosaic.version = 11 : i64} {
  func.func @_matmul_kernel(%arg0: i32, %arg1: i32, %arg2: i32, %arg3: memref<12x32xf32, #tpu.memory_space<vmem>>, %arg4: memref<32x32xf32, #tpu.memory_space<vmem>>, %arg5: memref<1x32xf32, #tpu.memory_space<vmem>>, %arg6: memref<12x32xf32, #tpu.memory_space<vmem>>, %arg7: memref<12x32xf32, #tpu.memory_space<vmem>>) attributes {dimension_semantics = [#tpu.dimension_semantics<parallel>, #tpu.dimension_semantics<parallel>, #tpu.dimension_semantics<arbitrary>], iteration_bounds = array<i64: 1, 1, 1>, scalar_prefetch = 0 : i64, scratch_operands = 0 : i64, tpu.core_type = #tpu.core_type<tc>, window_params = [{transform_indices = @transform_0, window_bounds = array<i64: 12, 32>}, {transform_indices = @transform_1, window_bounds = array<i64: 32, 32>}, {transform_indices = @transform_2, window_bounds = array<i64: 1, 32>}, {transform_indices = @transform_3, window_bounds = array<i64: 12, 32>}, {transform_indices = @transform_4, window_bounds = array<i64: 12, 32>}]} {
    %c0 = arith.constant 0 : index
    %c0_0 = arith.constant 0 : index
    %0 = vector.load %arg3[%c0, %c0_0] : memref<12x32xf32, #tpu.memory_space<vmem>>, vector<12x32xf32>
    %1 = arith.truncf %0 : vector<12x32xf32> to vector<12x32xbf16>
    %c0_1 = arith.constant 0 : index
    %c0_2 = arith.constant 0 : index
    %2 = vector.load %arg4[%c0_1, %c0_2] : memref<32x32xf32, #tpu.memory_space<vmem>>, vector<32x32xf32>
    %3 = arith.truncf %2 : vector<32x32xf32> to vector<32x32xbf16>
    %cst = arith.constant dense<0.000000e+00> : vector<12x32xf32>
    %4 = tpu.matmul %1, %3, %cst {dimension_numbers = #tpu.dot_dimension_numbers<[1], [0], [0], [1], [0, 0, 1, 1], [], []>} : vector<12x32xbf16>, vector<32x32xbf16>, vector<12x32xf32> -> vector<12x32xf32>
    %c0_3 = arith.constant 0 : index
    %c0_4 = arith.constant 0 : index
    %5 = vector.load %arg5[%c0_3, %c0_4] : memref<1x32xf32, #tpu.memory_space<vmem>>, vector<1x32xf32>
    %6 = vector.broadcast %5 : vector<1x32xf32> to vector<12x32xf32>
    %7 = arith.addf %4, %6 : vector<12x32xf32>
    %c0_5 = arith.constant 0 : index
    %c0_6 = arith.constant 0 : index
    %8 = vector.load %arg6[%c0_5, %c0_6] : memref<12x32xf32, #tpu.memory_space<vmem>>, vector<12x32xf32>
    %9 = arith.addf %7, %8 : vector<12x32xf32>
    %c0_7 = arith.constant 0 : index
    %c0_8 = arith.constant 0 : index
    %10 = vector.load %arg7[%c0_7, %c0_8] : memref<12x32xf32, #tpu.memory_space<vmem>>, vector<12x32xf32>
    tpu.vector_store %arg7[%c0_7, %c0_8], %9 {strides = array<i32>} : memref<12x32xf32, #tpu.memory_space<vmem>>, vector<12x32xf32>,
    return
  }
  func.func @transform_0(%arg0: i32, %arg1: i32, %arg2: i32) -> (i32, i32) {
    %c0_i32 = arith.constant 0 : i32
    return %arg0, %arg2 : i32, i32
  }
  func.func @transform_1(%arg0: i32, %arg1: i32, %arg2: i32) -> (i32, i32) {
    %c0_i32 = arith.constant 0 : i32
    return %arg2, %arg1 : i32, i32
  }
  func.func @transform_2(%arg0: i32, %arg1: i32, %arg2: i32) -> (i32, i32) {
    %c0_i32 = arith.constant 0 : i32
    %c0_i32_0 = arith.constant 0 : i32
    return %c0_i32, %arg1 : i32, i32
  }
  func.func @transform_3(%arg0: i32, %arg1: i32, %arg2: i32) -> (i32, i32) {
    %c0_i32 = arith.constant 0 : i32
    return %arg0, %arg1 : i32, i32
  }
  func.func @transform_4(%arg0: i32, %arg1: i32, %arg2: i32) -> (i32, i32) {
    %c0_i32 = arith.constant 0 : i32
    return %arg0, %arg1 : i32, i32
  }
}

module attributes {stable_mosaic.version = 11 : i64} {
  func.func @_attn_cross_kernel(%arg0: i32, %arg1: i32, %arg2: memref<1x6x32xf32, #tpu.memory_space<vmem>>, %arg3: memref<1x16x64xf32, #tpu.memory_space<vmem>>, %arg4: memref<1x6x32xf32, #tpu.memory_space<vmem>>) attributes {dimension_semantics = [#tpu.dimension_semantics<parallel>, #tpu.dimension_semantics<parallel>], iteration_bounds = array<i64: 2, 1>, scalar_prefetch = 0 : i64, scratch_operands = 0 : i64, tpu.core_type = #tpu.core_type<tc>, window_params = [{transform_indices = @transform_0, window_bounds = array<i64: 1, 6, 32>}, {transform_indices = @transform_1, window_bounds = array<i64: 1, 16, 64>}, {transform_indices = @transform_2, window_bounds = array<i64: 1, 6, 32>}]} {
    %c0 = arith.constant 0 : index
    %c0_0 = arith.constant 0 : index
    %c0_1 = arith.constant 0 : index
    %0 = vector.load %arg3[%c0, %c0_0, %c0_1] : memref<1x16x64xf32, #tpu.memory_space<vmem>>, vector<1x16x64xf32>
    %1 = vector.shape_cast %0 : vector<1x16x64xf32> to vector<16x64xf32>
    %c0_2 = arith.constant 0 : index
    %c0_3 = arith.constant 0 : index
    %c0_4 = arith.constant 0 : index
    %2 = vector.load %arg2[%c0_2, %c0_3, %c0_4] : memref<1x6x32xf32, #tpu.memory_space<vmem>>, vector<1x6x32xf32>
    %3 = vector.shape_cast %2 : vector<1x6x32xf32> to vector<6x32xf32>
    %4 = vector.extract_strided_slice %1 {offsets = [0, 0], sizes = [16, 32], strides = [1, 1]} : vector<16x64xf32> to vector<16x32xf32>
    %5 = vector.extract_strided_slice %1 {offsets = [0, 32], sizes = [16, 32], strides = [1, 1]} : vector<16x64xf32> to vector<16x32xf32>
    %6 = vector.extract_strided_slice %3 {offsets = [0, 0], sizes = [6, 8], strides = [1, 1]} : vector<6x32xf32> to vector<6x8xf32>
    %cst = arith.constant 0.353553385 : f32
    %7 = vector.broadcast %cst : f32 to vector<6x8xf32>
    %8 = arith.mulf %6, %7 : vector<6x8xf32>
    %9 = arith.truncf %8 : vector<6x8xf32> to vector<6x8xbf16>
    %10 = vector.extract_strided_slice %4 {offsets = [0, 0], sizes = [16, 8], strides = [1, 1]} : vector<16x32xf32> to vector<16x8xf32>
    %11 = arith.truncf %10 : vector<16x8xf32> to vector<16x8xbf16>
    %12 = vector.extract_strided_slice %5 {offsets = [0, 0], sizes = [16, 8], strides = [1, 1]} : vector<16x32xf32> to vector<16x8xf32>
    %13 = arith.truncf %12 : vector<16x8xf32> to vector<16x8xbf16>
    %cst_5 = arith.constant dense<0.000000e+00> : vector<6x16xf32>
    %14 = tpu.matmul %9, %11, %cst_5 {dimension_numbers = #tpu.dot_dimension_numbers<[1], [1], [0], [0], [0, 0, 1, 0], [], []>} : vector<6x8xbf16>, vector<16x8xbf16>, vector<6x16xf32> -> vector<6x16xf32>
    %cst_6 = arith.constant dense<0xFF800000> : vector<6xf32>
    %15 = vector.multi_reduction <maximumf>, %14, %cst_6 [1] : vector<6x16xf32> to vector<6xf32>
    %16 = vector.shape_cast %15 : vector<6xf32> to vector<6x1xf32>
    %17 = vector.broadcast %16 : vector<6x1xf32> to vector<6x16xf32>
    %18 = arith.subf %14, %17 : vector<6x16xf32>
    %19 = math.exp %18 : vector<6x16xf32>
    %cst_7 = arith.constant dense<0.000000e+00> : vector<6xf32>
    %20 = vector.multi_reduction <add>, %19, %cst_7 [1] : vector<6x16xf32> to vector<6xf32>
    %21 = vector.shape_cast %20 : vector<6xf32> to vector<6x1xf32>
    %22 = arith.truncf %19 : vector<6x16xf32> to vector<6x16xbf16>
    %cst_8 = arith.constant dense<0.000000e+00> : vector<6x8xf32>
    %23 = tpu.matmul %22, %13, %cst_8 {dimension_numbers = #tpu.dot_dimension_numbers<[1], [0], [0], [1], [0, 0, 1, 1], [], []>} : vector<6x16xbf16>, vector<16x8xbf16>, vector<6x8xf32> -> vector<6x8xf32>
    %24 = tpu.reciprocal %21 {approx = true} : vector<6x1xf32> -> vector<6x1xf32>
    %25 = vector.broadcast %24 : vector<6x1xf32> to vector<6x8xf32>
    %26 = arith.mulf %23, %25 : vector<6x8xf32>
    %27 = vector.extract_strided_slice %3 {offsets = [0, 8], sizes = [6, 8], strides = [1, 1]} : vector<6x32xf32> to vector<6x8xf32>
    %cst_9 = arith.constant 0.353553385 : f32
    %28 = vector.broadcast %cst_9 : f32 to vector<6x8xf32>
    %29 = arith.mulf %27, %28 : vector<6x8xf32>
    %30 = arith.truncf %29 : vector<6x8xf32> to vector<6x8xbf16>
    %31 = vector.extract_strided_slice %4 {offsets = [0, 8], sizes = [16, 8], strides = [1, 1]} : vector<16x32xf32> to vector<16x8xf32>
    %32 = arith.truncf %31 : vector<16x8xf32> to vector<16x8xbf16>
    %33 = vector.extract_strided_slice %5 {offsets = [0, 8], sizes = [16, 8], strides = [1, 1]} : vector<16x32xf32> to vector<16x8xf32>
    %34 = arith.truncf %33 : vector<16x8xf32> to vector<16x8xbf16>
    %cst_10 = arith.constant dense<0.000000e+00> : vector<6x16xf32>
    %35 = tpu.matmul %30, %32, %cst_10 {dimension_numbers = #tpu.dot_dimension_numbers<[1], [1], [0], [0], [0, 0, 1, 0], [], []>} : vector<6x8xbf16>, vector<16x8xbf16>, vector<6x16xf32> -> vector<6x16xf32>
    %cst_11 = arith.constant dense<0xFF800000> : vector<6xf32>
    %36 = vector.multi_reduction <maximumf>, %35, %cst_11 [1] : vector<6x16xf32> to vector<6xf32>
    %37 = vector.shape_cast %36 : vector<6xf32> to vector<6x1xf32>
    %38 = vector.broadcast %37 : vector<6x1xf32> to vector<6x16xf32>
    %39 = arith.subf %35, %38 : vector<6x16xf32>
    %40 = math.exp %39 : vector<6x16xf32>
    %cst_12 = arith.constant dense<0.000000e+00> : vector<6xf32>
    %41 = vector.multi_reduction <add>, %40, %cst_12 [1] : vector<6x16xf32> to vector<6xf32>
    %42 = vector.shape_cast %41 : vector<6xf32> to vector<6x1xf32>
    %43 = arith.truncf %40 : vector<6x16xf32> to vector<6x16xbf16>
    %cst_13 = arith.constant dense<0.000000e+00> : vector<6x8xf32>
    %44 = tpu.matmul %43, %34, %cst_13 {dimension_numbers = #tpu.dot_dimension_numbers<[1], [0], [0], [1], [0, 0, 1, 1], [], []>} : vector<6x16xbf16>, vector<16x8xbf16>, vector<6x8xf32> -> vector<6x8xf32>
    %45 = tpu.reciprocal %42 {approx = true} : vector<6x1xf32> -> vector<6x1xf32>
    %46 = vector.broadcast %45 : vector<6x1xf32> to vector<6x8xf32>
    %47 = arith.mulf %44, %46 : vector<6x8xf32>
    %48 = vector.extract_strided_slice %3 {offsets = [0, 16], sizes = [6, 8], strides = [1, 1]} : vector<6x32xf32> to vector<6x8xf32>
    %cst_14 = arith.constant 0.353553385 : f32
    %49 = vector.broadcast %cst_14 : f32 to vector<6x8xf32>
    %50 = arith.mulf %48, %49 : vector<6x8xf32>
    %51 = arith.truncf %50 : vector<6x8xf32> to vector<6x8xbf16>
    %52 = vector.extract_strided_slice %4 {offsets = [0, 16], sizes = [16, 8], strides = [1, 1]} : vector<16x32xf32> to vector<16x8xf32>
    %53 = arith.truncf %52 : vector<16x8xf32> to vector<16x8xbf16>
    %54 = vector.extract_strided_slice %5 {offsets = [0, 16], sizes = [16, 8], strides = [1, 1]} : vector<16x32xf32> to vector<16x8xf32>
    %55 = arith.truncf %54 : vector<16x8xf32> to vector<16x8xbf16>
    %cst_15 = arith.constant dense<0.000000e+00> : vector<6x16xf32>
    %56 = tpu.matmul %51, %53, %cst_15 {dimension_numbers = #tpu.dot_dimension_numbers<[1], [1], [0], [0], [0, 0, 1, 0], [], []>} : vector<6x8xbf16>, vector<16x8xbf16>, vector<6x16xf32> -> vector<6x16xf32>
    %cst_16 = arith.constant dense<0xFF800000> : vector<6xf32>
    %57 = vector.multi_reduction <maximumf>, %56, %cst_16 [1] : vector<6x16xf32> to vector<6xf32>
    %58 = vector.shape_cast %57 : vector<6xf32> to vector<6x1xf32>
    %59 = vector.broadcast %58 : vector<6x1xf32> to vector<6x16xf32>
    %60 = arith.subf %56, %59 : vector<6x16xf32>
    %61 = math.exp %60 : vector<6x16xf32>
    %cst_17 = arith.constant dense<0.000000e+00> : vector<6xf32>
    %62 = vector.multi_reduction <add>, %61, %cst_17 [1] : vector<6x16xf32> to vector<6xf32>
    %63 = vector.shape_cast %62 : vector<6xf32> to vector<6x1xf32>
    %64 = arith.truncf %61 : vector<6x16xf32> to vector<6x16xbf16>
    %cst_18 = arith.constant dense<0.000000e+00> : vector<6x8xf32>
    %65 = tpu.matmul %64, %55, %cst_18 {dimension_numbers = #tpu.dot_dimension_numbers<[1], [0], [0], [1], [0, 0, 1, 1], [], []>} : vector<6x16xbf16>, vector<16x8xbf16>, vector<6x8xf32> -> vector<6x8xf32>
    %66 = tpu.reciprocal %63 {approx = true} : vector<6x1xf32> -> vector<6x1xf32>
    %67 = vector.broadcast %66 : vector<6x1xf32> to vector<6x8xf32>
    %68 = arith.mulf %65, %67 : vector<6x8xf32>
    %69 = vector.extract_strided_slice %3 {offsets = [0, 24], sizes = [6, 8], strides = [1, 1]} : vector<6x32xf32> to vector<6x8xf32>
    %cst_19 = arith.constant 0.353553385 : f32
    %70 = vector.broadcast %cst_19 : f32 to vector<6x8xf32>
    %71 = arith.mulf %69, %70 : vector<6x8xf32>
    %72 = arith.truncf %71 : vector<6x8xf32> to vector<6x8xbf16>
    %73 = vector.extract_strided_slice %4 {offsets = [0, 24], sizes = [16, 8], strides = [1, 1]} : vector<16x32xf32> to vector<16x8xf32>
    %74 = arith.truncf %73 : vector<16x8xf32> to vector<16x8xbf16>
    %75 = vector.extract_strided_slice %5 {offsets = [0, 24], sizes = [16, 8], strides = [1, 1]} : vector<16x32xf32> to vector<16x8xf32>
    %76 = arith.truncf %75 : vector<16x8xf32> to vector<16x8xbf16>
    %cst_20 = arith.constant dense<0.000000e+00> : vector<6x16xf32>
    %77 = tpu.matmul %72, %74, %cst_20 {dimension_numbers = #tpu.dot_dimension_numbers<[1], [1], [0], [0], [0, 0, 1, 0], [], []>} : vector<6x8xbf16>, vector<16x8xbf16>, vector<6x16xf32> -> vector<6x16xf32>
    %cst_21 = arith.constant dense<0xFF800000> : vector<6xf32>
    %78 = vector.multi_reduction <maximumf>, %77, %cst_21 [1] : vector<6x16xf32> to vector<6xf32>
    %79 = vector.shape_cast %78 : vector<6xf32> to vector<6x1xf32>
    %80 = vector.broadcast %79 : vector<6x1xf32> to vector<6x16xf32>
    %81 = arith.subf %77, %80 : vector<6x16xf32>
    %82 = math.exp %81 : vector<6x16xf32>
    %cst_22 = arith.constant dense<0.000000e+00> : vector<6xf32>
    %83 = vector.multi_reduction <add>, %82, %cst_22 [1] : vector<6x16xf32> to vector<6xf32>
    %84 = vector.shape_cast %83 : vector<6xf32> to vector<6x1xf32>
    %85 = arith.truncf %82 : vector<6x16xf32> to vector<6x16xbf16>
    %cst_23 = arith.constant dense<0.000000e+00> : vector<6x8xf32>
    %86 = tpu.matmul %85, %76, %cst_23 {dimension_numbers = #tpu.dot_dimension_numbers<[1], [0], [0], [1], [0, 0, 1, 1], [], []>} : vector<6x16xbf16>, vector<16x8xbf16>, vector<6x8xf32> -> vector<6x8xf32>
    %87 = tpu.reciprocal %84 {approx = true} : vector<6x1xf32> -> vector<6x1xf32>
    %88 = vector.broadcast %87 : vector<6x1xf32> to vector<6x8xf32>
    %89 = arith.mulf %86, %88 : vector<6x8xf32>
    %90 = tpu.concatenate %26, %47, %68, %89 in 1 : vector<6x8xf32>, vector<6x8xf32>, vector<6x8xf32>, vector<6x8xf32> -> vector<6x32xf32>
    %c0_24 = arith.constant 0 : index
    %c0_25 = arith.constant 0 : index
    %c0_26 = arith.constant 0 : index
    %91 = vector.load %arg4[%c0_24, %c0_25, %c0_26] : memref<1x6x32xf32, #tpu.memory_space<vmem>>, vector<1x6x32xf32>
    %92 = vector.shape_cast %91 : vector<1x6x32xf32> to vector<6x32xf32>
    %93 = vector.shape_cast %90 : vector<6x32xf32> to vector<1x6x32xf32>
    tpu.vector_store %arg4[%c0_24, %c0_25, %c0_26], %93 {strides = array<i32>} : memref<1x6x32xf32, #tpu.memory_space<vmem>>, vector<1x6x32xf32>,
    return
  }
  func.func @transform_0(%arg0: i32, %arg1: i32) -> (i32, i32, i32) {
    %c0_i32 = arith.constant 0 : i32
    %c0_i32_0 = arith.constant 0 : i32
    return %arg0, %arg1, %c0_i32 : i32, i32, i32
  }
  func.func @transform_1(%arg0: i32, %arg1: i32) -> (i32, i32, i32) {
    %c0_i32 = arith.constant 0 : i32
    %c0_i32_0 = arith.constant 0 : i32
    %c0_i32_1 = arith.constant 0 : i32
    return %arg0, %c0_i32, %c0_i32_0 : i32, i32, i32
  }
  func.func @transform_2(%arg0: i32, %arg1: i32) -> (i32, i32, i32) {
    %c0_i32 = arith.constant 0 : i32
    %c0_i32_0 = arith.constant 0 : i32
    return %arg0, %arg1, %c0_i32 : i32, i32, i32
  }
}

module attributes {stable_mosaic.version = 11 : i64} {
  func.func @_matmul_kernel(%arg0: i32, %arg1: i32, %arg2: i32, %arg3: memref<12x32xf32, #tpu.memory_space<vmem>>, %arg4: memref<32x128xf32, #tpu.memory_space<vmem>>, %arg5: memref<1x128xf32, #tpu.memory_space<vmem>>, %arg6: memref<1x32xf32, #tpu.memory_space<vmem>>, %arg7: memref<1x32xf32, #tpu.memory_space<vmem>>, %arg8: memref<12x128xf32, #tpu.memory_space<vmem>>) attributes {dimension_semantics = [#tpu.dimension_semantics<parallel>, #tpu.dimension_semantics<parallel>, #tpu.dimension_semantics<arbitrary>], iteration_bounds = array<i64: 1, 1, 1>, scalar_prefetch = 0 : i64, scratch_operands = 0 : i64, tpu.core_type = #tpu.core_type<tc>, window_params = [{transform_indices = @transform_0, window_bounds = array<i64: 12, 32>}, {transform_indices = @transform_1, window_bounds = array<i64: 32, 128>}, {transform_indices = @transform_2, window_bounds = array<i64: 1, 128>}, {transform_indices = @transform_3, window_bounds = array<i64: 1, 32>}, {transform_indices = @transform_4, window_bounds = array<i64: 1, 32>}, {transform_indices = @transform_5, window_bounds = array<i64: 12, 128>}]} {
    %c0 = arith.constant 0 : index
    %c0_0 = arith.constant 0 : index
    %0 = vector.load %arg3[%c0, %c0_0] : memref<12x32xf32, #tpu.memory_space<vmem>>, vector<12x32xf32>
    %cst = arith.constant dense<0.000000e+00> : vector<12xf32>
    %1 = vector.multi_reduction <add>, %0, %cst [1] : vector<12x32xf32> to vector<12xf32>
    %2 = vector.shape_cast %1 : vector<12xf32> to vector<12x1xf32>
    %cst_1 = arith.constant 3.200000e+01 : f32
    %3 = vector.broadcast %cst_1 : f32 to vector<12x1xf32>
    %4 = arith.divf %2, %3 : vector<12x1xf32>
    %5 = vector.broadcast %4 : vector<12x1xf32> to vector<12x32xf32>
    %6 = arith.subf %0, %5 : vector<12x32xf32>
    %7 = arith.mulf %6, %6 : vector<12x32xf32>
    %cst_2 = arith.constant dense<0.000000e+00> : vector<12xf32>
    %8 = vector.multi_reduction <add>, %7, %cst_2 [1] : vector<12x32xf32> to vector<12xf32>
    %9 = vector.shape_cast %8 : vector<12xf32> to vector<12x1xf32>
    %cst_3 = arith.constant 3.200000e+01 : f32
    %10 = vector.broadcast %cst_3 : f32 to vector<12x1xf32>
    %11 = arith.divf %9, %10 : vector<12x1xf32>
    %cst_4 = arith.constant 9.99999974E-6 : f32
    %12 = vector.broadcast %cst_4 : f32 to vector<12x1xf32>
    %13 = arith.addf %11, %12 : vector<12x1xf32>
    %14 = math.rsqrt %13 : vector<12x1xf32>
    %15 = vector.broadcast %14 : vector<12x1xf32> to vector<12x32xf32>
    %16 = arith.mulf %6, %15 : vector<12x32xf32>
    %c0_5 = arith.constant 0 : index
    %c0_6 = arith.constant 0 : index
    %17 = vector.load %arg6[%c0_5, %c0_6] : memref<1x32xf32, #tpu.memory_space<vmem>>, vector<1x32xf32>
    %18 = vector.broadcast %17 : vector<1x32xf32> to vector<12x32xf32>
    %19 = arith.mulf %16, %18 : vector<12x32xf32>
    %c0_7 = arith.constant 0 : index
    %c0_8 = arith.constant 0 : index
    %20 = vector.load %arg7[%c0_7, %c0_8] : memref<1x32xf32, #tpu.memory_space<vmem>>, vector<1x32xf32>
    %21 = vector.broadcast %20 : vector<1x32xf32> to vector<12x32xf32>
    %22 = arith.addf %19, %21 : vector<12x32xf32>
    %23 = arith.truncf %22 : vector<12x32xf32> to vector<12x32xbf16>
    %c0_9 = arith.constant 0 : index
    %c0_10 = arith.constant 0 : index
    %24 = vector.load %arg4[%c0_9, %c0_10] : memref<32x128xf32, #tpu.memory_space<vmem>>, vector<32x128xf32>
    %25 = arith.truncf %24 : vector<32x128xf32> to vector<32x128xbf16>
    %cst_11 = arith.constant dense<0.000000e+00> : vector<12x128xf32>
    %26 = tpu.matmul %23, %25, %cst_11 {dimension_numbers = #tpu.dot_dimension_numbers<[1], [0], [0], [1], [0, 0, 1, 1], [], []>} : vector<12x32xbf16>, vector<32x128xbf16>, vector<12x128xf32> -> vector<12x128xf32>
    %c0_12 = arith.constant 0 : index
    %c0_13 = arith.constant 0 : index
    %27 = vector.load %arg5[%c0_12, %c0_13] : memref<1x128xf32, #tpu.memory_space<vmem>>, vector<1x128xf32>
    %28 = vector.broadcast %27 : vector<1x128xf32> to vector<12x128xf32>
    %29 = arith.addf %26, %28 : vector<12x128xf32>
    %cst_14 = arith.constant 5.000000e-01 : f32
    %30 = vector.broadcast %cst_14 : f32 to vector<12x128xf32>
    %31 = arith.mulf %30, %29 : vector<12x128xf32>
    %cst_15 = arith.constant 4.471500e-02 : f32
    %32 = vector.broadcast %cst_15 : f32 to vector<12x128xf32>
    %33 = arith.mulf %32, %29 : vector<12x128xf32>
    %34 = arith.mulf %33, %29 : vector<12x128xf32>
    %35 = arith.mulf %34, %29 : vector<12x128xf32>
    %36 = arith.addf %29, %35 : vector<12x128xf32>
    %cst_16 = arith.constant 0.797884583 : f32
    %37 = vector.broadcast %cst_16 : f32 to vector<12x128xf32>
    %38 = arith.mulf %37, %36 : vector<12x128xf32>
    %39 = math.tanh %38 : vector<12x128xf32>
    %cst_17 = arith.constant 1.000000e+00 : f32
    %40 = vector.broadcast %cst_17 : f32 to vector<12x128xf32>
    %41 = arith.addf %40, %39 : vector<12x128xf32>
    %42 = arith.mulf %31, %41 : vector<12x128xf32>
    %c0_18 = arith.constant 0 : index
    %c0_19 = arith.constant 0 : index
    %43 = vector.load %arg8[%c0_18, %c0_19] : memref<12x128xf32, #tpu.memory_space<vmem>>, vector<12x128xf32>
    tpu.vector_store %arg8[%c0_18, %c0_19], %42 {strides = array<i32>} : memref<12x128xf32, #tpu.memory_space<vmem>>, vector<12x128xf32>,
    return
  }
  func.func @transform_0(%arg0: i32, %arg1: i32, %arg2: i32) -> (i32, i32) {
    %c0_i32 = arith.constant 0 : i32
    return %arg0, %arg2 : i32, i32
  }
  func.func @transform_1(%arg0: i32, %arg1: i32, %arg2: i32) -> (i32, i32) {
    %c0_i32 = arith.constant 0 : i32
    return %arg2, %arg1 : i32, i32
  }
  func.func @transform_2(%arg0: i32, %arg1: i32, %arg2: i32) -> (i32, i32) {
    %c0_i32 = arith.constant 0 : i32
    %c0_i32_0 = arith.constant 0 : i32
    return %c0_i32, %arg1 : i32, i32
  }
  func.func @transform_3(%arg0: i32, %arg1: i32, %arg2: i32) -> (i32, i32) {
    %c0_i32 = arith.constant 0 : i32
    %c0_i32_0 = arith.constant 0 : i32
    return %c0_i32, %arg2 : i32, i32
  }
  func.func @transform_4(%arg0: i32, %arg1: i32, %arg2: i32) -> (i32, i32) {
    %c0_i32 = arith.constant 0 : i32
    %c0_i32_0 = arith.constant 0 : i32
    return %c0_i32, %arg2 : i32, i32
  }
  func.func @transform_5(%arg0: i32, %arg1: i32, %arg2: i32) -> (i32, i32) {
    %c0_i32 = arith.constant 0 : i32
    return %arg0, %arg1 : i32, i32
  }
}

module attributes {stable_mosaic.version = 11 : i64} {
  func.func @_matmul_kernel(%arg0: i32, %arg1: i32, %arg2: i32, %arg3: memref<12x128xf32, #tpu.memory_space<vmem>>, %arg4: memref<128x32xf32, #tpu.memory_space<vmem>>, %arg5: memref<1x32xf32, #tpu.memory_space<vmem>>, %arg6: memref<12x32xf32, #tpu.memory_space<vmem>>, %arg7: memref<12x32xf32, #tpu.memory_space<vmem>>) attributes {dimension_semantics = [#tpu.dimension_semantics<parallel>, #tpu.dimension_semantics<parallel>, #tpu.dimension_semantics<arbitrary>], iteration_bounds = array<i64: 1, 1, 1>, scalar_prefetch = 0 : i64, scratch_operands = 0 : i64, tpu.core_type = #tpu.core_type<tc>, window_params = [{transform_indices = @transform_0, window_bounds = array<i64: 12, 128>}, {transform_indices = @transform_1, window_bounds = array<i64: 128, 32>}, {transform_indices = @transform_2, window_bounds = array<i64: 1, 32>}, {transform_indices = @transform_3, window_bounds = array<i64: 12, 32>}, {transform_indices = @transform_4, window_bounds = array<i64: 12, 32>}]} {
    %c0 = arith.constant 0 : index
    %c0_0 = arith.constant 0 : index
    %0 = vector.load %arg3[%c0, %c0_0] : memref<12x128xf32, #tpu.memory_space<vmem>>, vector<12x128xf32>
    %1 = arith.truncf %0 : vector<12x128xf32> to vector<12x128xbf16>
    %c0_1 = arith.constant 0 : index
    %c0_2 = arith.constant 0 : index
    %2 = vector.load %arg4[%c0_1, %c0_2] : memref<128x32xf32, #tpu.memory_space<vmem>>, vector<128x32xf32>
    %3 = arith.truncf %2 : vector<128x32xf32> to vector<128x32xbf16>
    %cst = arith.constant dense<0.000000e+00> : vector<12x32xf32>
    %4 = tpu.matmul %1, %3, %cst {dimension_numbers = #tpu.dot_dimension_numbers<[1], [0], [0], [1], [0, 0, 1, 1], [], []>} : vector<12x128xbf16>, vector<128x32xbf16>, vector<12x32xf32> -> vector<12x32xf32>
    %c0_3 = arith.constant 0 : index
    %c0_4 = arith.constant 0 : index
    %5 = vector.load %arg5[%c0_3, %c0_4] : memref<1x32xf32, #tpu.memory_space<vmem>>, vector<1x32xf32>
    %6 = vector.broadcast %5 : vector<1x32xf32> to vector<12x32xf32>
    %7 = arith.addf %4, %6 : vector<12x32xf32>
    %c0_5 = arith.constant 0 : index
    %c0_6 = arith.constant 0 : index
    %8 = vector.load %arg6[%c0_5, %c0_6] : memref<12x32xf32, #tpu.memory_space<vmem>>, vector<12x32xf32>
    %9 = arith.addf %7, %8 : vector<12x32xf32>
    %c0_7 = arith.constant 0 : index
    %c0_8 = arith.constant 0 : index
    %10 = vector.load %arg7[%c0_7, %c0_8] : memref<12x32xf32, #tpu.memory_space<vmem>>, vector<12x32xf32>
    tpu.vector_store %arg7[%c0_7, %c0_8], %9 {strides = array<i32>} : memref<12x32xf32, #tpu.memory_space<vmem>>, vector<12x32xf32>,
    return
  }
  func.func @transform_0(%arg0: i32, %arg1: i32, %arg2: i32) -> (i32, i32) {
    %c0_i32 = arith.constant 0 : i32
    return %arg0, %arg2 : i32, i32
  }
  func.func @transform_1(%arg0: i32, %arg1: i32, %arg2: i32) -> (i32, i32) {
    %c0_i32 = arith.constant 0 : i32
    return %arg2, %arg1 : i32, i32
  }
  func.func @transform_2(%arg0: i32, %arg1: i32, %arg2: i32) -> (i32, i32) {
    %c0_i32 = arith.constant 0 : i32
    %c0_i32_0 = arith.constant 0 : i32
    return %c0_i32, %arg1 : i32, i32
  }
  func.func @transform_3(%arg0: i32, %arg1: i32, %arg2: i32) -> (i32, i32) {
    %c0_i32 = arith.constant 0 : i32
    return %arg0, %arg1 : i32, i32
  }
  func.func @transform_4(%arg0: i32, %arg1: i32, %arg2: i32) -> (i32, i32) {
    %c0_i32 = arith.constant 0 : i32
    return %arg0, %arg1 : i32, i32
  }
}

module attributes {stable_mosaic.version = 11 : i64} {
  func.func @_matmul_kernel(%arg0: i32, %arg1: i32, %arg2: i32, %arg3: memref<12x32xf32, #tpu.memory_space<vmem>>, %arg4: memref<32x64xf32, #tpu.memory_space<vmem>>, %arg5: memref<1x32xf32, #tpu.memory_space<vmem>>, %arg6: memref<1x32xf32, #tpu.memory_space<vmem>>, %arg7: memref<12x64xf32, #tpu.memory_space<vmem>>) attributes {dimension_semantics = [#tpu.dimension_semantics<parallel>, #tpu.dimension_semantics<parallel>, #tpu.dimension_semantics<arbitrary>], iteration_bounds = array<i64: 1, 1, 1>, scalar_prefetch = 0 : i64, scratch_operands = 0 : i64, tpu.core_type = #tpu.core_type<tc>, window_params = [{transform_indices = @transform_0, window_bounds = array<i64: 12, 32>}, {transform_indices = @transform_1, window_bounds = array<i64: 32, 64>}, {transform_indices = @transform_2, window_bounds = array<i64: 1, 32>}, {transform_indices = @transform_3, window_bounds = array<i64: 1, 32>}, {transform_indices = @transform_4, window_bounds = array<i64: 12, 64>}]} {
    %c0 = arith.constant 0 : index
    %c0_0 = arith.constant 0 : index
    %0 = vector.load %arg3[%c0, %c0_0] : memref<12x32xf32, #tpu.memory_space<vmem>>, vector<12x32xf32>
    %cst = arith.constant dense<0.000000e+00> : vector<12xf32>
    %1 = vector.multi_reduction <add>, %0, %cst [1] : vector<12x32xf32> to vector<12xf32>
    %2 = vector.shape_cast %1 : vector<12xf32> to vector<12x1xf32>
    %cst_1 = arith.constant 3.200000e+01 : f32
    %3 = vector.broadcast %cst_1 : f32 to vector<12x1xf32>
    %4 = arith.divf %2, %3 : vector<12x1xf32>
    %5 = vector.broadcast %4 : vector<12x1xf32> to vector<12x32xf32>
    %6 = arith.subf %0, %5 : vector<12x32xf32>
    %7 = arith.mulf %6, %6 : vector<12x32xf32>
    %cst_2 = arith.constant dense<0.000000e+00> : vector<12xf32>
    %8 = vector.multi_reduction <add>, %7, %cst_2 [1] : vector<12x32xf32> to vector<12xf32>
    %9 = vector.shape_cast %8 : vector<12xf32> to vector<12x1xf32>
    %cst_3 = arith.constant 3.200000e+01 : f32
    %10 = vector.broadcast %cst_3 : f32 to vector<12x1xf32>
    %11 = arith.divf %9, %10 : vector<12x1xf32>
    %cst_4 = arith.constant 9.99999974E-6 : f32
    %12 = vector.broadcast %cst_4 : f32 to vector<12x1xf32>
    %13 = arith.addf %11, %12 : vector<12x1xf32>
    %14 = math.rsqrt %13 : vector<12x1xf32>
    %15 = vector.broadcast %14 : vector<12x1xf32> to vector<12x32xf32>
    %16 = arith.mulf %6, %15 : vector<12x32xf32>
    %c0_5 = arith.constant 0 : index
    %c0_6 = arith.constant 0 : index
    %17 = vector.load %arg5[%c0_5, %c0_6] : memref<1x32xf32, #tpu.memory_space<vmem>>, vector<1x32xf32>
    %18 = vector.broadcast %17 : vector<1x32xf32> to vector<12x32xf32>
    %19 = arith.mulf %16, %18 : vector<12x32xf32>
    %c0_7 = arith.constant 0 : index
    %c0_8 = arith.constant 0 : index
    %20 = vector.load %arg6[%c0_7, %c0_8] : memref<1x32xf32, #tpu.memory_space<vmem>>, vector<1x32xf32>
    %21 = vector.broadcast %20 : vector<1x32xf32> to vector<12x32xf32>
    %22 = arith.addf %19, %21 : vector<12x32xf32>
    %23 = arith.truncf %22 : vector<12x32xf32> to vector<12x32xbf16>
    %c0_9 = arith.constant 0 : index
    %c0_10 = arith.constant 0 : index
    %24 = vector.load %arg4[%c0_9, %c0_10] : memref<32x64xf32, #tpu.memory_space<vmem>>, vector<32x64xf32>
    %25 = arith.truncf %24 : vector<32x64xf32> to vector<32x64xbf16>
    %cst_11 = arith.constant dense<0.000000e+00> : vector<12x64xf32>
    %26 = tpu.matmul %23, %25, %cst_11 {dimension_numbers = #tpu.dot_dimension_numbers<[1], [0], [0], [1], [0, 0, 1, 1], [], []>} : vector<12x32xbf16>, vector<32x64xbf16>, vector<12x64xf32> -> vector<12x64xf32>
    %c0_12 = arith.constant 0 : index
    %c0_13 = arith.constant 0 : index
    %27 = vector.load %arg7[%c0_12, %c0_13] : memref<12x64xf32, #tpu.memory_space<vmem>>, vector<12x64xf32>
    tpu.vector_store %arg7[%c0_12, %c0_13], %26 {strides = array<i32>} : memref<12x64xf32, #tpu.memory_space<vmem>>, vector<12x64xf32>,
    return
  }
  func.func @transform_0(%arg0: i32, %arg1: i32, %arg2: i32) -> (i32, i32) {
    %c0_i32 = arith.constant 0 : i32
    return %arg0, %arg2 : i32, i32
  }
  func.func @transform_1(%arg0: i32, %arg1: i32, %arg2: i32) -> (i32, i32) {
    %c0_i32 = arith.constant 0 : i32
    return %arg2, %arg1 : i32, i32
  }
  func.func @transform_2(%arg0: i32, %arg1: i32, %arg2: i32) -> (i32, i32) {
    %c0_i32 = arith.constant 0 : i32
    %c0_i32_0 = arith.constant 0 : i32
    return %c0_i32, %arg2 : i32, i32
  }
  func.func @transform_3(%arg0: i32, %arg1: i32, %arg2: i32) -> (i32, i32) {
    %c0_i32 = arith.constant 0 : i32
    %c0_i32_0 = arith.constant 0 : i32
    return %c0_i32, %arg2 : i32, i32
  }
  func.func @transform_4(%arg0: i32, %arg1: i32, %arg2: i32) -> (i32, i32) {
    %c0_i32 = arith.constant 0 : i32
    return %arg0, %arg1 : i32, i32
  }
}

</mosaic_0001>

<llo_original>
// kernel: telepath_forward.32
$region0: #{telepath_forward.32}
  #allocation0 [shape = 'u32[]', space=smem, size = 0x4, offset = 0x4, fixed_abs, tag = 'smem constant byte address 0x4 - core index']
  #allocation1 [shape = 'u32[144,128]{1,0:T(1,128)}', space=vmem, size = 0x12000, scoped, tag = 'internal scratch']
  %s0 = inlined_call_operand.hbm [shape: f32[2,2,32,9], index: 0, kind: input, shape index: {}]
  %s1 = inlined_call_operand.hbm [shape: f32[2,2,32,9], index: 1, kind: input, shape index: {}]
  %s2 = inlined_call_operand.hbm [shape: f32[2,96,32], index: 2, kind: input, shape index: {}]
  %s3 = inlined_call_operand.hbm [shape: f32[2,1,32], index: 3, kind: input, shape index: {}]
  %s4 = inlined_call_operand.hbm [shape: f32[8,32], index: 4, kind: input, shape index: {}]
  %s5 = inlined_call_operand.hbm [shape: f32[2,1,32], index: 5, kind: input, shape index: {}]
  %s6 = inlined_call_operand.hbm [shape: f32[2,2,8,32], index: 6, kind: output, shape index: {}]
  %s7 = sld [smem:[#allocation0]]
  $region81: #{telepath_forward.32} parent=0
    _
  %s9 = ssub.s32 1, %s7
  %s10 = scalar_select 0, %s9, %s7
  $region1: #{telepath_forward.32} parent=0
    #allocation2 [shape = 'u8[32768]{0}', space=vmem, size = 0x8000, scoped, tag = 'input window, operand 0']
    #allocation3 [shape = 's32[2]{0}', space=sflag, size = 0x8, scoped, tag = 'scoped memory for telepath_forward.32']
    #allocation4 [shape = 's32[2]{0}', space=sflag, size = 0x8, scoped, tag = 'scoped memory for telepath_forward.32']
    #allocation5 [shape = 'u8[32768]{0}', space=vmem, size = 0x8000, scoped, tag = 'input window, operand 1']
    #allocation6 [shape = 's32[2]{0}', space=sflag, size = 0x8, scoped, tag = 'scoped memory for telepath_forward.32']
    #allocation7 [shape = 'u8[98304]{0}', space=vmem, size = 0x18000, scoped, tag = 'input window, operand 2']
    #allocation8 [shape = 'u8[1024]{0}', space=vmem, size = 0x400, scoped, tag = 'input window, operand 3']
    #allocation9 [shape = 's32[2]{0}', space=sflag, size = 0x8, scoped, tag = 'scoped memory for telepath_forward.32']
    #allocation10 [shape = 'u8[4096]{0}', space=vmem, size = 0x1000, scoped, tag = 'input window, operand 4, single buffered']
    #allocation11 [shape = 'u8[1024]{0}', space=vmem, size = 0x400, scoped, tag = 'input window, operand 5']
    #allocation12 [shape = 's32[2]{0}', space=sflag, size = 0x8, scoped, tag = 'scoped memory for telepath_forward.32']
    #allocation13 [shape = 'u8[8192]{0}', space=vmem, size = 0x2000, scoped, tag = 'output window, operand 0']
    %11 = vsyncpa [#allocation3], 0
    %s12 = scalar_lea.sflag [#allocation3], 1
    %13 = vsyncpa %s12, 0
    %14 = vsyncpa [#allocation6], 0
    %s15 = scalar_lea.sflag [#allocation6], 1
    %16 = vsyncpa %s15, 0
    %17 = vsyncpa [#allocation9], 0
    %s18 = scalar_lea.sflag [#allocation9], 1
    %19 = vsyncpa %s18, 0
    %20 = vsyncpa [#allocation12], 0
    %s21 = scalar_lea.sflag [#allocation12], 1
    %22 = vsyncpa %s21, 0
    %23 = vsyncpa [#allocation4], 0
    %s24 = scalar_lea.sflag [#allocation4], 1
    %25 = vsyncpa %s24, 0
    loop: start=0, step=1, limit=6
    $region2: #{telepath_forward.32} parent=1 // loop_pre_header
      _
    $region3: #{telepath_forward.32} parent=1 // loop_header
      %s27 = sphi 0, %s31
      %p28 = scmp.ge.s32.totalorder %s27, 6
      %s34 = sphi 0, %s46
      %s35 = sphi 0, %s42
      %s36 = sphi 0, %s34
      %s37 = sphi 0, %s35
      %s38 = sphi 0, %s36
      %s39 = sphi 0, %s37
      %s51 = sphi 0, %s53
      %s54 = sphi 0, %s51
      %s55 = sphi 0, %s54
      %s71 = sphi 0, %s55
      %s79 = sphi 0, %s81
      %s82 = sphi 0, %s79
      %s83 = sphi 0, %s82
      %s99 = sphi 0, %s83
      %s105 = sphi 0, %s107
      %s108 = sphi 0, %s105
      %s109 = sphi 0, %s108
      %s125 = sphi 0, %s109
      %s131 = sphi 0, %s133
      %s134 = sphi 0, %s131
      %s135 = sphi 0, %s134
      %s151 = sphi 0, %s135
      %s155 = sphi 0, %s155
      %s157 = sphi 0, %s155
      %s158 = sphi 0, %s157
      %s172 = sphi 0, %s158
      %s178 = sphi 0, %s180
      %s181 = sphi 0, %s178
      %s182 = sphi 0, %s181
      %s198 = sphi 0, %s182
      %s206 = sphi 0, %s208
      %s209 = sphi 0, %s206
      %s210 = sphi 0, %s209
      %s226 = sphi 0, %s210
    $region4: #{telepath_forward.32} parent=1 // loop_header_branch
      %30 = sbr.rel (%p28) target = $region8
    $region5: #{telepath_forward.32} parent=1 // loop_body
      %s32 = ssub.s32 %s27, 1
      %s33 = ssub.s32 %s27, 2
      %s40 = sadd.s32 1, %s35
      %p41 = scmp.ge.s32.totalorder %s40, 2
      %s42 = scalar_select %p41, 0, %s40
      %s43 = sadd.s32 1, %s34
      %s44 = scalar_select %p41, %s43, %s34
      %p45 = scmp.ge.s32.totalorder %s44, 2
      %s46 = scalar_select %p45, 0, %s44
      %s47 = ssub.s32 %s34, %s46
      %s48 = ssub.s32 %s35, %s42
      %s49 = sor.u32 %s47, %s48
      %p50 = scmp.eq.s32.totalorder %s49, 0
      %s52 = sadd.s32 %s51, 1
      %s53 = scalar_select %p50, %s51, %s52
      %p56 = pneg %p50
      %p57 = scmp.eq.s32.totalorder %s27, 3
      %p58 = por %p56, %p57
      %p59 = scmp.ne.s32.totalorder %s51, %s54
      %p60 = scmp.eq.s32.totalorder %s27, 0
      %p61 = por %p59, %p60
      %p62 = scmp.ne.s32.totalorder %s51, %s54
      %p63 = scmp.eq.s32.totalorder %s32, 3
      %p64 = por %p62, %p63
      %p65 = scmp.ne.s32.totalorder %s54, %s55
      %p66 = scmp.eq.s32.totalorder %s32, 0
      %p67 = por %p65, %p66
      %p68 = scmp.ne.s32.totalorder %s54, %s55
      %p69 = scmp.eq.s32.totalorder %s33, 3
      %p70 = por %p68, %p69
      %p72 = scmp.ne.s32.totalorder %s55, %s71
      %p73 = scmp.eq.s32.totalorder %s33, 0
      %p74 = por %p72, %p73
      %s75 = ssub.s32 %s34, %s46
      %s76 = ssub.s32 %s35, %s42
      %s77 = sor.u32 %s75, %s76
      %p78 = scmp.eq.s32.totalorder %s77, 0
      %s80 = sadd.s32 %s79, 1
      %s81 = scalar_select %p78, %s79, %s80
      %p84 = pneg %p78
      %p85 = scmp.eq.s32.totalorder %s27, 3
      %p86 = por %p84, %p85
      %p87 = scmp.ne.s32.totalorder %s79, %s82
      %p88 = scmp.eq.s32.totalorder %s27, 0
      %p89 = por %p87, %p88
      %p90 = scmp.ne.s32.totalorder %s79, %s82
      %p91 = scmp.eq.s32.totalorder %s32, 3
      %p92 = por %p90, %p91
      %p93 = scmp.ne.s32.totalorder %s82, %s83
      %p94 = scmp.eq.s32.totalorder %s32, 0
      %p95 = por %p93, %p94
      %p96 = scmp.ne.s32.totalorder %s82, %s83
      %p97 = scmp.eq.s32.totalorder %s33, 3
      %p98 = por %p96, %p97
      %p100 = scmp.ne.s32.totalorder %s83, %s99
      %p101 = scmp.eq.s32.totalorder %s33, 0
      %p102 = por %p100, %p101
      %s103 = ssub.s32 %s35, %s42
      %p104 = scmp.eq.s32.totalorder %s103, 0
      %s106 = sadd.s32 %s105, 1
      %s107 = scalar_select %p104, %s105, %s106
      %p110 = pneg %p104
      %p111 = scmp.eq.s32.totalorder %s27, 3
      %p112 = por %p110, %p111
      %p113 = scmp.ne.s32.totalorder %s105, %s108
      %p114 = scmp.eq.s32.totalorder %s27, 0
      %p115 = por %p113, %p114
      %p116 = scmp.ne.s32.totalorder %s105, %s108
      %p117 = scmp.eq.s32.totalorder %s32, 3
      %p118 = por %p116, %p117
      %p119 = scmp.ne.s32.totalorder %s108, %s109
      %p120 = scmp.eq.s32.totalorder %s32, 0
      %p121 = por %p119, %p120
      %p122 = scmp.ne.s32.totalorder %s108, %s109
      %p123 = scmp.eq.s32.totalorder %s33, 3
      %p124 = por %p122, %p123
      %p126 = scmp.ne.s32.totalorder %s109, %s125
      %p127 = scmp.eq.s32.totalorder %s33, 0
      %p128 = por %p126, %p127
      %s129 = ssub.s32 %s35, %s42
      %p130 = scmp.eq.s32.totalorder %s129, 0
      %s132 = sadd.s32 %s131, 1
      %s133 = scalar_select %p130, %s131, %s132
      %p136 = pneg %p130
      %p137 = scmp.eq.s32.totalorder %s27, 3
      %p138 = por %p136, %p137
      %p139 = scmp.ne.s32.totalorder %s131, %s134
      %p140 = scmp.eq.s32.totalorder %s27, 0
      %p141 = por %p139, %p140
      %p142 = scmp.ne.s32.totalorder %s131, %s134
      %p143 = scmp.eq.s32.totalorder %s32, 3
      %p144 = por %p142, %p143
      %p145 = scmp.ne.s32.totalorder %s134, %s135
      %p146 = scmp.eq.s32.totalorder %s32, 0
      %p147 = por %p145, %p146
      %p148 = scmp.ne.s32.totalorder %s134, %s135
      %p149 = scmp.eq.s32.totalorder %s33, 3
      %p150 = por %p148, %p149
      %p152 = scmp.ne.s32.totalorder %s135, %s151
      %p153 = scmp.eq.s32.totalorder %s33, 0
      %p154 = por %p152, %p153
      %s156 = sadd.s32 %s155, 1
      %p159 = scmp.eq.s32.totalorder %s27, 3
      %p160 = scmp.ne.s32.totalorder %s155, %s157
      %p161 = scmp.eq.s32.totalorder %s27, 0
      %p162 = por %p160, %p161
      %p163 = scmp.ne.s32.totalorder %s155, %s157
      %p164 = scmp.eq.s32.totalorder %s32, 3
      %p165 = por %p163, %p164
      %p166 = scmp.ne.s32.totalorder %s157, %s158
      %p167 = scmp.eq.s32.totalorder %s32, 0
      %p168 = por %p166, %p167
      %p169 = scmp.ne.s32.totalorder %s157, %s158
      %p170 = scmp.eq.s32.totalorder %s33, 3
      %p171 = por %p169, %p170
      %p173 = scmp.ne.s32.totalorder %s158, %s172
      %p174 = scmp.eq.s32.totalorder %s33, 0
      %p175 = por %p173, %p174
      %s176 = ssub.s32 %s35, %s42
      %p177 = scmp.eq.s32.totalorder %s176, 0
      %s179 = sadd.s32 %s178, 1
      %s180 = scalar_select %p177, %s178, %s179
      %p183 = pneg %p177
      %p184 = scmp.eq.s32.totalorder %s27, 3
      %p185 = por %p183, %p184
      %p186 = scmp.ne.s32.totalorder %s178, %s181
      %p187 = scmp.eq.s32.totalorder %s27, 0
      %p188 = por %p186, %p187
      %p189 = scmp.ne.s32.totalorder %s178, %s181
      %p190 = scmp.eq.s32.totalorder %s32, 3
      %p191 = por %p189, %p190
      %p192 = scmp.ne.s32.totalorder %s181, %s182
      %p193 = scmp.eq.s32.totalorder %s32, 0
      %p194 = por %p192, %p193
      %p195 = scmp.ne.s32.totalorder %s181, %s182
      %p196 = scmp.eq.s32.totalorder %s33, 3
      %p197 = por %p195, %p196
      %p199 = scmp.ne.s32.totalorder %s182, %s198
      %p200 = scmp.eq.s32.totalorder %s33, 0
      %p201 = por %p199, %p200
      %s202 = ssub.s32 %s34, %s46
      %s203 = ssub.s32 %s35, %s42
      %s204 = sor.u32 %s202, %s203
      %p205 = scmp.eq.s32.totalorder %s204, 0
      %s207 = sadd.s32 %s206, 1
      %s208 = scalar_select %p205, %s206, %s207
      %p211 = pneg %p205
      %p212 = scmp.eq.s32.totalorder %s27, 3
      %p213 = por %p211, %p212
      %p214 = scmp.ne.s32.totalorder %s206, %s209
      %p215 = scmp.eq.s32.totalorder %s27, 0
      %p216 = por %p214, %p215
      %p217 = scmp.ne.s32.totalorder %s206, %s209
      %p218 = scmp.eq.s32.totalorder %s32, 3
      %p219 = por %p217, %p218
      %p220 = scmp.ne.s32.totalorder %s209, %s210
      %p221 = scmp.eq.s32.totalorder %s32, 0
      %p222 = por %p220, %p221
      %p223 = scmp.ne.s32.totalorder %s209, %s210
      %p224 = scmp.eq.s32.totalorder %s33, 3
      %p225 = por %p223, %p224
      %p227 = scmp.ne.s32.totalorder %s210, %s226
      %p228 = scmp.eq.s32.totalorder %s33, 0
      %p229 = por %p227, %p228
      %p230 = scmp.le.s32.totalorder 1, %s27
      %p231 = scmp.lt.s32.totalorder %s27, 5
      %p232 = pnand %p230, %p231
      %p233 = pneg %p232
      // Predicated region
      $region9: #{telepath_forward.32} parent=5 // pred_check
        _
      $region10: #{telepath_forward.32} parent=5 // pred_check_branch
        %235 = sbr.rel (%p232) target = $region12
      $region11: #{telepath_forward.32} parent=5 // pred_region
        %s236 = ssub.s32 %s27, 1
        // Predicated region
        $region13: #{telepath_forward.32} parent=11 // pred_check
          %p237 = pneg %p168
        $region14: #{telepath_forward.32} parent=11 // pred_check_branch
          %239 = sbr.rel (%p237) target = $region16
        $region15: #{telepath_forward.32} parent=11 // pred_region
          %s241 = ssub.s32 128, 128
          %242 = vsyncadd [#allocation9], %s241
          %s244 = sshll.u32 [#allocation10], 4
          %s245 = int_to_ptr.vmem [resolvable:$true] %s244
          %247 = dma.hbm_to_vmem [thread:$0]  %s4, 128, %s245, [#allocation9]
        $region16: #{telepath_forward.32} parent=11 // pred_fallthru
          _
      $region12: #{telepath_forward.32} parent=5 // pred_fallthru
        _
      %p248 = scmp.lt.s32.totalorder %s27, 4
      // Predicated region
      $region17: #{telepath_forward.32} parent=5 // pred_check
        %p249 = pneg %p248
      $region18: #{telepath_forward.32} parent=5 // pred_check_branch
        %251 = sbr.rel (%p249) target = $region20
      $region19: #{telepath_forward.32} parent=5 // pred_region
        // Predicated region
        $region21: #{telepath_forward.32} parent=19 // pred_check
          %p252 = pneg %p61
        $region22: #{telepath_forward.32} parent=19 // pred_check_branch
          %254 = sbr.rel (%p252) target = $region24
        $region23: #{telepath_forward.32} parent=19 // pred_region
          %s255 = sand.u32 %s51, 1
          %s256 = scalar_lea.sflag [#allocation3], %s255
          %s257 = sand.u32 %s51, 1
          %s258 = smul.addr %s257, 32
          %s259 = scalar_lea.vmem [#allocation2], %s258
          %s261 = ssub.s32 512, 512
          %262 = vsyncadd %s256, %s261
          %s263 = smul.addr %s35, 4
          %s264 = smul.addr %s34, 8
          %s265 = sadd.s32 %s263, %s264
          %s266 = smul.addr %s265, 128
          %s267 = scalar_lea.hbm %s0, %s266
          %s268 = sshll.u32 %s259, 4
          %s269 = int_to_ptr.vmem [resolvable:$true] %s268
          %274 = dma.hbm_to_vmem [thread:$0]  %s267, 512, %s269, %s256, 128, 128, 8
        $region24: #{telepath_forward.32} parent=19 // pred_fallthru
          _
        // Predicated region
        $region25: #{telepath_forward.32} parent=19 // pred_check
          %p275 = pneg %p89
        $region26: #{telepath_forward.32} parent=19 // pred_check_branch
          %277 = sbr.rel (%p275) target = $region28
        $region27: #{telepath_forward.32} parent=19 // pred_region
          %s278 = sand.u32 %s27, 1
          %s279 = scalar_lea.sflag [#allocation6], %s278
          %s280 = sand.u32 %s79, 1
          %s281 = smul.addr %s280, 32
          %s282 = scalar_lea.vmem [#allocation5], %s281
          %s284 = ssub.s32 512, 512
          %285 = vsyncadd %s279, %s284
          %s286 = smul.addr %s35, 4
          %s287 = smul.addr %s34, 8
          %s288 = sadd.s32 %s286, %s287
          %s289 = smul.addr %s288, 128
          %s290 = scalar_lea.hbm %s1, %s289
          %s291 = sshll.u32 %s282, 4
          %s292 = int_to_ptr.vmem [resolvable:$true] %s291
          %297 = dma.hbm_to_vmem [thread:$0]  %s290, 512, %s292, %s279, 128, 128, 8
        $region28: #{telepath_forward.32} parent=19 // pred_fallthru
          _
        // Predicated region
        $region29: #{telepath_forward.32} parent=19 // pred_check
          %p298 = pneg %p115
        $region30: #{telepath_forward.32} parent=19 // pred_check_branch
          %300 = sbr.rel (%p298) target = $region32
        $region31: #{telepath_forward.32} parent=19 // pred_region
          %s301 = sand.u32 %s27, 1
          %s302 = scalar_lea.sflag [#allocation6], %s301
          %s303 = sand.u32 %s105, 1
          %s304 = smul.addr %s303, 96
          %s305 = scalar_lea.vmem [#allocation7], %s304
          %s307 = ssub.s32 1536, 1536
          %308 = vsyncadd %s302, %s307
          %s309 = smul.addr %s35, 12
          %s310 = smul.addr %s309, 128
          %s311 = scalar_lea.hbm %s2, %s310
          %s312 = sshll.u32 %s305, 4
          %s313 = int_to_ptr.vmem [resolvable:$true] %s312
          %318 = dma.hbm_to_vmem [thread:$0]  %s311, 1536, %s313, %s302, 128, 128, 8
        $region32: #{telepath_forward.32} parent=19 // pred_fallthru
          _
        // Predicated region
        $region33: #{telepath_forward.32} parent=19 // pred_check
          %p319 = pneg %p141
        $region34: #{telepath_forward.32} parent=19 // pred_check_branch
          %321 = sbr.rel (%p319) target = $region36
        $region35: #{telepath_forward.32} parent=19 // pred_region
          %s322 = sand.u32 %s27, 1
          %s323 = scalar_lea.sflag [#allocation9], %s322
          %s324 = sand.u32 %s131, 1
          %s325 = scalar_lea.vmem [#allocation8], %s324
          %s327 = ssub.s32 16, 16
          %328 = vsyncadd %s323, %s327
          %s329 = smul.addr %s35, 16
          %s330 = scalar_lea.hbm %s3, %s329
          %s332 = sshll.u32 %s325, 4
          %s333 = int_to_ptr.vmem [resolvable:$true] %s332
          %335 = dma.hbm_to_vmem [thread:$0]  %s330, 16, %s333, %s323
        $region36: #{telepath_forward.32} parent=19 // pred_fallthru
          _
        // Predicated region
        $region37: #{telepath_forward.32} parent=19 // pred_check
          %p336 = pneg %p188
        $region38: #{telepath_forward.32} parent=19 // pred_check_branch
          %338 = sbr.rel (%p336) target = $region40
        $region39: #{telepath_forward.32} parent=19 // pred_region
          %s339 = sand.u32 %s178, 1
          %s340 = scalar_lea.sflag [#allocation12], %s339
          %s341 = sand.u32 %s178, 1
          %s342 = scalar_lea.vmem [#allocation11], %s341
          %s344 = ssub.s32 16, 16
          %345 = vsyncadd %s340, %s344
          %s346 = smul.addr %s35, 16
          %s347 = scalar_lea.hbm %s5, %s346
          %s349 = sshll.u32 %s342, 4
          %s350 = int_to_ptr.vmem [resolvable:$true] %s349
          %352 = dma.hbm_to_vmem [thread:$0]  %s347, 16, %s350, %s340
        $region40: #{telepath_forward.32} parent=19 // pred_fallthru
          _
      $region20: #{telepath_forward.32} parent=5 // pred_fallthru
        _
      %p353 = scmp.le.s32.totalorder 1, %s27
      %p354 = scmp.lt.s32.totalorder %s27, 5
      %p355 = pnand %p353, %p354
      %p356 = pneg %p355
      // Predicated region
      $region41: #{telepath_forward.32} parent=5 // pred_check
        _
      $region42: #{telepath_forward.32} parent=5 // pred_check_branch
        %358 = sbr.rel (%p355) target = $region44
      $region43: #{telepath_forward.32} parent=5 // pred_region
        %s359 = ssub.s32 %s27, 1
        %s360 = sand.u32 %s54, 1
        %s361 = scalar_lea.sflag [#allocation3], %s360
        %s362 = sand.u32 %s54, 1
        %s363 = smul.addr %s362, 32
        %s364 = scalar_lea.vmem [#allocation2], %s363
        // Predicated region
        $region45: #{telepath_forward.32} parent=43 // pred_check
          %p365 = pneg %p67
        $region46: #{telepath_forward.32} parent=43 // pred_check_branch
          %367 = sbr.rel (%p365) target = $region48
        $region47: #{telepath_forward.32} parent=43 // pred_region
          %368 = dma.done %s361, 512
        $region48: #{telepath_forward.32} parent=43 // pred_fallthru
          _
        %s369 = sand.u32 %s32, 1
        %s370 = scalar_lea.sflag [#allocation6], %s369
        %s371 = sand.u32 %s82, 1
        %s372 = smul.addr %s371, 32
        %s373 = scalar_lea.vmem [#allocation5], %s372
        // Predicated region
        $region49: #{telepath_forward.32} parent=43 // pred_check
          %p374 = pneg %p95
        $region50: #{telepath_forward.32} parent=43 // pred_check_branch
          %376 = sbr.rel (%p374) target = $region52
        $region51: #{telepath_forward.32} parent=43 // pred_region
          %377 = dma.done %s370, 512
        $region52: #{telepath_forward.32} parent=43 // pred_fallthru
          _
        %s378 = sand.u32 %s32, 1
        %s379 = scalar_lea.sflag [#allocation6], %s378
        %s380 = sand.u32 %s108, 1
        %s381 = smul.addr %s380, 96
        %s382 = scalar_lea.vmem [#allocation7], %s381
        // Predicated region
        $region53: #{telepath_forward.32} parent=43 // pred_check
          %p383 = pneg %p121
        $region54: #{telepath_forward.32} parent=43 // pred_check_branch
          %385 = sbr.rel (%p383) target = $region56
        $region55: #{telepath_forward.32} parent=43 // pred_region
          %386 = dma.done %s379, 1536
        $region56: #{telepath_forward.32} parent=43 // pred_fallthru
          _
        %s387 = sand.u32 %s32, 1
        %s388 = scalar_lea.sflag [#allocation9], %s387
        %s389 = sand.u32 %s134, 1
        %s390 = scalar_lea.vmem [#allocation8], %s389
        // Predicated region
        $region57: #{telepath_forward.32} parent=43 // pred_check
          %p391 = pneg %p147
        $region58: #{telepath_forward.32} parent=43 // pred_check_branch
          %393 = sbr.rel (%p391) target = $region60
        $region59: #{telepath_forward.32} parent=43 // pred_region
          %394 = dma.done %s388, 16
        $region60: #{telepath_forward.32} parent=43 // pred_fallthru
          _
        // Predicated region
        $region61: #{telepath_forward.32} parent=43 // pred_check
          %p395 = pneg %p168
        $region62: #{telepath_forward.32} parent=43 // pred_check_branch
          %397 = sbr.rel (%p395) target = $region64
        $region63: #{telepath_forward.32} parent=43 // pred_region
          %398 = dma.done [#allocation9], 128
        $region64: #{telepath_forward.32} parent=43 // pred_fallthru
          _
        %s399 = sand.u32 %s181, 1
        %s400 = scalar_lea.sflag [#allocation12], %s399
        %s401 = sand.u32 %s181, 1
        %s402 = scalar_lea.vmem [#allocation11], %s401
        // Predicated region
        $region65: #{telepath_forward.32} parent=43 // pred_check
          %p403 = pneg %p194
        $region66: #{telepath_forward.32} parent=43 // pred_check_branch
          %405 = sbr.rel (%p403) target = $region68
        $region67: #{telepath_forward.32} parent=43 // pred_region
          %406 = dma.done %s400, 16
        $region68: #{telepath_forward.32} parent=43 // pred_fallthru
          _
        %s407 = sand.u32 %s54, 1
        %s408 = scalar_lea.sflag [#allocation3], %s407
        %s409 = sand.u32 %s54, 1
        %s410 = smul.addr %s409, 32
        %s411 = scalar_lea.vmem [#allocation2], %s410
        %p412 = pneg %p67
        %p413 = pneg %p64
        %s414 = sand.u32 %s32, 1
        %s415 = scalar_lea.sflag [#allocation6], %s414
        %s416 = sand.u32 %s82, 1
        %s417 = smul.addr %s416, 32
        %s418 = scalar_lea.vmem [#allocation5], %s417
        %p419 = pneg %p95
        %p420 = pneg %p92
        %s421 = sand.u32 %s32, 1
        %s422 = scalar_lea.sflag [#allocation6], %s421
        %s423 = sand.u32 %s108, 1
        %s424 = smul.addr %s423, 96
        %s425 = scalar_lea.vmem [#allocation7], %s424
        %p426 = pneg %p121
        %p427 = pneg %p118
        %s428 = sand.u32 %s32, 1
        %s429 = scalar_lea.sflag [#allocation9], %s428
        %s430 = sand.u32 %s134, 1
        %s431 = scalar_lea.vmem [#allocation8], %s430
        %p432 = pneg %p147
        %p433 = pneg %p144
        %p434 = pneg %p168
        %p435 = pneg %p165
        %s436 = sand.u32 %s181, 1
        %s437 = scalar_lea.sflag [#allocation12], %s436
        %s438 = sand.u32 %s181, 1
        %s439 = scalar_lea.vmem [#allocation11], %s438
        %p440 = pneg %p194
        %p441 = pneg %p191
        %p442 = pneg %p222
        %p443 = pneg %p219
        %s444 = sand.u32 %s209, 1
        %s445 = scalar_lea.sflag [#allocation4], %s444
        %s446 = sand.u32 %s209, 1
        %s447 = smul.addr %s446, 8
        %s448 = scalar_lea.vmem [#allocation13], %s447
        %v450 = vld [vmem:[%s364] sm:$0xff]
        %v451 = vld [vmem:[%s364 + $0x8] sm:$0xff]
        %v452 = vld [vmem:[%s364 + $0x10] sm:$0xff]
        %v453 = vld [vmem:[%s364 + $0x18] sm:$0xff]
        %v454 = vld [vmem:[%s373] sm:$0xff]
        %v455 = vld [vmem:[%s373 + $0x8] sm:$0xff]
        %v456 = vld [vmem:[%s373 + $0x10] sm:$0xff]
        %v457 = vld [vmem:[%s373 + $0x18] sm:$0xff]
        %462 = vrot.lane.b32.xlu0 %v450, 127
        %v463 = vpop.permute.xlu0 %462
        %464 = vrot.lane.b32.xlu0 %v451, 127
        %v465 = vpop.permute.xlu0 %464
        %466 = vrot.lane.b32.xlu0 %v452, 127
        %v467 = vpop.permute.xlu0 %466
        %468 = vrot.lane.b32.xlu0 %v453, 127
        %v469 = vpop.permute.xlu0 %468
        %v474 = vpack.c.bf16 %v451, %v450
        %v475 = vpack.c.bf16 %v453, %v452
        %v476 = vpack.c.bf16 %v455, %v454
        %v477 = vpack.c.bf16 %v457, %v456
        %v478 = vpack.c.bf16 %v465, %v463
        %v479 = vpack.c.bf16 %v469, %v467
        %v480 = vld [vmem:[%s382] sm:$0xff]
        %v481 = vld [vmem:[%s382 + $0x8] sm:$0xff]
        %v482 = vld [vmem:[%s382 + $0x10] sm:$0xff]
        %v483 = vld [vmem:[%s382 + $0x18] sm:$0xff]
        %v484 = vld [vmem:[%s382 + $0x20] sm:$0xff]
        %v485 = vld [vmem:[%s382 + $0x28] sm:$0xff]
        %v486 = vld [vmem:[%s382 + $0x30] sm:$0xff]
        %v487 = vld [vmem:[%s382 + $0x38] sm:$0xff]
        %v488 = vld [vmem:[%s382 + $0x40] sm:$0xff]
        %v489 = vld [vmem:[%s382 + $0x48] sm:$0xff]
        %v490 = vld [vmem:[%s382 + $0x50] sm:$0xff]
        %v491 = vld [vmem:[%s382 + $0x58] sm:$0xff]
        %v492 = vpack.c.bf16 %v481, %v480
        %v493 = vpack.c.bf16 %v483, %v482
        %v494 = vpack.c.bf16 %v485, %v484
        %v495 = vpack.c.bf16 %v487, %v486
        %v496 = vpack.c.bf16 %v489, %v488
        %v497 = vpack.c.bf16 %v491, %v490
        %v498 = vld [vmem:[%s390] sm:$0x1]
        %v500 = vlaneseq
        %v501 = vshrl.u32 %v500, 7
        %v502 = vsub.s32 0, %v501
        %v503 = vrot.slane %v498, %v502
        %505 = vxpose.xlu0.c.b16.start [1/8] %v474, 128
        %506 = vxpose.xlu0.c.b16.cont [2/8] %v475, 128
        %507 = vxpose.xlu0.c.b16.cont [3/8] %v476, 128
        %508 = vxpose.xlu0.c.b16.cont [4/8] %v477, 128
        %509 = vxpose.xlu0.c.b16.cont [5/8] %v478, 128
        %510 = vxpose.xlu0.c.b16.cont [6/8] %v479, 128
        %511 = vxpose.xlu0.c.b16.cont [7/8] 0, 128
        %512 = vxpose.xlu0.c.b16.end [8/8] 0, 128
        %v513 = vpop.trf.xlu0
        %v514 = vpop.trf.xlu0
        %v515 = vpop.trf.xlu0
        %v516 = vpop.trf.xlu0
        %v517 = vpop.trf.xlu0
        %v518 = vpop.trf.xlu0
        %v519 = vpop.trf.xlu0
        %v520 = vpop.trf.xlu0
        %vm521 = vcmask 785408
        %v523 = vsel %vm521, %v513, 0
        %525 = vmatprep.subr.bf16.mxu0 0
        %526 = vmatpush1.bf16.msra.mxu0 %v492
        %527 = vmatprep.subr.bf16.mxu0 0
        %528 = vmatpush1.bf16.msra.mxu0 %v493
        %529 = vmatprep.subr.bf16.mxu0 0
        %530 = vmatpush1.bf16.msra.mxu0 %v494
        %531 = vmatprep.subr.bf16.mxu0 0
        %532 = vmatpush1.bf16.msra.mxu0 %v495
        %533 = vmatprep.subr.bf16.mxu0 0
        %534 = vmatpush1.bf16.msra.mxu0 %v496
        %535 = vmatprep.subr.bf16.mxu0 0
        %536 = vmatpush1.bf16.msra.mxu0 %v497
        %537 = vmatprep.subr.bf16.mxu0 0
        %538 = vmatpush1.bf16.msra.mxu0 0
        %539 = vmatprep.subr.bf16.mxu0 0
        %540 = vmatpush1.bf16.msra.mxu0 0
        %541 = vmatprep.subr.bf16.mxu0 0
        %542 = vmatpush1.bf16.msra.mxu0 0
        %543 = vmatprep.subr.bf16.mxu0 0
        %544 = vmatpush1.bf16.msra.mxu0 0
        %545 = vmatprep.subr.bf16.mxu0 0
        %546 = vmatpush1.bf16.msra.mxu0 0
        %547 = vmatprep.subr.bf16.mxu0 0
        %548 = vmatpush1.bf16.msra.mxu0 0
        %549 = vmatprep.subr.bf16.mxu0 0
        %550 = vmatpush1.bf16.msra.mxu0 0
        %551 = vmatprep.subr.bf16.mxu0 0
        %552 = vmatpush1.bf16.msra.mxu0 0
        %553 = vmatprep.subr.bf16.mxu0 0
        %554 = vmatpush1.bf16.msra.mxu0 0
        %555 = vmatprep.subr.bf16.mxu0 0
        %556 = vmatpush1.bf16.msra.mxu0 0
        %557 = vmatprep.mubr.bf16.mxu0 0
        %558 = vmatmul.mubr.bf16.gmra.mrb[0].mxu0 %v523
        %v559 = vpop.f32.mrb[0].mxu0
        %v560 = vadd.f32 %v503, %v559
        %v561 = vpop.f32.mrb[0].mxu0
        %v562 = vpop.f32.mrb[0].mxu0
        %v563 = vpop.f32.mrb[0].mxu0
        %564 = vdwg.mxu0
        %v565 = vmul.f32 %v560, 0.5
        %v566 = vmul.f32 %v560, 0.044715
        %v567 = vmul.f32 %v566, %v560
        %v568 = vmul.f32 %v567, %v560
        %v569 = vadd.f32 %v560, %v568
        %v570 = vmul.f32 %v569, 0.7978846
        %v571 = vtanh.pop %v570
        %v572 = vadd.f32 %v571, 1.0
        %v573 = vmul.f32 %v565, %v572
        %v574 = vld [vmem:[#allocation10] sm:$0xff]
        %v575 = vadd.f32 %v573, %v574
        %v576 = vld [vmem:[%s402] sm:$0x1]
        %v578 = vlaneseq
        %v579 = vshrl.u32 %v578, 7
        %v580 = vsub.s32 0, %v579
        %v581 = vrot.slane %v576, %v580
        %v583 = vadd.f32 %v575, %v581
        %vm584 = vcmask 261120
        %585 = vst.msk [vmem:[%s448] sm:$0xff] %vm584, %v583
        %s586 = sand.u32 %s209, 1
        %s587 = scalar_lea.sflag [#allocation4], %s586
        %s588 = sand.u32 %s209, 1
        %s589 = smul.addr %s588, 8
        %s590 = scalar_lea.vmem [#allocation13], %s589
        // Predicated region
        $region69: #{telepath_forward.32} parent=43 // pred_check
          %p591 = pneg %p219
        $region70: #{telepath_forward.32} parent=43 // pred_check_branch
          %593 = sbr.rel (%p591) target = $region72
        $region71: #{telepath_forward.32} parent=43 // pred_region
          %s595 = ssub.s32 128, 128
          %596 = vsyncadd %s587, %s595
          %s597 = smul.addr %s36, 2
          %s598 = sadd.s32 %s37, %s597
          %s599 = smul.addr %s598, 128
          %s600 = scalar_lea.hbm %s6, %s599
          %s602 = sshll.u32 %s590, 4
          %s603 = int_to_ptr.vmem [resolvable:$true] %s602
          %605 = dma.vmem_to_hbm [thread:$0]  %s603, 128, %s600, %s587
        $region72: #{telepath_forward.32} parent=43 // pred_fallthru
          _
      $region44: #{telepath_forward.32} parent=5 // pred_fallthru
        _
      %p606 = scmp.le.s32.totalorder 2, %s27
      // Predicated region
      $region73: #{telepath_forward.32} parent=5 // pred_check
        %p607 = pneg %p606
      $region74: #{telepath_forward.32} parent=5 // pred_check_branch
        %609 = sbr.rel (%p607) target = $region76
      $region75: #{telepath_forward.32} parent=5 // pred_region
        %s610 = ssub.s32 %s27, 2
        // Predicated region
        $region77: #{telepath_forward.32} parent=75 // pred_check
          %p611 = pneg %p225
        $region78: #{telepath_forward.32} parent=75 // pred_check_branch
          %613 = sbr.rel (%p611) target = $region80
        $region79: #{telepath_forward.32} parent=75 // pred_region
          %s614 = sand.u32 %s210, 1
          %s615 = scalar_lea.sflag [#allocation4], %s614
          %s616 = sand.u32 %s210, 1
          %s617 = smul.addr %s616, 8
          %s618 = scalar_lea.vmem [#allocation13], %s617
          %619 = dma.done %s615, 128
        $region80: #{telepath_forward.32} parent=75 // pred_fallthru
          _
      $region76: #{telepath_forward.32} parent=5 // pred_fallthru
        _
    $region6: #{telepath_forward.32} parent=1 // loop_footer
      %s31 = sadd.s32 1, %s27
    $region7: #{telepath_forward.32} parent=1 // loop_footer_branch
      %26 = sbr.rel target = $region3
    $region8: #{telepath_forward.32} parent=1 // loop_exit
      _
    %620 = vsyncpa [#allocation3], 1
    %s621 = scalar_lea.sflag [#allocation3], 1
    %622 = vsyncpa %s621, 1
    %623 = vsyncpa [#allocation6], 1
    %s624 = scalar_lea.sflag [#allocation6], 1
    %625 = vsyncpa %s624, 1
    %626 = vsyncpa [#allocation9], 1
    %s627 = scalar_lea.sflag [#allocation9], 1
    %628 = vsyncpa %s627, 1
    %629 = vsyncpa [#allocation12], 1
    %s630 = scalar_lea.sflag [#allocation12], 1
    %631 = vsyncpa %s630, 1
    %632 = vsyncpa [#allocation4], 1
    %s633 = scalar_lea.sflag [#allocation4], 1
    %634 = vsyncpa %s633, 1

// kernel: telepath_forward.31
$region0: #{telepath_forward.31}
  #allocation0 [shape = 'u32[]', space=smem, size = 0x4, offset = 0x4, fixed_abs, tag = 'smem constant byte address 0x4 - core index']
  #allocation1 [shape = 'u32[144,128]{1,0:T(1,128)}', space=vmem, size = 0x12000, scoped, tag = 'internal scratch']
  %s0 = inlined_call_operand.hbm [shape: f32[2,2,8,18], index: 0, kind: input, shape index: {}]
  %s1 = inlined_call_operand.hbm [shape: f32[2,32,24], index: 1, kind: input, shape index: {}]
  %s2 = inlined_call_operand.hbm [shape: f32[2,32,1], index: 2, kind: input, shape index: {}]
  %s3 = inlined_call_operand.hbm [shape: f32[2,2,32,16], index: 3, kind: output, shape index: {}]
  %s4 = sld [smem:[#allocation0]]
  $region57: #{telepath_forward.31} parent=0
    _
  %s6 = ssub.s32 1, %s4
  %s7 = scalar_select 0, %s6, %s4
  $region1: #{telepath_forward.31} parent=0
    #allocation2 [shape = 'u8[8192]{0}', space=vmem, size = 0x2000, scoped, tag = 'input window, operand 0']
    #allocation3 [shape = 's32[2]{0}', space=sflag, size = 0x8, scoped, tag = 'scoped memory for telepath_forward.31']
    #allocation4 [shape = 's32[2]{0}', space=sflag, size = 0x8, scoped, tag = 'scoped memory for telepath_forward.31']
    #allocation5 [shape = 'u8[32768]{0}', space=vmem, size = 0x8000, scoped, tag = 'input window, operand 1']
    #allocation6 [shape = 's32[2]{0}', space=sflag, size = 0x8, scoped, tag = 'scoped memory for telepath_forward.31']
    #allocation7 [shape = 'u8[32768]{0}', space=vmem, size = 0x8000, scoped, tag = 'input window, operand 2']
    #allocation8 [shape = 'u8[32768]{0}', space=vmem, size = 0x8000, scoped, tag = 'output window, operand 0']
    %8 = vsyncpa [#allocation3], 0
    %s9 = scalar_lea.sflag [#allocation3], 1
    %10 = vsyncpa %s9, 0
    %11 = vsyncpa [#allocation6], 0
    %s12 = scalar_lea.sflag [#allocation6], 1
    %13 = vsyncpa %s12, 0
    %14 = vsyncpa [#allocation4], 0
    %s15 = scalar_lea.sflag [#allocation4], 1
    %16 = vsyncpa %s15, 0
    loop: start=0, step=1, limit=6
    $region2: #{telepath_forward.31} parent=1 // loop_pre_header
      _
    $region3: #{telepath_forward.31} parent=1 // loop_header
      %s18 = sphi 0, %s22
      %p19 = scmp.ge.s32.totalorder %s18, 6
      %s25 = sphi 0, %s37
      %s26 = sphi 0, %s33
      %s27 = sphi 0, %s25
      %s28 = sphi 0, %s26
      %s29 = sphi 0, %s27
      %s30 = sphi 0, %s28
      %s42 = sphi 0, %s44
      %s45 = sphi 0, %s42
      %s46 = sphi 0, %s45
      %s62 = sphi 0, %s46
      %s68 = sphi 0, %s70
      %s71 = sphi 0, %s68
      %s72 = sphi 0, %s71
      %s88 = sphi 0, %s72
      %s94 = sphi 0, %s96
      %s97 = sphi 0, %s94
      %s98 = sphi 0, %s97
      %s114 = sphi 0, %s98
      %s122 = sphi 0, %s124
      %s125 = sphi 0, %s122
      %s126 = sphi 0, %s125
      %s142 = sphi 0, %s126
    $region4: #{telepath_forward.31} parent=1 // loop_header_branch
      %21 = sbr.rel (%p19) target = $region8
    $region5: #{telepath_forward.31} parent=1 // loop_body
      %s23 = ssub.s32 %s18, 1
      %s24 = ssub.s32 %s18, 2
      %s31 = sadd.s32 1, %s26
      %p32 = scmp.ge.s32.totalorder %s31, 2
      %s33 = scalar_select %p32, 0, %s31
      %s34 = sadd.s32 1, %s25
      %s35 = scalar_select %p32, %s34, %s25
      %p36 = scmp.ge.s32.totalorder %s35, 2
      %s37 = scalar_select %p36, 0, %s35
      %s38 = ssub.s32 %s25, %s37
      %s39 = ssub.s32 %s26, %s33
      %s40 = sor.u32 %s38, %s39
      %p41 = scmp.eq.s32.totalorder %s40, 0
      %s43 = sadd.s32 %s42, 1
      %s44 = scalar_select %p41, %s42, %s43
      %p47 = pneg %p41
      %p48 = scmp.eq.s32.totalorder %s18, 3
      %p49 = por %p47, %p48
      %p50 = scmp.ne.s32.totalorder %s42, %s45
      %p51 = scmp.eq.s32.totalorder %s18, 0
      %p52 = por %p50, %p51
      %p53 = scmp.ne.s32.totalorder %s42, %s45
      %p54 = scmp.eq.s32.totalorder %s23, 3
      %p55 = por %p53, %p54
      %p56 = scmp.ne.s32.totalorder %s45, %s46
      %p57 = scmp.eq.s32.totalorder %s23, 0
      %p58 = por %p56, %p57
      %p59 = scmp.ne.s32.totalorder %s45, %s46
      %p60 = scmp.eq.s32.totalorder %s24, 3
      %p61 = por %p59, %p60
      %p63 = scmp.ne.s32.totalorder %s46, %s62
      %p64 = scmp.eq.s32.totalorder %s24, 0
      %p65 = por %p63, %p64
      %s66 = ssub.s32 %s26, %s33
      %p67 = scmp.eq.s32.totalorder %s66, 0
      %s69 = sadd.s32 %s68, 1
      %s70 = scalar_select %p67, %s68, %s69
      %p73 = pneg %p67
      %p74 = scmp.eq.s32.totalorder %s18, 3
      %p75 = por %p73, %p74
      %p76 = scmp.ne.s32.totalorder %s68, %s71
      %p77 = scmp.eq.s32.totalorder %s18, 0
      %p78 = por %p76, %p77
      %p79 = scmp.ne.s32.totalorder %s68, %s71
      %p80 = scmp.eq.s32.totalorder %s23, 3
      %p81 = por %p79, %p80
      %p82 = scmp.ne.s32.totalorder %s71, %s72
      %p83 = scmp.eq.s32.totalorder %s23, 0
      %p84 = por %p82, %p83
      %p85 = scmp.ne.s32.totalorder %s71, %s72
      %p86 = scmp.eq.s32.totalorder %s24, 3
      %p87 = por %p85, %p86
      %p89 = scmp.ne.s32.totalorder %s72, %s88
      %p90 = scmp.eq.s32.totalorder %s24, 0
      %p91 = por %p89, %p90
      %s92 = ssub.s32 %s26, %s33
      %p93 = scmp.eq.s32.totalorder %s92, 0
      %s95 = sadd.s32 %s94, 1
      %s96 = scalar_select %p93, %s94, %s95
      %p99 = pneg %p93
      %p100 = scmp.eq.s32.totalorder %s18, 3
      %p101 = por %p99, %p100
      %p102 = scmp.ne.s32.totalorder %s94, %s97
      %p103 = scmp.eq.s32.totalorder %s18, 0
      %p104 = por %p102, %p103
      %p105 = scmp.ne.s32.totalorder %s94, %s97
      %p106 = scmp.eq.s32.totalorder %s23, 3
      %p107 = por %p105, %p106
      %p108 = scmp.ne.s32.totalorder %s97, %s98
      %p109 = scmp.eq.s32.totalorder %s23, 0
      %p110 = por %p108, %p109
      %p111 = scmp.ne.s32.totalorder %s97, %s98
      %p112 = scmp.eq.s32.totalorder %s24, 3
      %p113 = por %p111, %p112
      %p115 = scmp.ne.s32.totalorder %s98, %s114
      %p116 = scmp.eq.s32.totalorder %s24, 0
      %p117 = por %p115, %p116
      %s118 = ssub.s32 %s25, %s37
      %s119 = ssub.s32 %s26, %s33
      %s120 = sor.u32 %s118, %s119
      %p121 = scmp.eq.s32.totalorder %s120, 0
      %s123 = sadd.s32 %s122, 1
      %s124 = scalar_select %p121, %s122, %s123
      %p127 = pneg %p121
      %p128 = scmp.eq.s32.totalorder %s18, 3
      %p129 = por %p127, %p128
      %p130 = scmp.ne.s32.totalorder %s122, %s125
      %p131 = scmp.eq.s32.totalorder %s18, 0
      %p132 = por %p130, %p131
      %p133 = scmp.ne.s32.totalorder %s122, %s125
      %p134 = scmp.eq.s32.totalorder %s23, 3
      %p135 = por %p133, %p134
      %p136 = scmp.ne.s32.totalorder %s125, %s126
      %p137 = scmp.eq.s32.totalorder %s23, 0
      %p138 = por %p136, %p137
      %p139 = scmp.ne.s32.totalorder %s125, %s126
      %p140 = scmp.eq.s32.totalorder %s24, 3
      %p141 = por %p139, %p140
      %p143 = scmp.ne.s32.totalorder %s126, %s142
      %p144 = scmp.eq.s32.totalorder %s24, 0
      %p145 = por %p143, %p144
      %p146 = scmp.le.s32.totalorder 1, %s18
      %p147 = scmp.lt.s32.totalorder %s18, 5
      %p148 = pnand %p146, %p147
      %p149 = pneg %p148
      // Predicated region
      $region9: #{telepath_forward.31} parent=5 // pred_check
        _
      $region10: #{telepath_forward.31} parent=5 // pred_check_branch
        %151 = sbr.rel (%p148) target = $region12
      $region11: #{telepath_forward.31} parent=5 // pred_region
        %s152 = ssub.s32 %s18, 1
      $region12: #{telepath_forward.31} parent=5 // pred_fallthru
        _
      %p153 = scmp.lt.s32.totalorder %s18, 4
      // Predicated region
      $region13: #{telepath_forward.31} parent=5 // pred_check
        %p154 = pneg %p153
      $region14: #{telepath_forward.31} parent=5 // pred_check_branch
        %156 = sbr.rel (%p154) target = $region16
      $region15: #{telepath_forward.31} parent=5 // pred_region
        // Predicated region
        $region17: #{telepath_forward.31} parent=15 // pred_check
          %p157 = pneg %p52
        $region18: #{telepath_forward.31} parent=15 // pred_check_branch
          %159 = sbr.rel (%p157) target = $region20
        $region19: #{telepath_forward.31} parent=15 // pred_region
          %s160 = sand.u32 %s42, 1
          %s161 = scalar_lea.sflag [#allocation3], %s160
          %s162 = sand.u32 %s42, 1
          %s163 = smul.addr %s162, 8
          %s164 = scalar_lea.vmem [#allocation2], %s163
          %s166 = ssub.s32 128, 128
          %167 = vsyncadd %s161, %s166
          %s168 = smul.addr %s25, 2
          %s169 = sadd.s32 %s26, %s168
          %s170 = smul.addr %s169, 128
          %s171 = scalar_lea.hbm %s0, %s170
          %s173 = sshll.u32 %s164, 4
          %s174 = int_to_ptr.vmem [resolvable:$true] %s173
          %176 = dma.hbm_to_vmem [thread:$0]  %s171, 128, %s174, %s161
        $region20: #{telepath_forward.31} parent=15 // pred_fallthru
          _
        // Predicated region
        $region21: #{telepath_forward.31} parent=15 // pred_check
          %p177 = pneg %p78
        $region22: #{telepath_forward.31} parent=15 // pred_check_branch
          %179 = sbr.rel (%p177) target = $region24
        $region23: #{telepath_forward.31} parent=15 // pred_region
          %s180 = sand.u32 %s18, 1
          %s181 = scalar_lea.sflag [#allocation6], %s180
          %s182 = sand.u32 %s68, 1
          %s183 = smul.addr %s182, 32
          %s184 = scalar_lea.vmem [#allocation5], %s183
          %s186 = ssub.s32 512, 512
          %187 = vsyncadd %s181, %s186
          %s188 = smul.addr %s26, 4
          %s189 = smul.addr %s188, 128
          %s190 = scalar_lea.hbm %s1, %s189
          %s191 = sshll.u32 %s184, 4
          %s192 = int_to_ptr.vmem [resolvable:$true] %s191
          %197 = dma.hbm_to_vmem [thread:$0]  %s190, 512, %s192, %s181, 128, 128, 8
        $region24: #{telepath_forward.31} parent=15 // pred_fallthru
          _
        // Predicated region
        $region25: #{telepath_forward.31} parent=15 // pred_check
          %p198 = pneg %p104
        $region26: #{telepath_forward.31} parent=15 // pred_check_branch
          %200 = sbr.rel (%p198) target = $region28
        $region27: #{telepath_forward.31} parent=15 // pred_region
          %s201 = sand.u32 %s18, 1
          %s202 = scalar_lea.sflag [#allocation6], %s201
          %s203 = sand.u32 %s94, 1
          %s204 = smul.addr %s203, 32
          %s205 = scalar_lea.vmem [#allocation7], %s204
          %s207 = ssub.s32 512, 512
          %208 = vsyncadd %s202, %s207
          %s209 = smul.addr %s26, 4
          %s210 = smul.addr %s209, 128
          %s211 = scalar_lea.hbm %s2, %s210
          %s212 = sshll.u32 %s205, 4
          %s213 = int_to_ptr.vmem [resolvable:$true] %s212
          %218 = dma.hbm_to_vmem [thread:$0]  %s211, 512, %s213, %s202, 128, 128, 8
        $region28: #{telepath_forward.31} parent=15 // pred_fallthru
          _
      $region16: #{telepath_forward.31} parent=5 // pred_fallthru
        _
      %p219 = scmp.le.s32.totalorder 1, %s18
      %p220 = scmp.lt.s32.totalorder %s18, 5
      %p221 = pnand %p219, %p220
      %p222 = pneg %p221
      // Predicated region
      $region29: #{telepath_forward.31} parent=5 // pred_check
        _
      $region30: #{telepath_forward.31} parent=5 // pred_check_branch
        %224 = sbr.rel (%p221) target = $region32
      $region31: #{telepath_forward.31} parent=5 // pred_region
        %s225 = ssub.s32 %s18, 1
        %s226 = sand.u32 %s45, 1
        %s227 = scalar_lea.sflag [#allocation3], %s226
        %s228 = sand.u32 %s45, 1
        %s229 = smul.addr %s228, 8
        %s230 = scalar_lea.vmem [#allocation2], %s229
        // Predicated region
        $region33: #{telepath_forward.31} parent=31 // pred_check
          %p231 = pneg %p58
        $region34: #{telepath_forward.31} parent=31 // pred_check_branch
          %233 = sbr.rel (%p231) target = $region36
        $region35: #{telepath_forward.31} parent=31 // pred_region
          %234 = dma.done %s227, 128
        $region36: #{telepath_forward.31} parent=31 // pred_fallthru
          _
        %s235 = sand.u32 %s23, 1
        %s236 = scalar_lea.sflag [#allocation6], %s235
        %s237 = sand.u32 %s71, 1
        %s238 = smul.addr %s237, 32
        %s239 = scalar_lea.vmem [#allocation5], %s238
        // Predicated region
        $region37: #{telepath_forward.31} parent=31 // pred_check
          %p240 = pneg %p84
        $region38: #{telepath_forward.31} parent=31 // pred_check_branch
          %242 = sbr.rel (%p240) target = $region40
        $region39: #{telepath_forward.31} parent=31 // pred_region
          %243 = dma.done %s236, 512
        $region40: #{telepath_forward.31} parent=31 // pred_fallthru
          _
        %s244 = sand.u32 %s23, 1
        %s245 = scalar_lea.sflag [#allocation6], %s244
        %s246 = sand.u32 %s97, 1
        %s247 = smul.addr %s246, 32
        %s248 = scalar_lea.vmem [#allocation7], %s247
        // Predicated region
        $region41: #{telepath_forward.31} parent=31 // pred_check
          %p249 = pneg %p110
        $region42: #{telepath_forward.31} parent=31 // pred_check_branch
          %251 = sbr.rel (%p249) target = $region44
        $region43: #{telepath_forward.31} parent=31 // pred_region
          %252 = dma.done %s245, 512
        $region44: #{telepath_forward.31} parent=31 // pred_fallthru
          _
        %s253 = sand.u32 %s45, 1
        %s254 = scalar_lea.sflag [#allocation3], %s253
        %s255 = sand.u32 %s45, 1
        %s256 = smul.addr %s255, 8
        %s257 = scalar_lea.vmem [#allocation2], %s256
        %p258 = pneg %p58
        %p259 = pneg %p55
        %s260 = sand.u32 %s23, 1
        %s261 = scalar_lea.sflag [#allocation6], %s260
        %s262 = sand.u32 %s71, 1
        %s263 = smul.addr %s262, 32
        %s264 = scalar_lea.vmem [#allocation5], %s263
        %p265 = pneg %p84
        %p266 = pneg %p81
        %s267 = sand.u32 %s23, 1
        %s268 = scalar_lea.sflag [#allocation6], %s267
        %s269 = sand.u32 %s97, 1
        %s270 = smul.addr %s269, 32
        %s271 = scalar_lea.vmem [#allocation7], %s270
        %p272 = pneg %p110
        %p273 = pneg %p107
        %p274 = pneg %p138
        %p275 = pneg %p135
        %s276 = sand.u32 %s125, 1
        %s277 = scalar_lea.sflag [#allocation4], %s276
        %s278 = sand.u32 %s125, 1
        %s279 = smul.addr %s278, 32
        %s280 = scalar_lea.vmem [#allocation8], %s279
        %v282 = vld [vmem:[%s230] sm:$0xff]
        %284 = vrot.lane.b32.xlu0 %v282, 127
        %v285 = vpop.permute.xlu0 %284
        %287 = vrot.lane.b32.xlu0 %v282, 126
        %v288 = vpop.permute.xlu0 %287
        %v290 = vld [vmem:[%s239] sm:$0xff]
        %v291 = vld [vmem:[%s239 + $0x8] sm:$0xff]
        %v292 = vld [vmem:[%s239 + $0x10] sm:$0xff]
        %v293 = vld [vmem:[%s239 + $0x18] sm:$0xff]
        %v294 = vpack.c.bf16 %v291, %v290
        %v295 = vpack.c.bf16 %v293, %v292
        %v296 = vpack.c.bf16 %v285, %v282
        %v297 = vpack.c.bf16 %v288, %v288
        %v298 = vld [vmem:[%s248] sm:$0xff]
        %v299 = vld [vmem:[%s248 + $0x8] sm:$0xff]
        %v300 = vld [vmem:[%s248 + $0x10] sm:$0xff]
        %v301 = vld [vmem:[%s248 + $0x18] sm:$0xff]
        %303 = vset.pattern.permute.xlu0 0
        %304 = vperm.xlu0 %303, %v298
        %v305 = vpop.permute.xlu0 %304
        %308 = vset.pattern.permute.xlu0 0
        %309 = vperm.xlu0 %308, %v299
        %v310 = vpop.permute.xlu0 %309
        %313 = vset.pattern.permute.xlu0 0
        %314 = vperm.xlu0 %313, %v300
        %v315 = vpop.permute.xlu0 %314
        %318 = vset.pattern.permute.xlu0 0
        %319 = vperm.xlu0 %318, %v301
        %v320 = vpop.permute.xlu0 %319
        %vm322 = vcmask 195584
        %v324 = vsel %vm322, %v294, 0
        %v327 = vsel %vm322, %v295, 0
        %vm329 = vcmask 1043456
        %v331 = vsel %vm329, %v297, 0
        %333 = vmatprep.subr.bf16.mxu0 0
        %334 = vmatpush1.bf16.msra.mxu0 %v296
        %335 = vmatprep.subr.bf16.mxu0 0
        %336 = vmatpush1.bf16.msra.mxu0 %v331
        %337 = vmatprep.subr.bf16.mxu0 0
        %338 = vmatpush1.bf16.msra.mxu0 0
        %339 = vmatprep.subr.bf16.mxu0 0
        %340 = vmatpush1.bf16.msra.mxu0 0
        %341 = vmatprep.subr.bf16.mxu0 0
        %342 = vmatpush1.bf16.msra.mxu0 0
        %343 = vmatprep.subr.bf16.mxu0 0
        %344 = vmatpush1.bf16.msra.mxu0 0
        %345 = vmatprep.subr.bf16.mxu0 0
        %346 = vmatpush1.bf16.msra.mxu0 0
        %347 = vmatprep.subr.bf16.mxu0 0
        %348 = vmatpush1.bf16.msra.mxu0 0
        %349 = vmatprep.subr.bf16.mxu0 0
        %350 = vmatpush1.bf16.msra.mxu0 0
        %351 = vmatprep.subr.bf16.mxu0 0
        %352 = vmatpush1.bf16.msra.mxu0 0
        %353 = vmatprep.subr.bf16.mxu0 0
        %354 = vmatpush1.bf16.msra.mxu0 0
        %355 = vmatprep.subr.bf16.mxu0 0
        %356 = vmatpush1.bf16.msra.mxu0 0
        %357 = vmatprep.subr.bf16.mxu0 0
        %358 = vmatpush1.bf16.msra.mxu0 0
        %359 = vmatprep.subr.bf16.mxu0 0
        %360 = vmatpush1.bf16.msra.mxu0 0
        %361 = vmatprep.subr.bf16.mxu0 0
        %362 = vmatpush1.bf16.msra.mxu0 0
        %363 = vmatprep.subr.bf16.mxu0 0
        %364 = vmatpush1.bf16.msra.mxu0 0
        %365 = vmatprep.mubr.bf16.mxu0 0
        %366 = vmatmul.mubr.bf16.gmra.mrb[0].mxu0 %v324
        %v367 = vpop.f32.mrb[0].mxu0
        %v368 = vadd.f32 %v305, %v367
        %v369 = vpop.f32.mrb[0].mxu0
        %v370 = vpop.f32.mrb[0].mxu0
        %v371 = vadd.f32 %v310, %v370
        %v372 = vpop.f32.mrb[0].mxu0
        %373 = vmatprep.mubr.bf16.mxu0 0
        %374 = vmatmul.mubr.bf16.gmra.mrb[0].mxu0 %v327
        %v375 = vpop.f32.mrb[0].mxu0
        %v376 = vadd.f32 %v315, %v375
        %v377 = vpop.f32.mrb[0].mxu0
        %v378 = vpop.f32.mrb[0].mxu0
        %v379 = vadd.f32 %v320, %v378
        %v380 = vpop.f32.mrb[0].mxu0
        %381 = vdwg.mxu0
        %v382 = vmul.f32 %v368, 0.5
        %v383 = vmul.f32 %v371, 0.5
        %v384 = vmul.f32 %v376, 0.5
        %v385 = vmul.f32 %v379, 0.5
        %v386 = vmul.f32 %v368, 0.044715
        %v387 = vmul.f32 %v371, 0.044715
        %v388 = vmul.f32 %v376, 0.044715
        %v389 = vmul.f32 %v379, 0.044715
        %v390 = vmul.f32 %v386, %v368
        %v391 = vmul.f32 %v387, %v371
        %v392 = vmul.f32 %v388, %v376
        %v393 = vmul.f32 %v389, %v379
        %v394 = vmul.f32 %v390, %v368
        %v395 = vmul.f32 %v391, %v371
        %v396 = vmul.f32 %v392, %v376
        %v397 = vmul.f32 %v393, %v379
        %v398 = vadd.f32 %v368, %v394
        %v399 = vadd.f32 %v371, %v395
        %v400 = vadd.f32 %v376, %v396
        %v401 = vadd.f32 %v379, %v397
        %v402 = vmul.f32 %v398, 0.7978846
        %v403 = vmul.f32 %v399, 0.7978846
        %v404 = vmul.f32 %v400, 0.7978846
        %v405 = vmul.f32 %v401, 0.7978846
        %v406 = vtanh.pop %v402
        %v407 = vtanh.pop %v403
        %v408 = vtanh.pop %v404
        %v409 = vtanh.pop %v405
        %v410 = vadd.f32 %v406, 1.0
        %v411 = vadd.f32 %v407, 1.0
        %v412 = vadd.f32 %v408, 1.0
        %v413 = vadd.f32 %v409, 1.0
        %v414 = vmul.f32 %v382, %v410
        %v415 = vmul.f32 %v383, %v411
        %v416 = vmul.f32 %v384, %v412
        %v417 = vmul.f32 %v385, %v413
        %vm418 = vcmask 130048
        %419 = vst.msk [vmem:[%s280] sm:$0xff] %vm418, %v414
        %420 = vst.msk [vmem:[%s280 + $0x8] sm:$0xff] %vm418, %v415
        %421 = vst.msk [vmem:[%s280 + $0x10] sm:$0xff] %vm418, %v416
        %422 = vst.msk [vmem:[%s280 + $0x18] sm:$0xff] %vm418, %v417
        %s423 = sand.u32 %s125, 1
        %s424 = scalar_lea.sflag [#allocation4], %s423
        %s425 = sand.u32 %s125, 1
        %s426 = smul.addr %s425, 32
        %s427 = scalar_lea.vmem [#allocation8], %s426
        // Predicated region
        $region45: #{telepath_forward.31} parent=31 // pred_check
          %p428 = pneg %p135
        $region46: #{telepath_forward.31} parent=31 // pred_check_branch
          %430 = sbr.rel (%p428) target = $region48
        $region47: #{telepath_forward.31} parent=31 // pred_region
          %s432 = ssub.s32 512, 512
          %433 = vsyncadd %s424, %s432
          %s434 = smul.addr %s28, 4
          %s435 = smul.addr %s27, 8
          %s436 = sadd.s32 %s434, %s435
          %s437 = smul.addr %s436, 128
          %s438 = scalar_lea.hbm %s3, %s437
          %s439 = sshll.u32 %s427, 4
          %s440 = int_to_ptr.vmem [resolvable:$true] %s439
          %445 = dma.vmem_to_hbm [thread:$0]  %s440, 512, %s438, %s424, 128, 128, 8
        $region48: #{telepath_forward.31} parent=31 // pred_fallthru
          _
      $region32: #{telepath_forward.31} parent=5 // pred_fallthru
        _
      %p446 = scmp.le.s32.totalorder 2, %s18
      // Predicated region
      $region49: #{telepath_forward.31} parent=5 // pred_check
        %p447 = pneg %p446
      $region50: #{telepath_forward.31} parent=5 // pred_check_branch
        %449 = sbr.rel (%p447) target = $region52
      $region51: #{telepath_forward.31} parent=5 // pred_region
        %s450 = ssub.s32 %s18, 2
        // Predicated region
        $region53: #{telepath_forward.31} parent=51 // pred_check
          %p451 = pneg %p141
        $region54: #{telepath_forward.31} parent=51 // pred_check_branch
          %453 = sbr.rel (%p451) target = $region56
        $region55: #{telepath_forward.31} parent=51 // pred_region
          %s454 = sand.u32 %s126, 1
          %s455 = scalar_lea.sflag [#allocation4], %s454
          %s456 = sand.u32 %s126, 1
          %s457 = smul.addr %s456, 32
          %s458 = scalar_lea.vmem [#allocation8], %s457
          %459 = dma.done %s455, 512
        $region56: #{telepath_forward.31} parent=51 // pred_fallthru
          _
      $region52: #{telepath_forward.31} parent=5 // pred_fallthru
        _
    $region6: #{telepath_forward.31} parent=1 // loop_footer
      %s22 = sadd.s32 1, %s18
    $region7: #{telepath_forward.31} parent=1 // loop_footer_branch
      %17 = sbr.rel target = $region3
    $region8: #{telepath_forward.31} parent=1 // loop_exit
      _
    %460 = vsyncpa [#allocation3], 1
    %s461 = scalar_lea.sflag [#allocation3], 1
    %462 = vsyncpa %s461, 1
    %463 = vsyncpa [#allocation6], 1
    %s464 = scalar_lea.sflag [#allocation6], 1
    %465 = vsyncpa %s464, 1
    %466 = vsyncpa [#allocation4], 1
    %s467 = scalar_lea.sflag [#allocation4], 1
    %468 = vsyncpa %s467, 1

// kernel: telepath_forward.34
$region0: #{telepath_forward.34}
  #allocation0 [shape = 'u32[]', space=smem, size = 0x4, offset = 0x4, fixed_abs, tag = 'smem constant byte address 0x4 - core index']
  #allocation1 [shape = 'u32[144,128]{1,0:T(1,128)}', space=vmem, size = 0x12000, scoped, tag = 'internal scratch']
  %s0 = inlined_call_operand.hbm [shape: f32[2,16,96], index: 0, kind: input, shape index: {}]
  %s1 = inlined_call_operand.hbm [shape: f32[2,16,32], index: 1, kind: output, shape index: {}]
  %s2 = sld [smem:[#allocation0]]
  $region41: #{telepath_forward.34} parent=0
    _
  %s4 = ssub.s32 1, %s2
  %s5 = scalar_select 0, %s4, %s2
  $region1: #{telepath_forward.34} parent=0
    #allocation2 [shape = 'u8[16384]{0}', space=vmem, size = 0x4000, scoped, tag = 'input window, operand 0']
    #allocation3 [shape = 's32[2]{0}', space=sflag, size = 0x8, scoped, tag = 'scoped memory for telepath_forward.34']
    #allocation4 [shape = 's32[2]{0}', space=sflag, size = 0x8, scoped, tag = 'scoped memory for telepath_forward.34']
    #allocation5 [shape = 'u8[16384]{0}', space=vmem, size = 0x4000, scoped, tag = 'output window, operand 0']
    %6 = vsyncpa [#allocation3], 0
    %s7 = scalar_lea.sflag [#allocation3], 1
    %8 = vsyncpa %s7, 0
    %9 = vsyncpa [#allocation4], 0
    %s10 = scalar_lea.sflag [#allocation4], 1
    %11 = vsyncpa %s10, 0
    loop: start=0, step=1, limit=4
    $region2: #{telepath_forward.34} parent=1 // loop_pre_header
      _
    $region3: #{telepath_forward.34} parent=1 // loop_header
      %s13 = sphi 0, %s17
      %p14 = scmp.ge.s32.totalorder %s13, 4
      %s20 = sphi 0, %s32
      %s21 = sphi 0, %s28
      %s22 = sphi 0, %s20
      %s23 = sphi 0, %s21
      %s24 = sphi 0, %s22
      %s25 = sphi 0, %s23
      %s35 = sphi 0, %s37
      %s38 = sphi 0, %s35
      %s39 = sphi 0, %s38
      %s55 = sphi 0, %s39
      %s63 = sphi 0, %s65
      %s66 = sphi 0, %s63
      %s67 = sphi 0, %s66
      %s83 = sphi 0, %s67
    $region4: #{telepath_forward.34} parent=1 // loop_header_branch
      %16 = sbr.rel (%p14) target = $region8
    $region5: #{telepath_forward.34} parent=1 // loop_body
      %s18 = ssub.s32 %s13, 1
      %s19 = ssub.s32 %s13, 2
      %s26 = sadd.s32 1, %s21
      %p27 = scmp.ge.s32.totalorder %s26, 1
      %s28 = scalar_select %p27, 0, %s26
      %s29 = sadd.s32 1, %s20
      %s30 = scalar_select %p27, %s29, %s20
      %p31 = scmp.ge.s32.totalorder %s30, 2
      %s32 = scalar_select %p31, 0, %s30
      %s33 = ssub.s32 %s20, %s32
      %p34 = scmp.eq.s32.totalorder %s33, 0
      %s36 = sadd.s32 %s35, 1
      %s37 = scalar_select %p34, %s35, %s36
      %p40 = pneg %p34
      %p41 = scmp.eq.s32.totalorder %s13, 1
      %p42 = por %p40, %p41
      %p43 = scmp.ne.s32.totalorder %s35, %s38
      %p44 = scmp.eq.s32.totalorder %s13, 0
      %p45 = por %p43, %p44
      %p46 = scmp.ne.s32.totalorder %s35, %s38
      %p47 = scmp.eq.s32.totalorder %s18, 1
      %p48 = por %p46, %p47
      %p49 = scmp.ne.s32.totalorder %s38, %s39
      %p50 = scmp.eq.s32.totalorder %s18, 0
      %p51 = por %p49, %p50
      %p52 = scmp.ne.s32.totalorder %s38, %s39
      %p53 = scmp.eq.s32.totalorder %s19, 1
      %p54 = por %p52, %p53
      %p56 = scmp.ne.s32.totalorder %s39, %s55
      %p57 = scmp.eq.s32.totalorder %s19, 0
      %p58 = por %p56, %p57
      %s59 = ssub.s32 %s20, %s32
      %s60 = ssub.s32 %s21, %s28
      %s61 = sor.u32 %s59, %s60
      %p62 = scmp.eq.s32.totalorder %s61, 0
      %s64 = sadd.s32 %s63, 1
      %s65 = scalar_select %p62, %s63, %s64
      %p68 = pneg %p62
      %p69 = scmp.eq.s32.totalorder %s13, 1
      %p70 = por %p68, %p69
      %p71 = scmp.ne.s32.totalorder %s63, %s66
      %p72 = scmp.eq.s32.totalorder %s13, 0
      %p73 = por %p71, %p72
      %p74 = scmp.ne.s32.totalorder %s63, %s66
      %p75 = scmp.eq.s32.totalorder %s18, 1
      %p76 = por %p74, %p75
      %p77 = scmp.ne.s32.totalorder %s66, %s67
      %p78 = scmp.eq.s32.totalorder %s18, 0
      %p79 = por %p77, %p78
      %p80 = scmp.ne.s32.totalorder %s66, %s67
      %p81 = scmp.eq.s32.totalorder %s19, 1
      %p82 = por %p80, %p81
      %p84 = scmp.ne.s32.totalorder %s67, %s83
      %p85 = scmp.eq.s32.totalorder %s19, 0
      %p86 = por %p84, %p85
      %p87 = scmp.le.s32.totalorder 1, %s13
      %p88 = scmp.lt.s32.totalorder %s13, 3
      %p89 = pnand %p87, %p88
      %p90 = pneg %p89
      // Predicated region
      $region9: #{telepath_forward.34} parent=5 // pred_check
        _
      $region10: #{telepath_forward.34} parent=5 // pred_check_branch
        %92 = sbr.rel (%p89) target = $region12
      $region11: #{telepath_forward.34} parent=5 // pred_region
        %s93 = ssub.s32 %s13, 1
      $region12: #{telepath_forward.34} parent=5 // pred_fallthru
        _
      %p94 = scmp.lt.s32.totalorder %s13, 2
      // Predicated region
      $region13: #{telepath_forward.34} parent=5 // pred_check
        %p95 = pneg %p94
      $region14: #{telepath_forward.34} parent=5 // pred_check_branch
        %97 = sbr.rel (%p95) target = $region16
      $region15: #{telepath_forward.34} parent=5 // pred_region
        // Predicated region
        $region17: #{telepath_forward.34} parent=15 // pred_check
          %p98 = pneg %p45
        $region18: #{telepath_forward.34} parent=15 // pred_check_branch
          %100 = sbr.rel (%p98) target = $region20
        $region19: #{telepath_forward.34} parent=15 // pred_region
          %s101 = sand.u32 %s35, 1
          %s102 = scalar_lea.sflag [#allocation3], %s101
          %s103 = sand.u32 %s35, 1
          %s104 = smul.addr %s103, 16
          %s105 = scalar_lea.vmem [#allocation2], %s104
          %s107 = ssub.s32 256, 256
          %108 = vsyncadd %s102, %s107
          %s109 = smul.addr %s20, 2
          %s110 = smul.addr %s109, 128
          %s111 = scalar_lea.hbm %s0, %s110
          %s112 = sshll.u32 %s105, 4
          %s113 = int_to_ptr.vmem [resolvable:$true] %s112
          %118 = dma.hbm_to_vmem [thread:$0]  %s111, 256, %s113, %s102, 128, 128, 8
        $region20: #{telepath_forward.34} parent=15 // pred_fallthru
          _
      $region16: #{telepath_forward.34} parent=5 // pred_fallthru
        _
      %p119 = scmp.le.s32.totalorder 1, %s13
      %p120 = scmp.lt.s32.totalorder %s13, 3
      %p121 = pnand %p119, %p120
      %p122 = pneg %p121
      // Predicated region
      $region21: #{telepath_forward.34} parent=5 // pred_check
        _
      $region22: #{telepath_forward.34} parent=5 // pred_check_branch
        %124 = sbr.rel (%p121) target = $region24
      $region23: #{telepath_forward.34} parent=5 // pred_region
        %s125 = ssub.s32 %s13, 1
        %s126 = sand.u32 %s38, 1
        %s127 = scalar_lea.sflag [#allocation3], %s126
        %s128 = sand.u32 %s38, 1
        %s129 = smul.addr %s128, 16
        %s130 = scalar_lea.vmem [#allocation2], %s129
        // Predicated region
        $region25: #{telepath_forward.34} parent=23 // pred_check
          %p131 = pneg %p51
        $region26: #{telepath_forward.34} parent=23 // pred_check_branch
          %133 = sbr.rel (%p131) target = $region28
        $region27: #{telepath_forward.34} parent=23 // pred_region
          %134 = dma.done %s127, 256
        $region28: #{telepath_forward.34} parent=23 // pred_fallthru
          _
        %s135 = sand.u32 %s38, 1
        %s136 = scalar_lea.sflag [#allocation3], %s135
        %s137 = sand.u32 %s38, 1
        %s138 = smul.addr %s137, 16
        %s139 = scalar_lea.vmem [#allocation2], %s138
        %p140 = pneg %p51
        %p141 = pneg %p48
        %p142 = pneg %p79
        %p143 = pneg %p76
        %s144 = sand.u32 %s66, 1
        %s145 = scalar_lea.sflag [#allocation4], %s144
        %s146 = sand.u32 %s66, 1
        %s147 = smul.addr %s146, 16
        %s148 = scalar_lea.vmem [#allocation5], %s147
        %s149 = smul.u32 2, %s23
        %v151 = vld [vmem:[%s130] sm:$0xff]
        %v152 = vld [vmem:[%s130 + $0x8] sm:$0xff]
        %v153 = vmul.f32 %v151, 0.35355338
        %v154 = vmul.f32 %v152, 0.35355338
        %v155 = vpack.c.bf16 %v154, %v153
        %v156 = vpack.c.bf16 %v152, %v151
        %158 = vrot.lane.b32.xlu0 %v156, 96
        %v159 = vpop.permute.xlu0 %158
        %vm160 = vcmask 64512
        %v162 = vsel %vm160, %v155, 0
        %v165 = vsel %vm160, %v159, 0
        %167 = vmatprep.subr.bf16.mxu0 0
        %168 = vmatpush1.bf16.xpose.msra.mxu0 %v165
        %169 = vmatprep.subr.bf16.mxu0 0
        %170 = vmatpush1.bf16.xpose.msra.mxu0 0
        %171 = vmatprep.subr.bf16.mxu0 0
        %172 = vmatpush1.bf16.xpose.msra.mxu0 0
        %173 = vmatprep.subr.bf16.mxu0 0
        %174 = vmatpush1.bf16.xpose.msra.mxu0 0
        %175 = vmatprep.subr.bf16.mxu0 0
        %176 = vmatpush1.bf16.xpose.msra.mxu0 0
        %177 = vmatprep.subr.bf16.mxu0 0
        %178 = vmatpush1.bf16.xpose.msra.mxu0 0
        %179 = vmatprep.subr.bf16.mxu0 0
        %180 = vmatpush1.bf16.xpose.msra.mxu0 0
        %181 = vmatprep.subr.bf16.mxu0 0
        %182 = vmatpush1.bf16.xpose.msra.mxu0 0
        %183 = vmatprep.subr.bf16.mxu0 0
        %184 = vmatpush1.bf16.xpose.msra.mxu0 0
        %185 = vmatprep.subr.bf16.mxu0 0
        %186 = vmatpush1.bf16.xpose.msra.mxu0 0
        %187 = vmatprep.subr.bf16.mxu0 0
        %188 = vmatpush1.bf16.xpose.msra.mxu0 0
        %189 = vmatprep.subr.bf16.mxu0 0
        %190 = vmatpush1.bf16.xpose.msra.mxu0 0
        %191 = vmatprep.subr.bf16.mxu0 0
        %192 = vmatpush1.bf16.xpose.msra.mxu0 0
        %193 = vmatprep.subr.bf16.mxu0 0
        %194 = vmatpush1.bf16.xpose.msra.mxu0 0
        %195 = vmatprep.subr.bf16.mxu0 0
        %196 = vmatpush1.bf16.xpose.msra.mxu0 0
        %197 = vmatprep.subr.bf16.mxu0 0
        %198 = vmatpush1.bf16.xpose.msra.mxu0 0
        %199 = vmatprep.mubr.bf16.mxu0 0
        %200 = vmatmul.mubr.bf16.gmra.mrb[0].mxu0 %v162
        %v201 = vpop.f32.mrb[0].mxu0
        %v202 = vadd.f32 0.0, %v201
        %v203 = vpop.f32.mrb[0].mxu0
        %v204 = vpop.f32.mrb[0].mxu0
        %v205 = vadd.f32 0.0, %v204
        %v206 = vpop.f32.mrb[0].mxu0
        %207 = vdwg.mxu0
        %vm208 = vcmask 130048
        %v209 = vsel %vm208, %v202, -inf
        %210 = vmax.xlane.f32.xlu0 %v209
        %v211 = vpop.xlane.xlu0 %210
        %v212 = vsel %vm208, %v205, -inf
        %213 = vmax.xlane.f32.xlu0 %v212
        %v214 = vpop.xlane.xlu0 %213
        %v215 = vsub.f32 %v202, %v211
        %v216 = vsub.f32 %v205, %v214
        %v217 = vmul.f32 %v215, 1.442695
        %v218 = vpow.pop %v217
        %v219 = vmul.f32 %v216, 1.442695
        %v220 = vpow.pop %v219
        %v221 = vsel %vm208, %v218, 0.0
        %222 = vadd.xlane.f32.xlu0 %v221
        %v223 = vpop.xlane.xlu0 %222
        %v224 = vsel %vm208, %v220, 0.0
        %225 = vadd.xlane.f32.xlu0 %v224
        %v226 = vpop.xlane.xlu0 %225
        %v227 = vpack.c.bf16 %v220, %v218
        %228 = vrot.lane.b32.xlu0 %v156, 64
        %v229 = vpop.permute.xlu0 %228
        %v232 = vsel %vm208, %v227, 0
        %234 = vmatprep.subr.bf16.mxu0 0
        %235 = vmatpush1.bf16.msra.mxu0 %v229
        %236 = vmatprep.subr.bf16.mxu0 0
        %237 = vmatpush1.bf16.msra.mxu0 0
        %238 = vmatprep.subr.bf16.mxu0 0
        %239 = vmatpush1.bf16.msra.mxu0 0
        %240 = vmatprep.subr.bf16.mxu0 0
        %241 = vmatpush1.bf16.msra.mxu0 0
        %242 = vmatprep.subr.bf16.mxu0 0
        %243 = vmatpush1.bf16.msra.mxu0 0
        %244 = vmatprep.subr.bf16.mxu0 0
        %245 = vmatpush1.bf16.msra.mxu0 0
        %246 = vmatprep.subr.bf16.mxu0 0
        %247 = vmatpush1.bf16.msra.mxu0 0
        %248 = vmatprep.subr.bf16.mxu0 0
        %249 = vmatpush1.bf16.msra.mxu0 0
        %250 = vmatprep.subr.bf16.mxu0 0
        %251 = vmatpush1.bf16.msra.mxu0 0
        %252 = vmatprep.subr.bf16.mxu0 0
        %253 = vmatpush1.bf16.msra.mxu0 0
        %254 = vmatprep.subr.bf16.mxu0 0
        %255 = vmatpush1.bf16.msra.mxu0 0
        %256 = vmatprep.subr.bf16.mxu0 0
        %257 = vmatpush1.bf16.msra.mxu0 0
        %258 = vmatprep.subr.bf16.mxu0 0
        %259 = vmatpush1.bf16.msra.mxu0 0
        %260 = vmatprep.subr.bf16.mxu0 0
        %261 = vmatpush1.bf16.msra.mxu0 0
        %262 = vmatprep.subr.bf16.mxu0 0
        %263 = vmatpush1.bf16.msra.mxu0 0
        %264 = vmatprep.subr.bf16.mxu0 0
        %265 = vmatpush1.bf16.msra.mxu0 0
        %266 = vmatprep.mubr.bf16.mxu0 0
        %267 = vmatmul.mubr.bf16.gmra.mrb[0].mxu0 %v232
        %v268 = vpop.f32.mrb[0].mxu0
        %v269 = vadd.f32 0.0, %v268
        %v270 = vpop.f32.mrb[0].mxu0
        %v271 = vpop.f32.mrb[0].mxu0
        %v272 = vadd.f32 0.0, %v271
        %v273 = vpop.f32.mrb[0].mxu0
        %274 = vdwg.mxu0
        %v275 = vrcp.pop %v223
        %v276 = vrcp.pop %v226
        %v277 = vmul.f32 %v269, %v275
        %v278 = vmul.f32 %v272, %v276
        %280 = vrot.lane.b32.xlu0 %v155, 120
        %v281 = vpop.permute.xlu0 %280
        %282 = vrot.lane.b32.xlu0 %v156, 88
        %v283 = vpop.permute.xlu0 %282
        %v285 = vsel %vm160, %v281, 0
        %v288 = vsel %vm160, %v283, 0
        %290 = vmatprep.subr.bf16.mxu0 0
        %291 = vmatpush1.bf16.xpose.msra.mxu0 %v288
        %292 = vmatprep.subr.bf16.mxu0 0
        %293 = vmatpush1.bf16.xpose.msra.mxu0 0
        %294 = vmatprep.subr.bf16.mxu0 0
        %295 = vmatpush1.bf16.xpose.msra.mxu0 0
        %296 = vmatprep.subr.bf16.mxu0 0
        %297 = vmatpush1.bf16.xpose.msra.mxu0 0
        %298 = vmatprep.subr.bf16.mxu0 0
        %299 = vmatpush1.bf16.xpose.msra.mxu0 0
        %300 = vmatprep.subr.bf16.mxu0 0
        %301 = vmatpush1.bf16.xpose.msra.mxu0 0
        %302 = vmatprep.subr.bf16.mxu0 0
        %303 = vmatpush1.bf16.xpose.msra.mxu0 0
        %304 = vmatprep.subr.bf16.mxu0 0
        %305 = vmatpush1.bf16.xpose.msra.mxu0 0
        %306 = vmatprep.subr.bf16.mxu0 0
        %307 = vmatpush1.bf16.xpose.msra.mxu0 0
        %308 = vmatprep.subr.bf16.mxu0 0
        %309 = vmatpush1.bf16.xpose.msra.mxu0 0
        %310 = vmatprep.subr.bf16.mxu0 0
        %311 = vmatpush1.bf16.xpose.msra.mxu0 0
        %312 = vmatprep.subr.bf16.mxu0 0
        %313 = vmatpush1.bf16.xpose.msra.mxu0 0
        %314 = vmatprep.subr.bf16.mxu0 0
        %315 = vmatpush1.bf16.xpose.msra.mxu0 0
        %316 = vmatprep.subr.bf16.mxu0 0
        %317 = vmatpush1.bf16.xpose.msra.mxu0 0
        %318 = vmatprep.subr.bf16.mxu0 0
        %319 = vmatpush1.bf16.xpose.msra.mxu0 0
        %320 = vmatprep.subr.bf16.mxu0 0
        %321 = vmatpush1.bf16.xpose.msra.mxu0 0
        %322 = vmatprep.mubr.bf16.mxu0 0
        %323 = vmatmul.mubr.bf16.gmra.mrb[0].mxu0 %v285
        %v324 = vpop.f32.mrb[0].mxu0
        %v325 = vadd.f32 0.0, %v324
        %v326 = vpop.f32.mrb[0].mxu0
        %v327 = vpop.f32.mrb[0].mxu0
        %v328 = vadd.f32 0.0, %v327
        %v329 = vpop.f32.mrb[0].mxu0
        %330 = vdwg.mxu0
        %v331 = vsel %vm208, %v325, -inf
        %332 = vmax.xlane.f32.xlu0 %v331
        %v333 = vpop.xlane.xlu0 %332
        %v334 = vsel %vm208, %v328, -inf
        %335 = vmax.xlane.f32.xlu0 %v334
        %v336 = vpop.xlane.xlu0 %335
        %v337 = vsub.f32 %v325, %v333
        %v338 = vsub.f32 %v328, %v336
        %v339 = vmul.f32 %v337, 1.442695
        %v340 = vpow.pop %v339
        %v341 = vmul.f32 %v338, 1.442695
        %v342 = vpow.pop %v341
        %v343 = vsel %vm208, %v340, 0.0
        %344 = vadd.xlane.f32.xlu0 %v343
        %v345 = vpop.xlane.xlu0 %344
        %v346 = vsel %vm208, %v342, 0.0
        %347 = vadd.xlane.f32.xlu0 %v346
        %v348 = vpop.xlane.xlu0 %347
        %v349 = vpack.c.bf16 %v342, %v340
        %350 = vrot.lane.b32.xlu0 %v156, 56
        %v351 = vpop.permute.xlu0 %350
        %v354 = vsel %vm208, %v349, 0
        %356 = vmatprep.subr.bf16.mxu0 0
        %357 = vmatpush1.bf16.msra.mxu0 %v351
        %358 = vmatprep.subr.bf16.mxu0 0
        %359 = vmatpush1.bf16.msra.mxu0 0
        %360 = vmatprep.subr.bf16.mxu0 0
        %361 = vmatpush1.bf16.msra.mxu0 0
        %362 = vmatprep.subr.bf16.mxu0 0
        %363 = vmatpush1.bf16.msra.mxu0 0
        %364 = vmatprep.subr.bf16.mxu0 0
        %365 = vmatpush1.bf16.msra.mxu0 0
        %366 = vmatprep.subr.bf16.mxu0 0
        %367 = vmatpush1.bf16.msra.mxu0 0
        %368 = vmatprep.subr.bf16.mxu0 0
        %369 = vmatpush1.bf16.msra.mxu0 0
        %370 = vmatprep.subr.bf16.mxu0 0
        %371 = vmatpush1.bf16.msra.mxu0 0
        %372 = vmatprep.subr.bf16.mxu0 0
        %373 = vmatpush1.bf16.msra.mxu0 0
        %374 = vmatprep.subr.bf16.mxu0 0
        %375 = vmatpush1.bf16.msra.mxu0 0
        %376 = vmatprep.subr.bf16.mxu0 0
        %377 = vmatpush1.bf16.msra.mxu0 0
        %378 = vmatprep.subr.bf16.mxu0 0
        %379 = vmatpush1.bf16.msra.mxu0 0
        %380 = vmatprep.subr.bf16.mxu0 0
        %381 = vmatpush1.bf16.msra.mxu0 0
        %382 = vmatprep.subr.bf16.mxu0 0
        %383 = vmatpush1.bf16.msra.mxu0 0
        %384 = vmatprep.subr.bf16.mxu0 0
        %385 = vmatpush1.bf16.msra.mxu0 0
        %386 = vmatprep.subr.bf16.mxu0 0
        %387 = vmatpush1.bf16.msra.mxu0 0
        %388 = vmatprep.mubr.bf16.mxu0 0
        %389 = vmatmul.mubr.bf16.gmra.mrb[0].mxu0 %v354
        %v390 = vpop.f32.mrb[0].mxu0
        %v391 = vadd.f32 0.0, %v390
        %v392 = vpop.f32.mrb[0].mxu0
        %v393 = vpop.f32.mrb[0].mxu0
        %v394 = vadd.f32 0.0, %v393
        %v395 = vpop.f32.mrb[0].mxu0
        %396 = vdwg.mxu0
        %v397 = vrcp.pop %v345
        %v398 = vrcp.pop %v348
        %v399 = vmul.f32 %v391, %v397
        %v400 = vmul.f32 %v394, %v398
        %401 = vrot.lane.b32.xlu0 %v155, 112
        %v402 = vpop.permute.xlu0 %401
        %403 = vrot.lane.b32.xlu0 %v156, 80
        %v404 = vpop.permute.xlu0 %403
        %v406 = vsel %vm160, %v402, 0
        %v409 = vsel %vm160, %v404, 0
        %411 = vmatprep.subr.bf16.mxu0 0
        %412 = vmatpush1.bf16.xpose.msra.mxu0 %v409
        %413 = vmatprep.subr.bf16.mxu0 0
        %414 = vmatpush1.bf16.xpose.msra.mxu0 0
        %415 = vmatprep.subr.bf16.mxu0 0
        %416 = vmatpush1.bf16.xpose.msra.mxu0 0
        %417 = vmatprep.subr.bf16.mxu0 0
        %418 = vmatpush1.bf16.xpose.msra.mxu0 0
        %419 = vmatprep.subr.bf16.mxu0 0
        %420 = vmatpush1.bf16.xpose.msra.mxu0 0
        %421 = vmatprep.subr.bf16.mxu0 0
        %422 = vmatpush1.bf16.xpose.msra.mxu0 0
        %423 = vmatprep.subr.bf16.mxu0 0
        %424 = vmatpush1.bf16.xpose.msra.mxu0 0
        %425 = vmatprep.subr.bf16.mxu0 0
        %426 = vmatpush1.bf16.xpose.msra.mxu0 0
        %427 = vmatprep.subr.bf16.mxu0 0
        %428 = vmatpush1.bf16.xpose.msra.mxu0 0
        %429 = vmatprep.subr.bf16.mxu0 0
        %430 = vmatpush1.bf16.xpose.msra.mxu0 0
        %431 = vmatprep.subr.bf16.mxu0 0
        %432 = vmatpush1.bf16.xpose.msra.mxu0 0
        %433 = vmatprep.subr.bf16.mxu0 0
        %434 = vmatpush1.bf16.xpose.msra.mxu0 0
        %435 = vmatprep.subr.bf16.mxu0 0
        %436 = vmatpush1.bf16.xpose.msra.mxu0 0
        %437 = vmatprep.subr.bf16.mxu0 0
        %438 = vmatpush1.bf16.xpose.msra.mxu0 0
        %439 = vmatprep.subr.bf16.mxu0 0
        %440 = vmatpush1.bf16.xpose.msra.mxu0 0
        %441 = vmatprep.subr.bf16.mxu0 0
        %442 = vmatpush1.bf16.xpose.msra.mxu0 0
        %443 = vmatprep.mubr.bf16.mxu0 0
        %444 = vmatmul.mubr.bf16.gmra.mrb[0].mxu0 %v406
        %v445 = vpop.f32.mrb[0].mxu0
        %v446 = vadd.f32 0.0, %v445
        %v447 = vpop.f32.mrb[0].mxu0
        %v448 = vpop.f32.mrb[0].mxu0
        %v449 = vadd.f32 0.0, %v448
        %v450 = vpop.f32.mrb[0].mxu0
        %451 = vdwg.mxu0
        %v452 = vsel %vm208, %v446, -inf
        %453 = vmax.xlane.f32.xlu0 %v452
        %v454 = vpop.xlane.xlu0 %453
        %v455 = vsel %vm208, %v449, -inf
        %456 = vmax.xlane.f32.xlu0 %v455
        %v457 = vpop.xlane.xlu0 %456
        %v458 = vsub.f32 %v446, %v454
        %v459 = vsub.f32 %v449, %v457
        %v460 = vmul.f32 %v458, 1.442695
        %v461 = vpow.pop %v460
        %v462 = vmul.f32 %v459, 1.442695
        %v463 = vpow.pop %v462
        %v464 = vsel %vm208, %v461, 0.0
        %465 = vadd.xlane.f32.xlu0 %v464
        %v466 = vpop.xlane.xlu0 %465
        %v467 = vsel %vm208, %v463, 0.0
        %468 = vadd.xlane.f32.xlu0 %v467
        %v469 = vpop.xlane.xlu0 %468
        %v470 = vpack.c.bf16 %v463, %v461
        %471 = vrot.lane.b32.xlu0 %v156, 48
        %v472 = vpop.permute.xlu0 %471
        %v475 = vsel %vm208, %v470, 0
        %477 = vmatprep.subr.bf16.mxu0 0
        %478 = vmatpush1.bf16.msra.mxu0 %v472
        %479 = vmatprep.subr.bf16.mxu0 0
        %480 = vmatpush1.bf16.msra.mxu0 0
        %481 = vmatprep.subr.bf16.mxu0 0
        %482 = vmatpush1.bf16.msra.mxu0 0
        %483 = vmatprep.subr.bf16.mxu0 0
        %484 = vmatpush1.bf16.msra.mxu0 0
        %485 = vmatprep.subr.bf16.mxu0 0
        %486 = vmatpush1.bf16.msra.mxu0 0
        %487 = vmatprep.subr.bf16.mxu0 0
        %488 = vmatpush1.bf16.msra.mxu0 0
        %489 = vmatprep.subr.bf16.mxu0 0
        %490 = vmatpush1.bf16.msra.mxu0 0
        %491 = vmatprep.subr.bf16.mxu0 0
        %492 = vmatpush1.bf16.msra.mxu0 0
        %493 = vmatprep.subr.bf16.mxu0 0
        %494 = vmatpush1.bf16.msra.mxu0 0
        %495 = vmatprep.subr.bf16.mxu0 0
        %496 = vmatpush1.bf16.msra.mxu0 0
        %497 = vmatprep.subr.bf16.mxu0 0
        %498 = vmatpush1.bf16.msra.mxu0 0
        %499 = vmatprep.subr.bf16.mxu0 0
        %500 = vmatpush1.bf16.msra.mxu0 0
        %501 = vmatprep.subr.bf16.mxu0 0
        %502 = vmatpush1.bf16.msra.mxu0 0
        %503 = vmatprep.subr.bf16.mxu0 0
        %504 = vmatpush1.bf16.msra.mxu0 0
        %505 = vmatprep.subr.bf16.mxu0 0
        %506 = vmatpush1.bf16.msra.mxu0 0
        %507 = vmatprep.subr.bf16.mxu0 0
        %508 = vmatpush1.bf16.msra.mxu0 0
        %509 = vmatprep.mubr.bf16.mxu0 0
        %510 = vmatmul.mubr.bf16.gmra.mrb[0].mxu0 %v475
        %v511 = vpop.f32.mrb[0].mxu0
        %v512 = vadd.f32 0.0, %v511
        %v513 = vpop.f32.mrb[0].mxu0
        %v514 = vpop.f32.mrb[0].mxu0
        %v515 = vadd.f32 0.0, %v514
        %v516 = vpop.f32.mrb[0].mxu0
        %517 = vdwg.mxu0
        %v518 = vrcp.pop %v466
        %v519 = vrcp.pop %v469
        %v520 = vmul.f32 %v512, %v518
        %v521 = vmul.f32 %v515, %v519
        %522 = vrot.lane.b32.xlu0 %v155, 104
        %v523 = vpop.permute.xlu0 %522
        %524 = vrot.lane.b32.xlu0 %v156, 72
        %v525 = vpop.permute.xlu0 %524
        %v527 = vsel %vm160, %v523, 0
        %v530 = vsel %vm160, %v525, 0
        %532 = vmatprep.subr.bf16.mxu0 0
        %533 = vmatpush1.bf16.xpose.msra.mxu0 %v530
        %534 = vmatprep.subr.bf16.mxu0 0
        %535 = vmatpush1.bf16.xpose.msra.mxu0 0
        %536 = vmatprep.subr.bf16.mxu0 0
        %537 = vmatpush1.bf16.xpose.msra.mxu0 0
        %538 = vmatprep.subr.bf16.mxu0 0
        %539 = vmatpush1.bf16.xpose.msra.mxu0 0
        %540 = vmatprep.subr.bf16.mxu0 0
        %541 = vmatpush1.bf16.xpose.msra.mxu0 0
        %542 = vmatprep.subr.bf16.mxu0 0
        %543 = vmatpush1.bf16.xpose.msra.mxu0 0
        %544 = vmatprep.subr.bf16.mxu0 0
        %545 = vmatpush1.bf16.xpose.msra.mxu0 0
        %546 = vmatprep.subr.bf16.mxu0 0
        %547 = vmatpush1.bf16.xpose.msra.mxu0 0
        %548 = vmatprep.subr.bf16.mxu0 0
        %549 = vmatpush1.bf16.xpose.msra.mxu0 0
        %550 = vmatprep.subr.bf16.mxu0 0
        %551 = vmatpush1.bf16.xpose.msra.mxu0 0
        %552 = vmatprep.subr.bf16.mxu0 0
        %553 = vmatpush1.bf16.xpose.msra.mxu0 0
        %554 = vmatprep.subr.bf16.mxu0 0
        %555 = vmatpush1.bf16.xpose.msra.mxu0 0
        %556 = vmatprep.subr.bf16.mxu0 0
        %557 = vmatpush1.bf16.xpose.msra.mxu0 0
        %558 = vmatprep.subr.bf16.mxu0 0
        %559 = vmatpush1.bf16.xpose.msra.mxu0 0
        %560 = vmatprep.subr.bf16.mxu0 0
        %561 = vmatpush1.bf16.xpose.msra.mxu0 0
        %562 = vmatprep.subr.bf16.mxu0 0
        %563 = vmatpush1.bf16.xpose.msra.mxu0 0
        %564 = vmatprep.mubr.bf16.mxu0 0
        %565 = vmatmul.mubr.bf16.gmra.mrb[0].mxu0 %v527
        %v566 = vpop.f32.mrb[0].mxu0
        %v567 = vadd.f32 0.0, %v566
        %v568 = vpop.f32.mrb[0].mxu0
        %v569 = vpop.f32.mrb[0].mxu0
        %v570 = vadd.f32 0.0, %v569
        %v571 = vpop.f32.mrb[0].mxu0
        %572 = vdwg.mxu0
        %v573 = vsel %vm208, %v567, -inf
        %574 = vmax.xlane.f32.xlu0 %v573
        %v575 = vpop.xlane.xlu0 %574
        %v576 = vsel %vm208, %v570, -inf
        %577 = vmax.xlane.f32.xlu0 %v576
        %v578 = vpop.xlane.xlu0 %577
        %v579 = vsub.f32 %v567, %v575
        %v580 = vsub.f32 %v570, %v578
        %v581 = vmul.f32 %v579, 1.442695
        %v582 = vpow.pop %v581
        %v583 = vmul.f32 %v580, 1.442695
        %v584 = vpow.pop %v583
        %v585 = vsel %vm208, %v582, 0.0
        %586 = vadd.xlane.f32.xlu0 %v585
        %v587 = vpop.xlane.xlu0 %586
        %v588 = vsel %vm208, %v584, 0.0
        %589 = vadd.xlane.f32.xlu0 %v588
        %v590 = vpop.xlane.xlu0 %589
        %v591 = vpack.c.bf16 %v584, %v582
        %592 = vrot.lane.b32.xlu0 %v156, 40
        %v593 = vpop.permute.xlu0 %592
        %v596 = vsel %vm208, %v591, 0
        %598 = vmatprep.subr.bf16.mxu0 0
        %599 = vmatpush1.bf16.msra.mxu0 %v593
        %600 = vmatprep.subr.bf16.mxu0 0
        %601 = vmatpush1.bf16.msra.mxu0 0
        %602 = vmatprep.subr.bf16.mxu0 0
        %603 = vmatpush1.bf16.msra.mxu0 0
        %604 = vmatprep.subr.bf16.mxu0 0
        %605 = vmatpush1.bf16.msra.mxu0 0
        %606 = vmatprep.subr.bf16.mxu0 0
        %607 = vmatpush1.bf16.msra.mxu0 0
        %608 = vmatprep.subr.bf16.mxu0 0
        %609 = vmatpush1.bf16.msra.mxu0 0
        %610 = vmatprep.subr.bf16.mxu0 0
        %611 = vmatpush1.bf16.msra.mxu0 0
        %612 = vmatprep.subr.bf16.mxu0 0
        %613 = vmatpush1.bf16.msra.mxu0 0
        %614 = vmatprep.subr.bf16.mxu0 0
        %615 = vmatpush1.bf16.msra.mxu0 0
        %616 = vmatprep.subr.bf16.mxu0 0
        %617 = vmatpush1.bf16.msra.mxu0 0
        %618 = vmatprep.subr.bf16.mxu0 0
        %619 = vmatpush1.bf16.msra.mxu0 0
        %620 = vmatprep.subr.bf16.mxu0 0
        %621 = vmatpush1.bf16.msra.mxu0 0
        %622 = vmatprep.subr.bf16.mxu0 0
        %623 = vmatpush1.bf16.msra.mxu0 0
        %624 = vmatprep.subr.bf16.mxu0 0
        %625 = vmatpush1.bf16.msra.mxu0 0
        %626 = vmatprep.subr.bf16.mxu0 0
        %627 = vmatpush1.bf16.msra.mxu0 0
        %628 = vmatprep.subr.bf16.mxu0 0
        %629 = vmatpush1.bf16.msra.mxu0 0
        %630 = vmatprep.mubr.bf16.mxu0 0
        %631 = vmatmul.mubr.bf16.gmra.mrb[0].mxu0 %v596
        %v632 = vpop.f32.mrb[0].mxu0
        %v633 = vadd.f32 0.0, %v632
        %v634 = vpop.f32.mrb[0].mxu0
        %v635 = vpop.f32.mrb[0].mxu0
        %v636 = vadd.f32 0.0, %v635
        %v637 = vpop.f32.mrb[0].mxu0
        %638 = vdwg.mxu0
        %v639 = vrcp.pop %v587
        %v640 = vrcp.pop %v590
        %v641 = vmul.f32 %v633, %v639
        %v642 = vmul.f32 %v636, %v640
        %645 = vrot.lane.b32.xlu0 %v399, 8
        %v646 = vpop.permute.xlu0 %645
        %647 = vrot.lane.b32.xlu0 %v400, 8
        %v648 = vpop.permute.xlu0 %647
        %653 = vrot.lane.b32.xlu0 %v520, 16
        %v654 = vpop.permute.xlu0 %653
        %655 = vrot.lane.b32.xlu0 %v521, 16
        %v656 = vpop.permute.xlu0 %655
        %661 = vrot.lane.b32.xlu0 %v641, 24
        %v662 = vpop.permute.xlu0 %661
        %663 = vrot.lane.b32.xlu0 %v642, 24
        %v664 = vpop.permute.xlu0 %663
        %v667 = vsel %vm160, %v277, %v646
        %v668 = vsel %vm160, %v278, %v648
        %v669 = vsel %vm208, %v667, %v654
        %v670 = vsel %vm208, %v668, %v656
        %vm671 = vcmask 195584
        %v672 = vsel %vm671, %v669, %v662
        %v673 = vsel %vm671, %v670, %v664
        %vm674 = vcmask 261120
        %675 = vst.msk [vmem:[%s148] sm:$0xff] %vm674, %v672
        %676 = vst.msk [vmem:[%s148 + $0x8] sm:$0xff] %vm674, %v673
        %s677 = sand.u32 %s66, 1
        %s678 = scalar_lea.sflag [#allocation4], %s677
        %s679 = sand.u32 %s66, 1
        %s680 = smul.addr %s679, 16
        %s681 = scalar_lea.vmem [#allocation5], %s680
        // Predicated region
        $region29: #{telepath_forward.34} parent=23 // pred_check
          %p682 = pneg %p76
        $region30: #{telepath_forward.34} parent=23 // pred_check_branch
          %684 = sbr.rel (%p682) target = $region32
        $region31: #{telepath_forward.34} parent=23 // pred_region
          %s685 = smul.u32 2, %s23
          %s687 = ssub.s32 256, 256
          %688 = vsyncadd %s678, %s687
          %s689 = smul.addr %s22, 2
          %s690 = sadd.s32 %s685, %s689
          %s691 = smul.addr %s690, 128
          %s692 = scalar_lea.hbm %s1, %s691
          %s693 = sshll.u32 %s681, 4
          %s694 = int_to_ptr.vmem [resolvable:$true] %s693
          %699 = dma.vmem_to_hbm [thread:$0]  %s694, 256, %s692, %s678, 128, 128, 8
        $region32: #{telepath_forward.34} parent=23 // pred_fallthru
          _
      $region24: #{telepath_forward.34} parent=5 // pred_fallthru
        _
      %p700 = scmp.le.s32.totalorder 2, %s13
      // Predicated region
      $region33: #{telepath_forward.34} parent=5 // pred_check
        %p701 = pneg %p700
      $region34: #{telepath_forward.34} parent=5 // pred_check_branch
        %703 = sbr.rel (%p701) target = $region36
      $region35: #{telepath_forward.34} parent=5 // pred_region
        %s704 = ssub.s32 %s13, 2
        // Predicated region
        $region37: #{telepath_forward.34} parent=35 // pred_check
          %p705 = pneg %p82
        $region38: #{telepath_forward.34} parent=35 // pred_check_branch
          %707 = sbr.rel (%p705) target = $region40
        $region39: #{telepath_forward.34} parent=35 // pred_region
          %s708 = sand.u32 %s67, 1
          %s709 = scalar_lea.sflag [#allocation4], %s708
          %s710 = sand.u32 %s67, 1
          %s711 = smul.addr %s710, 16
          %s712 = scalar_lea.vmem [#allocation5], %s711
          %713 = dma.done %s709, 256
        $region40: #{telepath_forward.34} parent=35 // pred_fallthru
          _
      $region36: #{telepath_forward.34} parent=5 // pred_fallthru
        _
    $region6: #{telepath_forward.34} parent=1 // loop_footer
      %s17 = sadd.s32 1, %s13
    $region7: #{telepath_forward.34} parent=1 // loop_footer_branch
      %12 = sbr.rel target = $region3
    $region8: #{telepath_forward.34} parent=1 // loop_exit
      _
    %714 = vsyncpa [#allocation3], 1
    %s715 = scalar_lea.sflag [#allocation3], 1
    %716 = vsyncpa %s715, 1
    %717 = vsyncpa [#allocation4], 1
    %s718 = scalar_lea.sflag [#allocation4], 1
    %719 = vsyncpa %s718, 1

// kernel: telepath_forward.33
$region0: #{telepath_forward.33}
  #allocation0 [shape = 'u32[]', space=smem, size = 0x4, offset = 0x4, fixed_abs, tag = 'smem constant byte address 0x4 - core index']
  #allocation1 [shape = 'u32[144,128]{1,0:T(1,128)}', space=vmem, size = 0x12000, scoped, tag = 'internal scratch']
  %s0 = inlined_call_operand.hbm [shape: f32[32,32], index: 0, kind: input, shape index: {}]
  %s1 = inlined_call_operand.hbm [shape: f32[32,96], index: 1, kind: input, shape index: {}]
  %s2 = inlined_call_operand.hbm [shape: f32[1,96], index: 2, kind: input, shape index: {}]
  %s3 = inlined_call_operand.hbm [shape: f32[1,32], index: 3, kind: input, shape index: {}]
  %s4 = inlined_call_operand.hbm [shape: f32[1,32], index: 4, kind: input, shape index: {}]
  %s5 = inlined_call_operand.hbm [shape: f32[32,96], index: 5, kind: output, shape index: {}]
  %s6 = sld [smem:[#allocation0]]
  $region50: #{telepath_forward.33} parent=0
    _
  %s8 = ssub.s32 1, %s6
  %s9 = scalar_select 0, %s8, %s6
  $region1: #{telepath_forward.33} parent=0
    #allocation2 [shape = 'u8[16384]{0}', space=vmem, size = 0x4000, scoped, tag = 'input window, operand 0, single buffered']
    #allocation3 [shape = 's32[1]{0}', space=sflag, size = 0x4, scoped, tag = 'scoped memory for telepath_forward.33']
    #allocation4 [shape = 's32[1]{0}', space=sflag, size = 0x4, scoped, tag = 'scoped memory for telepath_forward.33']
    #allocation5 [shape = 'u8[16384]{0}', space=vmem, size = 0x4000, scoped, tag = 'input window, operand 1, single buffered']
    #allocation6 [shape = 's32[1]{0}', space=sflag, size = 0x4, scoped, tag = 'scoped memory for telepath_forward.33']
    #allocation7 [shape = 'u8[512]{0}', space=vmem, size = 0x400, scoped, tag = 'input window, operand 2, single buffered']
    #allocation8 [shape = 'u8[512]{0}', space=vmem, size = 0x400, scoped, tag = 'input window, operand 3, single buffered']
    #allocation9 [shape = 's32[1]{0}', space=sflag, size = 0x4, scoped, tag = 'scoped memory for telepath_forward.33']
    #allocation10 [shape = 'u8[512]{0}', space=vmem, size = 0x400, scoped, tag = 'input window, operand 4, single buffered']
    #allocation11 [shape = 'u8[16384]{0}', space=vmem, size = 0x4000, scoped, tag = 'output window, operand 0, single buffered']
    %10 = vsyncpa [#allocation3], 0
    %11 = vsyncpa [#allocation6], 0
    %12 = vsyncpa [#allocation9], 0
    %13 = vsyncpa [#allocation4], 0
    // Predicated region
    $region2: #{telepath_forward.33} parent=1 // pred_check
      _
    $region3: #{telepath_forward.33} parent=1 // pred_check_branch
      %15 = sbr.rel (0) target = $region5
    $region4: #{telepath_forward.33} parent=1 // pred_region
      %s17 = ssub.s32 512, 512
      %18 = vsyncadd [#allocation3], %s17
      %s19 = sshll.u32 [#allocation2], 4
      %s20 = int_to_ptr.vmem [resolvable:$true] %s19
      %25 = dma.hbm_to_vmem [thread:$0]  %s0, 512, %s20, [#allocation3], 128, 128, 8
    $region5: #{telepath_forward.33} parent=1 // pred_fallthru
      _
    // Predicated region
    $region6: #{telepath_forward.33} parent=1 // pred_check
      _
    $region7: #{telepath_forward.33} parent=1 // pred_check_branch
      %27 = sbr.rel (0) target = $region9
    $region8: #{telepath_forward.33} parent=1 // pred_region
      %s29 = ssub.s32 512, 512
      %30 = vsyncadd [#allocation6], %s29
      %s31 = sshll.u32 [#allocation5], 4
      %s32 = int_to_ptr.vmem [resolvable:$true] %s31
      %37 = dma.hbm_to_vmem [thread:$0]  %s1, 512, %s32, [#allocation6], 128, 128, 8
    $region9: #{telepath_forward.33} parent=1 // pred_fallthru
      _
    // Predicated region
    $region10: #{telepath_forward.33} parent=1 // pred_check
      _
    $region11: #{telepath_forward.33} parent=1 // pred_check_branch
      %39 = sbr.rel (0) target = $region13
    $region12: #{telepath_forward.33} parent=1 // pred_region
      %s41 = ssub.s32 16, 16
      %42 = vsyncadd [#allocation6], %s41
      %s44 = sshll.u32 [#allocation7], 4
      %s45 = int_to_ptr.vmem [resolvable:$true] %s44
      %47 = dma.hbm_to_vmem [thread:$0]  %s2, 16, %s45, [#allocation6]
    $region13: #{telepath_forward.33} parent=1 // pred_fallthru
      _
    // Predicated region
    $region14: #{telepath_forward.33} parent=1 // pred_check
      _
    $region15: #{telepath_forward.33} parent=1 // pred_check_branch
      %49 = sbr.rel (0) target = $region17
    $region16: #{telepath_forward.33} parent=1 // pred_region
      %s51 = ssub.s32 16, 16
      %52 = vsyncadd [#allocation9], %s51
      %s54 = sshll.u32 [#allocation8], 4
      %s55 = int_to_ptr.vmem [resolvable:$true] %s54
      %57 = dma.hbm_to_vmem [thread:$0]  %s3, 16, %s55, [#allocation9]
    $region17: #{telepath_forward.33} parent=1 // pred_fallthru
      _
    // Predicated region
    $region18: #{telepath_forward.33} parent=1 // pred_check
      _
    $region19: #{telepath_forward.33} parent=1 // pred_check_branch
      %59 = sbr.rel (0) target = $region21
    $region20: #{telepath_forward.33} parent=1 // pred_region
      %s61 = ssub.s32 16, 16
      %62 = vsyncadd [#allocation9], %s61
      %s64 = sshll.u32 [#allocation10], 4
      %s65 = int_to_ptr.vmem [resolvable:$true] %s64
      %67 = dma.hbm_to_vmem [thread:$0]  %s4, 16, %s65, [#allocation9]
    $region21: #{telepath_forward.33} parent=1 // pred_fallthru
      _
    // Predicated region
    $region22: #{telepath_forward.33} parent=1 // pred_check
      _
    $region23: #{telepath_forward.33} parent=1 // pred_check_branch
      %69 = sbr.rel (0) target = $region25
    $region24: #{telepath_forward.33} parent=1 // pred_region
      %70 = dma.done [#allocation3], 512
    $region25: #{telepath_forward.33} parent=1 // pred_fallthru
      _
    // Predicated region
    $region26: #{telepath_forward.33} parent=1 // pred_check
      _
    $region27: #{telepath_forward.33} parent=1 // pred_check_branch
      %72 = sbr.rel (0) target = $region29
    $region28: #{telepath_forward.33} parent=1 // pred_region
      %73 = dma.done [#allocation6], 512
    $region29: #{telepath_forward.33} parent=1 // pred_fallthru
      _
    // Predicated region
    $region30: #{telepath_forward.33} parent=1 // pred_check
      _
    $region31: #{telepath_forward.33} parent=1 // pred_check_branch
      %75 = sbr.rel (0) target = $region33
    $region32: #{telepath_forward.33} parent=1 // pred_region
      %76 = dma.done [#allocation6], 16
    $region33: #{telepath_forward.33} parent=1 // pred_fallthru
      _
    // Predicated region
    $region34: #{telepath_forward.33} parent=1 // pred_check
      _
    $region35: #{telepath_forward.33} parent=1 // pred_check_branch
      %78 = sbr.rel (0) target = $region37
    $region36: #{telepath_forward.33} parent=1 // pred_region
      %79 = dma.done [#allocation9], 16
    $region37: #{telepath_forward.33} parent=1 // pred_fallthru
      _
    // Predicated region
    $region38: #{telepath_forward.33} parent=1 // pred_check
      _
    $region39: #{telepath_forward.33} parent=1 // pred_check_branch
      %81 = sbr.rel (0) target = $region41
    $region40: #{telepath_forward.33} parent=1 // pred_region
      %82 = dma.done [#allocation9], 16
    $region41: #{telepath_forward.33} parent=1 // pred_fallthru
      _
    %v84 = vld [vmem:[#allocation2] sm:$0xff]
    %v85 = vld [vmem:[#allocation2 + $0x8] sm:$0xff]
    %v86 = vld [vmem:[#allocation2 + $0x10] sm:$0xff]
    %v87 = vld [vmem:[#allocation2 + $0x18] sm:$0xff]
    %vm88 = vcmask 261120
    %v89 = vsel %vm88, %v84, 0.0
    %90 = vadd.xlane.f32.xlu0 %v89
    %v91 = vpop.xlane.xlu0 %90
    %v92 = vsel %vm88, %v85, 0.0
    %93 = vadd.xlane.f32.xlu0 %v92
    %v94 = vpop.xlane.xlu0 %93
    %v95 = vsel %vm88, %v86, 0.0
    %96 = vadd.xlane.f32.xlu0 %v95
    %v97 = vpop.xlane.xlu0 %96
    %v98 = vsel %vm88, %v87, 0.0
    %99 = vadd.xlane.f32.xlu0 %v98
    %v100 = vpop.xlane.xlu0 %99
    %v101 = vrcp.pop 32.0
    %v102 = vmul.f32 %v91, %v101
    %v103 = vmul.f32 %v94, %v101
    %v104 = vmul.f32 %v97, %v101
    %v105 = vmul.f32 %v100, %v101
    %v106 = vsub.f32 %v84, %v102
    %v107 = vsub.f32 %v85, %v103
    %v108 = vsub.f32 %v86, %v104
    %v109 = vsub.f32 %v87, %v105
    %v110 = vmul.f32 %v106, %v106
    %v111 = vmul.f32 %v107, %v107
    %v112 = vmul.f32 %v108, %v108
    %v113 = vmul.f32 %v109, %v109
    %v114 = vsel %vm88, %v110, 0.0
    %115 = vadd.xlane.f32.xlu0 %v114
    %v116 = vpop.xlane.xlu0 %115
    %v117 = vsel %vm88, %v111, 0.0
    %118 = vadd.xlane.f32.xlu0 %v117
    %v119 = vpop.xlane.xlu0 %118
    %v120 = vsel %vm88, %v112, 0.0
    %121 = vadd.xlane.f32.xlu0 %v120
    %v122 = vpop.xlane.xlu0 %121
    %v123 = vsel %vm88, %v113, 0.0
    %124 = vadd.xlane.f32.xlu0 %v123
    %v125 = vpop.xlane.xlu0 %124
    %v126 = vmul.f32 %v116, %v101
    %v127 = vmul.f32 %v119, %v101
    %v128 = vmul.f32 %v122, %v101
    %v129 = vmul.f32 %v125, %v101
    %v130 = vadd.f32 %v126, 1e-05
    %v131 = vadd.f32 %v127, 1e-05
    %v132 = vadd.f32 %v128, 1e-05
    %v133 = vadd.f32 %v129, 1e-05
    %v134 = vrsqrt.pop %v130
    %v135 = vrsqrt.pop %v131
    %v136 = vrsqrt.pop %v132
    %v137 = vrsqrt.pop %v133
    %v138 = vmul.f32 %v106, %v134
    %v139 = vmul.f32 %v107, %v135
    %v140 = vmul.f32 %v108, %v136
    %v141 = vmul.f32 %v109, %v137
    %v142 = vld [vmem:[#allocation8] sm:$0x1]
    %v144 = vlaneseq
    %v145 = vshrl.u32 %v144, 7
    %v146 = vsub.s32 0, %v145
    %v147 = vrot.slane %v142, %v146
    %v149 = vmul.f32 %v138, %v147
    %v150 = vmul.f32 %v139, %v147
    %v151 = vmul.f32 %v140, %v147
    %v152 = vmul.f32 %v141, %v147
    %v153 = vld [vmem:[#allocation10] sm:$0x1]
    %v155 = vlaneseq
    %v156 = vshrl.u32 %v155, 7
    %v157 = vsub.s32 0, %v156
    %v158 = vrot.slane %v153, %v157
    %v160 = vadd.f32 %v149, %v158
    %v161 = vadd.f32 %v150, %v158
    %v162 = vadd.f32 %v151, %v158
    %v163 = vadd.f32 %v152, %v158
    %v164 = vpack.c.bf16 %v161, %v160
    %v165 = vpack.c.bf16 %v163, %v162
    %v166 = vld [vmem:[#allocation5] sm:$0xff]
    %v167 = vld [vmem:[#allocation5 + $0x8] sm:$0xff]
    %v168 = vld [vmem:[#allocation5 + $0x10] sm:$0xff]
    %v169 = vld [vmem:[#allocation5 + $0x18] sm:$0xff]
    %v170 = vpack.c.bf16 %v167, %v166
    %v171 = vpack.c.bf16 %v169, %v168
    %v172 = vld [vmem:[#allocation7] sm:$0x1]
    %v174 = vlaneseq
    %v175 = vshrl.u32 %v174, 7
    %v176 = vsub.s32 0, %v175
    %v177 = vrot.slane %v172, %v176
    %v180 = vsel %vm88, %v164, 0
    %v183 = vsel %vm88, %v165, 0
    %185 = vmatprep.subr.bf16.mxu0 0
    %186 = vmatpush1.bf16.msra.mxu0 %v170
    %187 = vmatprep.subr.bf16.mxu0 0
    %188 = vmatpush1.bf16.msra.mxu0 %v171
    %189 = vmatprep.subr.bf16.mxu0 0
    %190 = vmatpush1.bf16.msra.mxu0 0
    %191 = vmatprep.subr.bf16.mxu0 0
    %192 = vmatpush1.bf16.msra.mxu0 0
    %193 = vmatprep.subr.bf16.mxu0 0
    %194 = vmatpush1.bf16.msra.mxu0 0
    %195 = vmatprep.subr.bf16.mxu0 0
    %196 = vmatpush1.bf16.msra.mxu0 0
    %197 = vmatprep.subr.bf16.mxu0 0
    %198 = vmatpush1.bf16.msra.mxu0 0
    %199 = vmatprep.subr.bf16.mxu0 0
    %200 = vmatpush1.bf16.msra.mxu0 0
    %201 = vmatprep.subr.bf16.mxu0 0
    %202 = vmatpush1.bf16.msra.mxu0 0
    %203 = vmatprep.subr.bf16.mxu0 0
    %204 = vmatpush1.bf16.msra.mxu0 0
    %205 = vmatprep.subr.bf16.mxu0 0
    %206 = vmatpush1.bf16.msra.mxu0 0
    %207 = vmatprep.subr.bf16.mxu0 0
    %208 = vmatpush1.bf16.msra.mxu0 0
    %209 = vmatprep.subr.bf16.mxu0 0
    %210 = vmatpush1.bf16.msra.mxu0 0
    %211 = vmatprep.subr.bf16.mxu0 0
    %212 = vmatpush1.bf16.msra.mxu0 0
    %213 = vmatprep.subr.bf16.mxu0 0
    %214 = vmatpush1.bf16.msra.mxu0 0
    %215 = vmatprep.subr.bf16.mxu0 0
    %216 = vmatpush1.bf16.msra.mxu0 0
    %217 = vmatprep.mubr.bf16.mxu0 0
    %218 = vmatmul.mubr.bf16.gmra.mrb[0].mxu0 %v180
    %v219 = vpop.f32.mrb[0].mxu0
    %v220 = vadd.f32 %v177, %v219
    %v221 = vpop.f32.mrb[0].mxu0
    %v222 = vpop.f32.mrb[0].mxu0
    %v223 = vadd.f32 %v177, %v222
    %v224 = vpop.f32.mrb[0].mxu0
    %225 = vmatprep.mubr.bf16.mxu0 0
    %226 = vmatmul.mubr.bf16.gmra.mrb[0].mxu0 %v183
    %v227 = vpop.f32.mrb[0].mxu0
    %v228 = vadd.f32 %v177, %v227
    %v229 = vpop.f32.mrb[0].mxu0
    %v230 = vpop.f32.mrb[0].mxu0
    %v231 = vadd.f32 %v177, %v230
    %v232 = vpop.f32.mrb[0].mxu0
    %233 = vdwg.mxu0
    %vm234 = vcmask 785408
    %235 = vst.msk [vmem:[#allocation11] sm:$0xff] %vm234, %v220
    %236 = vst.msk [vmem:[#allocation11 + $0x8] sm:$0xff] %vm234, %v223
    %237 = vst.msk [vmem:[#allocation11 + $0x10] sm:$0xff] %vm234, %v228
    %238 = vst.msk [vmem:[#allocation11 + $0x18] sm:$0xff] %vm234, %v231
    // Predicated region
    $region42: #{telepath_forward.33} parent=1 // pred_check
      _
    $region43: #{telepath_forward.33} parent=1 // pred_check_branch
      %240 = sbr.rel (0) target = $region45
    $region44: #{telepath_forward.33} parent=1 // pred_region
      %s242 = ssub.s32 512, 512
      %243 = vsyncadd [#allocation4], %s242
      %s244 = sshll.u32 [#allocation11], 4
      %s245 = int_to_ptr.vmem [resolvable:$true] %s244
      %250 = dma.vmem_to_hbm [thread:$0]  %s245, 512, %s5, [#allocation4], 128, 128, 8
    $region45: #{telepath_forward.33} parent=1 // pred_fallthru
      _
    // Predicated region
    $region46: #{telepath_forward.33} parent=1 // pred_check
      _
    $region47: #{telepath_forward.33} parent=1 // pred_check_branch
      %252 = sbr.rel (0) target = $region49
    $region48: #{telepath_forward.33} parent=1 // pred_region
      %253 = dma.done [#allocation4], 512
    $region49: #{telepath_forward.33} parent=1 // pred_fallthru
      _
    %254 = vsyncpa [#allocation3], 1
    %255 = vsyncpa [#allocation6], 1
    %256 = vsyncpa [#allocation9], 1
    %257 = vsyncpa [#allocation4], 1

// kernel: telepath_forward.36
$region0: #{telepath_forward.36}
  #allocation0 [shape = 'u32[]', space=smem, size = 0x4, offset = 0x4, fixed_abs, tag = 'smem constant byte address 0x4 - core index']
  #allocation1 [shape = 'u32[144,128]{1,0:T(1,128)}', space=vmem, size = 0x12000, scoped, tag = 'internal scratch']
  %s0 = inlined_call_operand.hbm [shape: f32[32,32], index: 0, kind: input, shape index: {}]
  %s1 = inlined_call_operand.hbm [shape: f32[32,128], index: 1, kind: input, shape index: {}]
  %s2 = inlined_call_operand.hbm [shape: f32[1,128], index: 2, kind: input, shape index: {}]
  %s3 = inlined_call_operand.hbm [shape: f32[1,32], index: 3, kind: input, shape index: {}]
  %s4 = inlined_call_operand.hbm [shape: f32[1,32], index: 4, kind: input, shape index: {}]
  %s5 = inlined_call_operand.hbm [shape: f32[32,128], index: 5, kind: output, shape index: {}]
  %s6 = sld [smem:[#allocation0]]
  $region50: #{telepath_forward.36} parent=0
    _
  %s8 = ssub.s32 1, %s6
  %s9 = scalar_select 0, %s8, %s6
  $region1: #{telepath_forward.36} parent=0
    #allocation2 [shape = 'u8[16384]{0}', space=vmem, size = 0x4000, scoped, tag = 'input window, operand 0, single buffered']
    #allocation3 [shape = 's32[1]{0}', space=sflag, size = 0x4, scoped, tag = 'scoped memory for telepath_forward.36']
    #allocation4 [shape = 's32[1]{0}', space=sflag, size = 0x4, scoped, tag = 'scoped memory for telepath_forward.36']
    #allocation5 [shape = 'u8[16384]{0}', space=vmem, size = 0x4000, scoped, tag = 'input window, operand 1, single buffered']
    #allocation6 [shape = 's32[1]{0}', space=sflag, size = 0x4, scoped, tag = 'scoped memory for telepath_forward.36']
    #allocation7 [shape = 'u8[512]{0}', space=vmem, size = 0x400, scoped, tag = 'input window, operand 2, single buffered']
    #allocation8 [shape = 'u8[512]{0}', space=vmem, size = 0x400, scoped, tag = 'input window, operand 3, single buffered']
    #allocation9 [shape = 's32[1]{0}', space=sflag, size = 0x4, scoped, tag = 'scoped memory for telepath_forward.36']
    #allocation10 [shape = 'u8[512]{0}', space=vmem, size = 0x400, scoped, tag = 'input window, operand 4, single buffered']
    #allocation11 [shape = 'u8[16384]{0}', space=vmem, size = 0x4000, scoped, tag = 'output window, operand 0, single buffered']
    %10 = vsyncpa [#allocation3], 0
    %11 = vsyncpa [#allocation6], 0
    %12 = vsyncpa [#allocation9], 0
    %13 = vsyncpa [#allocation4], 0
    // Predicated region
    $region2: #{telepath_forward.36} parent=1 // pred_check
      _
    $region3: #{telepath_forward.36} parent=1 // pred_check_branch
      %15 = sbr.rel (0) target = $region5
    $region4: #{telepath_forward.36} parent=1 // pred_region
      %s17 = ssub.s32 512, 512
      %18 = vsyncadd [#allocation3], %s17
      %s19 = sshll.u32 [#allocation2], 4
      %s20 = int_to_ptr.vmem [resolvable:$true] %s19
      %25 = dma.hbm_to_vmem [thread:$0]  %s0, 512, %s20, [#allocation3], 128, 128, 8
    $region5: #{telepath_forward.36} parent=1 // pred_fallthru
      _
    // Predicated region
    $region6: #{telepath_forward.36} parent=1 // pred_check
      _
    $region7: #{telepath_forward.36} parent=1 // pred_check_branch
      %27 = sbr.rel (0) target = $region9
    $region8: #{telepath_forward.36} parent=1 // pred_region
      %s29 = ssub.s32 512, 512
      %30 = vsyncadd [#allocation6], %s29
      %s31 = sshll.u32 [#allocation5], 4
      %s32 = int_to_ptr.vmem [resolvable:$true] %s31
      %37 = dma.hbm_to_vmem [thread:$0]  %s1, 512, %s32, [#allocation6], 128, 128, 8
    $region9: #{telepath_forward.36} parent=1 // pred_fallthru
      _
    // Predicated region
    $region10: #{telepath_forward.36} parent=1 // pred_check
      _
    $region11: #{telepath_forward.36} parent=1 // pred_check_branch
      %39 = sbr.rel (0) target = $region13
    $region12: #{telepath_forward.36} parent=1 // pred_region
      %s41 = ssub.s32 16, 16
      %42 = vsyncadd [#allocation6], %s41
      %s44 = sshll.u32 [#allocation7], 4
      %s45 = int_to_ptr.vmem [resolvable:$true] %s44
      %47 = dma.hbm_to_vmem [thread:$0]  %s2, 16, %s45, [#allocation6]
    $region13: #{telepath_forward.36} parent=1 // pred_fallthru
      _
    // Predicated region
    $region14: #{telepath_forward.36} parent=1 // pred_check
      _
    $region15: #{telepath_forward.36} parent=1 // pred_check_branch
      %49 = sbr.rel (0) target = $region17
    $region16: #{telepath_forward.36} parent=1 // pred_region
      %s51 = ssub.s32 16, 16
      %52 = vsyncadd [#allocation9], %s51
      %s54 = sshll.u32 [#allocation8], 4
      %s55 = int_to_ptr.vmem [resolvable:$true] %s54
      %57 = dma.hbm_to_vmem [thread:$0]  %s3, 16, %s55, [#allocation9]
    $region17: #{telepath_forward.36} parent=1 // pred_fallthru
      _
    // Predicated region
    $region18: #{telepath_forward.36} parent=1 // pred_check
      _
    $region19: #{telepath_forward.36} parent=1 // pred_check_branch
      %59 = sbr.rel (0) target = $region21
    $region20: #{telepath_forward.36} parent=1 // pred_region
      %s61 = ssub.s32 16, 16
      %62 = vsyncadd [#allocation9], %s61
      %s64 = sshll.u32 [#allocation10], 4
      %s65 = int_to_ptr.vmem [resolvable:$true] %s64
      %67 = dma.hbm_to_vmem [thread:$0]  %s4, 16, %s65, [#allocation9]
    $region21: #{telepath_forward.36} parent=1 // pred_fallthru
      _
    // Predicated region
    $region22: #{telepath_forward.36} parent=1 // pred_check
      _
    $region23: #{telepath_forward.36} parent=1 // pred_check_branch
      %69 = sbr.rel (0) target = $region25
    $region24: #{telepath_forward.36} parent=1 // pred_region
      %70 = dma.done [#allocation3], 512
    $region25: #{telepath_forward.36} parent=1 // pred_fallthru
      _
    // Predicated region
    $region26: #{telepath_forward.36} parent=1 // pred_check
      _
    $region27: #{telepath_forward.36} parent=1 // pred_check_branch
      %72 = sbr.rel (0) target = $region29
    $region28: #{telepath_forward.36} parent=1 // pred_region
      %73 = dma.done [#allocation6], 512
    $region29: #{telepath_forward.36} parent=1 // pred_fallthru
      _
    // Predicated region
    $region30: #{telepath_forward.36} parent=1 // pred_check
      _
    $region31: #{telepath_forward.36} parent=1 // pred_check_branch
      %75 = sbr.rel (0) target = $region33
    $region32: #{telepath_forward.36} parent=1 // pred_region
      %76 = dma.done [#allocation6], 16
    $region33: #{telepath_forward.36} parent=1 // pred_fallthru
      _
    // Predicated region
    $region34: #{telepath_forward.36} parent=1 // pred_check
      _
    $region35: #{telepath_forward.36} parent=1 // pred_check_branch
      %78 = sbr.rel (0) target = $region37
    $region36: #{telepath_forward.36} parent=1 // pred_region
      %79 = dma.done [#allocation9], 16
    $region37: #{telepath_forward.36} parent=1 // pred_fallthru
      _
    // Predicated region
    $region38: #{telepath_forward.36} parent=1 // pred_check
      _
    $region39: #{telepath_forward.36} parent=1 // pred_check_branch
      %81 = sbr.rel (0) target = $region41
    $region40: #{telepath_forward.36} parent=1 // pred_region
      %82 = dma.done [#allocation9], 16
    $region41: #{telepath_forward.36} parent=1 // pred_fallthru
      _
    %v84 = vld [vmem:[#allocation2] sm:$0xff]
    %v85 = vld [vmem:[#allocation2 + $0x8] sm:$0xff]
    %v86 = vld [vmem:[#allocation2 + $0x10] sm:$0xff]
    %v87 = vld [vmem:[#allocation2 + $0x18] sm:$0xff]
    %vm88 = vcmask 261120
    %v89 = vsel %vm88, %v84, 0.0
    %90 = vadd.xlane.f32.xlu0 %v89
    %v91 = vpop.xlane.xlu0 %90
    %v92 = vsel %vm88, %v85, 0.0
    %93 = vadd.xlane.f32.xlu0 %v92
    %v94 = vpop.xlane.xlu0 %93
    %v95 = vsel %vm88, %v86, 0.0
    %96 = vadd.xlane.f32.xlu0 %v95
    %v97 = vpop.xlane.xlu0 %96
    %v98 = vsel %vm88, %v87, 0.0
    %99 = vadd.xlane.f32.xlu0 %v98
    %v100 = vpop.xlane.xlu0 %99
    %v101 = vrcp.pop 32.0
    %v102 = vmul.f32 %v91, %v101
    %v103 = vmul.f32 %v94, %v101
    %v104 = vmul.f32 %v97, %v101
    %v105 = vmul.f32 %v100, %v101
    %v106 = vsub.f32 %v84, %v102
    %v107 = vsub.f32 %v85, %v103
    %v108 = vsub.f32 %v86, %v104
    %v109 = vsub.f32 %v87, %v105
    %v110 = vmul.f32 %v106, %v106
    %v111 = vmul.f32 %v107, %v107
    %v112 = vmul.f32 %v108, %v108
    %v113 = vmul.f32 %v109, %v109
    %v114 = vsel %vm88, %v110, 0.0
    %115 = vadd.xlane.f32.xlu0 %v114
    %v116 = vpop.xlane.xlu0 %115
    %v117 = vsel %vm88, %v111, 0.0
    %118 = vadd.xlane.f32.xlu0 %v117
    %v119 = vpop.xlane.xlu0 %118
    %v120 = vsel %vm88, %v112, 0.0
    %121 = vadd.xlane.f32.xlu0 %v120
    %v122 = vpop.xlane.xlu0 %121
    %v123 = vsel %vm88, %v113, 0.0
    %124 = vadd.xlane.f32.xlu0 %v123
    %v125 = vpop.xlane.xlu0 %124
    %v126 = vmul.f32 %v116, %v101
    %v127 = vmul.f32 %v119, %v101
    %v128 = vmul.f32 %v122, %v101
    %v129 = vmul.f32 %v125, %v101
    %v130 = vadd.f32 %v126, 1e-05
    %v131 = vadd.f32 %v127, 1e-05
    %v132 = vadd.f32 %v128, 1e-05
    %v133 = vadd.f32 %v129, 1e-05
    %v134 = vrsqrt.pop %v130
    %v135 = vrsqrt.pop %v131
    %v136 = vrsqrt.pop %v132
    %v137 = vrsqrt.pop %v133
    %v138 = vmul.f32 %v106, %v134
    %v139 = vmul.f32 %v107, %v135
    %v140 = vmul.f32 %v108, %v136
    %v141 = vmul.f32 %v109, %v137
    %v142 = vld [vmem:[#allocation8] sm:$0x1]
    %v144 = vlaneseq
    %v145 = vshrl.u32 %v144, 7
    %v146 = vsub.s32 0, %v145
    %v147 = vrot.slane %v142, %v146
    %v149 = vmul.f32 %v138, %v147
    %v150 = vmul.f32 %v139, %v147
    %v151 = vmul.f32 %v140, %v147
    %v152 = vmul.f32 %v141, %v147
    %v153 = vld [vmem:[#allocation10] sm:$0x1]
    %v155 = vlaneseq
    %v156 = vshrl.u32 %v155, 7
    %v157 = vsub.s32 0, %v156
    %v158 = vrot.slane %v153, %v157
    %v160 = vadd.f32 %v149, %v158
    %v161 = vadd.f32 %v150, %v158
    %v162 = vadd.f32 %v151, %v158
    %v163 = vadd.f32 %v152, %v158
    %v164 = vpack.c.bf16 %v161, %v160
    %v165 = vpack.c.bf16 %v163, %v162
    %v166 = vld [vmem:[#allocation5] sm:$0xff]
    %v167 = vld [vmem:[#allocation5 + $0x8] sm:$0xff]
    %v168 = vld [vmem:[#allocation5 + $0x10] sm:$0xff]
    %v169 = vld [vmem:[#allocation5 + $0x18] sm:$0xff]
    %v170 = vpack.c.bf16 %v167, %v166
    %v171 = vpack.c.bf16 %v169, %v168
    %v172 = vld [vmem:[#allocation7] sm:$0x1]
    %v174 = vlaneseq
    %v175 = vshrl.u32 %v174, 7
    %v176 = vsub.s32 0, %v175
    %v177 = vrot.slane %v172, %v176
    %v180 = vsel %vm88, %v164, 0
    %v183 = vsel %vm88, %v165, 0
    %185 = vmatprep.subr.bf16.mxu0 0
    %186 = vmatpush1.bf16.msra.mxu0 %v170
    %187 = vmatprep.subr.bf16.mxu0 0
    %188 = vmatpush1.bf16.msra.mxu0 %v171
    %189 = vmatprep.subr.bf16.mxu0 0
    %190 = vmatpush1.bf16.msra.mxu0 0
    %191 = vmatprep.subr.bf16.mxu0 0
    %192 = vmatpush1.bf16.msra.mxu0 0
    %193 = vmatprep.subr.bf16.mxu0 0
    %194 = vmatpush1.bf16.msra.mxu0 0
    %195 = vmatprep.subr.bf16.mxu0 0
    %196 = vmatpush1.bf16.msra.mxu0 0
    %197 = vmatprep.subr.bf16.mxu0 0
    %198 = vmatpush1.bf16.msra.mxu0 0
    %199 = vmatprep.subr.bf16.mxu0 0
    %200 = vmatpush1.bf16.msra.mxu0 0
    %201 = vmatprep.subr.bf16.mxu0 0
    %202 = vmatpush1.bf16.msra.mxu0 0
    %203 = vmatprep.subr.bf16.mxu0 0
    %204 = vmatpush1.bf16.msra.mxu0 0
    %205 = vmatprep.subr.bf16.mxu0 0
    %206 = vmatpush1.bf16.msra.mxu0 0
    %207 = vmatprep.subr.bf16.mxu0 0
    %208 = vmatpush1.bf16.msra.mxu0 0
    %209 = vmatprep.subr.bf16.mxu0 0
    %210 = vmatpush1.bf16.msra.mxu0 0
    %211 = vmatprep.subr.bf16.mxu0 0
    %212 = vmatpush1.bf16.msra.mxu0 0
    %213 = vmatprep.subr.bf16.mxu0 0
    %214 = vmatpush1.bf16.msra.mxu0 0
    %215 = vmatprep.subr.bf16.mxu0 0
    %216 = vmatpush1.bf16.msra.mxu0 0
    %217 = vmatprep.mubr.bf16.mxu0 0
    %218 = vmatmul.mubr.bf16.gmra.mrb[0].mxu0 %v180
    %v219 = vpop.f32.mrb[0].mxu0
    %v220 = vadd.f32 %v177, %v219
    %v221 = vpop.f32.mrb[0].mxu0
    %v222 = vpop.f32.mrb[0].mxu0
    %v223 = vadd.f32 %v177, %v222
    %v224 = vpop.f32.mrb[0].mxu0
    %225 = vmatprep.mubr.bf16.mxu0 0
    %226 = vmatmul.mubr.bf16.gmra.mrb[0].mxu0 %v183
    %v227 = vpop.f32.mrb[0].mxu0
    %v228 = vadd.f32 %v177, %v227
    %v229 = vpop.f32.mrb[0].mxu0
    %v230 = vpop.f32.mrb[0].mxu0
    %v231 = vadd.f32 %v177, %v230
    %v232 = vpop.f32.mrb[0].mxu0
    %233 = vdwg.mxu0
    %v234 = vmul.f32 %v220, 0.5
    %v235 = vmul.f32 %v223, 0.5
    %v236 = vmul.f32 %v228, 0.5
    %v237 = vmul.f32 %v231, 0.5
    %v238 = vmul.f32 %v220, 0.044715
    %v239 = vmul.f32 %v223, 0.044715
    %v240 = vmul.f32 %v228, 0.044715
    %v241 = vmul.f32 %v231, 0.044715
    %v242 = vmul.f32 %v238, %v220
    %v243 = vmul.f32 %v239, %v223
    %v244 = vmul.f32 %v240, %v228
    %v245 = vmul.f32 %v241, %v231
    %v246 = vmul.f32 %v242, %v220
    %v247 = vmul.f32 %v243, %v223
    %v248 = vmul.f32 %v244, %v228
    %v249 = vmul.f32 %v245, %v231
    %v250 = vadd.f32 %v220, %v246
    %v251 = vadd.f32 %v223, %v247
    %v252 = vadd.f32 %v228, %v248
    %v253 = vadd.f32 %v231, %v249
    %v254 = vmul.f32 %v250, 0.7978846
    %v255 = vmul.f32 %v251, 0.7978846
    %v256 = vmul.f32 %v252, 0.7978846
    %v257 = vmul.f32 %v253, 0.7978846
    %v258 = vtanh.pop %v254
    %v259 = vtanh.pop %v255
    %v260 = vtanh.pop %v256
    %v261 = vtanh.pop %v257
    %v262 = vadd.f32 %v258, 1.0
    %v263 = vadd.f32 %v259, 1.0
    %v264 = vadd.f32 %v260, 1.0
    %v265 = vadd.f32 %v261, 1.0
    %v266 = vmul.f32 %v234, %v262
    %v267 = vmul.f32 %v235, %v263
    %v268 = vmul.f32 %v236, %v264
    %v269 = vmul.f32 %v237, %v265
    %270 = vst [vmem:[#allocation11] sm:$0xff] %v266
    %271 = vst [vmem:[#allocation11 + $0x8] sm:$0xff] %v267
    %272 = vst [vmem:[#allocation11 + $0x10] sm:$0xff] %v268
    %273 = vst [vmem:[#allocation11 + $0x18] sm:$0xff] %v269
    // Predicated region
    $region42: #{telepath_forward.36} parent=1 // pred_check
      _
    $region43: #{telepath_forward.36} parent=1 // pred_check_branch
      %275 = sbr.rel (0) target = $region45
    $region44: #{telepath_forward.36} parent=1 // pred_region
      %s277 = ssub.s32 512, 512
      %278 = vsyncadd [#allocation4], %s277
      %s279 = sshll.u32 [#allocation11], 4
      %s280 = int_to_ptr.vmem [resolvable:$true] %s279
      %285 = dma.vmem_to_hbm [thread:$0]  %s280, 512, %s5, [#allocation4], 128, 128, 8
    $region45: #{telepath_forward.36} parent=1 // pred_fallthru
      _
    // Predicated region
    $region46: #{telepath_forward.36} parent=1 // pred_check
      _
    $region47: #{telepath_forward.36} parent=1 // pred_check_branch
      %287 = sbr.rel (0) target = $region49
    $region48: #{telepath_forward.36} parent=1 // pred_region
      %288 = dma.done [#allocation4], 512
    $region49: #{telepath_forward.36} parent=1 // pred_fallthru
      _
    %289 = vsyncpa [#allocation3], 1
    %290 = vsyncpa [#allocation6], 1
    %291 = vsyncpa [#allocation9], 1
    %292 = vsyncpa [#allocation4], 1

// kernel: telepath_forward.37
$region0: #{telepath_forward.37}
  #allocation0 [shape = 'u32[]', space=smem, size = 0x4, offset = 0x4, fixed_abs, tag = 'smem constant byte address 0x4 - core index']
  #allocation1 [shape = 'u32[144,128]{1,0:T(1,128)}', space=vmem, size = 0x12000, scoped, tag = 'internal scratch']
  %s0 = inlined_call_operand.hbm [shape: f32[32,128], index: 0, kind: input, shape index: {}]
  %s1 = inlined_call_operand.hbm [shape: f32[128,32], index: 1, kind: input, shape index: {}]
  %s2 = inlined_call_operand.hbm [shape: f32[1,32], index: 2, kind: input, shape index: {}]
  %s3 = inlined_call_operand.hbm [shape: f32[32,32], index: 3, kind: input, shape index: {}]
  %s4 = inlined_call_operand.hbm [shape: f32[32,32], index: 4, kind: output, shape index: {}]
  %s5 = sld [smem:[#allocation0]]
  $region42: #{telepath_forward.37} parent=0
    _
  %s7 = ssub.s32 1, %s5
  %s8 = scalar_select 0, %s7, %s5
  $region1: #{telepath_forward.37} parent=0
    #allocation2 [shape = 'u8[16384]{0}', space=vmem, size = 0x4000, scoped, tag = 'input window, operand 0, single buffered']
    #allocation3 [shape = 's32[1]{0}', space=sflag, size = 0x4, scoped, tag = 'scoped memory for telepath_forward.37']
    #allocation4 [shape = 's32[1]{0}', space=sflag, size = 0x4, scoped, tag = 'scoped memory for telepath_forward.37']
    #allocation5 [shape = 'u8[65536]{0}', space=vmem, size = 0x10000, scoped, tag = 'input window, operand 1, single buffered']
    #allocation6 [shape = 's32[1]{0}', space=sflag, size = 0x4, scoped, tag = 'scoped memory for telepath_forward.37']
    #allocation7 [shape = 'u8[512]{0}', space=vmem, size = 0x400, scoped, tag = 'input window, operand 2, single buffered']
    #allocation8 [shape = 'u8[16384]{0}', space=vmem, size = 0x4000, scoped, tag = 'input window, operand 3, single buffered']
    #allocation9 [shape = 's32[1]{0}', space=sflag, size = 0x4, scoped, tag = 'scoped memory for telepath_forward.37']
    #allocation10 [shape = 'u8[16384]{0}', space=vmem, size = 0x4000, scoped, tag = 'output window, operand 0, single buffered']
    %9 = vsyncpa [#allocation3], 0
    %10 = vsyncpa [#allocation6], 0
    %11 = vsyncpa [#allocation9], 0
    %12 = vsyncpa [#allocation4], 0
    // Predicated region
    $region2: #{telepath_forward.37} parent=1 // pred_check
      _
    $region3: #{telepath_forward.37} parent=1 // pred_check_branch
      %14 = sbr.rel (0) target = $region5
    $region4: #{telepath_forward.37} parent=1 // pred_region
      %s16 = ssub.s32 512, 512
      %17 = vsyncadd [#allocation3], %s16
      %s18 = sshll.u32 [#allocation2], 4
      %s19 = int_to_ptr.vmem [resolvable:$true] %s18
      %24 = dma.hbm_to_vmem [thread:$0]  %s0, 512, %s19, [#allocation3], 128, 128, 8
    $region5: #{telepath_forward.37} parent=1 // pred_fallthru
      _
    // Predicated region
    $region6: #{telepath_forward.37} parent=1 // pred_check
      _
    $region7: #{telepath_forward.37} parent=1 // pred_check_branch
      %26 = sbr.rel (0) target = $region9
    $region8: #{telepath_forward.37} parent=1 // pred_region
      %s28 = ssub.s32 2048, 2048
      %29 = vsyncadd [#allocation6], %s28
      %s30 = sshll.u32 [#allocation5], 4
      %s31 = int_to_ptr.vmem [resolvable:$true] %s30
      %36 = dma.hbm_to_vmem [thread:$0]  %s1, 2048, %s31, [#allocation6], 128, 128, 8
    $region9: #{telepath_forward.37} parent=1 // pred_fallthru
      _
    // Predicated region
    $region10: #{telepath_forward.37} parent=1 // pred_check
      _
    $region11: #{telepath_forward.37} parent=1 // pred_check_branch
      %38 = sbr.rel (0) target = $region13
    $region12: #{telepath_forward.37} parent=1 // pred_region
      %s40 = ssub.s32 16, 16
      %41 = vsyncadd [#allocation6], %s40
      %s43 = sshll.u32 [#allocation7], 4
      %s44 = int_to_ptr.vmem [resolvable:$true] %s43
      %46 = dma.hbm_to_vmem [thread:$0]  %s2, 16, %s44, [#allocation6]
    $region13: #{telepath_forward.37} parent=1 // pred_fallthru
      _
    // Predicated region
    $region14: #{telepath_forward.37} parent=1 // pred_check
      _
    $region15: #{telepath_forward.37} parent=1 // pred_check_branch
      %48 = sbr.rel (0) target = $region17
    $region16: #{telepath_forward.37} parent=1 // pred_region
      %s50 = ssub.s32 512, 512
      %51 = vsyncadd [#allocation9], %s50
      %s52 = sshll.u32 [#allocation8], 4
      %s53 = int_to_ptr.vmem [resolvable:$true] %s52
      %58 = dma.hbm_to_vmem [thread:$0]  %s3, 512, %s53, [#allocation9], 128, 128, 8
    $region17: #{telepath_forward.37} parent=1 // pred_fallthru
      _
    // Predicated region
    $region18: #{telepath_forward.37} parent=1 // pred_check
      _
    $region19: #{telepath_forward.37} parent=1 // pred_check_branch
      %60 = sbr.rel (0) target = $region21
    $region20: #{telepath_forward.37} parent=1 // pred_region
      %61 = dma.done [#allocation3], 512
    $region21: #{telepath_forward.37} parent=1 // pred_fallthru
      _
    // Predicated region
    $region22: #{telepath_forward.37} parent=1 // pred_check
      _
    $region23: #{telepath_forward.37} parent=1 // pred_check_branch
      %63 = sbr.rel (0) target = $region25
    $region24: #{telepath_forward.37} parent=1 // pred_region
      %64 = dma.done [#allocation6], 2048
    $region25: #{telepath_forward.37} parent=1 // pred_fallthru
      _
    // Predicated region
    $region26: #{telepath_forward.37} parent=1 // pred_check
      _
    $region27: #{telepath_forward.37} parent=1 // pred_check_branch
      %66 = sbr.rel (0) target = $region29
    $region28: #{telepath_forward.37} parent=1 // pred_region
      %67 = dma.done [#allocation6], 16
    $region29: #{telepath_forward.37} parent=1 // pred_fallthru
      _
    // Predicated region
    $region30: #{telepath_forward.37} parent=1 // pred_check
      _
    $region31: #{telepath_forward.37} parent=1 // pred_check_branch
      %69 = sbr.rel (0) target = $region33
    $region32: #{telepath_forward.37} parent=1 // pred_region
      %70 = dma.done [#allocation9], 512
    $region33: #{telepath_forward.37} parent=1 // pred_fallthru
      _
    %v72 = vld [vmem:[#allocation2] sm:$0xff]
    %v73 = vld [vmem:[#allocation2 + $0x8] sm:$0xff]
    %v74 = vld [vmem:[#allocation2 + $0x10] sm:$0xff]
    %v75 = vld [vmem:[#allocation2 + $0x18] sm:$0xff]
    %v76 = vpack.c.bf16 %v73, %v72
    %v77 = vpack.c.bf16 %v75, %v74
    %v78 = vld [vmem:[#allocation5] sm:$0xff]
    %v79 = vld [vmem:[#allocation5 + $0x8] sm:$0xff]
    %v80 = vld [vmem:[#allocation5 + $0x10] sm:$0xff]
    %v81 = vld [vmem:[#allocation5 + $0x18] sm:$0xff]
    %v82 = vld [vmem:[#allocation5 + $0x20] sm:$0xff]
    %v83 = vld [vmem:[#allocation5 + $0x28] sm:$0xff]
    %v84 = vld [vmem:[#allocation5 + $0x30] sm:$0xff]
    %v85 = vld [vmem:[#allocation5 + $0x38] sm:$0xff]
    %v86 = vld [vmem:[#allocation5 + $0x40] sm:$0xff]
    %v87 = vld [vmem:[#allocation5 + $0x48] sm:$0xff]
    %v88 = vld [vmem:[#allocation5 + $0x50] sm:$0xff]
    %v89 = vld [vmem:[#allocation5 + $0x58] sm:$0xff]
    %v90 = vld [vmem:[#allocation5 + $0x60] sm:$0xff]
    %v91 = vld [vmem:[#allocation5 + $0x68] sm:$0xff]
    %v92 = vld [vmem:[#allocation5 + $0x70] sm:$0xff]
    %v93 = vld [vmem:[#allocation5 + $0x78] sm:$0xff]
    %v94 = vpack.c.bf16 %v79, %v78
    %v95 = vpack.c.bf16 %v81, %v80
    %v96 = vpack.c.bf16 %v83, %v82
    %v97 = vpack.c.bf16 %v85, %v84
    %v98 = vpack.c.bf16 %v87, %v86
    %v99 = vpack.c.bf16 %v89, %v88
    %v100 = vpack.c.bf16 %v91, %v90
    %v101 = vpack.c.bf16 %v93, %v92
    %v102 = vld [vmem:[#allocation7] sm:$0x1]
    %v104 = vlaneseq
    %v105 = vshrl.u32 %v104, 7
    %v106 = vsub.s32 0, %v105
    %v107 = vrot.slane %v102, %v106
    %109 = vmatprep.subr.bf16.mxu0 0
    %110 = vmatpush1.bf16.msra.mxu0 %v94
    %111 = vmatprep.subr.bf16.mxu0 0
    %112 = vmatpush1.bf16.msra.mxu0 %v95
    %113 = vmatprep.subr.bf16.mxu0 0
    %114 = vmatpush1.bf16.msra.mxu0 %v96
    %115 = vmatprep.subr.bf16.mxu0 0
    %116 = vmatpush1.bf16.msra.mxu0 %v97
    %117 = vmatprep.subr.bf16.mxu0 0
    %118 = vmatpush1.bf16.msra.mxu0 %v98
    %119 = vmatprep.subr.bf16.mxu0 0
    %120 = vmatpush1.bf16.msra.mxu0 %v99
    %121 = vmatprep.subr.bf16.mxu0 0
    %122 = vmatpush1.bf16.msra.mxu0 %v100
    %123 = vmatprep.subr.bf16.mxu0 0
    %124 = vmatpush1.bf16.msra.mxu0 %v101
    %125 = vmatprep.subr.bf16.mxu0 0
    %126 = vmatpush1.bf16.msra.mxu0 0
    %127 = vmatprep.subr.bf16.mxu0 0
    %128 = vmatpush1.bf16.msra.mxu0 0
    %129 = vmatprep.subr.bf16.mxu0 0
    %130 = vmatpush1.bf16.msra.mxu0 0
    %131 = vmatprep.subr.bf16.mxu0 0
    %132 = vmatpush1.bf16.msra.mxu0 0
    %133 = vmatprep.subr.bf16.mxu0 0
    %134 = vmatpush1.bf16.msra.mxu0 0
    %135 = vmatprep.subr.bf16.mxu0 0
    %136 = vmatpush1.bf16.msra.mxu0 0
    %137 = vmatprep.subr.bf16.mxu0 0
    %138 = vmatpush1.bf16.msra.mxu0 0
    %139 = vmatprep.subr.bf16.mxu0 0
    %140 = vmatpush1.bf16.msra.mxu0 0
    %141 = vmatprep.mubr.bf16.mxu0 0
    %142 = vmatmul.mubr.bf16.gmra.mrb[0].mxu0 %v76
    %v143 = vpop.f32.mrb[0].mxu0
    %v144 = vadd.f32 %v107, %v143
    %v145 = vpop.f32.mrb[0].mxu0
    %v146 = vpop.f32.mrb[0].mxu0
    %v147 = vadd.f32 %v107, %v146
    %v148 = vpop.f32.mrb[0].mxu0
    %149 = vmatprep.mubr.bf16.mxu0 0
    %150 = vmatmul.mubr.bf16.gmra.mrb[0].mxu0 %v77
    %v151 = vpop.f32.mrb[0].mxu0
    %v152 = vadd.f32 %v107, %v151
    %v153 = vpop.f32.mrb[0].mxu0
    %v154 = vpop.f32.mrb[0].mxu0
    %v155 = vadd.f32 %v107, %v154
    %v156 = vpop.f32.mrb[0].mxu0
    %157 = vdwg.mxu0
    %v158 = vld [vmem:[#allocation8] sm:$0xff]
    %v159 = vld [vmem:[#allocation8 + $0x8] sm:$0xff]
    %v160 = vld [vmem:[#allocation8 + $0x10] sm:$0xff]
    %v161 = vld [vmem:[#allocation8 + $0x18] sm:$0xff]
    %v162 = vadd.f32 %v144, %v158
    %v163 = vadd.f32 %v147, %v159
    %v164 = vadd.f32 %v152, %v160
    %v165 = vadd.f32 %v155, %v161
    %vm166 = vcmask 261120
    %167 = vst.msk [vmem:[#allocation10] sm:$0xff] %vm166, %v162
    %168 = vst.msk [vmem:[#allocation10 + $0x8] sm:$0xff] %vm166, %v163
    %169 = vst.msk [vmem:[#allocation10 + $0x10] sm:$0xff] %vm166, %v164
    %170 = vst.msk [vmem:[#allocation10 + $0x18] sm:$0xff] %vm166, %v165
    // Predicated region
    $region34: #{telepath_forward.37} parent=1 // pred_check
      _
    $region35: #{telepath_forward.37} parent=1 // pred_check_branch
      %172 = sbr.rel (0) target = $region37
    $region36: #{telepath_forward.37} parent=1 // pred_region
      %s174 = ssub.s32 512, 512
      %175 = vsyncadd [#allocation4], %s174
      %s176 = sshll.u32 [#allocation10], 4
      %s177 = int_to_ptr.vmem [resolvable:$true] %s176
      %182 = dma.vmem_to_hbm [thread:$0]  %s177, 512, %s4, [#allocation4], 128, 128, 8
    $region37: #{telepath_forward.37} parent=1 // pred_fallthru
      _
    // Predicated region
    $region38: #{telepath_forward.37} parent=1 // pred_check
      _
    $region39: #{telepath_forward.37} parent=1 // pred_check_branch
      %184 = sbr.rel (0) target = $region41
    $region40: #{telepath_forward.37} parent=1 // pred_region
      %185 = dma.done [#allocation4], 512
    $region41: #{telepath_forward.37} parent=1 // pred_fallthru
      _
    %186 = vsyncpa [#allocation3], 1
    %187 = vsyncpa [#allocation6], 1
    %188 = vsyncpa [#allocation9], 1
    %189 = vsyncpa [#allocation4], 1

// kernel: telepath_forward.35
$region0: #{telepath_forward.35}
  #allocation0 [shape = 'u32[]', space=smem, size = 0x4, offset = 0x4, fixed_abs, tag = 'smem constant byte address 0x4 - core index']
  #allocation1 [shape = 'u32[144,128]{1,0:T(1,128)}', space=vmem, size = 0x12000, scoped, tag = 'internal scratch']
  %s0 = inlined_call_operand.hbm [shape: f32[32,32], index: 0, kind: input, shape index: {}]
  %s1 = inlined_call_operand.hbm [shape: f32[32,32], index: 1, kind: input, shape index: {}]
  %s2 = inlined_call_operand.hbm [shape: f32[1,32], index: 2, kind: input, shape index: {}]
  %s3 = inlined_call_operand.hbm [shape: f32[32,32], index: 3, kind: input, shape index: {}]
  %s4 = inlined_call_operand.hbm [shape: f32[32,32], index: 4, kind: output, shape index: {}]
  %s5 = sld [smem:[#allocation0]]
  $region42: #{telepath_forward.35} parent=0
    _
  %s7 = ssub.s32 1, %s5
  %s8 = scalar_select 0, %s7, %s5
  $region1: #{telepath_forward.35} parent=0
    #allocation2 [shape = 'u8[16384]{0}', space=vmem, size = 0x4000, scoped, tag = 'input window, operand 0, single buffered']
    #allocation3 [shape = 's32[1]{0}', space=sflag, size = 0x4, scoped, tag = 'scoped memory for telepath_forward.35']
    #allocation4 [shape = 's32[1]{0}', space=sflag, size = 0x4, scoped, tag = 'scoped memory for telepath_forward.35']
    #allocation5 [shape = 'u8[16384]{0}', space=vmem, size = 0x4000, scoped, tag = 'input window, operand 1, single buffered']
    #allocation6 [shape = 's32[1]{0}', space=sflag, size = 0x4, scoped, tag = 'scoped memory for telepath_forward.35']
    #allocation7 [shape = 'u8[512]{0}', space=vmem, size = 0x400, scoped, tag = 'input window, operand 2, single buffered']
    #allocation8 [shape = 'u8[16384]{0}', space=vmem, size = 0x4000, scoped, tag = 'input window, operand 3, single buffered']
    #allocation9 [shape = 's32[1]{0}', space=sflag, size = 0x4, scoped, tag = 'scoped memory for telepath_forward.35']
    #allocation10 [shape = 'u8[16384]{0}', space=vmem, size = 0x4000, scoped, tag = 'output window, operand 0, single buffered']
    %9 = vsyncpa [#allocation3], 0
    %10 = vsyncpa [#allocation6], 0
    %11 = vsyncpa [#allocation9], 0
    %12 = vsyncpa [#allocation4], 0
    // Predicated region
    $region2: #{telepath_forward.35} parent=1 // pred_check
      _
    $region3: #{telepath_forward.35} parent=1 // pred_check_branch
      %14 = sbr.rel (0) target = $region5
    $region4: #{telepath_forward.35} parent=1 // pred_region
      %s16 = ssub.s32 512, 512
      %17 = vsyncadd [#allocation3], %s16
      %s18 = sshll.u32 [#allocation2], 4
      %s19 = int_to_ptr.vmem [resolvable:$true] %s18
      %24 = dma.hbm_to_vmem [thread:$0]  %s0, 512, %s19, [#allocation3], 128, 128, 8
    $region5: #{telepath_forward.35} parent=1 // pred_fallthru
      _
    // Predicated region
    $region6: #{telepath_forward.35} parent=1 // pred_check
      _
    $region7: #{telepath_forward.35} parent=1 // pred_check_branch
      %26 = sbr.rel (0) target = $region9
    $region8: #{telepath_forward.35} parent=1 // pred_region
      %s28 = ssub.s32 512, 512
      %29 = vsyncadd [#allocation6], %s28
      %s30 = sshll.u32 [#allocation5], 4
      %s31 = int_to_ptr.vmem [resolvable:$true] %s30
      %36 = dma.hbm_to_vmem [thread:$0]  %s1, 512, %s31, [#allocation6], 128, 128, 8
    $region9: #{telepath_forward.35} parent=1 // pred_fallthru
      _
    // Predicated region
    $region10: #{telepath_forward.35} parent=1 // pred_check
      _
    $region11: #{telepath_forward.35} parent=1 // pred_check_branch
      %38 = sbr.rel (0) target = $region13
    $region12: #{telepath_forward.35} parent=1 // pred_region
      %s40 = ssub.s32 16, 16
      %41 = vsyncadd [#allocation6], %s40
      %s43 = sshll.u32 [#allocation7], 4
      %s44 = int_to_ptr.vmem [resolvable:$true] %s43
      %46 = dma.hbm_to_vmem [thread:$0]  %s2, 16, %s44, [#allocation6]
    $region13: #{telepath_forward.35} parent=1 // pred_fallthru
      _
    // Predicated region
    $region14: #{telepath_forward.35} parent=1 // pred_check
      _
    $region15: #{telepath_forward.35} parent=1 // pred_check_branch
      %48 = sbr.rel (0) target = $region17
    $region16: #{telepath_forward.35} parent=1 // pred_region
      %s50 = ssub.s32 512, 512
      %51 = vsyncadd [#allocation9], %s50
      %s52 = sshll.u32 [#allocation8], 4
      %s53 = int_to_ptr.vmem [resolvable:$true] %s52
      %58 = dma.hbm_to_vmem [thread:$0]  %s3, 512, %s53, [#allocation9], 128, 128, 8
    $region17: #{telepath_forward.35} parent=1 // pred_fallthru
      _
    // Predicated region
    $region18: #{telepath_forward.35} parent=1 // pred_check
      _
    $region19: #{telepath_forward.35} parent=1 // pred_check_branch
      %60 = sbr.rel (0) target = $region21
    $region20: #{telepath_forward.35} parent=1 // pred_region
      %61 = dma.done [#allocation3], 512
    $region21: #{telepath_forward.35} parent=1 // pred_fallthru
      _
    // Predicated region
    $region22: #{telepath_forward.35} parent=1 // pred_check
      _
    $region23: #{telepath_forward.35} parent=1 // pred_check_branch
      %63 = sbr.rel (0) target = $region25
    $region24: #{telepath_forward.35} parent=1 // pred_region
      %64 = dma.done [#allocation6], 512
    $region25: #{telepath_forward.35} parent=1 // pred_fallthru
      _
    // Predicated region
    $region26: #{telepath_forward.35} parent=1 // pred_check
      _
    $region27: #{telepath_forward.35} parent=1 // pred_check_branch
      %66 = sbr.rel (0) target = $region29
    $region28: #{telepath_forward.35} parent=1 // pred_region
      %67 = dma.done [#allocation6], 16
    $region29: #{telepath_forward.35} parent=1 // pred_fallthru
      _
    // Predicated region
    $region30: #{telepath_forward.35} parent=1 // pred_check
      _
    $region31: #{telepath_forward.35} parent=1 // pred_check_branch
      %69 = sbr.rel (0) target = $region33
    $region32: #{telepath_forward.35} parent=1 // pred_region
      %70 = dma.done [#allocation9], 512
    $region33: #{telepath_forward.35} parent=1 // pred_fallthru
      _
    %v72 = vld [vmem:[#allocation2] sm:$0xff]
    %v73 = vld [vmem:[#allocation2 + $0x8] sm:$0xff]
    %v74 = vld [vmem:[#allocation2 + $0x10] sm:$0xff]
    %v75 = vld [vmem:[#allocation2 + $0x18] sm:$0xff]
    %v76 = vpack.c.bf16 %v73, %v72
    %v77 = vpack.c.bf16 %v75, %v74
    %v78 = vld [vmem:[#allocation5] sm:$0xff]
    %v79 = vld [vmem:[#allocation5 + $0x8] sm:$0xff]
    %v80 = vld [vmem:[#allocation5 + $0x10] sm:$0xff]
    %v81 = vld [vmem:[#allocation5 + $0x18] sm:$0xff]
    %v82 = vpack.c.bf16 %v79, %v78
    %v83 = vpack.c.bf16 %v81, %v80
    %v84 = vld [vmem:[#allocation7] sm:$0x1]
    %v86 = vlaneseq
    %v87 = vshrl.u32 %v86, 7
    %v88 = vsub.s32 0, %v87
    %v89 = vrot.slane %v84, %v88
    %vm91 = vcmask 261120
    %v93 = vsel %vm91, %v76, 0
    %v96 = vsel %vm91, %v77, 0
    %98 = vmatprep.subr.bf16.mxu0 0
    %99 = vmatpush1.bf16.msra.mxu0 %v82
    %100 = vmatprep.subr.bf16.mxu0 0
    %101 = vmatpush1.bf16.msra.mxu0 %v83
    %102 = vmatprep.subr.bf16.mxu0 0
    %103 = vmatpush1.bf16.msra.mxu0 0
    %104 = vmatprep.subr.bf16.mxu0 0
    %105 = vmatpush1.bf16.msra.mxu0 0
    %106 = vmatprep.subr.bf16.mxu0 0
    %107 = vmatpush1.bf16.msra.mxu0 0
    %108 = vmatprep.subr.bf16.mxu0 0
    %109 = vmatpush1.bf16.msra.mxu0 0
    %110 = vmatprep.subr.bf16.mxu0 0
    %111 = vmatpush1.bf16.msra.mxu0 0
    %112 = vmatprep.subr.bf16.mxu0 0
    %113 = vmatpush1.bf16.msra.mxu0 0
    %114 = vmatprep.subr.bf16.mxu0 0
    %115 = vmatpush1.bf16.msra.mxu0 0
    %116 = vmatprep.subr.bf16.mxu0 0
    %117 = vmatpush1.bf16.msra.mxu0 0
    %118 = vmatprep.subr.bf16.mxu0 0
    %119 = vmatpush1.bf16.msra.mxu0 0
    %120 = vmatprep.subr.bf16.mxu0 0
    %121 = vmatpush1.bf16.msra.mxu0 0
    %122 = vmatprep.subr.bf16.mxu0 0
    %123 = vmatpush1.bf16.msra.mxu0 0
    %124 = vmatprep.subr.bf16.mxu0 0
    %125 = vmatpush1.bf16.msra.mxu0 0
    %126 = vmatprep.subr.bf16.mxu0 0
    %127 = vmatpush1.bf16.msra.mxu0 0
    %128 = vmatprep.subr.bf16.mxu0 0
    %129 = vmatpush1.bf16.msra.mxu0 0
    %130 = vmatprep.mubr.bf16.mxu0 0
    %131 = vmatmul.mubr.bf16.gmra.mrb[0].mxu0 %v93
    %v132 = vpop.f32.mrb[0].mxu0
    %v133 = vadd.f32 %v89, %v132
    %v134 = vpop.f32.mrb[0].mxu0
    %v135 = vpop.f32.mrb[0].mxu0
    %v136 = vadd.f32 %v89, %v135
    %v137 = vpop.f32.mrb[0].mxu0
    %138 = vmatprep.mubr.bf16.mxu0 0
    %139 = vmatmul.mubr.bf16.gmra.mrb[0].mxu0 %v96
    %v140 = vpop.f32.mrb[0].mxu0
    %v141 = vadd.f32 %v89, %v140
    %v142 = vpop.f32.mrb[0].mxu0
    %v143 = vpop.f32.mrb[0].mxu0
    %v144 = vadd.f32 %v89, %v143
    %v145 = vpop.f32.mrb[0].mxu0
    %146 = vdwg.mxu0
    %v147 = vld [vmem:[#allocation8] sm:$0xff]
    %v148 = vld [vmem:[#allocation8 + $0x8] sm:$0xff]
    %v149 = vld [vmem:[#allocation8 + $0x10] sm:$0xff]
    %v150 = vld [vmem:[#allocation8 + $0x18] sm:$0xff]
    %v151 = vadd.f32 %v133, %v147
    %v152 = vadd.f32 %v136, %v148
    %v153 = vadd.f32 %v141, %v149
    %v154 = vadd.f32 %v144, %v150
    %155 = vst.msk [vmem:[#allocation10] sm:$0xff] %vm91, %v151
    %156 = vst.msk [vmem:[#allocation10 + $0x8] sm:$0xff] %vm91, %v152
    %157 = vst.msk [vmem:[#allocation10 + $0x10] sm:$0xff] %vm91, %v153
    %158 = vst.msk [vmem:[#allocation10 + $0x18] sm:$0xff] %vm91, %v154
    // Predicated region
    $region34: #{telepath_forward.35} parent=1 // pred_check
      _
    $region35: #{telepath_forward.35} parent=1 // pred_check_branch
      %160 = sbr.rel (0) target = $region37
    $region36: #{telepath_forward.35} parent=1 // pred_region
      %s162 = ssub.s32 512, 512
      %163 = vsyncadd [#allocation4], %s162
      %s164 = sshll.u32 [#allocation10], 4
      %s165 = int_to_ptr.vmem [resolvable:$true] %s164
      %170 = dma.vmem_to_hbm [thread:$0]  %s165, 512, %s4, [#allocation4], 128, 128, 8
    $region37: #{telepath_forward.35} parent=1 // pred_fallthru
      _
    // Predicated region
    $region38: #{telepath_forward.35} parent=1 // pred_check
      _
    $region39: #{telepath_forward.35} parent=1 // pred_check_branch
      %172 = sbr.rel (0) target = $region41
    $region40: #{telepath_forward.35} parent=1 // pred_region
      %173 = dma.done [#allocation4], 512
    $region41: #{telepath_forward.35} parent=1 // pred_fallthru
      _
    %174 = vsyncpa [#allocation3], 1
    %175 = vsyncpa [#allocation6], 1
    %176 = vsyncpa [#allocation9], 1
    %177 = vsyncpa [#allocation4], 1

// kernel: telepath_forward.47
$region0: #{telepath_forward.47}
  #allocation0 [shape = 'u32[]', space=smem, size = 0x4, offset = 0x4, fixed_abs, tag = 'smem constant byte address 0x4 - core index']
  #allocation1 [shape = 'u32[144,128]{1,0:T(1,128)}', space=vmem, size = 0x12000, scoped, tag = 'internal scratch']
  %s0 = inlined_call_operand.hbm [shape: f32[32,32], index: 0, kind: input, shape index: {}]
  %s1 = inlined_call_operand.hbm [shape: f32[32,64], index: 1, kind: input, shape index: {}]
  %s2 = inlined_call_operand.hbm [shape: f32[1,64], index: 2, kind: input, shape index: {}]
  %s3 = inlined_call_operand.hbm [shape: f32[32,64], index: 3, kind: output, shape index: {}]
  %s4 = sld [smem:[#allocation0]]
  $region34: #{telepath_forward.47} parent=0
    _
  %s6 = ssub.s32 1, %s4
  %s7 = scalar_select 0, %s6, %s4
  $region1: #{telepath_forward.47} parent=0
    #allocation2 [shape = 'u8[16384]{0}', space=vmem, size = 0x4000, scoped, tag = 'input window, operand 0, single buffered']
    #allocation3 [shape = 's32[1]{0}', space=sflag, size = 0x4, scoped, tag = 'scoped memory for telepath_forward.47']
    #allocation4 [shape = 's32[1]{0}', space=sflag, size = 0x4, scoped, tag = 'scoped memory for telepath_forward.47']
    #allocation5 [shape = 'u8[16384]{0}', space=vmem, size = 0x4000, scoped, tag = 'input window, operand 1, single buffered']
    #allocation6 [shape = 's32[1]{0}', space=sflag, size = 0x4, scoped, tag = 'scoped memory for telepath_forward.47']
    #allocation7 [shape = 'u8[512]{0}', space=vmem, size = 0x400, scoped, tag = 'input window, operand 2, single buffered']
    #allocation8 [shape = 'u8[16384]{0}', space=vmem, size = 0x4000, scoped, tag = 'output window, operand 0, single buffered']
    %8 = vsyncpa [#allocation3], 0
    %9 = vsyncpa [#allocation6], 0
    %10 = vsyncpa [#allocation4], 0
    // Predicated region
    $region2: #{telepath_forward.47} parent=1 // pred_check
      _
    $region3: #{telepath_forward.47} parent=1 // pred_check_branch
      %12 = sbr.rel (0) target = $region5
    $region4: #{telepath_forward.47} parent=1 // pred_region
      %s14 = ssub.s32 512, 512
      %15 = vsyncadd [#allocation3], %s14
      %s16 = sshll.u32 [#allocation2], 4
      %s17 = int_to_ptr.vmem [resolvable:$true] %s16
      %22 = dma.hbm_to_vmem [thread:$0]  %s0, 512, %s17, [#allocation3], 128, 128, 8
    $region5: #{telepath_forward.47} parent=1 // pred_fallthru
      _
    // Predicated region
    $region6: #{telepath_forward.47} parent=1 // pred_check
      _
    $region7: #{telepath_forward.47} parent=1 // pred_check_branch
      %24 = sbr.rel (0) target = $region9
    $region8: #{telepath_forward.47} parent=1 // pred_region
      %s26 = ssub.s32 512, 512
      %27 = vsyncadd [#allocation6], %s26
      %s28 = sshll.u32 [#allocation5], 4
      %s29 = int_to_ptr.vmem [resolvable:$true] %s28
      %34 = dma.hbm_to_vmem [thread:$0]  %s1, 512, %s29, [#allocation6], 128, 128, 8
    $region9: #{telepath_forward.47} parent=1 // pred_fallthru
      _
    // Predicated region
    $region10: #{telepath_forward.47} parent=1 // pred_check
      _
    $region11: #{telepath_forward.47} parent=1 // pred_check_branch
      %36 = sbr.rel (0) target = $region13
    $region12: #{telepath_forward.47} parent=1 // pred_region
      %s38 = ssub.s32 16, 16
      %39 = vsyncadd [#allocation6], %s38
      %s41 = sshll.u32 [#allocation7], 4
      %s42 = int_to_ptr.vmem [resolvable:$true] %s41
      %44 = dma.hbm_to_vmem [thread:$0]  %s2, 16, %s42, [#allocation6]
    $region13: #{telepath_forward.47} parent=1 // pred_fallthru
      _
    // Predicated region
    $region14: #{telepath_forward.47} parent=1 // pred_check
      _
    $region15: #{telepath_forward.47} parent=1 // pred_check_branch
      %46 = sbr.rel (0) target = $region17
    $region16: #{telepath_forward.47} parent=1 // pred_region
      %47 = dma.done [#allocation3], 512
    $region17: #{telepath_forward.47} parent=1 // pred_fallthru
      _
    // Predicated region
    $region18: #{telepath_forward.47} parent=1 // pred_check
      _
    $region19: #{telepath_forward.47} parent=1 // pred_check_branch
      %49 = sbr.rel (0) target = $region21
    $region20: #{telepath_forward.47} parent=1 // pred_region
      %50 = dma.done [#allocation6], 512
    $region21: #{telepath_forward.47} parent=1 // pred_fallthru
      _
    // Predicated region
    $region22: #{telepath_forward.47} parent=1 // pred_check
      _
    $region23: #{telepath_forward.47} parent=1 // pred_check_branch
      %52 = sbr.rel (0) target = $region25
    $region24: #{telepath_forward.47} parent=1 // pred_region
      %53 = dma.done [#allocation6], 16
    $region25: #{telepath_forward.47} parent=1 // pred_fallthru
      _
    %v55 = vld [vmem:[#allocation2] sm:$0xff]
    %v56 = vld [vmem:[#allocation2 + $0x8] sm:$0xff]
    %v57 = vld [vmem:[#allocation2 + $0x10] sm:$0xff]
    %v58 = vld [vmem:[#allocation2 + $0x18] sm:$0xff]
    %v59 = vpack.c.bf16 %v56, %v55
    %v60 = vpack.c.bf16 %v58, %v57
    %v61 = vld [vmem:[#allocation5] sm:$0xff]
    %v62 = vld [vmem:[#allocation5 + $0x8] sm:$0xff]
    %v63 = vld [vmem:[#allocation5 + $0x10] sm:$0xff]
    %v64 = vld [vmem:[#allocation5 + $0x18] sm:$0xff]
    %v65 = vpack.c.bf16 %v62, %v61
    %v66 = vpack.c.bf16 %v64, %v63
    %v67 = vld [vmem:[#allocation7] sm:$0x1]
    %v69 = vlaneseq
    %v70 = vshrl.u32 %v69, 7
    %v71 = vsub.s32 0, %v70
    %v72 = vrot.slane %v67, %v71
    %vm74 = vcmask 261120
    %v76 = vsel %vm74, %v59, 0
    %v79 = vsel %vm74, %v60, 0
    %81 = vmatprep.subr.bf16.mxu0 0
    %82 = vmatpush1.bf16.msra.mxu0 %v65
    %83 = vmatprep.subr.bf16.mxu0 0
    %84 = vmatpush1.bf16.msra.mxu0 %v66
    %85 = vmatprep.subr.bf16.mxu0 0
    %86 = vmatpush1.bf16.msra.mxu0 0
    %87 = vmatprep.subr.bf16.mxu0 0
    %88 = vmatpush1.bf16.msra.mxu0 0
    %89 = vmatprep.subr.bf16.mxu0 0
    %90 = vmatpush1.bf16.msra.mxu0 0
    %91 = vmatprep.subr.bf16.mxu0 0
    %92 = vmatpush1.bf16.msra.mxu0 0
    %93 = vmatprep.subr.bf16.mxu0 0
    %94 = vmatpush1.bf16.msra.mxu0 0
    %95 = vmatprep.subr.bf16.mxu0 0
    %96 = vmatpush1.bf16.msra.mxu0 0
    %97 = vmatprep.subr.bf16.mxu0 0
    %98 = vmatpush1.bf16.msra.mxu0 0
    %99 = vmatprep.subr.bf16.mxu0 0
    %100 = vmatpush1.bf16.msra.mxu0 0
    %101 = vmatprep.subr.bf16.mxu0 0
    %102 = vmatpush1.bf16.msra.mxu0 0
    %103 = vmatprep.subr.bf16.mxu0 0
    %104 = vmatpush1.bf16.msra.mxu0 0
    %105 = vmatprep.subr.bf16.mxu0 0
    %106 = vmatpush1.bf16.msra.mxu0 0
    %107 = vmatprep.subr.bf16.mxu0 0
    %108 = vmatpush1.bf16.msra.mxu0 0
    %109 = vmatprep.subr.bf16.mxu0 0
    %110 = vmatpush1.bf16.msra.mxu0 0
    %111 = vmatprep.subr.bf16.mxu0 0
    %112 = vmatpush1.bf16.msra.mxu0 0
    %113 = vmatprep.mubr.bf16.mxu0 0
    %114 = vmatmul.mubr.bf16.gmra.mrb[0].mxu0 %v76
    %v115 = vpop.f32.mrb[0].mxu0
    %v116 = vadd.f32 %v72, %v115
    %v117 = vpop.f32.mrb[0].mxu0
    %v118 = vpop.f32.mrb[0].mxu0
    %v119 = vadd.f32 %v72, %v118
    %v120 = vpop.f32.mrb[0].mxu0
    %121 = vmatprep.mubr.bf16.mxu0 0
    %122 = vmatmul.mubr.bf16.gmra.mrb[0].mxu0 %v79
    %v123 = vpop.f32.mrb[0].mxu0
    %v124 = vadd.f32 %v72, %v123
    %v125 = vpop.f32.mrb[0].mxu0
    %v126 = vpop.f32.mrb[0].mxu0
    %v127 = vadd.f32 %v72, %v126
    %v128 = vpop.f32.mrb[0].mxu0
    %129 = vdwg.mxu0
    %vm130 = vcmask 523264
    %131 = vst.msk [vmem:[#allocation8] sm:$0xff] %vm130, %v116
    %132 = vst.msk [vmem:[#allocation8 + $0x8] sm:$0xff] %vm130, %v119
    %133 = vst.msk [vmem:[#allocation8 + $0x10] sm:$0xff] %vm130, %v124
    %134 = vst.msk [vmem:[#allocation8 + $0x18] sm:$0xff] %vm130, %v127
    // Predicated region
    $region26: #{telepath_forward.47} parent=1 // pred_check
      _
    $region27: #{telepath_forward.47} parent=1 // pred_check_branch
      %136 = sbr.rel (0) target = $region29
    $region28: #{telepath_forward.47} parent=1 // pred_region
      %s138 = ssub.s32 512, 512
      %139 = vsyncadd [#allocation4], %s138
      %s140 = sshll.u32 [#allocation8], 4
      %s141 = int_to_ptr.vmem [resolvable:$true] %s140
      %146 = dma.vmem_to_hbm [thread:$0]  %s141, 512, %s3, [#allocation4], 128, 128, 8
    $region29: #{telepath_forward.47} parent=1 // pred_fallthru
      _
    // Predicated region
    $region30: #{telepath_forward.47} parent=1 // pred_check
      _
    $region31: #{telepath_forward.47} parent=1 // pred_check_branch
      %148 = sbr.rel (0) target = $region33
    $region32: #{telepath_forward.47} parent=1 // pred_region
      %149 = dma.done [#allocation4], 512
    $region33: #{telepath_forward.47} parent=1 // pred_fallthru
      _
    %150 = vsyncpa [#allocation3], 1
    %151 = vsyncpa [#allocation6], 1
    %152 = vsyncpa [#allocation4], 1

// kernel: telepath_forward.46
$region0: #{telepath_forward.46}
  #allocation0 [shape = 'u32[]', space=smem, size = 0x4, offset = 0x4, fixed_abs, tag = 'smem constant byte address 0x4 - core index']
  #allocation1 [shape = 'u32[144,128]{1,0:T(1,128)}', space=vmem, size = 0x12000, scoped, tag = 'internal scratch']
  %s0 = inlined_call_operand.hbm [shape: f32[12,32], index: 0, kind: input, shape index: {}]
  %s1 = inlined_call_operand.hbm [shape: f32[32,32], index: 1, kind: input, shape index: {}]
  %s2 = inlined_call_operand.hbm [shape: f32[1,32], index: 2, kind: input, shape index: {}]
  %s3 = inlined_call_operand.hbm [shape: f32[1,32], index: 3, kind: input, shape index: {}]
  %s4 = inlined_call_operand.hbm [shape: f32[1,32], index: 4, kind: input, shape index: {}]
  %s5 = inlined_call_operand.hbm [shape: f32[12,32], index: 5, kind: output, shape index: {}]
  %s6 = sld [smem:[#allocation0]]
  $region50: #{telepath_forward.46} parent=0
    _
  %s8 = ssub.s32 1, %s6
  %s9 = scalar_select 0, %s8, %s6
  $region1: #{telepath_forward.46} parent=0
    #allocation2 [shape = 'u8[8192]{0}', space=vmem, size = 0x2000, scoped, tag = 'input window, operand 0, single buffered']
    #allocation3 [shape = 's32[1]{0}', space=sflag, size = 0x4, scoped, tag = 'scoped memory for telepath_forward.46']
    #allocation4 [shape = 's32[1]{0}', space=sflag, size = 0x4, scoped, tag = 'scoped memory for telepath_forward.46']
    #allocation5 [shape = 'u8[16384]{0}', space=vmem, size = 0x4000, scoped, tag = 'input window, operand 1, single buffered']
    #allocation6 [shape = 's32[1]{0}', space=sflag, size = 0x4, scoped, tag = 'scoped memory for telepath_forward.46']
    #allocation7 [shape = 'u8[512]{0}', space=vmem, size = 0x400, scoped, tag = 'input window, operand 2, single buffered']
    #allocation8 [shape = 'u8[512]{0}', space=vmem, size = 0x400, scoped, tag = 'input window, operand 3, single buffered']
    #allocation9 [shape = 's32[1]{0}', space=sflag, size = 0x4, scoped, tag = 'scoped memory for telepath_forward.46']
    #allocation10 [shape = 'u8[512]{0}', space=vmem, size = 0x400, scoped, tag = 'input window, operand 4, single buffered']
    #allocation11 [shape = 'u8[8192]{0}', space=vmem, size = 0x2000, scoped, tag = 'output window, operand 0, single buffered']
    %10 = vsyncpa [#allocation3], 0
    %11 = vsyncpa [#allocation6], 0
    %12 = vsyncpa [#allocation9], 0
    %13 = vsyncpa [#allocation4], 0
    // Predicated region
    $region2: #{telepath_forward.46} parent=1 // pred_check
      _
    $region3: #{telepath_forward.46} parent=1 // pred_check_branch
      %15 = sbr.rel (0) target = $region5
    $region4: #{telepath_forward.46} parent=1 // pred_region
      %s17 = ssub.s32 256, 256
      %18 = vsyncadd [#allocation3], %s17
      %s19 = sshll.u32 [#allocation2], 4
      %s20 = int_to_ptr.vmem [resolvable:$true] %s19
      %25 = dma.hbm_to_vmem [thread:$0]  %s0, 256, %s20, [#allocation3], 128, 128, 8
    $region5: #{telepath_forward.46} parent=1 // pred_fallthru
      _
    // Predicated region
    $region6: #{telepath_forward.46} parent=1 // pred_check
      _
    $region7: #{telepath_forward.46} parent=1 // pred_check_branch
      %27 = sbr.rel (0) target = $region9
    $region8: #{telepath_forward.46} parent=1 // pred_region
      %s29 = ssub.s32 512, 512
      %30 = vsyncadd [#allocation6], %s29
      %s31 = sshll.u32 [#allocation5], 4
      %s32 = int_to_ptr.vmem [resolvable:$true] %s31
      %37 = dma.hbm_to_vmem [thread:$0]  %s1, 512, %s32, [#allocation6], 128, 128, 8
    $region9: #{telepath_forward.46} parent=1 // pred_fallthru
      _
    // Predicated region
    $region10: #{telepath_forward.46} parent=1 // pred_check
      _
    $region11: #{telepath_forward.46} parent=1 // pred_check_branch
      %39 = sbr.rel (0) target = $region13
    $region12: #{telepath_forward.46} parent=1 // pred_region
      %s41 = ssub.s32 16, 16
      %42 = vsyncadd [#allocation6], %s41
      %s44 = sshll.u32 [#allocation7], 4
      %s45 = int_to_ptr.vmem [resolvable:$true] %s44
      %47 = dma.hbm_to_vmem [thread:$0]  %s2, 16, %s45, [#allocation6]
    $region13: #{telepath_forward.46} parent=1 // pred_fallthru
      _
    // Predicated region
    $region14: #{telepath_forward.46} parent=1 // pred_check
      _
    $region15: #{telepath_forward.46} parent=1 // pred_check_branch
      %49 = sbr.rel (0) target = $region17
    $region16: #{telepath_forward.46} parent=1 // pred_region
      %s51 = ssub.s32 16, 16
      %52 = vsyncadd [#allocation9], %s51
      %s54 = sshll.u32 [#allocation8], 4
      %s55 = int_to_ptr.vmem [resolvable:$true] %s54
      %57 = dma.hbm_to_vmem [thread:$0]  %s3, 16, %s55, [#allocation9]
    $region17: #{telepath_forward.46} parent=1 // pred_fallthru
      _
    // Predicated region
    $region18: #{telepath_forward.46} parent=1 // pred_check
      _
    $region19: #{telepath_forward.46} parent=1 // pred_check_branch
      %59 = sbr.rel (0) target = $region21
    $region20: #{telepath_forward.46} parent=1 // pred_region
      %s61 = ssub.s32 16, 16
      %62 = vsyncadd [#allocation9], %s61
      %s64 = sshll.u32 [#allocation10], 4
      %s65 = int_to_ptr.vmem [resolvable:$true] %s64
      %67 = dma.hbm_to_vmem [thread:$0]  %s4, 16, %s65, [#allocation9]
    $region21: #{telepath_forward.46} parent=1 // pred_fallthru
      _
    // Predicated region
    $region22: #{telepath_forward.46} parent=1 // pred_check
      _
    $region23: #{telepath_forward.46} parent=1 // pred_check_branch
      %69 = sbr.rel (0) target = $region25
    $region24: #{telepath_forward.46} parent=1 // pred_region
      %70 = dma.done [#allocation3], 256
    $region25: #{telepath_forward.46} parent=1 // pred_fallthru
      _
    // Predicated region
    $region26: #{telepath_forward.46} parent=1 // pred_check
      _
    $region27: #{telepath_forward.46} parent=1 // pred_check_branch
      %72 = sbr.rel (0) target = $region29
    $region28: #{telepath_forward.46} parent=1 // pred_region
      %73 = dma.done [#allocation6], 512
    $region29: #{telepath_forward.46} parent=1 // pred_fallthru
      _
    // Predicated region
    $region30: #{telepath_forward.46} parent=1 // pred_check
      _
    $region31: #{telepath_forward.46} parent=1 // pred_check_branch
      %75 = sbr.rel (0) target = $region33
    $region32: #{telepath_forward.46} parent=1 // pred_region
      %76 = dma.done [#allocation6], 16
    $region33: #{telepath_forward.46} parent=1 // pred_fallthru
      _
    // Predicated region
    $region34: #{telepath_forward.46} parent=1 // pred_check
      _
    $region35: #{telepath_forward.46} parent=1 // pred_check_branch
      %78 = sbr.rel (0) target = $region37
    $region36: #{telepath_forward.46} parent=1 // pred_region
      %79 = dma.done [#allocation9], 16
    $region37: #{telepath_forward.46} parent=1 // pred_fallthru
      _
    // Predicated region
    $region38: #{telepath_forward.46} parent=1 // pred_check
      _
    $region39: #{telepath_forward.46} parent=1 // pred_check_branch
      %81 = sbr.rel (0) target = $region41
    $region40: #{telepath_forward.46} parent=1 // pred_region
      %82 = dma.done [#allocation9], 16
    $region41: #{telepath_forward.46} parent=1 // pred_fallthru
      _
    %v84 = vld [vmem:[#allocation2] sm:$0xff]
    %v85 = vld [vmem:[#allocation2 + $0x8] sm:$0xf]
    %vm86 = vcmask 261120
    %v87 = vsel %vm86, %v84, 0.0
    %88 = vadd.xlane.f32.xlu0 %v87
    %v89 = vpop.xlane.xlu0 %88
    %vm90 = vcmask 257024
    %v91 = vsel %vm90, %v85, 0.0
    %92 = vadd.xlane.f32.xlu0 %v91
    %v93 = vpop.xlane.xlu0 %92
    %v94 = vrcp.pop 32.0
    %v95 = vmul.f32 %v89, %v94
    %v96 = vmul.f32 %v93, %v94
    %v97 = vsub.f32 %v84, %v95
    %v98 = vsub.f32 %v85, %v96
    %v99 = vmul.f32 %v97, %v97
    %v100 = vmul.f32 %v98, %v98
    %v101 = vsel %vm86, %v99, 0.0
    %102 = vadd.xlane.f32.xlu0 %v101
    %v103 = vpop.xlane.xlu0 %102
    %v104 = vsel %vm90, %v100, 0.0
    %105 = vadd.xlane.f32.xlu0 %v104
    %v106 = vpop.xlane.xlu0 %105
    %v107 = vmul.f32 %v103, %v94
    %v108 = vmul.f32 %v106, %v94
    %v109 = vadd.f32 %v107, 1e-05
    %v110 = vadd.f32 %v108, 1e-05
    %v111 = vrsqrt.pop %v109
    %v112 = vrsqrt.pop %v110
    %v113 = vmul.f32 %v97, %v111
    %v114 = vmul.f32 %v98, %v112
    %v115 = vld [vmem:[#allocation8] sm:$0x1]
    %v117 = vlaneseq
    %v118 = vshrl.u32 %v117, 7
    %v119 = vsub.s32 0, %v118
    %v120 = vrot.slane %v115, %v119
    %v122 = vmul.f32 %v113, %v120
    %v123 = vmul.f32 %v114, %v120
    %v124 = vld [vmem:[#allocation10] sm:$0x1]
    %v126 = vlaneseq
    %v127 = vshrl.u32 %v126, 7
    %v128 = vsub.s32 0, %v127
    %v129 = vrot.slane %v124, %v128
    %v131 = vadd.f32 %v122, %v129
    %v132 = vadd.f32 %v123, %v129
    %v133 = vpack.c.bf16 %v132, %v131
    %v134 = vld [vmem:[#allocation5] sm:$0xff]
    %v135 = vld [vmem:[#allocation5 + $0x8] sm:$0xff]
    %v136 = vld [vmem:[#allocation5 + $0x10] sm:$0xff]
    %v137 = vld [vmem:[#allocation5 + $0x18] sm:$0xff]
    %v138 = vpack.c.bf16 %v135, %v134
    %v139 = vpack.c.bf16 %v137, %v136
    %v140 = vld [vmem:[#allocation7] sm:$0x1]
    %v142 = vlaneseq
    %v143 = vshrl.u32 %v142, 7
    %v144 = vsub.s32 0, %v143
    %v145 = vrot.slane %v140, %v144
    %v148 = vsel %vm86, %v133, 0
    %150 = vmatprep.subr.bf16.mxu0 0
    %151 = vmatpush1.bf16.msra.mxu0 %v138
    %152 = vmatprep.subr.bf16.mxu0 0
    %153 = vmatpush1.bf16.msra.mxu0 %v139
    %154 = vmatprep.subr.bf16.mxu0 0
    %155 = vmatpush1.bf16.msra.mxu0 0
    %156 = vmatprep.subr.bf16.mxu0 0
    %157 = vmatpush1.bf16.msra.mxu0 0
    %158 = vmatprep.subr.bf16.mxu0 0
    %159 = vmatpush1.bf16.msra.mxu0 0
    %160 = vmatprep.subr.bf16.mxu0 0
    %161 = vmatpush1.bf16.msra.mxu0 0
    %162 = vmatprep.subr.bf16.mxu0 0
    %163 = vmatpush1.bf16.msra.mxu0 0
    %164 = vmatprep.subr.bf16.mxu0 0
    %165 = vmatpush1.bf16.msra.mxu0 0
    %166 = vmatprep.subr.bf16.mxu0 0
    %167 = vmatpush1.bf16.msra.mxu0 0
    %168 = vmatprep.subr.bf16.mxu0 0
    %169 = vmatpush1.bf16.msra.mxu0 0
    %170 = vmatprep.subr.bf16.mxu0 0
    %171 = vmatpush1.bf16.msra.mxu0 0
    %172 = vmatprep.subr.bf16.mxu0 0
    %173 = vmatpush1.bf16.msra.mxu0 0
    %174 = vmatprep.subr.bf16.mxu0 0
    %175 = vmatpush1.bf16.msra.mxu0 0
    %176 = vmatprep.subr.bf16.mxu0 0
    %177 = vmatpush1.bf16.msra.mxu0 0
    %178 = vmatprep.subr.bf16.mxu0 0
    %179 = vmatpush1.bf16.msra.mxu0 0
    %180 = vmatprep.subr.bf16.mxu0 0
    %181 = vmatpush1.bf16.msra.mxu0 0
    %182 = vmatprep.mubr.bf16.mxu0 0
    %183 = vmatmul.mubr.bf16.gmra.mrb[0].mxu0 %v148
    %v184 = vpop.f32.mrb[0].mxu0
    %v185 = vadd.f32 %v145, %v184
    %v186 = vpop.f32.mrb[0].mxu0
    %v187 = vpop.f32.mrb[0].mxu0
    %v188 = vadd.f32 %v145, %v187
    %v189 = vpop.f32.mrb[0].mxu0
    %190 = vdwg.mxu0
    %191 = vst.msk [vmem:[#allocation11] sm:$0xff] %vm86, %v185
    %192 = vst.msk [vmem:[#allocation11 + $0x8] sm:$0xf] %vm90, %v188
    // Predicated region
    $region42: #{telepath_forward.46} parent=1 // pred_check
      _
    $region43: #{telepath_forward.46} parent=1 // pred_check_branch
      %194 = sbr.rel (0) target = $region45
    $region44: #{telepath_forward.46} parent=1 // pred_region
      %s196 = ssub.s32 256, 256
      %197 = vsyncadd [#allocation4], %s196
      %s198 = sshll.u32 [#allocation11], 4
      %s199 = int_to_ptr.vmem [resolvable:$true] %s198
      %204 = dma.vmem_to_hbm [thread:$0]  %s199, 256, %s5, [#allocation4], 128, 128, 8
    $region45: #{telepath_forward.46} parent=1 // pred_fallthru
      _
    // Predicated region
    $region46: #{telepath_forward.46} parent=1 // pred_check
      _
    $region47: #{telepath_forward.46} parent=1 // pred_check_branch
      %206 = sbr.rel (0) target = $region49
    $region48: #{telepath_forward.46} parent=1 // pred_region
      %207 = dma.done [#allocation4], 256
    $region49: #{telepath_forward.46} parent=1 // pred_fallthru
      _
    %208 = vsyncpa [#allocation3], 1
    %209 = vsyncpa [#allocation6], 1
    %210 = vsyncpa [#allocation9], 1
    %211 = vsyncpa [#allocation4], 1

// kernel: telepath_forward.43
$region0: #{telepath_forward.43}
  #allocation0 [shape = 'u32[]', space=smem, size = 0x4, offset = 0x4, fixed_abs, tag = 'smem constant byte address 0x4 - core index']
  #allocation1 [shape = 'u32[144,128]{1,0:T(1,128)}', space=vmem, size = 0x12000, scoped, tag = 'internal scratch']
  %s0 = inlined_call_operand.hbm [shape: f32[12,32], index: 0, kind: input, shape index: {}]
  %s1 = inlined_call_operand.hbm [shape: f32[32,96], index: 1, kind: input, shape index: {}]
  %s2 = inlined_call_operand.hbm [shape: f32[1,96], index: 2, kind: input, shape index: {}]
  %s3 = inlined_call_operand.hbm [shape: f32[1,32], index: 3, kind: input, shape index: {}]
  %s4 = inlined_call_operand.hbm [shape: f32[1,32], index: 4, kind: input, shape index: {}]
  %s5 = inlined_call_operand.hbm [shape: f32[12,96], index: 5, kind: output, shape index: {}]
  %s6 = sld [smem:[#allocation0]]
  $region50: #{telepath_forward.43} parent=0
    _
  %s8 = ssub.s32 1, %s6
  %s9 = scalar_select 0, %s8, %s6
  $region1: #{telepath_forward.43} parent=0
    #allocation2 [shape = 'u8[8192]{0}', space=vmem, size = 0x2000, scoped, tag = 'input window, operand 0, single buffered']
    #allocation3 [shape = 's32[1]{0}', space=sflag, size = 0x4, scoped, tag = 'scoped memory for telepath_forward.43']
    #allocation4 [shape = 's32[1]{0}', space=sflag, size = 0x4, scoped, tag = 'scoped memory for telepath_forward.43']
    #allocation5 [shape = 'u8[16384]{0}', space=vmem, size = 0x4000, scoped, tag = 'input window, operand 1, single buffered']
    #allocation6 [shape = 's32[1]{0}', space=sflag, size = 0x4, scoped, tag = 'scoped memory for telepath_forward.43']
    #allocation7 [shape = 'u8[512]{0}', space=vmem, size = 0x400, scoped, tag = 'input window, operand 2, single buffered']
    #allocation8 [shape = 'u8[512]{0}', space=vmem, size = 0x400, scoped, tag = 'input window, operand 3, single buffered']
    #allocation9 [shape = 's32[1]{0}', space=sflag, size = 0x4, scoped, tag = 'scoped memory for telepath_forward.43']
    #allocation10 [shape = 'u8[512]{0}', space=vmem, size = 0x400, scoped, tag = 'input window, operand 4, single buffered']
    #allocation11 [shape = 'u8[8192]{0}', space=vmem, size = 0x2000, scoped, tag = 'output window, operand 0, single buffered']
    %10 = vsyncpa [#allocation3], 0
    %11 = vsyncpa [#allocation6], 0
    %12 = vsyncpa [#allocation9], 0
    %13 = vsyncpa [#allocation4], 0
    // Predicated region
    $region2: #{telepath_forward.43} parent=1 // pred_check
      _
    $region3: #{telepath_forward.43} parent=1 // pred_check_branch
      %15 = sbr.rel (0) target = $region5
    $region4: #{telepath_forward.43} parent=1 // pred_region
      %s17 = ssub.s32 256, 256
      %18 = vsyncadd [#allocation3], %s17
      %s19 = sshll.u32 [#allocation2], 4
      %s20 = int_to_ptr.vmem [resolvable:$true] %s19
      %25 = dma.hbm_to_vmem [thread:$0]  %s0, 256, %s20, [#allocation3], 128, 128, 8
    $region5: #{telepath_forward.43} parent=1 // pred_fallthru
      _
    // Predicated region
    $region6: #{telepath_forward.43} parent=1 // pred_check
      _
    $region7: #{telepath_forward.43} parent=1 // pred_check_branch
      %27 = sbr.rel (0) target = $region9
    $region8: #{telepath_forward.43} parent=1 // pred_region
      %s29 = ssub.s32 512, 512
      %30 = vsyncadd [#allocation6], %s29
      %s31 = sshll.u32 [#allocation5], 4
      %s32 = int_to_ptr.vmem [resolvable:$true] %s31
      %37 = dma.hbm_to_vmem [thread:$0]  %s1, 512, %s32, [#allocation6], 128, 128, 8
    $region9: #{telepath_forward.43} parent=1 // pred_fallthru
      _
    // Predicated region
    $region10: #{telepath_forward.43} parent=1 // pred_check
      _
    $region11: #{telepath_forward.43} parent=1 // pred_check_branch
      %39 = sbr.rel (0) target = $region13
    $region12: #{telepath_forward.43} parent=1 // pred_region
      %s41 = ssub.s32 16, 16
      %42 = vsyncadd [#allocation6], %s41
      %s44 = sshll.u32 [#allocation7], 4
      %s45 = int_to_ptr.vmem [resolvable:$true] %s44
      %47 = dma.hbm_to_vmem [thread:$0]  %s2, 16, %s45, [#allocation6]
    $region13: #{telepath_forward.43} parent=1 // pred_fallthru
      _
    // Predicated region
    $region14: #{telepath_forward.43} parent=1 // pred_check
      _
    $region15: #{telepath_forward.43} parent=1 // pred_check_branch
      %49 = sbr.rel (0) target = $region17
    $region16: #{telepath_forward.43} parent=1 // pred_region
      %s51 = ssub.s32 16, 16
      %52 = vsyncadd [#allocation9], %s51
      %s54 = sshll.u32 [#allocation8], 4
      %s55 = int_to_ptr.vmem [resolvable:$true] %s54
      %57 = dma.hbm_to_vmem [thread:$0]  %s3, 16, %s55, [#allocation9]
    $region17: #{telepath_forward.43} parent=1 // pred_fallthru
      _
    // Predicated region
    $region18: #{telepath_forward.43} parent=1 // pred_check
      _
    $region19: #{telepath_forward.43} parent=1 // pred_check_branch
      %59 = sbr.rel (0) target = $region21
    $region20: #{telepath_forward.43} parent=1 // pred_region
      %s61 = ssub.s32 16, 16
      %62 = vsyncadd [#allocation9], %s61
      %s64 = sshll.u32 [#allocation10], 4
      %s65 = int_to_ptr.vmem [resolvable:$true] %s64
      %67 = dma.hbm_to_vmem [thread:$0]  %s4, 16, %s65, [#allocation9]
    $region21: #{telepath_forward.43} parent=1 // pred_fallthru
      _
    // Predicated region
    $region22: #{telepath_forward.43} parent=1 // pred_check
      _
    $region23: #{telepath_forward.43} parent=1 // pred_check_branch
      %69 = sbr.rel (0) target = $region25
    $region24: #{telepath_forward.43} parent=1 // pred_region
      %70 = dma.done [#allocation3], 256
    $region25: #{telepath_forward.43} parent=1 // pred_fallthru
      _
    // Predicated region
    $region26: #{telepath_forward.43} parent=1 // pred_check
      _
    $region27: #{telepath_forward.43} parent=1 // pred_check_branch
      %72 = sbr.rel (0) target = $region29
    $region28: #{telepath_forward.43} parent=1 // pred_region
      %73 = dma.done [#allocation6], 512
    $region29: #{telepath_forward.43} parent=1 // pred_fallthru
      _
    // Predicated region
    $region30: #{telepath_forward.43} parent=1 // pred_check
      _
    $region31: #{telepath_forward.43} parent=1 // pred_check_branch
      %75 = sbr.rel (0) target = $region33
    $region32: #{telepath_forward.43} parent=1 // pred_region
      %76 = dma.done [#allocation6], 16
    $region33: #{telepath_forward.43} parent=1 // pred_fallthru
      _
    // Predicated region
    $region34: #{telepath_forward.43} parent=1 // pred_check
      _
    $region35: #{telepath_forward.43} parent=1 // pred_check_branch
      %78 = sbr.rel (0) target = $region37
    $region36: #{telepath_forward.43} parent=1 // pred_region
      %79 = dma.done [#allocation9], 16
    $region37: #{telepath_forward.43} parent=1 // pred_fallthru
      _
    // Predicated region
    $region38: #{telepath_forward.43} parent=1 // pred_check
      _
    $region39: #{telepath_forward.43} parent=1 // pred_check_branch
      %81 = sbr.rel (0) target = $region41
    $region40: #{telepath_forward.43} parent=1 // pred_region
      %82 = dma.done [#allocation9], 16
    $region41: #{telepath_forward.43} parent=1 // pred_fallthru
      _
    %v84 = vld [vmem:[#allocation2] sm:$0xff]
    %v85 = vld [vmem:[#allocation2 + $0x8] sm:$0xf]
    %vm86 = vcmask 261120
    %v87 = vsel %vm86, %v84, 0.0
    %88 = vadd.xlane.f32.xlu0 %v87
    %v89 = vpop.xlane.xlu0 %88
    %vm90 = vcmask 257024
    %v91 = vsel %vm90, %v85, 0.0
    %92 = vadd.xlane.f32.xlu0 %v91
    %v93 = vpop.xlane.xlu0 %92
    %v94 = vrcp.pop 32.0
    %v95 = vmul.f32 %v89, %v94
    %v96 = vmul.f32 %v93, %v94
    %v97 = vsub.f32 %v84, %v95
    %v98 = vsub.f32 %v85, %v96
    %v99 = vmul.f32 %v97, %v97
    %v100 = vmul.f32 %v98, %v98
    %v101 = vsel %vm86, %v99, 0.0
    %102 = vadd.xlane.f32.xlu0 %v101
    %v103 = vpop.xlane.xlu0 %102
    %v104 = vsel %vm90, %v100, 0.0
    %105 = vadd.xlane.f32.xlu0 %v104
    %v106 = vpop.xlane.xlu0 %105
    %v107 = vmul.f32 %v103, %v94
    %v108 = vmul.f32 %v106, %v94
    %v109 = vadd.f32 %v107, 1e-05
    %v110 = vadd.f32 %v108, 1e-05
    %v111 = vrsqrt.pop %v109
    %v112 = vrsqrt.pop %v110
    %v113 = vmul.f32 %v97, %v111
    %v114 = vmul.f32 %v98, %v112
    %v115 = vld [vmem:[#allocation8] sm:$0x1]
    %v117 = vlaneseq
    %v118 = vshrl.u32 %v117, 7
    %v119 = vsub.s32 0, %v118
    %v120 = vrot.slane %v115, %v119
    %v122 = vmul.f32 %v113, %v120
    %v123 = vmul.f32 %v114, %v120
    %v124 = vld [vmem:[#allocation10] sm:$0x1]
    %v126 = vlaneseq
    %v127 = vshrl.u32 %v126, 7
    %v128 = vsub.s32 0, %v127
    %v129 = vrot.slane %v124, %v128
    %v131 = vadd.f32 %v122, %v129
    %v132 = vadd.f32 %v123, %v129
    %v133 = vpack.c.bf16 %v132, %v131
    %v134 = vld [vmem:[#allocation5] sm:$0xff]
    %v135 = vld [vmem:[#allocation5 + $0x8] sm:$0xff]
    %v136 = vld [vmem:[#allocation5 + $0x10] sm:$0xff]
    %v137 = vld [vmem:[#allocation5 + $0x18] sm:$0xff]
    %v138 = vpack.c.bf16 %v135, %v134
    %v139 = vpack.c.bf16 %v137, %v136
    %v140 = vld [vmem:[#allocation7] sm:$0x1]
    %v142 = vlaneseq
    %v143 = vshrl.u32 %v142, 7
    %v144 = vsub.s32 0, %v143
    %v145 = vrot.slane %v140, %v144
    %v148 = vsel %vm86, %v133, 0
    %150 = vmatprep.subr.bf16.mxu0 0
    %151 = vmatpush1.bf16.msra.mxu0 %v138
    %152 = vmatprep.subr.bf16.mxu0 0
    %153 = vmatpush1.bf16.msra.mxu0 %v139
    %154 = vmatprep.subr.bf16.mxu0 0
    %155 = vmatpush1.bf16.msra.mxu0 0
    %156 = vmatprep.subr.bf16.mxu0 0
    %157 = vmatpush1.bf16.msra.mxu0 0
    %158 = vmatprep.subr.bf16.mxu0 0
    %159 = vmatpush1.bf16.msra.mxu0 0
    %160 = vmatprep.subr.bf16.mxu0 0
    %161 = vmatpush1.bf16.msra.mxu0 0
    %162 = vmatprep.subr.bf16.mxu0 0
    %163 = vmatpush1.bf16.msra.mxu0 0
    %164 = vmatprep.subr.bf16.mxu0 0
    %165 = vmatpush1.bf16.msra.mxu0 0
    %166 = vmatprep.subr.bf16.mxu0 0
    %167 = vmatpush1.bf16.msra.mxu0 0
    %168 = vmatprep.subr.bf16.mxu0 0
    %169 = vmatpush1.bf16.msra.mxu0 0
    %170 = vmatprep.subr.bf16.mxu0 0
    %171 = vmatpush1.bf16.msra.mxu0 0
    %172 = vmatprep.subr.bf16.mxu0 0
    %173 = vmatpush1.bf16.msra.mxu0 0
    %174 = vmatprep.subr.bf16.mxu0 0
    %175 = vmatpush1.bf16.msra.mxu0 0
    %176 = vmatprep.subr.bf16.mxu0 0
    %177 = vmatpush1.bf16.msra.mxu0 0
    %178 = vmatprep.subr.bf16.mxu0 0
    %179 = vmatpush1.bf16.msra.mxu0 0
    %180 = vmatprep.subr.bf16.mxu0 0
    %181 = vmatpush1.bf16.msra.mxu0 0
    %182 = vmatprep.mubr.bf16.mxu0 0
    %183 = vmatmul.mubr.bf16.gmra.mrb[0].mxu0 %v148
    %v184 = vpop.f32.mrb[0].mxu0
    %v185 = vadd.f32 %v145, %v184
    %v186 = vpop.f32.mrb[0].mxu0
    %v187 = vpop.f32.mrb[0].mxu0
    %v188 = vadd.f32 %v145, %v187
    %v189 = vpop.f32.mrb[0].mxu0
    %190 = vdwg.mxu0
    %vm191 = vcmask 785408
    %192 = vst.msk [vmem:[#allocation11] sm:$0xff] %vm191, %v185
    %vm193 = vcmask 781312
    %194 = vst.msk [vmem:[#allocation11 + $0x8] sm:$0xf] %vm193, %v188
    // Predicated region
    $region42: #{telepath_forward.43} parent=1 // pred_check
      _
    $region43: #{telepath_forward.43} parent=1 // pred_check_branch
      %196 = sbr.rel (0) target = $region45
    $region44: #{telepath_forward.43} parent=1 // pred_region
      %s198 = ssub.s32 256, 256
      %199 = vsyncadd [#allocation4], %s198
      %s200 = sshll.u32 [#allocation11], 4
      %s201 = int_to_ptr.vmem [resolvable:$true] %s200
      %206 = dma.vmem_to_hbm [thread:$0]  %s201, 256, %s5, [#allocation4], 128, 128, 8
    $region45: #{telepath_forward.43} parent=1 // pred_fallthru
      _
    // Predicated region
    $region46: #{telepath_forward.43} parent=1 // pred_check
      _
    $region47: #{telepath_forward.43} parent=1 // pred_check_branch
      %208 = sbr.rel (0) target = $region49
    $region48: #{telepath_forward.43} parent=1 // pred_region
      %209 = dma.done [#allocation4], 256
    $region49: #{telepath_forward.43} parent=1 // pred_fallthru
      _
    %210 = vsyncpa [#allocation3], 1
    %211 = vsyncpa [#allocation6], 1
    %212 = vsyncpa [#allocation9], 1
    %213 = vsyncpa [#allocation4], 1

// kernel: telepath_forward.45
$region0: #{telepath_forward.45}
  #allocation0 [shape = 'u32[]', space=smem, size = 0x4, offset = 0x4, fixed_abs, tag = 'smem constant byte address 0x4 - core index']
  #allocation1 [shape = 'u32[144,128]{1,0:T(1,128)}', space=vmem, size = 0x12000, scoped, tag = 'internal scratch']
  %s0 = inlined_call_operand.hbm [shape: f32[12,32], index: 0, kind: input, shape index: {}]
  %s1 = inlined_call_operand.hbm [shape: f32[32,32], index: 1, kind: input, shape index: {}]
  %s2 = inlined_call_operand.hbm [shape: f32[1,32], index: 2, kind: input, shape index: {}]
  %s3 = inlined_call_operand.hbm [shape: f32[12,32], index: 3, kind: input, shape index: {}]
  %s4 = inlined_call_operand.hbm [shape: f32[12,32], index: 4, kind: output, shape index: {}]
  %s5 = sld [smem:[#allocation0]]
  $region42: #{telepath_forward.45} parent=0
    _
  %s7 = ssub.s32 1, %s5
  %s8 = scalar_select 0, %s7, %s5
  $region1: #{telepath_forward.45} parent=0
    #allocation2 [shape = 'u8[8192]{0}', space=vmem, size = 0x2000, scoped, tag = 'input window, operand 0, single buffered']
    #allocation3 [shape = 's32[1]{0}', space=sflag, size = 0x4, scoped, tag = 'scoped memory for telepath_forward.45']
    #allocation4 [shape = 's32[1]{0}', space=sflag, size = 0x4, scoped, tag = 'scoped memory for telepath_forward.45']
    #allocation5 [shape = 'u8[16384]{0}', space=vmem, size = 0x4000, scoped, tag = 'input window, operand 1, single buffered']
    #allocation6 [shape = 's32[1]{0}', space=sflag, size = 0x4, scoped, tag = 'scoped memory for telepath_forward.45']
    #allocation7 [shape = 'u8[512]{0}', space=vmem, size = 0x400, scoped, tag = 'input window, operand 2, single buffered']
    #allocation8 [shape = 'u8[8192]{0}', space=vmem, size = 0x2000, scoped, tag = 'input window, operand 3, single buffered']
    #allocation9 [shape = 's32[1]{0}', space=sflag, size = 0x4, scoped, tag = 'scoped memory for telepath_forward.45']
    #allocation10 [shape = 'u8[8192]{0}', space=vmem, size = 0x2000, scoped, tag = 'output window, operand 0, single buffered']
    %9 = vsyncpa [#allocation3], 0
    %10 = vsyncpa [#allocation6], 0
    %11 = vsyncpa [#allocation9], 0
    %12 = vsyncpa [#allocation4], 0
    // Predicated region
    $region2: #{telepath_forward.45} parent=1 // pred_check
      _
    $region3: #{telepath_forward.45} parent=1 // pred_check_branch
      %14 = sbr.rel (0) target = $region5
    $region4: #{telepath_forward.45} parent=1 // pred_region
      %s16 = ssub.s32 256, 256
      %17 = vsyncadd [#allocation3], %s16
      %s18 = sshll.u32 [#allocation2], 4
      %s19 = int_to_ptr.vmem [resolvable:$true] %s18
      %24 = dma.hbm_to_vmem [thread:$0]  %s0, 256, %s19, [#allocation3], 128, 128, 8
    $region5: #{telepath_forward.45} parent=1 // pred_fallthru
      _
    // Predicated region
    $region6: #{telepath_forward.45} parent=1 // pred_check
      _
    $region7: #{telepath_forward.45} parent=1 // pred_check_branch
      %26 = sbr.rel (0) target = $region9
    $region8: #{telepath_forward.45} parent=1 // pred_region
      %s28 = ssub.s32 512, 512
      %29 = vsyncadd [#allocation6], %s28
      %s30 = sshll.u32 [#allocation5], 4
      %s31 = int_to_ptr.vmem [resolvable:$true] %s30
      %36 = dma.hbm_to_vmem [thread:$0]  %s1, 512, %s31, [#allocation6], 128, 128, 8
    $region9: #{telepath_forward.45} parent=1 // pred_fallthru
      _
    // Predicated region
    $region10: #{telepath_forward.45} parent=1 // pred_check
      _
    $region11: #{telepath_forward.45} parent=1 // pred_check_branch
      %38 = sbr.rel (0) target = $region13
    $region12: #{telepath_forward.45} parent=1 // pred_region
      %s40 = ssub.s32 16, 16
      %41 = vsyncadd [#allocation6], %s40
      %s43 = sshll.u32 [#allocation7], 4
      %s44 = int_to_ptr.vmem [resolvable:$true] %s43
      %46 = dma.hbm_to_vmem [thread:$0]  %s2, 16, %s44, [#allocation6]
    $region13: #{telepath_forward.45} parent=1 // pred_fallthru
      _
    // Predicated region
    $region14: #{telepath_forward.45} parent=1 // pred_check
      _
    $region15: #{telepath_forward.45} parent=1 // pred_check_branch
      %48 = sbr.rel (0) target = $region17
    $region16: #{telepath_forward.45} parent=1 // pred_region
      %s50 = ssub.s32 256, 256
      %51 = vsyncadd [#allocation9], %s50
      %s52 = sshll.u32 [#allocation8], 4
      %s53 = int_to_ptr.vmem [resolvable:$true] %s52
      %58 = dma.hbm_to_vmem [thread:$0]  %s3, 256, %s53, [#allocation9], 128, 128, 8
    $region17: #{telepath_forward.45} parent=1 // pred_fallthru
      _
    // Predicated region
    $region18: #{telepath_forward.45} parent=1 // pred_check
      _
    $region19: #{telepath_forward.45} parent=1 // pred_check_branch
      %60 = sbr.rel (0) target = $region21
    $region20: #{telepath_forward.45} parent=1 // pred_region
      %61 = dma.done [#allocation3], 256
    $region21: #{telepath_forward.45} parent=1 // pred_fallthru
      _
    // Predicated region
    $region22: #{telepath_forward.45} parent=1 // pred_check
      _
    $region23: #{telepath_forward.45} parent=1 // pred_check_branch
      %63 = sbr.rel (0) target = $region25
    $region24: #{telepath_forward.45} parent=1 // pred_region
      %64 = dma.done [#allocation6], 512
    $region25: #{telepath_forward.45} parent=1 // pred_fallthru
      _
    // Predicated region
    $region26: #{telepath_forward.45} parent=1 // pred_check
      _
    $region27: #{telepath_forward.45} parent=1 // pred_check_branch
      %66 = sbr.rel (0) target = $region29
    $region28: #{telepath_forward.45} parent=1 // pred_region
      %67 = dma.done [#allocation6], 16
    $region29: #{telepath_forward.45} parent=1 // pred_fallthru
      _
    // Predicated region
    $region30: #{telepath_forward.45} parent=1 // pred_check
      _
    $region31: #{telepath_forward.45} parent=1 // pred_check_branch
      %69 = sbr.rel (0) target = $region33
    $region32: #{telepath_forward.45} parent=1 // pred_region
      %70 = dma.done [#allocation9], 256
    $region33: #{telepath_forward.45} parent=1 // pred_fallthru
      _
    %v72 = vld [vmem:[#allocation2] sm:$0xff]
    %v73 = vld [vmem:[#allocation2 + $0x8] sm:$0xf]
    %v74 = vpack.c.bf16 %v73, %v72
    %v75 = vld [vmem:[#allocation5] sm:$0xff]
    %v76 = vld [vmem:[#allocation5 + $0x8] sm:$0xff]
    %v77 = vld [vmem:[#allocation5 + $0x10] sm:$0xff]
    %v78 = vld [vmem:[#allocation5 + $0x18] sm:$0xff]
    %v79 = vpack.c.bf16 %v76, %v75
    %v80 = vpack.c.bf16 %v78, %v77
    %v81 = vld [vmem:[#allocation7] sm:$0x1]
    %v83 = vlaneseq
    %v84 = vshrl.u32 %v83, 7
    %v85 = vsub.s32 0, %v84
    %v86 = vrot.slane %v81, %v85
    %vm88 = vcmask 261120
    %v90 = vsel %vm88, %v74, 0
    %92 = vmatprep.subr.bf16.mxu0 0
    %93 = vmatpush1.bf16.msra.mxu0 %v79
    %94 = vmatprep.subr.bf16.mxu0 0
    %95 = vmatpush1.bf16.msra.mxu0 %v80
    %96 = vmatprep.subr.bf16.mxu0 0
    %97 = vmatpush1.bf16.msra.mxu0 0
    %98 = vmatprep.subr.bf16.mxu0 0
    %99 = vmatpush1.bf16.msra.mxu0 0
    %100 = vmatprep.subr.bf16.mxu0 0
    %101 = vmatpush1.bf16.msra.mxu0 0
    %102 = vmatprep.subr.bf16.mxu0 0
    %103 = vmatpush1.bf16.msra.mxu0 0
    %104 = vmatprep.subr.bf16.mxu0 0
    %105 = vmatpush1.bf16.msra.mxu0 0
    %106 = vmatprep.subr.bf16.mxu0 0
    %107 = vmatpush1.bf16.msra.mxu0 0
    %108 = vmatprep.subr.bf16.mxu0 0
    %109 = vmatpush1.bf16.msra.mxu0 0
    %110 = vmatprep.subr.bf16.mxu0 0
    %111 = vmatpush1.bf16.msra.mxu0 0
    %112 = vmatprep.subr.bf16.mxu0 0
    %113 = vmatpush1.bf16.msra.mxu0 0
    %114 = vmatprep.subr.bf16.mxu0 0
    %115 = vmatpush1.bf16.msra.mxu0 0
    %116 = vmatprep.subr.bf16.mxu0 0
    %117 = vmatpush1.bf16.msra.mxu0 0
    %118 = vmatprep.subr.bf16.mxu0 0
    %119 = vmatpush1.bf16.msra.mxu0 0
    %120 = vmatprep.subr.bf16.mxu0 0
    %121 = vmatpush1.bf16.msra.mxu0 0
    %122 = vmatprep.subr.bf16.mxu0 0
    %123 = vmatpush1.bf16.msra.mxu0 0
    %124 = vmatprep.mubr.bf16.mxu0 0
    %125 = vmatmul.mubr.bf16.gmra.mrb[0].mxu0 %v90
    %v126 = vpop.f32.mrb[0].mxu0
    %v127 = vadd.f32 %v86, %v126
    %v128 = vpop.f32.mrb[0].mxu0
    %v129 = vpop.f32.mrb[0].mxu0
    %v130 = vadd.f32 %v86, %v129
    %v131 = vpop.f32.mrb[0].mxu0
    %132 = vdwg.mxu0
    %v133 = vld [vmem:[#allocation8] sm:$0xff]
    %v134 = vld [vmem:[#allocation8 + $0x8] sm:$0xf]
    %v135 = vadd.f32 %v127, %v133
    %v136 = vadd.f32 %v130, %v134
    %137 = vst.msk [vmem:[#allocation10] sm:$0xff] %vm88, %v135
    %vm138 = vcmask 257024
    %139 = vst.msk [vmem:[#allocation10 + $0x8] sm:$0xf] %vm138, %v136
    // Predicated region
    $region34: #{telepath_forward.45} parent=1 // pred_check
      _
    $region35: #{telepath_forward.45} parent=1 // pred_check_branch
      %141 = sbr.rel (0) target = $region37
    $region36: #{telepath_forward.45} parent=1 // pred_region
      %s143 = ssub.s32 256, 256
      %144 = vsyncadd [#allocation4], %s143
      %s145 = sshll.u32 [#allocation10], 4
      %s146 = int_to_ptr.vmem [resolvable:$true] %s145
      %151 = dma.vmem_to_hbm [thread:$0]  %s146, 256, %s4, [#allocation4], 128, 128, 8
    $region37: #{telepath_forward.45} parent=1 // pred_fallthru
      _
    // Predicated region
    $region38: #{telepath_forward.45} parent=1 // pred_check
      _
    $region39: #{telepath_forward.45} parent=1 // pred_check_branch
      %153 = sbr.rel (0) target = $region41
    $region40: #{telepath_forward.45} parent=1 // pred_region
      %154 = dma.done [#allocation4], 256
    $region41: #{telepath_forward.45} parent=1 // pred_fallthru
      _
    %155 = vsyncpa [#allocation3], 1
    %156 = vsyncpa [#allocation6], 1
    %157 = vsyncpa [#allocation9], 1
    %158 = vsyncpa [#allocation4], 1

// kernel: telepath_forward.44
$region0: #{telepath_forward.44}
  #allocation0 [shape = 'u32[]', space=smem, size = 0x4, offset = 0x4, fixed_abs, tag = 'smem constant byte address 0x4 - core index']
  #allocation1 [shape = 'u32[144,128]{1,0:T(1,128)}', space=vmem, size = 0x12000, scoped, tag = 'internal scratch']
  %s0 = inlined_call_operand.hbm [shape: f32[2,6,96], index: 0, kind: input, shape index: {}]
  %s1 = inlined_call_operand.hbm [shape: f32[2,6,32], index: 1, kind: output, shape index: {}]
  %s2 = sld [smem:[#allocation0]]
  $region41: #{telepath_forward.44} parent=0
    _
  %s4 = ssub.s32 1, %s2
  %s5 = scalar_select 0, %s4, %s2
  $region1: #{telepath_forward.44} parent=0
    #allocation2 [shape = 'u8[8192]{0}', space=vmem, size = 0x2000, scoped, tag = 'input window, operand 0']
    #allocation3 [shape = 's32[2]{0}', space=sflag, size = 0x8, scoped, tag = 'scoped memory for telepath_forward.44']
    #allocation4 [shape = 's32[2]{0}', space=sflag, size = 0x8, scoped, tag = 'scoped memory for telepath_forward.44']
    #allocation5 [shape = 'u8[8192]{0}', space=vmem, size = 0x2000, scoped, tag = 'output window, operand 0']
    %6 = vsyncpa [#allocation3], 0
    %s7 = scalar_lea.sflag [#allocation3], 1
    %8 = vsyncpa %s7, 0
    %9 = vsyncpa [#allocation4], 0
    %s10 = scalar_lea.sflag [#allocation4], 1
    %11 = vsyncpa %s10, 0
    loop: start=0, step=1, limit=4
    $region2: #{telepath_forward.44} parent=1 // loop_pre_header
      _
    $region3: #{telepath_forward.44} parent=1 // loop_header
      %s13 = sphi 0, %s17
      %p14 = scmp.ge.s32.totalorder %s13, 4
      %s20 = sphi 0, %s32
      %s21 = sphi 0, %s28
      %s22 = sphi 0, %s20
      %s23 = sphi 0, %s21
      %s24 = sphi 0, %s22
      %s25 = sphi 0, %s23
      %s35 = sphi 0, %s37
      %s38 = sphi 0, %s35
      %s39 = sphi 0, %s38
      %s55 = sphi 0, %s39
      %s63 = sphi 0, %s65
      %s66 = sphi 0, %s63
      %s67 = sphi 0, %s66
      %s83 = sphi 0, %s67
    $region4: #{telepath_forward.44} parent=1 // loop_header_branch
      %16 = sbr.rel (%p14) target = $region8
    $region5: #{telepath_forward.44} parent=1 // loop_body
      %s18 = ssub.s32 %s13, 1
      %s19 = ssub.s32 %s13, 2
      %s26 = sadd.s32 1, %s21
      %p27 = scmp.ge.s32.totalorder %s26, 1
      %s28 = scalar_select %p27, 0, %s26
      %s29 = sadd.s32 1, %s20
      %s30 = scalar_select %p27, %s29, %s20
      %p31 = scmp.ge.s32.totalorder %s30, 2
      %s32 = scalar_select %p31, 0, %s30
      %s33 = ssub.s32 %s20, %s32
      %p34 = scmp.eq.s32.totalorder %s33, 0
      %s36 = sadd.s32 %s35, 1
      %s37 = scalar_select %p34, %s35, %s36
      %p40 = pneg %p34
      %p41 = scmp.eq.s32.totalorder %s13, 1
      %p42 = por %p40, %p41
      %p43 = scmp.ne.s32.totalorder %s35, %s38
      %p44 = scmp.eq.s32.totalorder %s13, 0
      %p45 = por %p43, %p44
      %p46 = scmp.ne.s32.totalorder %s35, %s38
      %p47 = scmp.eq.s32.totalorder %s18, 1
      %p48 = por %p46, %p47
      %p49 = scmp.ne.s32.totalorder %s38, %s39
      %p50 = scmp.eq.s32.totalorder %s18, 0
      %p51 = por %p49, %p50
      %p52 = scmp.ne.s32.totalorder %s38, %s39
      %p53 = scmp.eq.s32.totalorder %s19, 1
      %p54 = por %p52, %p53
      %p56 = scmp.ne.s32.totalorder %s39, %s55
      %p57 = scmp.eq.s32.totalorder %s19, 0
      %p58 = por %p56, %p57
      %s59 = ssub.s32 %s20, %s32
      %s60 = ssub.s32 %s21, %s28
      %s61 = sor.u32 %s59, %s60
      %p62 = scmp.eq.s32.totalorder %s61, 0
      %s64 = sadd.s32 %s63, 1
      %s65 = scalar_select %p62, %s63, %s64
      %p68 = pneg %p62
      %p69 = scmp.eq.s32.totalorder %s13, 1
      %p70 = por %p68, %p69
      %p71 = scmp.ne.s32.totalorder %s63, %s66
      %p72 = scmp.eq.s32.totalorder %s13, 0
      %p73 = por %p71, %p72
      %p74 = scmp.ne.s32.totalorder %s63, %s66
      %p75 = scmp.eq.s32.totalorder %s18, 1
      %p76 = por %p74, %p75
      %p77 = scmp.ne.s32.totalorder %s66, %s67
      %p78 = scmp.eq.s32.totalorder %s18, 0
      %p79 = por %p77, %p78
      %p80 = scmp.ne.s32.totalorder %s66, %s67
      %p81 = scmp.eq.s32.totalorder %s19, 1
      %p82 = por %p80, %p81
      %p84 = scmp.ne.s32.totalorder %s67, %s83
      %p85 = scmp.eq.s32.totalorder %s19, 0
      %p86 = por %p84, %p85
      %p87 = scmp.le.s32.totalorder 1, %s13
      %p88 = scmp.lt.s32.totalorder %s13, 3
      %p89 = pnand %p87, %p88
      %p90 = pneg %p89
      // Predicated region
      $region9: #{telepath_forward.44} parent=5 // pred_check
        _
      $region10: #{telepath_forward.44} parent=5 // pred_check_branch
        %92 = sbr.rel (%p89) target = $region12
      $region11: #{telepath_forward.44} parent=5 // pred_region
        %s93 = ssub.s32 %s13, 1
      $region12: #{telepath_forward.44} parent=5 // pred_fallthru
        _
      %p94 = scmp.lt.s32.totalorder %s13, 2
      // Predicated region
      $region13: #{telepath_forward.44} parent=5 // pred_check
        %p95 = pneg %p94
      $region14: #{telepath_forward.44} parent=5 // pred_check_branch
        %97 = sbr.rel (%p95) target = $region16
      $region15: #{telepath_forward.44} parent=5 // pred_region
        // Predicated region
        $region17: #{telepath_forward.44} parent=15 // pred_check
          %p98 = pneg %p45
        $region18: #{telepath_forward.44} parent=15 // pred_check_branch
          %100 = sbr.rel (%p98) target = $region20
        $region19: #{telepath_forward.44} parent=15 // pred_region
          %s101 = sand.u32 %s35, 1
          %s102 = scalar_lea.sflag [#allocation3], %s101
          %s103 = sand.u32 %s35, 1
          %s104 = smul.addr %s103, 8
          %s105 = scalar_lea.vmem [#allocation2], %s104
          %s107 = ssub.s32 128, 128
          %108 = vsyncadd %s102, %s107
          %s109 = smul.addr %s20, 128
          %s110 = scalar_lea.hbm %s0, %s109
          %s112 = sshll.u32 %s105, 4
          %s113 = int_to_ptr.vmem [resolvable:$true] %s112
          %115 = dma.hbm_to_vmem [thread:$0]  %s110, 128, %s113, %s102
        $region20: #{telepath_forward.44} parent=15 // pred_fallthru
          _
      $region16: #{telepath_forward.44} parent=5 // pred_fallthru
        _
      %p116 = scmp.le.s32.totalorder 1, %s13
      %p117 = scmp.lt.s32.totalorder %s13, 3
      %p118 = pnand %p116, %p117
      %p119 = pneg %p118
      // Predicated region
      $region21: #{telepath_forward.44} parent=5 // pred_check
        _
      $region22: #{telepath_forward.44} parent=5 // pred_check_branch
        %121 = sbr.rel (%p118) target = $region24
      $region23: #{telepath_forward.44} parent=5 // pred_region
        %s122 = ssub.s32 %s13, 1
        %s123 = sand.u32 %s38, 1
        %s124 = scalar_lea.sflag [#allocation3], %s123
        %s125 = sand.u32 %s38, 1
        %s126 = smul.addr %s125, 8
        %s127 = scalar_lea.vmem [#allocation2], %s126
        // Predicated region
        $region25: #{telepath_forward.44} parent=23 // pred_check
          %p128 = pneg %p51
        $region26: #{telepath_forward.44} parent=23 // pred_check_branch
          %130 = sbr.rel (%p128) target = $region28
        $region27: #{telepath_forward.44} parent=23 // pred_region
          %131 = dma.done %s124, 128
        $region28: #{telepath_forward.44} parent=23 // pred_fallthru
          _
        %s132 = sand.u32 %s38, 1
        %s133 = scalar_lea.sflag [#allocation3], %s132
        %s134 = sand.u32 %s38, 1
        %s135 = smul.addr %s134, 8
        %s136 = scalar_lea.vmem [#allocation2], %s135
        %p137 = pneg %p51
        %p138 = pneg %p48
        %p139 = pneg %p79
        %p140 = pneg %p76
        %s141 = sand.u32 %s66, 1
        %s142 = scalar_lea.sflag [#allocation4], %s141
        %s143 = sand.u32 %s66, 1
        %s144 = smul.addr %s143, 8
        %s145 = scalar_lea.vmem [#allocation5], %s144
        %v147 = vld [vmem:[%s127] sm:$0x3f]
        %v148 = vlaneseq
        %v149 = vshrl.u32 %v148, 7
        %v150 = vlaneseq
        %v151 = vand.u32 %v150, 127
        %vm152 = vcmp.le.s32.totalorder %v151, %v149
        %v153 = vmul.f32 %v147, 0.35355338
        %v154 = vpack.c.bf16 %v153, %v153
        %v155 = vpack.c.bf16 %v147, %v147
        %157 = vrot.lane.b32.xlu0 %v155, 96
        %v158 = vpop.permute.xlu0 %157
        %vm159 = vcmask 64512
        %v161 = vsel %vm159, %v154, 0
        %v164 = vsel %vm159, %v158, 0
        %166 = vmatprep.subr.bf16.mxu0 0
        %167 = vmatpush1.bf16.xpose.msra.mxu0 %v164
        %168 = vmatprep.subr.bf16.mxu0 0
        %169 = vmatpush1.bf16.xpose.msra.mxu0 0
        %170 = vmatprep.subr.bf16.mxu0 0
        %171 = vmatpush1.bf16.xpose.msra.mxu0 0
        %172 = vmatprep.subr.bf16.mxu0 0
        %173 = vmatpush1.bf16.xpose.msra.mxu0 0
        %174 = vmatprep.subr.bf16.mxu0 0
        %175 = vmatpush1.bf16.xpose.msra.mxu0 0
        %176 = vmatprep.subr.bf16.mxu0 0
        %177 = vmatpush1.bf16.xpose.msra.mxu0 0
        %178 = vmatprep.subr.bf16.mxu0 0
        %179 = vmatpush1.bf16.xpose.msra.mxu0 0
        %180 = vmatprep.subr.bf16.mxu0 0
        %181 = vmatpush1.bf16.xpose.msra.mxu0 0
        %182 = vmatprep.subr.bf16.mxu0 0
        %183 = vmatpush1.bf16.xpose.msra.mxu0 0
        %184 = vmatprep.subr.bf16.mxu0 0
        %185 = vmatpush1.bf16.xpose.msra.mxu0 0
        %186 = vmatprep.subr.bf16.mxu0 0
        %187 = vmatpush1.bf16.xpose.msra.mxu0 0
        %188 = vmatprep.subr.bf16.mxu0 0
        %189 = vmatpush1.bf16.xpose.msra.mxu0 0
        %190 = vmatprep.subr.bf16.mxu0 0
        %191 = vmatpush1.bf16.xpose.msra.mxu0 0
        %192 = vmatprep.subr.bf16.mxu0 0
        %193 = vmatpush1.bf16.xpose.msra.mxu0 0
        %194 = vmatprep.subr.bf16.mxu0 0
        %195 = vmatpush1.bf16.xpose.msra.mxu0 0
        %196 = vmatprep.subr.bf16.mxu0 0
        %197 = vmatpush1.bf16.xpose.msra.mxu0 0
        %198 = vmatprep.mubr.bf16.mxu0 0
        %199 = vmatmul.mubr.bf16.gmra.mrb[0].mxu0 %v161
        %v200 = vpop.f32.mrb[0].mxu0
        %v201 = vadd.f32 0.0, %v200
        %v202 = vpop.f32.mrb[0].mxu0
        %v203 = vpop.f32.mrb[0].mxu0
        %v204 = vpop.f32.mrb[0].mxu0
        %205 = vdwg.mxu0
        %v206 = vsel %vm152, %v201, -1e+30
        %vm207 = vcmask 46080
        %v208 = vsel %vm207, %v206, -inf
        %209 = vmax.xlane.f32.xlu0 %v208
        %v210 = vpop.xlane.xlu0 %209
        %v211 = vsub.f32 %v206, %v210
        %v212 = vmul.f32 %v211, 1.442695
        %v213 = vpow.pop %v212
        %v214 = vsel %vm207, %v213, 0.0
        %215 = vadd.xlane.f32.xlu0 %v214
        %v216 = vpop.xlane.xlu0 %215
        %v217 = vpack.c.bf16 %v213, %v213
        %218 = vrot.lane.b32.xlu0 %v155, 64
        %v219 = vpop.permute.xlu0 %218
        %vm220 = vcmask 48128
        %v222 = vsel %vm220, %v217, 0
        %vm224 = vcmask 1042432
        %v226 = vsel %vm224, %v219, 0
        %228 = vmatprep.subr.bf16.mxu0 0
        %229 = vmatpush1.bf16.msra.mxu0 %v226
        %230 = vmatprep.subr.bf16.mxu0 0
        %231 = vmatpush1.bf16.msra.mxu0 0
        %232 = vmatprep.subr.bf16.mxu0 0
        %233 = vmatpush1.bf16.msra.mxu0 0
        %234 = vmatprep.subr.bf16.mxu0 0
        %235 = vmatpush1.bf16.msra.mxu0 0
        %236 = vmatprep.subr.bf16.mxu0 0
        %237 = vmatpush1.bf16.msra.mxu0 0
        %238 = vmatprep.subr.bf16.mxu0 0
        %239 = vmatpush1.bf16.msra.mxu0 0
        %240 = vmatprep.subr.bf16.mxu0 0
        %241 = vmatpush1.bf16.msra.mxu0 0
        %242 = vmatprep.subr.bf16.mxu0 0
        %243 = vmatpush1.bf16.msra.mxu0 0
        %244 = vmatprep.subr.bf16.mxu0 0
        %245 = vmatpush1.bf16.msra.mxu0 0
        %246 = vmatprep.subr.bf16.mxu0 0
        %247 = vmatpush1.bf16.msra.mxu0 0
        %248 = vmatprep.subr.bf16.mxu0 0
        %249 = vmatpush1.bf16.msra.mxu0 0
        %250 = vmatprep.subr.bf16.mxu0 0
        %251 = vmatpush1.bf16.msra.mxu0 0
        %252 = vmatprep.subr.bf16.mxu0 0
        %253 = vmatpush1.bf16.msra.mxu0 0
        %254 = vmatprep.subr.bf16.mxu0 0
        %255 = vmatpush1.bf16.msra.mxu0 0
        %256 = vmatprep.subr.bf16.mxu0 0
        %257 = vmatpush1.bf16.msra.mxu0 0
        %258 = vmatprep.subr.bf16.mxu0 0
        %259 = vmatpush1.bf16.msra.mxu0 0
        %260 = vmatprep.mubr.bf16.mxu0 0
        %261 = vmatmul.mubr.bf16.gmra.mrb[0].mxu0 %v222
        %v262 = vpop.f32.mrb[0].mxu0
        %v263 = vadd.f32 0.0, %v262
        %v264 = vpop.f32.mrb[0].mxu0
        %v265 = vpop.f32.mrb[0].mxu0
        %v266 = vpop.f32.mrb[0].mxu0
        %267 = vdwg.mxu0
        %v268 = vrcp.pop %v216
        %v269 = vmul.f32 %v263, %v268
        %271 = vrot.lane.b32.xlu0 %v154, 120
        %v272 = vpop.permute.xlu0 %271
        %273 = vrot.lane.b32.xlu0 %v155, 88
        %v274 = vpop.permute.xlu0 %273
        %v276 = vsel %vm159, %v272, 0
        %v279 = vsel %vm159, %v274, 0
        %281 = vmatprep.subr.bf16.mxu0 0
        %282 = vmatpush1.bf16.xpose.msra.mxu0 %v279
        %283 = vmatprep.subr.bf16.mxu0 0
        %284 = vmatpush1.bf16.xpose.msra.mxu0 0
        %285 = vmatprep.subr.bf16.mxu0 0
        %286 = vmatpush1.bf16.xpose.msra.mxu0 0
        %287 = vmatprep.subr.bf16.mxu0 0
        %288 = vmatpush1.bf16.xpose.msra.mxu0 0
        %289 = vmatprep.subr.bf16.mxu0 0
        %290 = vmatpush1.bf16.xpose.msra.mxu0 0
        %291 = vmatprep.subr.bf16.mxu0 0
        %292 = vmatpush1.bf16.xpose.msra.mxu0 0
        %293 = vmatprep.subr.bf16.mxu0 0
        %294 = vmatpush1.bf16.xpose.msra.mxu0 0
        %295 = vmatprep.subr.bf16.mxu0 0
        %296 = vmatpush1.bf16.xpose.msra.mxu0 0
        %297 = vmatprep.subr.bf16.mxu0 0
        %298 = vmatpush1.bf16.xpose.msra.mxu0 0
        %299 = vmatprep.subr.bf16.mxu0 0
        %300 = vmatpush1.bf16.xpose.msra.mxu0 0
        %301 = vmatprep.subr.bf16.mxu0 0
        %302 = vmatpush1.bf16.xpose.msra.mxu0 0
        %303 = vmatprep.subr.bf16.mxu0 0
        %304 = vmatpush1.bf16.xpose.msra.mxu0 0
        %305 = vmatprep.subr.bf16.mxu0 0
        %306 = vmatpush1.bf16.xpose.msra.mxu0 0
        %307 = vmatprep.subr.bf16.mxu0 0
        %308 = vmatpush1.bf16.xpose.msra.mxu0 0
        %309 = vmatprep.subr.bf16.mxu0 0
        %310 = vmatpush1.bf16.xpose.msra.mxu0 0
        %311 = vmatprep.subr.bf16.mxu0 0
        %312 = vmatpush1.bf16.xpose.msra.mxu0 0
        %313 = vmatprep.mubr.bf16.mxu0 0
        %314 = vmatmul.mubr.bf16.gmra.mrb[0].mxu0 %v276
        %v315 = vpop.f32.mrb[0].mxu0
        %v316 = vadd.f32 0.0, %v315
        %v317 = vpop.f32.mrb[0].mxu0
        %v318 = vpop.f32.mrb[0].mxu0
        %v319 = vpop.f32.mrb[0].mxu0
        %320 = vdwg.mxu0
        %v321 = vsel %vm152, %v316, -1e+30
        %v322 = vsel %vm207, %v321, -inf
        %323 = vmax.xlane.f32.xlu0 %v322
        %v324 = vpop.xlane.xlu0 %323
        %v325 = vsub.f32 %v321, %v324
        %v326 = vmul.f32 %v325, 1.442695
        %v327 = vpow.pop %v326
        %v328 = vsel %vm207, %v327, 0.0
        %329 = vadd.xlane.f32.xlu0 %v328
        %v330 = vpop.xlane.xlu0 %329
        %v331 = vpack.c.bf16 %v327, %v327
        %332 = vrot.lane.b32.xlu0 %v155, 56
        %v333 = vpop.permute.xlu0 %332
        %v335 = vsel %vm220, %v331, 0
        %v338 = vsel %vm224, %v333, 0
        %340 = vmatprep.subr.bf16.mxu0 0
        %341 = vmatpush1.bf16.msra.mxu0 %v338
        %342 = vmatprep.subr.bf16.mxu0 0
        %343 = vmatpush1.bf16.msra.mxu0 0
        %344 = vmatprep.subr.bf16.mxu0 0
        %345 = vmatpush1.bf16.msra.mxu0 0
        %346 = vmatprep.subr.bf16.mxu0 0
        %347 = vmatpush1.bf16.msra.mxu0 0
        %348 = vmatprep.subr.bf16.mxu0 0
        %349 = vmatpush1.bf16.msra.mxu0 0
        %350 = vmatprep.subr.bf16.mxu0 0
        %351 = vmatpush1.bf16.msra.mxu0 0
        %352 = vmatprep.subr.bf16.mxu0 0
        %353 = vmatpush1.bf16.msra.mxu0 0
        %354 = vmatprep.subr.bf16.mxu0 0
        %355 = vmatpush1.bf16.msra.mxu0 0
        %356 = vmatprep.subr.bf16.mxu0 0
        %357 = vmatpush1.bf16.msra.mxu0 0
        %358 = vmatprep.subr.bf16.mxu0 0
        %359 = vmatpush1.bf16.msra.mxu0 0
        %360 = vmatprep.subr.bf16.mxu0 0
        %361 = vmatpush1.bf16.msra.mxu0 0
        %362 = vmatprep.subr.bf16.mxu0 0
        %363 = vmatpush1.bf16.msra.mxu0 0
        %364 = vmatprep.subr.bf16.mxu0 0
        %365 = vmatpush1.bf16.msra.mxu0 0
        %366 = vmatprep.subr.bf16.mxu0 0
        %367 = vmatpush1.bf16.msra.mxu0 0
        %368 = vmatprep.subr.bf16.mxu0 0
        %369 = vmatpush1.bf16.msra.mxu0 0
        %370 = vmatprep.subr.bf16.mxu0 0
        %371 = vmatpush1.bf16.msra.mxu0 0
        %372 = vmatprep.mubr.bf16.mxu0 0
        %373 = vmatmul.mubr.bf16.gmra.mrb[0].mxu0 %v335
        %v374 = vpop.f32.mrb[0].mxu0
        %v375 = vadd.f32 0.0, %v374
        %v376 = vpop.f32.mrb[0].mxu0
        %v377 = vpop.f32.mrb[0].mxu0
        %v378 = vpop.f32.mrb[0].mxu0
        %379 = vdwg.mxu0
        %v380 = vrcp.pop %v330
        %v381 = vmul.f32 %v375, %v380
        %382 = vrot.lane.b32.xlu0 %v154, 112
        %v383 = vpop.permute.xlu0 %382
        %384 = vrot.lane.b32.xlu0 %v155, 80
        %v385 = vpop.permute.xlu0 %384
        %v387 = vsel %vm159, %v383, 0
        %v390 = vsel %vm159, %v385, 0
        %392 = vmatprep.subr.bf16.mxu0 0
        %393 = vmatpush1.bf16.xpose.msra.mxu0 %v390
        %394 = vmatprep.subr.bf16.mxu0 0
        %395 = vmatpush1.bf16.xpose.msra.mxu0 0
        %396 = vmatprep.subr.bf16.mxu0 0
        %397 = vmatpush1.bf16.xpose.msra.mxu0 0
        %398 = vmatprep.subr.bf16.mxu0 0
        %399 = vmatpush1.bf16.xpose.msra.mxu0 0
        %400 = vmatprep.subr.bf16.mxu0 0
        %401 = vmatpush1.bf16.xpose.msra.mxu0 0
        %402 = vmatprep.subr.bf16.mxu0 0
        %403 = vmatpush1.bf16.xpose.msra.mxu0 0
        %404 = vmatprep.subr.bf16.mxu0 0
        %405 = vmatpush1.bf16.xpose.msra.mxu0 0
        %406 = vmatprep.subr.bf16.mxu0 0
        %407 = vmatpush1.bf16.xpose.msra.mxu0 0
        %408 = vmatprep.subr.bf16.mxu0 0
        %409 = vmatpush1.bf16.xpose.msra.mxu0 0
        %410 = vmatprep.subr.bf16.mxu0 0
        %411 = vmatpush1.bf16.xpose.msra.mxu0 0
        %412 = vmatprep.subr.bf16.mxu0 0
        %413 = vmatpush1.bf16.xpose.msra.mxu0 0
        %414 = vmatprep.subr.bf16.mxu0 0
        %415 = vmatpush1.bf16.xpose.msra.mxu0 0
        %416 = vmatprep.subr.bf16.mxu0 0
        %417 = vmatpush1.bf16.xpose.msra.mxu0 0
        %418 = vmatprep.subr.bf16.mxu0 0
        %419 = vmatpush1.bf16.xpose.msra.mxu0 0
        %420 = vmatprep.subr.bf16.mxu0 0
        %421 = vmatpush1.bf16.xpose.msra.mxu0 0
        %422 = vmatprep.subr.bf16.mxu0 0
        %423 = vmatpush1.bf16.xpose.msra.mxu0 0
        %424 = vmatprep.mubr.bf16.mxu0 0
        %425 = vmatmul.mubr.bf16.gmra.mrb[0].mxu0 %v387
        %v426 = vpop.f32.mrb[0].mxu0
        %v427 = vadd.f32 0.0, %v426
        %v428 = vpop.f32.mrb[0].mxu0
        %v429 = vpop.f32.mrb[0].mxu0
        %v430 = vpop.f32.mrb[0].mxu0
        %431 = vdwg.mxu0
        %v432 = vsel %vm152, %v427, -1e+30
        %v433 = vsel %vm207, %v432, -inf
        %434 = vmax.xlane.f32.xlu0 %v433
        %v435 = vpop.xlane.xlu0 %434
        %v436 = vsub.f32 %v432, %v435
        %v437 = vmul.f32 %v436, 1.442695
        %v438 = vpow.pop %v437
        %v439 = vsel %vm207, %v438, 0.0
        %440 = vadd.xlane.f32.xlu0 %v439
        %v441 = vpop.xlane.xlu0 %440
        %v442 = vpack.c.bf16 %v438, %v438
        %443 = vrot.lane.b32.xlu0 %v155, 48
        %v444 = vpop.permute.xlu0 %443
        %v446 = vsel %vm220, %v442, 0
        %v449 = vsel %vm224, %v444, 0
        %451 = vmatprep.subr.bf16.mxu0 0
        %452 = vmatpush1.bf16.msra.mxu0 %v449
        %453 = vmatprep.subr.bf16.mxu0 0
        %454 = vmatpush1.bf16.msra.mxu0 0
        %455 = vmatprep.subr.bf16.mxu0 0
        %456 = vmatpush1.bf16.msra.mxu0 0
        %457 = vmatprep.subr.bf16.mxu0 0
        %458 = vmatpush1.bf16.msra.mxu0 0
        %459 = vmatprep.subr.bf16.mxu0 0
        %460 = vmatpush1.bf16.msra.mxu0 0
        %461 = vmatprep.subr.bf16.mxu0 0
        %462 = vmatpush1.bf16.msra.mxu0 0
        %463 = vmatprep.subr.bf16.mxu0 0
        %464 = vmatpush1.bf16.msra.mxu0 0
        %465 = vmatprep.subr.bf16.mxu0 0
        %466 = vmatpush1.bf16.msra.mxu0 0
        %467 = vmatprep.subr.bf16.mxu0 0
        %468 = vmatpush1.bf16.msra.mxu0 0
        %469 = vmatprep.subr.bf16.mxu0 0
        %470 = vmatpush1.bf16.msra.mxu0 0
        %471 = vmatprep.subr.bf16.mxu0 0
        %472 = vmatpush1.bf16.msra.mxu0 0
        %473 = vmatprep.subr.bf16.mxu0 0
        %474 = vmatpush1.bf16.msra.mxu0 0
        %475 = vmatprep.subr.bf16.mxu0 0
        %476 = vmatpush1.bf16.msra.mxu0 0
        %477 = vmatprep.subr.bf16.mxu0 0
        %478 = vmatpush1.bf16.msra.mxu0 0
        %479 = vmatprep.subr.bf16.mxu0 0
        %480 = vmatpush1.bf16.msra.mxu0 0
        %481 = vmatprep.subr.bf16.mxu0 0
        %482 = vmatpush1.bf16.msra.mxu0 0
        %483 = vmatprep.mubr.bf16.mxu0 0
        %484 = vmatmul.mubr.bf16.gmra.mrb[0].mxu0 %v446
        %v485 = vpop.f32.mrb[0].mxu0
        %v486 = vadd.f32 0.0, %v485
        %v487 = vpop.f32.mrb[0].mxu0
        %v488 = vpop.f32.mrb[0].mxu0
        %v489 = vpop.f32.mrb[0].mxu0
        %490 = vdwg.mxu0
        %v491 = vrcp.pop %v441
        %v492 = vmul.f32 %v486, %v491
        %493 = vrot.lane.b32.xlu0 %v154, 104
        %v494 = vpop.permute.xlu0 %493
        %495 = vrot.lane.b32.xlu0 %v155, 72
        %v496 = vpop.permute.xlu0 %495
        %v498 = vsel %vm159, %v494, 0
        %v501 = vsel %vm159, %v496, 0
        %503 = vmatprep.subr.bf16.mxu0 0
        %504 = vmatpush1.bf16.xpose.msra.mxu0 %v501
        %505 = vmatprep.subr.bf16.mxu0 0
        %506 = vmatpush1.bf16.xpose.msra.mxu0 0
        %507 = vmatprep.subr.bf16.mxu0 0
        %508 = vmatpush1.bf16.xpose.msra.mxu0 0
        %509 = vmatprep.subr.bf16.mxu0 0
        %510 = vmatpush1.bf16.xpose.msra.mxu0 0
        %511 = vmatprep.subr.bf16.mxu0 0
        %512 = vmatpush1.bf16.xpose.msra.mxu0 0
        %513 = vmatprep.subr.bf16.mxu0 0
        %514 = vmatpush1.bf16.xpose.msra.mxu0 0
        %515 = vmatprep.subr.bf16.mxu0 0
        %516 = vmatpush1.bf16.xpose.msra.mxu0 0
        %517 = vmatprep.subr.bf16.mxu0 0
        %518 = vmatpush1.bf16.xpose.msra.mxu0 0
        %519 = vmatprep.subr.bf16.mxu0 0
        %520 = vmatpush1.bf16.xpose.msra.mxu0 0
        %521 = vmatprep.subr.bf16.mxu0 0
        %522 = vmatpush1.bf16.xpose.msra.mxu0 0
        %523 = vmatprep.subr.bf16.mxu0 0
        %524 = vmatpush1.bf16.xpose.msra.mxu0 0
        %525 = vmatprep.subr.bf16.mxu0 0
        %526 = vmatpush1.bf16.xpose.msra.mxu0 0
        %527 = vmatprep.subr.bf16.mxu0 0
        %528 = vmatpush1.bf16.xpose.msra.mxu0 0
        %529 = vmatprep.subr.bf16.mxu0 0
        %530 = vmatpush1.bf16.xpose.msra.mxu0 0
        %531 = vmatprep.subr.bf16.mxu0 0
        %532 = vmatpush1.bf16.xpose.msra.mxu0 0
        %533 = vmatprep.subr.bf16.mxu0 0
        %534 = vmatpush1.bf16.xpose.msra.mxu0 0
        %535 = vmatprep.mubr.bf16.mxu0 0
        %536 = vmatmul.mubr.bf16.gmra.mrb[0].mxu0 %v498
        %v537 = vpop.f32.mrb[0].mxu0
        %v538 = vadd.f32 0.0, %v537
        %v539 = vpop.f32.mrb[0].mxu0
        %v540 = vpop.f32.mrb[0].mxu0
        %v541 = vpop.f32.mrb[0].mxu0
        %542 = vdwg.mxu0
        %v543 = vsel %vm152, %v538, -1e+30
        %v544 = vsel %vm207, %v543, -inf
        %545 = vmax.xlane.f32.xlu0 %v544
        %v546 = vpop.xlane.xlu0 %545
        %v547 = vsub.f32 %v543, %v546
        %v548 = vmul.f32 %v547, 1.442695
        %v549 = vpow.pop %v548
        %v550 = vsel %vm207, %v549, 0.0
        %551 = vadd.xlane.f32.xlu0 %v550
        %v552 = vpop.xlane.xlu0 %551
        %v553 = vpack.c.bf16 %v549, %v549
        %554 = vrot.lane.b32.xlu0 %v155, 40
        %v555 = vpop.permute.xlu0 %554
        %v557 = vsel %vm220, %v553, 0
        %v560 = vsel %vm224, %v555, 0
        %562 = vmatprep.subr.bf16.mxu0 0
        %563 = vmatpush1.bf16.msra.mxu0 %v560
        %564 = vmatprep.subr.bf16.mxu0 0
        %565 = vmatpush1.bf16.msra.mxu0 0
        %566 = vmatprep.subr.bf16.mxu0 0
        %567 = vmatpush1.bf16.msra.mxu0 0
        %568 = vmatprep.subr.bf16.mxu0 0
        %569 = vmatpush1.bf16.msra.mxu0 0
        %570 = vmatprep.subr.bf16.mxu0 0
        %571 = vmatpush1.bf16.msra.mxu0 0
        %572 = vmatprep.subr.bf16.mxu0 0
        %573 = vmatpush1.bf16.msra.mxu0 0
        %574 = vmatprep.subr.bf16.mxu0 0
        %575 = vmatpush1.bf16.msra.mxu0 0
        %576 = vmatprep.subr.bf16.mxu0 0
        %577 = vmatpush1.bf16.msra.mxu0 0
        %578 = vmatprep.subr.bf16.mxu0 0
        %579 = vmatpush1.bf16.msra.mxu0 0
        %580 = vmatprep.subr.bf16.mxu0 0
        %581 = vmatpush1.bf16.msra.mxu0 0
        %582 = vmatprep.subr.bf16.mxu0 0
        %583 = vmatpush1.bf16.msra.mxu0 0
        %584 = vmatprep.subr.bf16.mxu0 0
        %585 = vmatpush1.bf16.msra.mxu0 0
        %586 = vmatprep.subr.bf16.mxu0 0
        %587 = vmatpush1.bf16.msra.mxu0 0
        %588 = vmatprep.subr.bf16.mxu0 0
        %589 = vmatpush1.bf16.msra.mxu0 0
        %590 = vmatprep.subr.bf16.mxu0 0
        %591 = vmatpush1.bf16.msra.mxu0 0
        %592 = vmatprep.subr.bf16.mxu0 0
        %593 = vmatpush1.bf16.msra.mxu0 0
        %594 = vmatprep.mubr.bf16.mxu0 0
        %595 = vmatmul.mubr.bf16.gmra.mrb[0].mxu0 %v557
        %v596 = vpop.f32.mrb[0].mxu0
        %v597 = vadd.f32 0.0, %v596
        %v598 = vpop.f32.mrb[0].mxu0
        %v599 = vpop.f32.mrb[0].mxu0
        %v600 = vpop.f32.mrb[0].mxu0
        %601 = vdwg.mxu0
        %v602 = vrcp.pop %v552
        %v603 = vmul.f32 %v597, %v602
        %605 = vrot.lane.b32.xlu0 %v381, 8
        %v606 = vpop.permute.xlu0 %605
        %609 = vrot.lane.b32.xlu0 %v492, 16
        %v610 = vpop.permute.xlu0 %609
        %613 = vrot.lane.b32.xlu0 %v603, 24
        %v614 = vpop.permute.xlu0 %613
        %v616 = vsel %vm159, %v269, %v606
        %vm617 = vcmask 130048
        %v618 = vsel %vm617, %v616, %v610
        %vm619 = vcmask 195584
        %v620 = vsel %vm619, %v618, %v614
        %vm621 = vcmask 259072
        %622 = vst.msk [vmem:[%s145] sm:$0x3f] %vm621, %v620
        %s623 = sand.u32 %s66, 1
        %s624 = scalar_lea.sflag [#allocation4], %s623
        %s625 = sand.u32 %s66, 1
        %s626 = smul.addr %s625, 8
        %s627 = scalar_lea.vmem [#allocation5], %s626
        // Predicated region
        $region29: #{telepath_forward.44} parent=23 // pred_check
          %p628 = pneg %p76
        $region30: #{telepath_forward.44} parent=23 // pred_check_branch
          %630 = sbr.rel (%p628) target = $region32
        $region31: #{telepath_forward.44} parent=23 // pred_region
          %s632 = ssub.s32 128, 128
          %633 = vsyncadd %s624, %s632
          %s634 = sadd.s32 %s23, %s22
          %s635 = smul.addr %s634, 128
          %s636 = scalar_lea.hbm %s1, %s635
          %s638 = sshll.u32 %s627, 4
          %s639 = int_to_ptr.vmem [resolvable:$true] %s638
          %641 = dma.vmem_to_hbm [thread:$0]  %s639, 128, %s636, %s624
        $region32: #{telepath_forward.44} parent=23 // pred_fallthru
          _
      $region24: #{telepath_forward.44} parent=5 // pred_fallthru
        _
      %p642 = scmp.le.s32.totalorder 2, %s13
      // Predicated region
      $region33: #{telepath_forward.44} parent=5 // pred_check
        %p643 = pneg %p642
      $region34: #{telepath_forward.44} parent=5 // pred_check_branch
        %645 = sbr.rel (%p643) target = $region36
      $region35: #{telepath_forward.44} parent=5 // pred_region
        %s646 = ssub.s32 %s13, 2
        // Predicated region
        $region37: #{telepath_forward.44} parent=35 // pred_check
          %p647 = pneg %p82
        $region38: #{telepath_forward.44} parent=35 // pred_check_branch
          %649 = sbr.rel (%p647) target = $region40
        $region39: #{telepath_forward.44} parent=35 // pred_region
          %s650 = sand.u32 %s67, 1
          %s651 = scalar_lea.sflag [#allocation4], %s650
          %s652 = sand.u32 %s67, 1
          %s653 = smul.addr %s652, 8
          %s654 = scalar_lea.vmem [#allocation5], %s653
          %655 = dma.done %s651, 128
        $region40: #{telepath_forward.44} parent=35 // pred_fallthru
          _
      $region36: #{telepath_forward.44} parent=5 // pred_fallthru
        _
    $region6: #{telepath_forward.44} parent=1 // loop_footer
      %s17 = sadd.s32 1, %s13
    $region7: #{telepath_forward.44} parent=1 // loop_footer_branch
      %12 = sbr.rel target = $region3
    $region8: #{telepath_forward.44} parent=1 // loop_exit
      _
    %656 = vsyncpa [#allocation3], 1
    %s657 = scalar_lea.sflag [#allocation3], 1
    %658 = vsyncpa %s657, 1
    %659 = vsyncpa [#allocation4], 1
    %s660 = scalar_lea.sflag [#allocation4], 1
    %661 = vsyncpa %s660, 1

// kernel: telepath_forward.50
$region0: #{telepath_forward.50}
  #allocation0 [shape = 'u32[]', space=smem, size = 0x4, offset = 0x4, fixed_abs, tag = 'smem constant byte address 0x4 - core index']
  #allocation1 [shape = 'u32[144,128]{1,0:T(1,128)}', space=vmem, size = 0x12000, scoped, tag = 'internal scratch']
  %s0 = inlined_call_operand.hbm [shape: f32[12,32], index: 0, kind: input, shape index: {}]
  %s1 = inlined_call_operand.hbm [shape: f32[32,128], index: 1, kind: input, shape index: {}]
  %s2 = inlined_call_operand.hbm [shape: f32[1,128], index: 2, kind: input, shape index: {}]
  %s3 = inlined_call_operand.hbm [shape: f32[1,32], index: 3, kind: input, shape index: {}]
  %s4 = inlined_call_operand.hbm [shape: f32[1,32], index: 4, kind: input, shape index: {}]
  %s5 = inlined_call_operand.hbm [shape: f32[12,128], index: 5, kind: output, shape index: {}]
  %s6 = sld [smem:[#allocation0]]
  $region50: #{telepath_forward.50} parent=0
    _
  %s8 = ssub.s32 1, %s6
  %s9 = scalar_select 0, %s8, %s6
  $region1: #{telepath_forward.50} parent=0
    #allocation2 [shape = 'u8[8192]{0}', space=vmem, size = 0x2000, scoped, tag = 'input window, operand 0, single buffered']
    #allocation3 [shape = 's32[1]{0}', space=sflag, size = 0x4, scoped, tag = 'scoped memory for telepath_forward.50']
    #allocation4 [shape = 's32[1]{0}', space=sflag, size = 0x4, scoped, tag = 'scoped memory for telepath_forward.50']
    #allocation5 [shape = 'u8[16384]{0}', space=vmem, size = 0x4000, scoped, tag = 'input window, operand 1, single buffered']
    #allocation6 [shape = 's32[1]{0}', space=sflag, size = 0x4, scoped, tag = 'scoped memory for telepath_forward.50']
    #allocation7 [shape = 'u8[512]{0}', space=vmem, size = 0x400, scoped, tag = 'input window, operand 2, single buffered']
    #allocation8 [shape = 'u8[512]{0}', space=vmem, size = 0x400, scoped, tag = 'input window, operand 3, single buffered']
    #allocation9 [shape = 's32[1]{0}', space=sflag, size = 0x4, scoped, tag = 'scoped memory for telepath_forward.50']
    #allocation10 [shape = 'u8[512]{0}', space=vmem, size = 0x400, scoped, tag = 'input window, operand 4, single buffered']
    #allocation11 [shape = 'u8[8192]{0}', space=vmem, size = 0x2000, scoped, tag = 'output window, operand 0, single buffered']
    %10 = vsyncpa [#allocation3], 0
    %11 = vsyncpa [#allocation6], 0
    %12 = vsyncpa [#allocation9], 0
    %13 = vsyncpa [#allocation4], 0
    // Predicated region
    $region2: #{telepath_forward.50} parent=1 // pred_check
      _
    $region3: #{telepath_forward.50} parent=1 // pred_check_branch
      %15 = sbr.rel (0) target = $region5
    $region4: #{telepath_forward.50} parent=1 // pred_region
      %s17 = ssub.s32 256, 256
      %18 = vsyncadd [#allocation3], %s17
      %s19 = sshll.u32 [#allocation2], 4
      %s20 = int_to_ptr.vmem [resolvable:$true] %s19
      %25 = dma.hbm_to_vmem [thread:$0]  %s0, 256, %s20, [#allocation3], 128, 128, 8
    $region5: #{telepath_forward.50} parent=1 // pred_fallthru
      _
    // Predicated region
    $region6: #{telepath_forward.50} parent=1 // pred_check
      _
    $region7: #{telepath_forward.50} parent=1 // pred_check_branch
      %27 = sbr.rel (0) target = $region9
    $region8: #{telepath_forward.50} parent=1 // pred_region
      %s29 = ssub.s32 512, 512
      %30 = vsyncadd [#allocation6], %s29
      %s31 = sshll.u32 [#allocation5], 4
      %s32 = int_to_ptr.vmem [resolvable:$true] %s31
      %37 = dma.hbm_to_vmem [thread:$0]  %s1, 512, %s32, [#allocation6], 128, 128, 8
    $region9: #{telepath_forward.50} parent=1 // pred_fallthru
      _
    // Predicated region
    $region10: #{telepath_forward.50} parent=1 // pred_check
      _
    $region11: #{telepath_forward.50} parent=1 // pred_check_branch
      %39 = sbr.rel (0) target = $region13
    $region12: #{telepath_forward.50} parent=1 // pred_region
      %s41 = ssub.s32 16, 16
      %42 = vsyncadd [#allocation6], %s41
      %s44 = sshll.u32 [#allocation7], 4
      %s45 = int_to_ptr.vmem [resolvable:$true] %s44
      %47 = dma.hbm_to_vmem [thread:$0]  %s2, 16, %s45, [#allocation6]
    $region13: #{telepath_forward.50} parent=1 // pred_fallthru
      _
    // Predicated region
    $region14: #{telepath_forward.50} parent=1 // pred_check
      _
    $region15: #{telepath_forward.50} parent=1 // pred_check_branch
      %49 = sbr.rel (0) target = $region17
    $region16: #{telepath_forward.50} parent=1 // pred_region
      %s51 = ssub.s32 16, 16
      %52 = vsyncadd [#allocation9], %s51
      %s54 = sshll.u32 [#allocation8], 4
      %s55 = int_to_ptr.vmem [resolvable:$true] %s54
      %57 = dma.hbm_to_vmem [thread:$0]  %s3, 16, %s55, [#allocation9]
    $region17: #{telepath_forward.50} parent=1 // pred_fallthru
      _
    // Predicated region
    $region18: #{telepath_forward.50} parent=1 // pred_check
      _
    $region19: #{telepath_forward.50} parent=1 // pred_check_branch
      %59 = sbr.rel (0) target = $region21
    $region20: #{telepath_forward.50} parent=1 // pred_region
      %s61 = ssub.s32 16, 16
      %62 = vsyncadd [#allocation9], %s61
      %s64 = sshll.u32 [#allocation10], 4
      %s65 = int_to_ptr.vmem [resolvable:$true] %s64
      %67 = dma.hbm_to_vmem [thread:$0]  %s4, 16, %s65, [#allocation9]
    $region21: #{telepath_forward.50} parent=1 // pred_fallthru
      _
    // Predicated region
    $region22: #{telepath_forward.50} parent=1 // pred_check
      _
    $region23: #{telepath_forward.50} parent=1 // pred_check_branch
      %69 = sbr.rel (0) target = $region25
    $region24: #{telepath_forward.50} parent=1 // pred_region
      %70 = dma.done [#allocation3], 256
    $region25: #{telepath_forward.50} parent=1 // pred_fallthru
      _
    // Predicated region
    $region26: #{telepath_forward.50} parent=1 // pred_check
      _
    $region27: #{telepath_forward.50} parent=1 // pred_check_branch
      %72 = sbr.rel (0) target = $region29
    $region28: #{telepath_forward.50} parent=1 // pred_region
      %73 = dma.done [#allocation6], 512
    $region29: #{telepath_forward.50} parent=1 // pred_fallthru
      _
    // Predicated region
    $region30: #{telepath_forward.50} parent=1 // pred_check
      _
    $region31: #{telepath_forward.50} parent=1 // pred_check_branch
      %75 = sbr.rel (0) target = $region33
    $region32: #{telepath_forward.50} parent=1 // pred_region
      %76 = dma.done [#allocation6], 16
    $region33: #{telepath_forward.50} parent=1 // pred_fallthru
      _
    // Predicated region
    $region34: #{telepath_forward.50} parent=1 // pred_check
      _
    $region35: #{telepath_forward.50} parent=1 // pred_check_branch
      %78 = sbr.rel (0) target = $region37
    $region36: #{telepath_forward.50} parent=1 // pred_region
      %79 = dma.done [#allocation9], 16
    $region37: #{telepath_forward.50} parent=1 // pred_fallthru
      _
    // Predicated region
    $region38: #{telepath_forward.50} parent=1 // pred_check
      _
    $region39: #{telepath_forward.50} parent=1 // pred_check_branch
      %81 = sbr.rel (0) target = $region41
    $region40: #{telepath_forward.50} parent=1 // pred_region
      %82 = dma.done [#allocation9], 16
    $region41: #{telepath_forward.50} parent=1 // pred_fallthru
      _
    %v84 = vld [vmem:[#allocation2] sm:$0xff]
    %v85 = vld [vmem:[#allocation2 + $0x8] sm:$0xf]
    %vm86 = vcmask 261120
    %v87 = vsel %vm86, %v84, 0.0
    %88 = vadd.xlane.f32.xlu0 %v87
    %v89 = vpop.xlane.xlu0 %88
    %vm90 = vcmask 257024
    %v91 = vsel %vm90, %v85, 0.0
    %92 = vadd.xlane.f32.xlu0 %v91
    %v93 = vpop.xlane.xlu0 %92
    %v94 = vrcp.pop 32.0
    %v95 = vmul.f32 %v89, %v94
    %v96 = vmul.f32 %v93, %v94
    %v97 = vsub.f32 %v84, %v95
    %v98 = vsub.f32 %v85, %v96
    %v99 = vmul.f32 %v97, %v97
    %v100 = vmul.f32 %v98, %v98
    %v101 = vsel %vm86, %v99, 0.0
    %102 = vadd.xlane.f32.xlu0 %v101
    %v103 = vpop.xlane.xlu0 %102
    %v104 = vsel %vm90, %v100, 0.0
    %105 = vadd.xlane.f32.xlu0 %v104
    %v106 = vpop.xlane.xlu0 %105
    %v107 = vmul.f32 %v103, %v94
    %v108 = vmul.f32 %v106, %v94
    %v109 = vadd.f32 %v107, 1e-05
    %v110 = vadd.f32 %v108, 1e-05
    %v111 = vrsqrt.pop %v109
    %v112 = vrsqrt.pop %v110
    %v113 = vmul.f32 %v97, %v111
    %v114 = vmul.f32 %v98, %v112
    %v115 = vld [vmem:[#allocation8] sm:$0x1]
    %v117 = vlaneseq
    %v118 = vshrl.u32 %v117, 7
    %v119 = vsub.s32 0, %v118
    %v120 = vrot.slane %v115, %v119
    %v122 = vmul.f32 %v113, %v120
    %v123 = vmul.f32 %v114, %v120
    %v124 = vld [vmem:[#allocation10] sm:$0x1]
    %v126 = vlaneseq
    %v127 = vshrl.u32 %v126, 7
    %v128 = vsub.s32 0, %v127
    %v129 = vrot.slane %v124, %v128
    %v131 = vadd.f32 %v122, %v129
    %v132 = vadd.f32 %v123, %v129
    %v133 = vpack.c.bf16 %v132, %v131
    %v134 = vld [vmem:[#allocation5] sm:$0xff]
    %v135 = vld [vmem:[#allocation5 + $0x8] sm:$0xff]
    %v136 = vld [vmem:[#allocation5 + $0x10] sm:$0xff]
    %v137 = vld [vmem:[#allocation5 + $0x18] sm:$0xff]
    %v138 = vpack.c.bf16 %v135, %v134
    %v139 = vpack.c.bf16 %v137, %v136
    %v140 = vld [vmem:[#allocation7] sm:$0x1]
    %v142 = vlaneseq
    %v143 = vshrl.u32 %v142, 7
    %v144 = vsub.s32 0, %v143
    %v145 = vrot.slane %v140, %v144
    %v148 = vsel %vm86, %v133, 0
    %150 = vmatprep.subr.bf16.mxu0 0
    %151 = vmatpush1.bf16.msra.mxu0 %v138
    %152 = vmatprep.subr.bf16.mxu0 0
    %153 = vmatpush1.bf16.msra.mxu0 %v139
    %154 = vmatprep.subr.bf16.mxu0 0
    %155 = vmatpush1.bf16.msra.mxu0 0
    %156 = vmatprep.subr.bf16.mxu0 0
    %157 = vmatpush1.bf16.msra.mxu0 0
    %158 = vmatprep.subr.bf16.mxu0 0
    %159 = vmatpush1.bf16.msra.mxu0 0
    %160 = vmatprep.subr.bf16.mxu0 0
    %161 = vmatpush1.bf16.msra.mxu0 0
    %162 = vmatprep.subr.bf16.mxu0 0
    %163 = vmatpush1.bf16.msra.mxu0 0
    %164 = vmatprep.subr.bf16.mxu0 0
    %165 = vmatpush1.bf16.msra.mxu0 0
    %166 = vmatprep.subr.bf16.mxu0 0
    %167 = vmatpush1.bf16.msra.mxu0 0
    %168 = vmatprep.subr.bf16.mxu0 0
    %169 = vmatpush1.bf16.msra.mxu0 0
    %170 = vmatprep.subr.bf16.mxu0 0
    %171 = vmatpush1.bf16.msra.mxu0 0
    %172 = vmatprep.subr.bf16.mxu0 0
    %173 = vmatpush1.bf16.msra.mxu0 0
    %174 = vmatprep.subr.bf16.mxu0 0
    %175 = vmatpush1.bf16.msra.mxu0 0
    %176 = vmatprep.subr.bf16.mxu0 0
    %177 = vmatpush1.bf16.msra.mxu0 0
    %178 = vmatprep.subr.bf16.mxu0 0
    %179 = vmatpush1.bf16.msra.mxu0 0
    %180 = vmatprep.subr.bf16.mxu0 0
    %181 = vmatpush1.bf16.msra.mxu0 0
    %182 = vmatprep.mubr.bf16.mxu0 0
    %183 = vmatmul.mubr.bf16.gmra.mrb[0].mxu0 %v148
    %v184 = vpop.f32.mrb[0].mxu0
    %v185 = vadd.f32 %v145, %v184
    %v186 = vpop.f32.mrb[0].mxu0
    %v187 = vpop.f32.mrb[0].mxu0
    %v188 = vadd.f32 %v145, %v187
    %v189 = vpop.f32.mrb[0].mxu0
    %190 = vdwg.mxu0
    %v191 = vmul.f32 %v185, 0.5
    %v192 = vmul.f32 %v188, 0.5
    %v193 = vmul.f32 %v185, 0.044715
    %v194 = vmul.f32 %v188, 0.044715
    %v195 = vmul.f32 %v193, %v185
    %v196 = vmul.f32 %v194, %v188
    %v197 = vmul.f32 %v195, %v185
    %v198 = vmul.f32 %v196, %v188
    %v199 = vadd.f32 %v185, %v197
    %v200 = vadd.f32 %v188, %v198
    %v201 = vmul.f32 %v199, 0.7978846
    %v202 = vmul.f32 %v200, 0.7978846
    %v203 = vtanh.pop %v201
    %v204 = vtanh.pop %v202
    %v205 = vadd.f32 %v203, 1.0
    %v206 = vadd.f32 %v204, 1.0
    %v207 = vmul.f32 %v191, %v205
    %v208 = vmul.f32 %v192, %v206
    %209 = vst [vmem:[#allocation11] sm:$0xff] %v207
    %210 = vst [vmem:[#allocation11 + $0x8] sm:$0xf] %v208
    // Predicated region
    $region42: #{telepath_forward.50} parent=1 // pred_check
      _
    $region43: #{telepath_forward.50} parent=1 // pred_check_branch
      %212 = sbr.rel (0) target = $region45
    $region44: #{telepath_forward.50} parent=1 // pred_region
      %s214 = ssub.s32 256, 256
      %215 = vsyncadd [#allocation4], %s214
      %s216 = sshll.u32 [#allocation11], 4
      %s217 = int_to_ptr.vmem [resolvable:$true] %s216
      %222 = dma.vmem_to_hbm [thread:$0]  %s217, 256, %s5, [#allocation4], 128, 128, 8
    $region45: #{telepath_forward.50} parent=1 // pred_fallthru
      _
    // Predicated region
    $region46: #{telepath_forward.50} parent=1 // pred_check
      _
    $region47: #{telepath_forward.50} parent=1 // pred_check_branch
      %224 = sbr.rel (0) target = $region49
    $region48: #{telepath_forward.50} parent=1 // pred_region
      %225 = dma.done [#allocation4], 256
    $region49: #{telepath_forward.50} parent=1 // pred_fallthru
      _
    %226 = vsyncpa [#allocation3], 1
    %227 = vsyncpa [#allocation6], 1
    %228 = vsyncpa [#allocation9], 1
    %229 = vsyncpa [#allocation4], 1

// kernel: telepath_forward.51
$region0: #{telepath_forward.51}
  #allocation0 [shape = 'u32[]', space=smem, size = 0x4, offset = 0x4, fixed_abs, tag = 'smem constant byte address 0x4 - core index']
  #allocation1 [shape = 'u32[144,128]{1,0:T(1,128)}', space=vmem, size = 0x12000, scoped, tag = 'internal scratch']
  %s0 = inlined_call_operand.hbm [shape: f32[12,128], index: 0, kind: input, shape index: {}]
  %s1 = inlined_call_operand.hbm [shape: f32[128,32], index: 1, kind: input, shape index: {}]
  %s2 = inlined_call_operand.hbm [shape: f32[1,32], index: 2, kind: input, shape index: {}]
  %s3 = inlined_call_operand.hbm [shape: f32[12,32], index: 3, kind: input, shape index: {}]
  %s4 = inlined_call_operand.hbm [shape: f32[12,32], index: 4, kind: output, shape index: {}]
  %s5 = sld [smem:[#allocation0]]
  $region42: #{telepath_forward.51} parent=0
    _
  %s7 = ssub.s32 1, %s5
  %s8 = scalar_select 0, %s7, %s5
  $region1: #{telepath_forward.51} parent=0
    #allocation2 [shape = 'u8[8192]{0}', space=vmem, size = 0x2000, scoped, tag = 'input window, operand 0, single buffered']
    #allocation3 [shape = 's32[1]{0}', space=sflag, size = 0x4, scoped, tag = 'scoped memory for telepath_forward.51']
    #allocation4 [shape = 's32[1]{0}', space=sflag, size = 0x4, scoped, tag = 'scoped memory for telepath_forward.51']
    #allocation5 [shape = 'u8[65536]{0}', space=vmem, size = 0x10000, scoped, tag = 'input window, operand 1, single buffered']
    #allocation6 [shape = 's32[1]{0}', space=sflag, size = 0x4, scoped, tag = 'scoped memory for telepath_forward.51']
    #allocation7 [shape = 'u8[512]{0}', space=vmem, size = 0x400, scoped, tag = 'input window, operand 2, single buffered']
    #allocation8 [shape = 'u8[8192]{0}', space=vmem, size = 0x2000, scoped, tag = 'input window, operand 3, single buffered']
    #allocation9 [shape = 's32[1]{0}', space=sflag, size = 0x4, scoped, tag = 'scoped memory for telepath_forward.51']
    #allocation10 [shape = 'u8[8192]{0}', space=vmem, size = 0x2000, scoped, tag = 'output window, operand 0, single buffered']
    %9 = vsyncpa [#allocation3], 0
    %10 = vsyncpa [#allocation6], 0
    %11 = vsyncpa [#allocation9], 0
    %12 = vsyncpa [#allocation4], 0
    // Predicated region
    $region2: #{telepath_forward.51} parent=1 // pred_check
      _
    $region3: #{telepath_forward.51} parent=1 // pred_check_branch
      %14 = sbr.rel (0) target = $region5
    $region4: #{telepath_forward.51} parent=1 // pred_region
      %s16 = ssub.s32 256, 256
      %17 = vsyncadd [#allocation3], %s16
      %s18 = sshll.u32 [#allocation2], 4
      %s19 = int_to_ptr.vmem [resolvable:$true] %s18
      %24 = dma.hbm_to_vmem [thread:$0]  %s0, 256, %s19, [#allocation3], 128, 128, 8
    $region5: #{telepath_forward.51} parent=1 // pred_fallthru
      _
    // Predicated region
    $region6: #{telepath_forward.51} parent=1 // pred_check
      _
    $region7: #{telepath_forward.51} parent=1 // pred_check_branch
      %26 = sbr.rel (0) target = $region9
    $region8: #{telepath_forward.51} parent=1 // pred_region
      %s28 = ssub.s32 2048, 2048
      %29 = vsyncadd [#allocation6], %s28
      %s30 = sshll.u32 [#allocation5], 4
      %s31 = int_to_ptr.vmem [resolvable:$true] %s30
      %36 = dma.hbm_to_vmem [thread:$0]  %s1, 2048, %s31, [#allocation6], 128, 128, 8
    $region9: #{telepath_forward.51} parent=1 // pred_fallthru
      _
    // Predicated region
    $region10: #{telepath_forward.51} parent=1 // pred_check
      _
    $region11: #{telepath_forward.51} parent=1 // pred_check_branch
      %38 = sbr.rel (0) target = $region13
    $region12: #{telepath_forward.51} parent=1 // pred_region
      %s40 = ssub.s32 16, 16
      %41 = vsyncadd [#allocation6], %s40
      %s43 = sshll.u32 [#allocation7], 4
      %s44 = int_to_ptr.vmem [resolvable:$true] %s43
      %46 = dma.hbm_to_vmem [thread:$0]  %s2, 16, %s44, [#allocation6]
    $region13: #{telepath_forward.51} parent=1 // pred_fallthru
      _
    // Predicated region
    $region14: #{telepath_forward.51} parent=1 // pred_check
      _
    $region15: #{telepath_forward.51} parent=1 // pred_check_branch
      %48 = sbr.rel (0) target = $region17
    $region16: #{telepath_forward.51} parent=1 // pred_region
      %s50 = ssub.s32 256, 256
      %51 = vsyncadd [#allocation9], %s50
      %s52 = sshll.u32 [#allocation8], 4
      %s53 = int_to_ptr.vmem [resolvable:$true] %s52
      %58 = dma.hbm_to_vmem [thread:$0]  %s3, 256, %s53, [#allocation9], 128, 128, 8
    $region17: #{telepath_forward.51} parent=1 // pred_fallthru
      _
    // Predicated region
    $region18: #{telepath_forward.51} parent=1 // pred_check
      _
    $region19: #{telepath_forward.51} parent=1 // pred_check_branch
      %60 = sbr.rel (0) target = $region21
    $region20: #{telepath_forward.51} parent=1 // pred_region
      %61 = dma.done [#allocation3], 256
    $region21: #{telepath_forward.51} parent=1 // pred_fallthru
      _
    // Predicated region
    $region22: #{telepath_forward.51} parent=1 // pred_check
      _
    $region23: #{telepath_forward.51} parent=1 // pred_check_branch
      %63 = sbr.rel (0) target = $region25
    $region24: #{telepath_forward.51} parent=1 // pred_region
      %64 = dma.done [#allocation6], 2048
    $region25: #{telepath_forward.51} parent=1 // pred_fallthru
      _
    // Predicated region
    $region26: #{telepath_forward.51} parent=1 // pred_check
      _
    $region27: #{telepath_forward.51} parent=1 // pred_check_branch
      %66 = sbr.rel (0) target = $region29
    $region28: #{telepath_forward.51} parent=1 // pred_region
      %67 = dma.done [#allocation6], 16
    $region29: #{telepath_forward.51} parent=1 // pred_fallthru
      _
    // Predicated region
    $region30: #{telepath_forward.51} parent=1 // pred_check
      _
    $region31: #{telepath_forward.51} parent=1 // pred_check_branch
      %69 = sbr.rel (0) target = $region33
    $region32: #{telepath_forward.51} parent=1 // pred_region
      %70 = dma.done [#allocation9], 256
    $region33: #{telepath_forward.51} parent=1 // pred_fallthru
      _
    %v72 = vld [vmem:[#allocation2] sm:$0xff]
    %v73 = vld [vmem:[#allocation2 + $0x8] sm:$0xf]
    %v74 = vpack.c.bf16 %v73, %v72
    %v75 = vld [vmem:[#allocation5] sm:$0xff]
    %v76 = vld [vmem:[#allocation5 + $0x8] sm:$0xff]
    %v77 = vld [vmem:[#allocation5 + $0x10] sm:$0xff]
    %v78 = vld [vmem:[#allocation5 + $0x18] sm:$0xff]
    %v79 = vld [vmem:[#allocation5 + $0x20] sm:$0xff]
    %v80 = vld [vmem:[#allocation5 + $0x28] sm:$0xff]
    %v81 = vld [vmem:[#allocation5 + $0x30] sm:$0xff]
    %v82 = vld [vmem:[#allocation5 + $0x38] sm:$0xff]
    %v83 = vld [vmem:[#allocation5 + $0x40] sm:$0xff]
    %v84 = vld [vmem:[#allocation5 + $0x48] sm:$0xff]
    %v85 = vld [vmem:[#allocation5 + $0x50] sm:$0xff]
    %v86 = vld [vmem:[#allocation5 + $0x58] sm:$0xff]
    %v87 = vld [vmem:[#allocation5 + $0x60] sm:$0xff]
    %v88 = vld [vmem:[#allocation5 + $0x68] sm:$0xff]
    %v89 = vld [vmem:[#allocation5 + $0x70] sm:$0xff]
    %v90 = vld [vmem:[#allocation5 + $0x78] sm:$0xff]
    %v91 = vpack.c.bf16 %v76, %v75
    %v92 = vpack.c.bf16 %v78, %v77
    %v93 = vpack.c.bf16 %v80, %v79
    %v94 = vpack.c.bf16 %v82, %v81
    %v95 = vpack.c.bf16 %v84, %v83
    %v96 = vpack.c.bf16 %v86, %v85
    %v97 = vpack.c.bf16 %v88, %v87
    %v98 = vpack.c.bf16 %v90, %v89
    %v99 = vld [vmem:[#allocation7] sm:$0x1]
    %v101 = vlaneseq
    %v102 = vshrl.u32 %v101, 7
    %v103 = vsub.s32 0, %v102
    %v104 = vrot.slane %v99, %v103
    %106 = vmatprep.subr.bf16.mxu0 0
    %107 = vmatpush1.bf16.msra.mxu0 %v91
    %108 = vmatprep.subr.bf16.mxu0 0
    %109 = vmatpush1.bf16.msra.mxu0 %v92
    %110 = vmatprep.subr.bf16.mxu0 0
    %111 = vmatpush1.bf16.msra.mxu0 %v93
    %112 = vmatprep.subr.bf16.mxu0 0
    %113 = vmatpush1.bf16.msra.mxu0 %v94
    %114 = vmatprep.subr.bf16.mxu0 0
    %115 = vmatpush1.bf16.msra.mxu0 %v95
    %116 = vmatprep.subr.bf16.mxu0 0
    %117 = vmatpush1.bf16.msra.mxu0 %v96
    %118 = vmatprep.subr.bf16.mxu0 0
    %119 = vmatpush1.bf16.msra.mxu0 %v97
    %120 = vmatprep.subr.bf16.mxu0 0
    %121 = vmatpush1.bf16.msra.mxu0 %v98
    %122 = vmatprep.subr.bf16.mxu0 0
    %123 = vmatpush1.bf16.msra.mxu0 0
    %124 = vmatprep.subr.bf16.mxu0 0
    %125 = vmatpush1.bf16.msra.mxu0 0
    %126 = vmatprep.subr.bf16.mxu0 0
    %127 = vmatpush1.bf16.msra.mxu0 0
    %128 = vmatprep.subr.bf16.mxu0 0
    %129 = vmatpush1.bf16.msra.mxu0 0
    %130 = vmatprep.subr.bf16.mxu0 0
    %131 = vmatpush1.bf16.msra.mxu0 0
    %132 = vmatprep.subr.bf16.mxu0 0
    %133 = vmatpush1.bf16.msra.mxu0 0
    %134 = vmatprep.subr.bf16.mxu0 0
    %135 = vmatpush1.bf16.msra.mxu0 0
    %136 = vmatprep.subr.bf16.mxu0 0
    %137 = vmatpush1.bf16.msra.mxu0 0
    %138 = vmatprep.mubr.bf16.mxu0 0
    %139 = vmatmul.mubr.bf16.gmra.mrb[0].mxu0 %v74
    %v140 = vpop.f32.mrb[0].mxu0
    %v141 = vadd.f32 %v104, %v140
    %v142 = vpop.f32.mrb[0].mxu0
    %v143 = vpop.f32.mrb[0].mxu0
    %v144 = vadd.f32 %v104, %v143
    %v145 = vpop.f32.mrb[0].mxu0
    %146 = vdwg.mxu0
    %v147 = vld [vmem:[#allocation8] sm:$0xff]
    %v148 = vld [vmem:[#allocation8 + $0x8] sm:$0xf]
    %v149 = vadd.f32 %v141, %v147
    %v150 = vadd.f32 %v144, %v148
    %vm151 = vcmask 261120
    %152 = vst.msk [vmem:[#allocation10] sm:$0xff] %vm151, %v149
    %vm153 = vcmask 257024
    %154 = vst.msk [vmem:[#allocation10 + $0x8] sm:$0xf] %vm153, %v150
    // Predicated region
    $region34: #{telepath_forward.51} parent=1 // pred_check
      _
    $region35: #{telepath_forward.51} parent=1 // pred_check_branch
      %156 = sbr.rel (0) target = $region37
    $region36: #{telepath_forward.51} parent=1 // pred_region
      %s158 = ssub.s32 256, 256
      %159 = vsyncadd [#allocation4], %s158
      %s160 = sshll.u32 [#allocation10], 4
      %s161 = int_to_ptr.vmem [resolvable:$true] %s160
      %166 = dma.vmem_to_hbm [thread:$0]  %s161, 256, %s4, [#allocation4], 128, 128, 8
    $region37: #{telepath_forward.51} parent=1 // pred_fallthru
      _
    // Predicated region
    $region38: #{telepath_forward.51} parent=1 // pred_check
      _
    $region39: #{telepath_forward.51} parent=1 // pred_check_branch
      %168 = sbr.rel (0) target = $region41
    $region40: #{telepath_forward.51} parent=1 // pred_region
      %169 = dma.done [#allocation4], 256
    $region41: #{telepath_forward.51} parent=1 // pred_fallthru
      _
    %170 = vsyncpa [#allocation3], 1
    %171 = vsyncpa [#allocation6], 1
    %172 = vsyncpa [#allocation9], 1
    %173 = vsyncpa [#allocation4], 1

// kernel: telepath_forward.48
$region0: #{telepath_forward.48}
  #allocation0 [shape = 'u32[]', space=smem, size = 0x4, offset = 0x4, fixed_abs, tag = 'smem constant byte address 0x4 - core index']
  #allocation1 [shape = 'u32[144,128]{1,0:T(1,128)}', space=vmem, size = 0x12000, scoped, tag = 'internal scratch']
  %s0 = inlined_call_operand.hbm [shape: f32[2,6,32], index: 0, kind: input, shape index: {}]
  %s1 = inlined_call_operand.hbm [shape: f32[2,16,64], index: 1, kind: input, shape index: {}]
  %s2 = inlined_call_operand.hbm [shape: f32[2,6,32], index: 2, kind: output, shape index: {}]
  %s3 = sld [smem:[#allocation0]]
  $region49: #{telepath_forward.48} parent=0
    _
  %s5 = ssub.s32 1, %s3
  %s6 = scalar_select 0, %s5, %s3
  $region1: #{telepath_forward.48} parent=0
    #allocation2 [shape = 'u8[8192]{0}', space=vmem, size = 0x2000, scoped, tag = 'input window, operand 0']
    #allocation3 [shape = 's32[2]{0}', space=sflag, size = 0x8, scoped, tag = 'scoped memory for telepath_forward.48']
    #allocation4 [shape = 's32[2]{0}', space=sflag, size = 0x8, scoped, tag = 'scoped memory for telepath_forward.48']
    #allocation5 [shape = 'u8[16384]{0}', space=vmem, size = 0x4000, scoped, tag = 'input window, operand 1']
    #allocation6 [shape = 's32[2]{0}', space=sflag, size = 0x8, scoped, tag = 'scoped memory for telepath_forward.48']
    #allocation7 [shape = 'u8[8192]{0}', space=vmem, size = 0x2000, scoped, tag = 'output window, operand 0']
    %7 = vsyncpa [#allocation3], 0
    %s8 = scalar_lea.sflag [#allocation3], 1
    %9 = vsyncpa %s8, 0
    %10 = vsyncpa [#allocation6], 0
    %s11 = scalar_lea.sflag [#allocation6], 1
    %12 = vsyncpa %s11, 0
    %13 = vsyncpa [#allocation4], 0
    %s14 = scalar_lea.sflag [#allocation4], 1
    %15 = vsyncpa %s14, 0
    loop: start=0, step=1, limit=4
    $region2: #{telepath_forward.48} parent=1 // loop_pre_header
      _
    $region3: #{telepath_forward.48} parent=1 // loop_header
      %s17 = sphi 0, %s21
      %p18 = scmp.ge.s32.totalorder %s17, 4
      %s24 = sphi 0, %s36
      %s25 = sphi 0, %s32
      %s26 = sphi 0, %s24
      %s27 = sphi 0, %s25
      %s28 = sphi 0, %s26
      %s29 = sphi 0, %s27
      %s41 = sphi 0, %s43
      %s44 = sphi 0, %s41
      %s45 = sphi 0, %s44
      %s61 = sphi 0, %s45
      %s67 = sphi 0, %s69
      %s70 = sphi 0, %s67
      %s71 = sphi 0, %s70
      %s87 = sphi 0, %s71
      %s95 = sphi 0, %s97
      %s98 = sphi 0, %s95
      %s99 = sphi 0, %s98
      %s115 = sphi 0, %s99
    $region4: #{telepath_forward.48} parent=1 // loop_header_branch
      %20 = sbr.rel (%p18) target = $region8
    $region5: #{telepath_forward.48} parent=1 // loop_body
      %s22 = ssub.s32 %s17, 1
      %s23 = ssub.s32 %s17, 2
      %s30 = sadd.s32 1, %s25
      %p31 = scmp.ge.s32.totalorder %s30, 1
      %s32 = scalar_select %p31, 0, %s30
      %s33 = sadd.s32 1, %s24
      %s34 = scalar_select %p31, %s33, %s24
      %p35 = scmp.ge.s32.totalorder %s34, 2
      %s36 = scalar_select %p35, 0, %s34
      %s37 = ssub.s32 %s24, %s36
      %s38 = ssub.s32 %s25, %s32
      %s39 = sor.u32 %s37, %s38
      %p40 = scmp.eq.s32.totalorder %s39, 0
      %s42 = sadd.s32 %s41, 1
      %s43 = scalar_select %p40, %s41, %s42
      %p46 = pneg %p40
      %p47 = scmp.eq.s32.totalorder %s17, 1
      %p48 = por %p46, %p47
      %p49 = scmp.ne.s32.totalorder %s41, %s44
      %p50 = scmp.eq.s32.totalorder %s17, 0
      %p51 = por %p49, %p50
      %p52 = scmp.ne.s32.totalorder %s41, %s44
      %p53 = scmp.eq.s32.totalorder %s22, 1
      %p54 = por %p52, %p53
      %p55 = scmp.ne.s32.totalorder %s44, %s45
      %p56 = scmp.eq.s32.totalorder %s22, 0
      %p57 = por %p55, %p56
      %p58 = scmp.ne.s32.totalorder %s44, %s45
      %p59 = scmp.eq.s32.totalorder %s23, 1
      %p60 = por %p58, %p59
      %p62 = scmp.ne.s32.totalorder %s45, %s61
      %p63 = scmp.eq.s32.totalorder %s23, 0
      %p64 = por %p62, %p63
      %s65 = ssub.s32 %s24, %s36
      %p66 = scmp.eq.s32.totalorder %s65, 0
      %s68 = sadd.s32 %s67, 1
      %s69 = scalar_select %p66, %s67, %s68
      %p72 = pneg %p66
      %p73 = scmp.eq.s32.totalorder %s17, 1
      %p74 = por %p72, %p73
      %p75 = scmp.ne.s32.totalorder %s67, %s70
      %p76 = scmp.eq.s32.totalorder %s17, 0
      %p77 = por %p75, %p76
      %p78 = scmp.ne.s32.totalorder %s67, %s70
      %p79 = scmp.eq.s32.totalorder %s22, 1
      %p80 = por %p78, %p79
      %p81 = scmp.ne.s32.totalorder %s70, %s71
      %p82 = scmp.eq.s32.totalorder %s22, 0
      %p83 = por %p81, %p82
      %p84 = scmp.ne.s32.totalorder %s70, %s71
      %p85 = scmp.eq.s32.totalorder %s23, 1
      %p86 = por %p84, %p85
      %p88 = scmp.ne.s32.totalorder %s71, %s87
      %p89 = scmp.eq.s32.totalorder %s23, 0
      %p90 = por %p88, %p89
      %s91 = ssub.s32 %s24, %s36
      %s92 = ssub.s32 %s25, %s32
      %s93 = sor.u32 %s91, %s92
      %p94 = scmp.eq.s32.totalorder %s93, 0
      %s96 = sadd.s32 %s95, 1
      %s97 = scalar_select %p94, %s95, %s96
      %p100 = pneg %p94
      %p101 = scmp.eq.s32.totalorder %s17, 1
      %p102 = por %p100, %p101
      %p103 = scmp.ne.s32.totalorder %s95, %s98
      %p104 = scmp.eq.s32.totalorder %s17, 0
      %p105 = por %p103, %p104
      %p106 = scmp.ne.s32.totalorder %s95, %s98
      %p107 = scmp.eq.s32.totalorder %s22, 1
      %p108 = por %p106, %p107
      %p109 = scmp.ne.s32.totalorder %s98, %s99
      %p110 = scmp.eq.s32.totalorder %s22, 0
      %p111 = por %p109, %p110
      %p112 = scmp.ne.s32.totalorder %s98, %s99
      %p113 = scmp.eq.s32.totalorder %s23, 1
      %p114 = por %p112, %p113
      %p116 = scmp.ne.s32.totalorder %s99, %s115
      %p117 = scmp.eq.s32.totalorder %s23, 0
      %p118 = por %p116, %p117
      %p119 = scmp.le.s32.totalorder 1, %s17
      %p120 = scmp.lt.s32.totalorder %s17, 3
      %p121 = pnand %p119, %p120
      %p122 = pneg %p121
      // Predicated region
      $region9: #{telepath_forward.48} parent=5 // pred_check
        _
      $region10: #{telepath_forward.48} parent=5 // pred_check_branch
        %124 = sbr.rel (%p121) target = $region12
      $region11: #{telepath_forward.48} parent=5 // pred_region
        %s125 = ssub.s32 %s17, 1
      $region12: #{telepath_forward.48} parent=5 // pred_fallthru
        _
      %p126 = scmp.lt.s32.totalorder %s17, 2
      // Predicated region
      $region13: #{telepath_forward.48} parent=5 // pred_check
        %p127 = pneg %p126
      $region14: #{telepath_forward.48} parent=5 // pred_check_branch
        %129 = sbr.rel (%p127) target = $region16
      $region15: #{telepath_forward.48} parent=5 // pred_region
        // Predicated region
        $region17: #{telepath_forward.48} parent=15 // pred_check
          %p130 = pneg %p51
        $region18: #{telepath_forward.48} parent=15 // pred_check_branch
          %132 = sbr.rel (%p130) target = $region20
        $region19: #{telepath_forward.48} parent=15 // pred_region
          %s133 = sand.u32 %s41, 1
          %s134 = scalar_lea.sflag [#allocation3], %s133
          %s135 = sand.u32 %s41, 1
          %s136 = smul.addr %s135, 8
          %s137 = scalar_lea.vmem [#allocation2], %s136
          %s139 = ssub.s32 128, 128
          %140 = vsyncadd %s134, %s139
          %s141 = sadd.s32 %s25, %s24
          %s142 = smul.addr %s141, 128
          %s143 = scalar_lea.hbm %s0, %s142
          %s145 = sshll.u32 %s137, 4
          %s146 = int_to_ptr.vmem [resolvable:$true] %s145
          %148 = dma.hbm_to_vmem [thread:$0]  %s143, 128, %s146, %s134
        $region20: #{telepath_forward.48} parent=15 // pred_fallthru
          _
        // Predicated region
        $region21: #{telepath_forward.48} parent=15 // pred_check
          %p149 = pneg %p77
        $region22: #{telepath_forward.48} parent=15 // pred_check_branch
          %151 = sbr.rel (%p149) target = $region24
        $region23: #{telepath_forward.48} parent=15 // pred_region
          %s152 = sand.u32 %s67, 1
          %s153 = scalar_lea.sflag [#allocation6], %s152
          %s154 = sand.u32 %s67, 1
          %s155 = smul.addr %s154, 16
          %s156 = scalar_lea.vmem [#allocation5], %s155
          %s158 = ssub.s32 256, 256
          %159 = vsyncadd %s153, %s158
          %s160 = smul.addr %s24, 2
          %s161 = smul.addr %s160, 128
          %s162 = scalar_lea.hbm %s1, %s161
          %s163 = sshll.u32 %s156, 4
          %s164 = int_to_ptr.vmem [resolvable:$true] %s163
          %169 = dma.hbm_to_vmem [thread:$0]  %s162, 256, %s164, %s153, 128, 128, 8
        $region24: #{telepath_forward.48} parent=15 // pred_fallthru
          _
      $region16: #{telepath_forward.48} parent=5 // pred_fallthru
        _
      %p170 = scmp.le.s32.totalorder 1, %s17
      %p171 = scmp.lt.s32.totalorder %s17, 3
      %p172 = pnand %p170, %p171
      %p173 = pneg %p172
      // Predicated region
      $region25: #{telepath_forward.48} parent=5 // pred_check
        _
      $region26: #{telepath_forward.48} parent=5 // pred_check_branch
        %175 = sbr.rel (%p172) target = $region28
      $region27: #{telepath_forward.48} parent=5 // pred_region
        %s176 = ssub.s32 %s17, 1
        %s177 = sand.u32 %s44, 1
        %s178 = scalar_lea.sflag [#allocation3], %s177
        %s179 = sand.u32 %s44, 1
        %s180 = smul.addr %s179, 8
        %s181 = scalar_lea.vmem [#allocation2], %s180
        // Predicated region
        $region29: #{telepath_forward.48} parent=27 // pred_check
          %p182 = pneg %p57
        $region30: #{telepath_forward.48} parent=27 // pred_check_branch
          %184 = sbr.rel (%p182) target = $region32
        $region31: #{telepath_forward.48} parent=27 // pred_region
          %185 = dma.done %s178, 128
        $region32: #{telepath_forward.48} parent=27 // pred_fallthru
          _
        %s186 = sand.u32 %s70, 1
        %s187 = scalar_lea.sflag [#allocation6], %s186
        %s188 = sand.u32 %s70, 1
        %s189 = smul.addr %s188, 16
        %s190 = scalar_lea.vmem [#allocation5], %s189
        // Predicated region
        $region33: #{telepath_forward.48} parent=27 // pred_check
          %p191 = pneg %p83
        $region34: #{telepath_forward.48} parent=27 // pred_check_branch
          %193 = sbr.rel (%p191) target = $region36
        $region35: #{telepath_forward.48} parent=27 // pred_region
          %194 = dma.done %s187, 256
        $region36: #{telepath_forward.48} parent=27 // pred_fallthru
          _
        %s195 = sand.u32 %s44, 1
        %s196 = scalar_lea.sflag [#allocation3], %s195
        %s197 = sand.u32 %s44, 1
        %s198 = smul.addr %s197, 8
        %s199 = scalar_lea.vmem [#allocation2], %s198
        %p200 = pneg %p57
        %p201 = pneg %p54
        %s202 = sand.u32 %s70, 1
        %s203 = scalar_lea.sflag [#allocation6], %s202
        %s204 = sand.u32 %s70, 1
        %s205 = smul.addr %s204, 16
        %s206 = scalar_lea.vmem [#allocation5], %s205
        %p207 = pneg %p83
        %p208 = pneg %p80
        %p209 = pneg %p111
        %p210 = pneg %p108
        %s211 = sand.u32 %s98, 1
        %s212 = scalar_lea.sflag [#allocation4], %s211
        %s213 = sand.u32 %s98, 1
        %s214 = smul.addr %s213, 8
        %s215 = scalar_lea.vmem [#allocation7], %s214
        %v217 = vld [vmem:[%s190] sm:$0xff]
        %v218 = vld [vmem:[%s190 + $0x8] sm:$0xff]
        %v219 = vld [vmem:[%s181] sm:$0x3f]
        %v220 = vmul.f32 %v219, 0.35355338
        %v221 = vpack.c.bf16 %v220, %v220
        %v222 = vpack.c.bf16 %v218, %v217
        %vm223 = vcmask 64512
        %v225 = vsel %vm223, %v221, 0
        %v228 = vsel %vm223, %v222, 0
        %230 = vmatprep.subr.bf16.mxu0 0
        %231 = vmatpush1.bf16.xpose.msra.mxu0 %v228
        %232 = vmatprep.subr.bf16.mxu0 0
        %233 = vmatpush1.bf16.xpose.msra.mxu0 0
        %234 = vmatprep.subr.bf16.mxu0 0
        %235 = vmatpush1.bf16.xpose.msra.mxu0 0
        %236 = vmatprep.subr.bf16.mxu0 0
        %237 = vmatpush1.bf16.xpose.msra.mxu0 0
        %238 = vmatprep.subr.bf16.mxu0 0
        %239 = vmatpush1.bf16.xpose.msra.mxu0 0
        %240 = vmatprep.subr.bf16.mxu0 0
        %241 = vmatpush1.bf16.xpose.msra.mxu0 0
        %242 = vmatprep.subr.bf16.mxu0 0
        %243 = vmatpush1.bf16.xpose.msra.mxu0 0
        %244 = vmatprep.subr.bf16.mxu0 0
        %245 = vmatpush1.bf16.xpose.msra.mxu0 0
        %246 = vmatprep.subr.bf16.mxu0 0
        %247 = vmatpush1.bf16.xpose.msra.mxu0 0
        %248 = vmatprep.subr.bf16.mxu0 0
        %249 = vmatpush1.bf16.xpose.msra.mxu0 0
        %250 = vmatprep.subr.bf16.mxu0 0
        %251 = vmatpush1.bf16.xpose.msra.mxu0 0
        %252 = vmatprep.subr.bf16.mxu0 0
        %253 = vmatpush1.bf16.xpose.msra.mxu0 0
        %254 = vmatprep.subr.bf16.mxu0 0
        %255 = vmatpush1.bf16.xpose.msra.mxu0 0
        %256 = vmatprep.subr.bf16.mxu0 0
        %257 = vmatpush1.bf16.xpose.msra.mxu0 0
        %258 = vmatprep.subr.bf16.mxu0 0
        %259 = vmatpush1.bf16.xpose.msra.mxu0 0
        %260 = vmatprep.subr.bf16.mxu0 0
        %261 = vmatpush1.bf16.xpose.msra.mxu0 0
        %262 = vmatprep.mubr.bf16.mxu0 0
        %263 = vmatmul.mubr.bf16.gmra.mrb[0].mxu0 %v225
        %v264 = vpop.f32.mrb[0].mxu0
        %v265 = vadd.f32 0.0, %v264
        %v266 = vpop.f32.mrb[0].mxu0
        %v267 = vpop.f32.mrb[0].mxu0
        %v268 = vpop.f32.mrb[0].mxu0
        %269 = vdwg.mxu0
        %vm270 = vcmask 128000
        %v271 = vsel %vm270, %v265, -inf
        %272 = vmax.xlane.f32.xlu0 %v271
        %v273 = vpop.xlane.xlu0 %272
        %v274 = vsub.f32 %v265, %v273
        %v275 = vmul.f32 %v274, 1.442695
        %v276 = vpow.pop %v275
        %v277 = vsel %vm270, %v276, 0.0
        %278 = vadd.xlane.f32.xlu0 %v277
        %v279 = vpop.xlane.xlu0 %278
        %v280 = vpack.c.bf16 %v276, %v276
        %282 = vrot.lane.b32.xlu0 %v222, 96
        %v283 = vpop.permute.xlu0 %282
        %vm285 = vcmask 130048
        %v287 = vsel %vm285, %v280, 0
        %289 = vmatprep.subr.bf16.mxu0 0
        %290 = vmatpush1.bf16.msra.mxu0 %v283
        %291 = vmatprep.subr.bf16.mxu0 0
        %292 = vmatpush1.bf16.msra.mxu0 0
        %293 = vmatprep.subr.bf16.mxu0 0
        %294 = vmatpush1.bf16.msra.mxu0 0
        %295 = vmatprep.subr.bf16.mxu0 0
        %296 = vmatpush1.bf16.msra.mxu0 0
        %297 = vmatprep.subr.bf16.mxu0 0
        %298 = vmatpush1.bf16.msra.mxu0 0
        %299 = vmatprep.subr.bf16.mxu0 0
        %300 = vmatpush1.bf16.msra.mxu0 0
        %301 = vmatprep.subr.bf16.mxu0 0
        %302 = vmatpush1.bf16.msra.mxu0 0
        %303 = vmatprep.subr.bf16.mxu0 0
        %304 = vmatpush1.bf16.msra.mxu0 0
        %305 = vmatprep.subr.bf16.mxu0 0
        %306 = vmatpush1.bf16.msra.mxu0 0
        %307 = vmatprep.subr.bf16.mxu0 0
        %308 = vmatpush1.bf16.msra.mxu0 0
        %309 = vmatprep.subr.bf16.mxu0 0
        %310 = vmatpush1.bf16.msra.mxu0 0
        %311 = vmatprep.subr.bf16.mxu0 0
        %312 = vmatpush1.bf16.msra.mxu0 0
        %313 = vmatprep.subr.bf16.mxu0 0
        %314 = vmatpush1.bf16.msra.mxu0 0
        %315 = vmatprep.subr.bf16.mxu0 0
        %316 = vmatpush1.bf16.msra.mxu0 0
        %317 = vmatprep.subr.bf16.mxu0 0
        %318 = vmatpush1.bf16.msra.mxu0 0
        %319 = vmatprep.subr.bf16.mxu0 0
        %320 = vmatpush1.bf16.msra.mxu0 0
        %321 = vmatprep.mubr.bf16.mxu0 0
        %322 = vmatmul.mubr.bf16.gmra.mrb[0].mxu0 %v287
        %v323 = vpop.f32.mrb[0].mxu0
        %v324 = vadd.f32 0.0, %v323
        %v325 = vpop.f32.mrb[0].mxu0
        %v326 = vpop.f32.mrb[0].mxu0
        %v327 = vpop.f32.mrb[0].mxu0
        %328 = vdwg.mxu0
        %v329 = vrcp.pop %v279
        %v330 = vmul.f32 %v324, %v329
        %332 = vrot.lane.b32.xlu0 %v221, 120
        %v333 = vpop.permute.xlu0 %332
        %334 = vrot.lane.b32.xlu0 %v222, 120
        %v335 = vpop.permute.xlu0 %334
        %v337 = vsel %vm223, %v333, 0
        %v340 = vsel %vm223, %v335, 0
        %342 = vmatprep.subr.bf16.mxu0 0
        %343 = vmatpush1.bf16.xpose.msra.mxu0 %v340
        %344 = vmatprep.subr.bf16.mxu0 0
        %345 = vmatpush1.bf16.xpose.msra.mxu0 0
        %346 = vmatprep.subr.bf16.mxu0 0
        %347 = vmatpush1.bf16.xpose.msra.mxu0 0
        %348 = vmatprep.subr.bf16.mxu0 0
        %349 = vmatpush1.bf16.xpose.msra.mxu0 0
        %350 = vmatprep.subr.bf16.mxu0 0
        %351 = vmatpush1.bf16.xpose.msra.mxu0 0
        %352 = vmatprep.subr.bf16.mxu0 0
        %353 = vmatpush1.bf16.xpose.msra.mxu0 0
        %354 = vmatprep.subr.bf16.mxu0 0
        %355 = vmatpush1.bf16.xpose.msra.mxu0 0
        %356 = vmatprep.subr.bf16.mxu0 0
        %357 = vmatpush1.bf16.xpose.msra.mxu0 0
        %358 = vmatprep.subr.bf16.mxu0 0
        %359 = vmatpush1.bf16.xpose.msra.mxu0 0
        %360 = vmatprep.subr.bf16.mxu0 0
        %361 = vmatpush1.bf16.xpose.msra.mxu0 0
        %362 = vmatprep.subr.bf16.mxu0 0
        %363 = vmatpush1.bf16.xpose.msra.mxu0 0
        %364 = vmatprep.subr.bf16.mxu0 0
        %365 = vmatpush1.bf16.xpose.msra.mxu0 0
        %366 = vmatprep.subr.bf16.mxu0 0
        %367 = vmatpush1.bf16.xpose.msra.mxu0 0
        %368 = vmatprep.subr.bf16.mxu0 0
        %369 = vmatpush1.bf16.xpose.msra.mxu0 0
        %370 = vmatprep.subr.bf16.mxu0 0
        %371 = vmatpush1.bf16.xpose.msra.mxu0 0
        %372 = vmatprep.subr.bf16.mxu0 0
        %373 = vmatpush1.bf16.xpose.msra.mxu0 0
        %374 = vmatprep.mubr.bf16.mxu0 0
        %375 = vmatmul.mubr.bf16.gmra.mrb[0].mxu0 %v337
        %v376 = vpop.f32.mrb[0].mxu0
        %v377 = vadd.f32 0.0, %v376
        %v378 = vpop.f32.mrb[0].mxu0
        %v379 = vpop.f32.mrb[0].mxu0
        %v380 = vpop.f32.mrb[0].mxu0
        %381 = vdwg.mxu0
        %v382 = vsel %vm270, %v377, -inf
        %383 = vmax.xlane.f32.xlu0 %v382
        %v384 = vpop.xlane.xlu0 %383
        %v385 = vsub.f32 %v377, %v384
        %v386 = vmul.f32 %v385, 1.442695
        %v387 = vpow.pop %v386
        %v388 = vsel %vm270, %v387, 0.0
        %389 = vadd.xlane.f32.xlu0 %v388
        %v390 = vpop.xlane.xlu0 %389
        %v391 = vpack.c.bf16 %v387, %v387
        %392 = vrot.lane.b32.xlu0 %v222, 88
        %v393 = vpop.permute.xlu0 %392
        %v396 = vsel %vm285, %v391, 0
        %398 = vmatprep.subr.bf16.mxu0 0
        %399 = vmatpush1.bf16.msra.mxu0 %v393
        %400 = vmatprep.subr.bf16.mxu0 0
        %401 = vmatpush1.bf16.msra.mxu0 0
        %402 = vmatprep.subr.bf16.mxu0 0
        %403 = vmatpush1.bf16.msra.mxu0 0
        %404 = vmatprep.subr.bf16.mxu0 0
        %405 = vmatpush1.bf16.msra.mxu0 0
        %406 = vmatprep.subr.bf16.mxu0 0
        %407 = vmatpush1.bf16.msra.mxu0 0
        %408 = vmatprep.subr.bf16.mxu0 0
        %409 = vmatpush1.bf16.msra.mxu0 0
        %410 = vmatprep.subr.bf16.mxu0 0
        %411 = vmatpush1.bf16.msra.mxu0 0
        %412 = vmatprep.subr.bf16.mxu0 0
        %413 = vmatpush1.bf16.msra.mxu0 0
        %414 = vmatprep.subr.bf16.mxu0 0
        %415 = vmatpush1.bf16.msra.mxu0 0
        %416 = vmatprep.subr.bf16.mxu0 0
        %417 = vmatpush1.bf16.msra.mxu0 0
        %418 = vmatprep.subr.bf16.mxu0 0
        %419 = vmatpush1.bf16.msra.mxu0 0
        %420 = vmatprep.subr.bf16.mxu0 0
        %421 = vmatpush1.bf16.msra.mxu0 0
        %422 = vmatprep.subr.bf16.mxu0 0
        %423 = vmatpush1.bf16.msra.mxu0 0
        %424 = vmatprep.subr.bf16.mxu0 0
        %425 = vmatpush1.bf16.msra.mxu0 0
        %426 = vmatprep.subr.bf16.mxu0 0
        %427 = vmatpush1.bf16.msra.mxu0 0
        %428 = vmatprep.subr.bf16.mxu0 0
        %429 = vmatpush1.bf16.msra.mxu0 0
        %430 = vmatprep.mubr.bf16.mxu0 0
        %431 = vmatmul.mubr.bf16.gmra.mrb[0].mxu0 %v396
        %v432 = vpop.f32.mrb[0].mxu0
        %v433 = vadd.f32 0.0, %v432
        %v434 = vpop.f32.mrb[0].mxu0
        %v435 = vpop.f32.mrb[0].mxu0
        %v436 = vpop.f32.mrb[0].mxu0
        %437 = vdwg.mxu0
        %v438 = vrcp.pop %v390
        %v439 = vmul.f32 %v433, %v438
        %440 = vrot.lane.b32.xlu0 %v221, 112
        %v441 = vpop.permute.xlu0 %440
        %442 = vrot.lane.b32.xlu0 %v222, 112
        %v443 = vpop.permute.xlu0 %442
        %v445 = vsel %vm223, %v441, 0
        %v448 = vsel %vm223, %v443, 0
        %450 = vmatprep.subr.bf16.mxu0 0
        %451 = vmatpush1.bf16.xpose.msra.mxu0 %v448
        %452 = vmatprep.subr.bf16.mxu0 0
        %453 = vmatpush1.bf16.xpose.msra.mxu0 0
        %454 = vmatprep.subr.bf16.mxu0 0
        %455 = vmatpush1.bf16.xpose.msra.mxu0 0
        %456 = vmatprep.subr.bf16.mxu0 0
        %457 = vmatpush1.bf16.xpose.msra.mxu0 0
        %458 = vmatprep.subr.bf16.mxu0 0
        %459 = vmatpush1.bf16.xpose.msra.mxu0 0
        %460 = vmatprep.subr.bf16.mxu0 0
        %461 = vmatpush1.bf16.xpose.msra.mxu0 0
        %462 = vmatprep.subr.bf16.mxu0 0
        %463 = vmatpush1.bf16.xpose.msra.mxu0 0
        %464 = vmatprep.subr.bf16.mxu0 0
        %465 = vmatpush1.bf16.xpose.msra.mxu0 0
        %466 = vmatprep.subr.bf16.mxu0 0
        %467 = vmatpush1.bf16.xpose.msra.mxu0 0
        %468 = vmatprep.subr.bf16.mxu0 0
        %469 = vmatpush1.bf16.xpose.msra.mxu0 0
        %470 = vmatprep.subr.bf16.mxu0 0
        %471 = vmatpush1.bf16.xpose.msra.mxu0 0
        %472 = vmatprep.subr.bf16.mxu0 0
        %473 = vmatpush1.bf16.xpose.msra.mxu0 0
        %474 = vmatprep.subr.bf16.mxu0 0
        %475 = vmatpush1.bf16.xpose.msra.mxu0 0
        %476 = vmatprep.subr.bf16.mxu0 0
        %477 = vmatpush1.bf16.xpose.msra.mxu0 0
        %478 = vmatprep.subr.bf16.mxu0 0
        %479 = vmatpush1.bf16.xpose.msra.mxu0 0
        %480 = vmatprep.subr.bf16.mxu0 0
        %481 = vmatpush1.bf16.xpose.msra.mxu0 0
        %482 = vmatprep.mubr.bf16.mxu0 0
        %483 = vmatmul.mubr.bf16.gmra.mrb[0].mxu0 %v445
        %v484 = vpop.f32.mrb[0].mxu0
        %v485 = vadd.f32 0.0, %v484
        %v486 = vpop.f32.mrb[0].mxu0
        %v487 = vpop.f32.mrb[0].mxu0
        %v488 = vpop.f32.mrb[0].mxu0
        %489 = vdwg.mxu0
        %v490 = vsel %vm270, %v485, -inf
        %491 = vmax.xlane.f32.xlu0 %v490
        %v492 = vpop.xlane.xlu0 %491
        %v493 = vsub.f32 %v485, %v492
        %v494 = vmul.f32 %v493, 1.442695
        %v495 = vpow.pop %v494
        %v496 = vsel %vm270, %v495, 0.0
        %497 = vadd.xlane.f32.xlu0 %v496
        %v498 = vpop.xlane.xlu0 %497
        %v499 = vpack.c.bf16 %v495, %v495
        %500 = vrot.lane.b32.xlu0 %v222, 80
        %v501 = vpop.permute.xlu0 %500
        %v504 = vsel %vm285, %v499, 0
        %506 = vmatprep.subr.bf16.mxu0 0
        %507 = vmatpush1.bf16.msra.mxu0 %v501
        %508 = vmatprep.subr.bf16.mxu0 0
        %509 = vmatpush1.bf16.msra.mxu0 0
        %510 = vmatprep.subr.bf16.mxu0 0
        %511 = vmatpush1.bf16.msra.mxu0 0
        %512 = vmatprep.subr.bf16.mxu0 0
        %513 = vmatpush1.bf16.msra.mxu0 0
        %514 = vmatprep.subr.bf16.mxu0 0
        %515 = vmatpush1.bf16.msra.mxu0 0
        %516 = vmatprep.subr.bf16.mxu0 0
        %517 = vmatpush1.bf16.msra.mxu0 0
        %518 = vmatprep.subr.bf16.mxu0 0
        %519 = vmatpush1.bf16.msra.mxu0 0
        %520 = vmatprep.subr.bf16.mxu0 0
        %521 = vmatpush1.bf16.msra.mxu0 0
        %522 = vmatprep.subr.bf16.mxu0 0
        %523 = vmatpush1.bf16.msra.mxu0 0
        %524 = vmatprep.subr.bf16.mxu0 0
        %525 = vmatpush1.bf16.msra.mxu0 0
        %526 = vmatprep.subr.bf16.mxu0 0
        %527 = vmatpush1.bf16.msra.mxu0 0
        %528 = vmatprep.subr.bf16.mxu0 0
        %529 = vmatpush1.bf16.msra.mxu0 0
        %530 = vmatprep.subr.bf16.mxu0 0
        %531 = vmatpush1.bf16.msra.mxu0 0
        %532 = vmatprep.subr.bf16.mxu0 0
        %533 = vmatpush1.bf16.msra.mxu0 0
        %534 = vmatprep.subr.bf16.mxu0 0
        %535 = vmatpush1.bf16.msra.mxu0 0
        %536 = vmatprep.subr.bf16.mxu0 0
        %537 = vmatpush1.bf16.msra.mxu0 0
        %538 = vmatprep.mubr.bf16.mxu0 0
        %539 = vmatmul.mubr.bf16.gmra.mrb[0].mxu0 %v504
        %v540 = vpop.f32.mrb[0].mxu0
        %v541 = vadd.f32 0.0, %v540
        %v542 = vpop.f32.mrb[0].mxu0
        %v543 = vpop.f32.mrb[0].mxu0
        %v544 = vpop.f32.mrb[0].mxu0
        %545 = vdwg.mxu0
        %v546 = vrcp.pop %v498
        %v547 = vmul.f32 %v541, %v546
        %548 = vrot.lane.b32.xlu0 %v221, 104
        %v549 = vpop.permute.xlu0 %548
        %550 = vrot.lane.b32.xlu0 %v222, 104
        %v551 = vpop.permute.xlu0 %550
        %v553 = vsel %vm223, %v549, 0
        %v556 = vsel %vm223, %v551, 0
        %558 = vmatprep.subr.bf16.mxu0 0
        %559 = vmatpush1.bf16.xpose.msra.mxu0 %v556
        %560 = vmatprep.subr.bf16.mxu0 0
        %561 = vmatpush1.bf16.xpose.msra.mxu0 0
        %562 = vmatprep.subr.bf16.mxu0 0
        %563 = vmatpush1.bf16.xpose.msra.mxu0 0
        %564 = vmatprep.subr.bf16.mxu0 0
        %565 = vmatpush1.bf16.xpose.msra.mxu0 0
        %566 = vmatprep.subr.bf16.mxu0 0
        %567 = vmatpush1.bf16.xpose.msra.mxu0 0
        %568 = vmatprep.subr.bf16.mxu0 0
        %569 = vmatpush1.bf16.xpose.msra.mxu0 0
        %570 = vmatprep.subr.bf16.mxu0 0
        %571 = vmatpush1.bf16.xpose.msra.mxu0 0
        %572 = vmatprep.subr.bf16.mxu0 0
        %573 = vmatpush1.bf16.xpose.msra.mxu0 0
        %574 = vmatprep.subr.bf16.mxu0 0
        %575 = vmatpush1.bf16.xpose.msra.mxu0 0
        %576 = vmatprep.subr.bf16.mxu0 0
        %577 = vmatpush1.bf16.xpose.msra.mxu0 0
        %578 = vmatprep.subr.bf16.mxu0 0
        %579 = vmatpush1.bf16.xpose.msra.mxu0 0
        %580 = vmatprep.subr.bf16.mxu0 0
        %581 = vmatpush1.bf16.xpose.msra.mxu0 0
        %582 = vmatprep.subr.bf16.mxu0 0
        %583 = vmatpush1.bf16.xpose.msra.mxu0 0
        %584 = vmatprep.subr.bf16.mxu0 0
        %585 = vmatpush1.bf16.xpose.msra.mxu0 0
        %586 = vmatprep.subr.bf16.mxu0 0
        %587 = vmatpush1.bf16.xpose.msra.mxu0 0
        %588 = vmatprep.subr.bf16.mxu0 0
        %589 = vmatpush1.bf16.xpose.msra.mxu0 0
        %590 = vmatprep.mubr.bf16.mxu0 0
        %591 = vmatmul.mubr.bf16.gmra.mrb[0].mxu0 %v553
        %v592 = vpop.f32.mrb[0].mxu0
        %v593 = vadd.f32 0.0, %v592
        %v594 = vpop.f32.mrb[0].mxu0
        %v595 = vpop.f32.mrb[0].mxu0
        %v596 = vpop.f32.mrb[0].mxu0
        %597 = vdwg.mxu0
        %v598 = vsel %vm270, %v593, -inf
        %599 = vmax.xlane.f32.xlu0 %v598
        %v600 = vpop.xlane.xlu0 %599
        %v601 = vsub.f32 %v593, %v600
        %v602 = vmul.f32 %v601, 1.442695
        %v603 = vpow.pop %v602
        %v604 = vsel %vm270, %v603, 0.0
        %605 = vadd.xlane.f32.xlu0 %v604
        %v606 = vpop.xlane.xlu0 %605
        %v607 = vpack.c.bf16 %v603, %v603
        %608 = vrot.lane.b32.xlu0 %v222, 72
        %v609 = vpop.permute.xlu0 %608
        %v612 = vsel %vm285, %v607, 0
        %614 = vmatprep.subr.bf16.mxu0 0
        %615 = vmatpush1.bf16.msra.mxu0 %v609
        %616 = vmatprep.subr.bf16.mxu0 0
        %617 = vmatpush1.bf16.msra.mxu0 0
        %618 = vmatprep.subr.bf16.mxu0 0
        %619 = vmatpush1.bf16.msra.mxu0 0
        %620 = vmatprep.subr.bf16.mxu0 0
        %621 = vmatpush1.bf16.msra.mxu0 0
        %622 = vmatprep.subr.bf16.mxu0 0
        %623 = vmatpush1.bf16.msra.mxu0 0
        %624 = vmatprep.subr.bf16.mxu0 0
        %625 = vmatpush1.bf16.msra.mxu0 0
        %626 = vmatprep.subr.bf16.mxu0 0
        %627 = vmatpush1.bf16.msra.mxu0 0
        %628 = vmatprep.subr.bf16.mxu0 0
        %629 = vmatpush1.bf16.msra.mxu0 0
        %630 = vmatprep.subr.bf16.mxu0 0
        %631 = vmatpush1.bf16.msra.mxu0 0
        %632 = vmatprep.subr.bf16.mxu0 0
        %633 = vmatpush1.bf16.msra.mxu0 0
        %634 = vmatprep.subr.bf16.mxu0 0
        %635 = vmatpush1.bf16.msra.mxu0 0
        %636 = vmatprep.subr.bf16.mxu0 0
        %637 = vmatpush1.bf16.msra.mxu0 0
        %638 = vmatprep.subr.bf16.mxu0 0
        %639 = vmatpush1.bf16.msra.mxu0 0
        %640 = vmatprep.subr.bf16.mxu0 0
        %641 = vmatpush1.bf16.msra.mxu0 0
        %642 = vmatprep.subr.bf16.mxu0 0
        %643 = vmatpush1.bf16.msra.mxu0 0
        %644 = vmatprep.subr.bf16.mxu0 0
        %645 = vmatpush1.bf16.msra.mxu0 0
        %646 = vmatprep.mubr.bf16.mxu0 0
        %647 = vmatmul.mubr.bf16.gmra.mrb[0].mxu0 %v612
        %v648 = vpop.f32.mrb[0].mxu0
        %v649 = vadd.f32 0.0, %v648
        %v650 = vpop.f32.mrb[0].mxu0
        %v651 = vpop.f32.mrb[0].mxu0
        %v652 = vpop.f32.mrb[0].mxu0
        %653 = vdwg.mxu0
        %v654 = vrcp.pop %v606
        %v655 = vmul.f32 %v649, %v654
        %657 = vrot.lane.b32.xlu0 %v439, 8
        %v658 = vpop.permute.xlu0 %657
        %661 = vrot.lane.b32.xlu0 %v547, 16
        %v662 = vpop.permute.xlu0 %661
        %665 = vrot.lane.b32.xlu0 %v655, 24
        %v666 = vpop.permute.xlu0 %665
        %v668 = vsel %vm223, %v330, %v658
        %v669 = vsel %vm285, %v668, %v662
        %vm670 = vcmask 195584
        %v671 = vsel %vm670, %v669, %v666
        %vm672 = vcmask 259072
        %673 = vst.msk [vmem:[%s215] sm:$0x3f] %vm672, %v671
        %s674 = sand.u32 %s98, 1
        %s675 = scalar_lea.sflag [#allocation4], %s674
        %s676 = sand.u32 %s98, 1
        %s677 = smul.addr %s676, 8
        %s678 = scalar_lea.vmem [#allocation7], %s677
        // Predicated region
        $region37: #{telepath_forward.48} parent=27 // pred_check
          %p679 = pneg %p108
        $region38: #{telepath_forward.48} parent=27 // pred_check_branch
          %681 = sbr.rel (%p679) target = $region40
        $region39: #{telepath_forward.48} parent=27 // pred_region
          %s683 = ssub.s32 128, 128
          %684 = vsyncadd %s675, %s683
          %s685 = sadd.s32 %s27, %s26
          %s686 = smul.addr %s685, 128
          %s687 = scalar_lea.hbm %s2, %s686
          %s689 = sshll.u32 %s678, 4
          %s690 = int_to_ptr.vmem [resolvable:$true] %s689
          %692 = dma.vmem_to_hbm [thread:$0]  %s690, 128, %s687, %s675
        $region40: #{telepath_forward.48} parent=27 // pred_fallthru
          _
      $region28: #{telepath_forward.48} parent=5 // pred_fallthru
        _
      %p693 = scmp.le.s32.totalorder 2, %s17
      // Predicated region
      $region41: #{telepath_forward.48} parent=5 // pred_check
        %p694 = pneg %p693
      $region42: #{telepath_forward.48} parent=5 // pred_check_branch
        %696 = sbr.rel (%p694) target = $region44
      $region43: #{telepath_forward.48} parent=5 // pred_region
        %s697 = ssub.s32 %s17, 2
        // Predicated region
        $region45: #{telepath_forward.48} parent=43 // pred_check
          %p698 = pneg %p114
        $region46: #{telepath_forward.48} parent=43 // pred_check_branch
          %700 = sbr.rel (%p698) target = $region48
        $region47: #{telepath_forward.48} parent=43 // pred_region
          %s701 = sand.u32 %s99, 1
          %s702 = scalar_lea.sflag [#allocation4], %s701
          %s703 = sand.u32 %s99, 1
          %s704 = smul.addr %s703, 8
          %s705 = scalar_lea.vmem [#allocation7], %s704
          %706 = dma.done %s702, 128
        $region48: #{telepath_forward.48} parent=43 // pred_fallthru
          _
      $region44: #{telepath_forward.48} parent=5 // pred_fallthru
        _
    $region6: #{telepath_forward.48} parent=1 // loop_footer
      %s21 = sadd.s32 1, %s17
    $region7: #{telepath_forward.48} parent=1 // loop_footer_branch
      %16 = sbr.rel target = $region3
    $region8: #{telepath_forward.48} parent=1 // loop_exit
      _
    %707 = vsyncpa [#allocation3], 1
    %s708 = scalar_lea.sflag [#allocation3], 1
    %709 = vsyncpa %s708, 1
    %710 = vsyncpa [#allocation6], 1
    %s711 = scalar_lea.sflag [#allocation6], 1
    %712 = vsyncpa %s711, 1
    %713 = vsyncpa [#allocation4], 1
    %s714 = scalar_lea.sflag [#allocation4], 1
    %715 = vsyncpa %s714, 1

// kernel: telepath_forward.61
$region0: #{telepath_forward.61}
  #allocation0 [shape = 'u32[]', space=smem, size = 0x4, offset = 0x4, fixed_abs, tag = 'smem constant byte address 0x4 - core index']
  #allocation1 [shape = 'u32[144,128]{1,0:T(1,128)}', space=vmem, size = 0x12000, scoped, tag = 'internal scratch']
  %s0 = inlined_call_operand.hbm [shape: f32[12,32], index: 0, kind: input, shape index: {}]
  %s1 = inlined_call_operand.hbm [shape: f32[32,64], index: 1, kind: input, shape index: {}]
  %s2 = inlined_call_operand.hbm [shape: f32[1,32], index: 2, kind: input, shape index: {}]
  %s3 = inlined_call_operand.hbm [shape: f32[1,32], index: 3, kind: input, shape index: {}]
  %s4 = inlined_call_operand.hbm [shape: f32[12,64], index: 4, kind: output, shape index: {}]
  %s5 = sld [smem:[#allocation0]]
  $region42: #{telepath_forward.61} parent=0
    _
  %s7 = ssub.s32 1, %s5
  %s8 = scalar_select 0, %s7, %s5
  $region1: #{telepath_forward.61} parent=0
    #allocation2 [shape = 'u8[8192]{0}', space=vmem, size = 0x2000, scoped, tag = 'input window, operand 0, single buffered']
    #allocation3 [shape = 's32[1]{0}', space=sflag, size = 0x4, scoped, tag = 'scoped memory for telepath_forward.61']
    #allocation4 [shape = 's32[1]{0}', space=sflag, size = 0x4, scoped, tag = 'scoped memory for telepath_forward.61']
    #allocation5 [shape = 'u8[16384]{0}', space=vmem, size = 0x4000, scoped, tag = 'input window, operand 1, single buffered']
    #allocation6 [shape = 's32[1]{0}', space=sflag, size = 0x4, scoped, tag = 'scoped memory for telepath_forward.61']
    #allocation7 [shape = 'u8[512]{0}', space=vmem, size = 0x400, scoped, tag = 'input window, operand 2, single buffered']
    #allocation8 [shape = 'u8[512]{0}', space=vmem, size = 0x400, scoped, tag = 'input window, operand 3, single buffered']
    #allocation9 [shape = 's32[1]{0}', space=sflag, size = 0x4, scoped, tag = 'scoped memory for telepath_forward.61']
    #allocation10 [shape = 'u8[8192]{0}', space=vmem, size = 0x2000, scoped, tag = 'output window, operand 0, single buffered']
    %9 = vsyncpa [#allocation3], 0
    %10 = vsyncpa [#allocation6], 0
    %11 = vsyncpa [#allocation9], 0
    %12 = vsyncpa [#allocation4], 0
    // Predicated region
    $region2: #{telepath_forward.61} parent=1 // pred_check
      _
    $region3: #{telepath_forward.61} parent=1 // pred_check_branch
      %14 = sbr.rel (0) target = $region5
    $region4: #{telepath_forward.61} parent=1 // pred_region
      %s16 = ssub.s32 256, 256
      %17 = vsyncadd [#allocation3], %s16
      %s18 = sshll.u32 [#allocation2], 4
      %s19 = int_to_ptr.vmem [resolvable:$true] %s18
      %24 = dma.hbm_to_vmem [thread:$0]  %s0, 256, %s19, [#allocation3], 128, 128, 8
    $region5: #{telepath_forward.61} parent=1 // pred_fallthru
      _
    // Predicated region
    $region6: #{telepath_forward.61} parent=1 // pred_check
      _
    $region7: #{telepath_forward.61} parent=1 // pred_check_branch
      %26 = sbr.rel (0) target = $region9
    $region8: #{telepath_forward.61} parent=1 // pred_region
      %s28 = ssub.s32 512, 512
      %29 = vsyncadd [#allocation6], %s28
      %s30 = sshll.u32 [#allocation5], 4
      %s31 = int_to_ptr.vmem [resolvable:$true] %s30
      %36 = dma.hbm_to_vmem [thread:$0]  %s1, 512, %s31, [#allocation6], 128, 128, 8
    $region9: #{telepath_forward.61} parent=1 // pred_fallthru
      _
    // Predicated region
    $region10: #{telepath_forward.61} parent=1 // pred_check
      _
    $region11: #{telepath_forward.61} parent=1 // pred_check_branch
      %38 = sbr.rel (0) target = $region13
    $region12: #{telepath_forward.61} parent=1 // pred_region
      %s40 = ssub.s32 16, 16
      %41 = vsyncadd [#allocation6], %s40
      %s43 = sshll.u32 [#allocation7], 4
      %s44 = int_to_ptr.vmem [resolvable:$true] %s43
      %46 = dma.hbm_to_vmem [thread:$0]  %s2, 16, %s44, [#allocation6]
    $region13: #{telepath_forward.61} parent=1 // pred_fallthru
      _
    // Predicated region
    $region14: #{telepath_forward.61} parent=1 // pred_check
      _
    $region15: #{telepath_forward.61} parent=1 // pred_check_branch
      %48 = sbr.rel (0) target = $region17
    $region16: #{telepath_forward.61} parent=1 // pred_region
      %s50 = ssub.s32 16, 16
      %51 = vsyncadd [#allocation9], %s50
      %s53 = sshll.u32 [#allocation8], 4
      %s54 = int_to_ptr.vmem [resolvable:$true] %s53
      %56 = dma.hbm_to_vmem [thread:$0]  %s3, 16, %s54, [#allocation9]
    $region17: #{telepath_forward.61} parent=1 // pred_fallthru
      _
    // Predicated region
    $region18: #{telepath_forward.61} parent=1 // pred_check
      _
    $region19: #{telepath_forward.61} parent=1 // pred_check_branch
      %58 = sbr.rel (0) target = $region21
    $region20: #{telepath_forward.61} parent=1 // pred_region
      %59 = dma.done [#allocation3], 256
    $region21: #{telepath_forward.61} parent=1 // pred_fallthru
      _
    // Predicated region
    $region22: #{telepath_forward.61} parent=1 // pred_check
      _
    $region23: #{telepath_forward.61} parent=1 // pred_check_branch
      %61 = sbr.rel (0) target = $region25
    $region24: #{telepath_forward.61} parent=1 // pred_region
      %62 = dma.done [#allocation6], 512
    $region25: #{telepath_forward.61} parent=1 // pred_fallthru
      _
    // Predicated region
    $region26: #{telepath_forward.61} parent=1 // pred_check
      _
    $region27: #{telepath_forward.61} parent=1 // pred_check_branch
      %64 = sbr.rel (0) target = $region29
    $region28: #{telepath_forward.61} parent=1 // pred_region
      %65 = dma.done [#allocation6], 16
    $region29: #{telepath_forward.61} parent=1 // pred_fallthru
      _
    // Predicated region
    $region30: #{telepath_forward.61} parent=1 // pred_check
      _
    $region31: #{telepath_forward.61} parent=1 // pred_check_branch
      %67 = sbr.rel (0) target = $region33
    $region32: #{telepath_forward.61} parent=1 // pred_region
      %68 = dma.done [#allocation9], 16
    $region33: #{telepath_forward.61} parent=1 // pred_fallthru
      _
    %v70 = vld [vmem:[#allocation2] sm:$0xff]
    %v71 = vld [vmem:[#allocation2 + $0x8] sm:$0xf]
    %vm72 = vcmask 261120
    %v73 = vsel %vm72, %v70, 0.0
    %74 = vadd.xlane.f32.xlu0 %v73
    %v75 = vpop.xlane.xlu0 %74
    %vm76 = vcmask 257024
    %v77 = vsel %vm76, %v71, 0.0
    %78 = vadd.xlane.f32.xlu0 %v77
    %v79 = vpop.xlane.xlu0 %78
    %v80 = vrcp.pop 32.0
    %v81 = vmul.f32 %v75, %v80
    %v82 = vmul.f32 %v79, %v80
    %v83 = vsub.f32 %v70, %v81
    %v84 = vsub.f32 %v71, %v82
    %v85 = vmul.f32 %v83, %v83
    %v86 = vmul.f32 %v84, %v84
    %v87 = vsel %vm72, %v85, 0.0
    %88 = vadd.xlane.f32.xlu0 %v87
    %v89 = vpop.xlane.xlu0 %88
    %v90 = vsel %vm76, %v86, 0.0
    %91 = vadd.xlane.f32.xlu0 %v90
    %v92 = vpop.xlane.xlu0 %91
    %v93 = vmul.f32 %v89, %v80
    %v94 = vmul.f32 %v92, %v80
    %v95 = vadd.f32 %v93, 1e-05
    %v96 = vadd.f32 %v94, 1e-05
    %v97 = vrsqrt.pop %v95
    %v98 = vrsqrt.pop %v96
    %v99 = vmul.f32 %v83, %v97
    %v100 = vmul.f32 %v84, %v98
    %v101 = vld [vmem:[#allocation7] sm:$0x1]
    %v103 = vlaneseq
    %v104 = vshrl.u32 %v103, 7
    %v105 = vsub.s32 0, %v104
    %v106 = vrot.slane %v101, %v105
    %v108 = vmul.f32 %v99, %v106
    %v109 = vmul.f32 %v100, %v106
    %v110 = vld [vmem:[#allocation8] sm:$0x1]
    %v112 = vlaneseq
    %v113 = vshrl.u32 %v112, 7
    %v114 = vsub.s32 0, %v113
    %v115 = vrot.slane %v110, %v114
    %v117 = vadd.f32 %v108, %v115
    %v118 = vadd.f32 %v109, %v115
    %v119 = vpack.c.bf16 %v118, %v117
    %v120 = vld [vmem:[#allocation5] sm:$0xff]
    %v121 = vld [vmem:[#allocation5 + $0x8] sm:$0xff]
    %v122 = vld [vmem:[#allocation5 + $0x10] sm:$0xff]
    %v123 = vld [vmem:[#allocation5 + $0x18] sm:$0xff]
    %v124 = vpack.c.bf16 %v121, %v120
    %v125 = vpack.c.bf16 %v123, %v122
    %v127 = vsel %vm72, %v119, 0
    %129 = vmatprep.subr.bf16.mxu0 0
    %130 = vmatpush1.bf16.msra.mxu0 %v124
    %131 = vmatprep.subr.bf16.mxu0 0
    %132 = vmatpush1.bf16.msra.mxu0 %v125
    %133 = vmatprep.subr.bf16.mxu0 0
    %134 = vmatpush1.bf16.msra.mxu0 0
    %135 = vmatprep.subr.bf16.mxu0 0
    %136 = vmatpush1.bf16.msra.mxu0 0
    %137 = vmatprep.subr.bf16.mxu0 0
    %138 = vmatpush1.bf16.msra.mxu0 0
    %139 = vmatprep.subr.bf16.mxu0 0
    %140 = vmatpush1.bf16.msra.mxu0 0
    %141 = vmatprep.subr.bf16.mxu0 0
    %142 = vmatpush1.bf16.msra.mxu0 0
    %143 = vmatprep.subr.bf16.mxu0 0
    %144 = vmatpush1.bf16.msra.mxu0 0
    %145 = vmatprep.subr.bf16.mxu0 0
    %146 = vmatpush1.bf16.msra.mxu0 0
    %147 = vmatprep.subr.bf16.mxu0 0
    %148 = vmatpush1.bf16.msra.mxu0 0
    %149 = vmatprep.subr.bf16.mxu0 0
    %150 = vmatpush1.bf16.msra.mxu0 0
    %151 = vmatprep.subr.bf16.mxu0 0
    %152 = vmatpush1.bf16.msra.mxu0 0
    %153 = vmatprep.subr.bf16.mxu0 0
    %154 = vmatpush1.bf16.msra.mxu0 0
    %155 = vmatprep.subr.bf16.mxu0 0
    %156 = vmatpush1.bf16.msra.mxu0 0
    %157 = vmatprep.subr.bf16.mxu0 0
    %158 = vmatpush1.bf16.msra.mxu0 0
    %159 = vmatprep.subr.bf16.mxu0 0
    %160 = vmatpush1.bf16.msra.mxu0 0
    %161 = vmatprep.mubr.bf16.mxu0 0
    %162 = vmatmul.mubr.bf16.gmra.mrb[0].mxu0 %v127
    %v163 = vpop.f32.mrb[0].mxu0
    %v164 = vadd.f32 0.0, %v163
    %v165 = vpop.f32.mrb[0].mxu0
    %v166 = vpop.f32.mrb[0].mxu0
    %v167 = vadd.f32 0.0, %v166
    %v168 = vpop.f32.mrb[0].mxu0
    %169 = vdwg.mxu0
    %vm170 = vcmask 523264
    %171 = vst.msk [vmem:[#allocation10] sm:$0xff] %vm170, %v164
    %vm172 = vcmask 519168
    %173 = vst.msk [vmem:[#allocation10 + $0x8] sm:$0xf] %vm172, %v167
    // Predicated region
    $region34: #{telepath_forward.61} parent=1 // pred_check
      _
    $region35: #{telepath_forward.61} parent=1 // pred_check_branch
      %175 = sbr.rel (0) target = $region37
    $region36: #{telepath_forward.61} parent=1 // pred_region
      %s177 = ssub.s32 256, 256
      %178 = vsyncadd [#allocation4], %s177
      %s179 = sshll.u32 [#allocation10], 4
      %s180 = int_to_ptr.vmem [resolvable:$true] %s179
      %185 = dma.vmem_to_hbm [thread:$0]  %s180, 256, %s4, [#allocation4], 128, 128, 8
    $region37: #{telepath_forward.61} parent=1 // pred_fallthru
      _
    // Predicated region
    $region38: #{telepath_forward.61} parent=1 // pred_check
      _
    $region39: #{telepath_forward.61} parent=1 // pred_check_branch
      %187 = sbr.rel (0) target = $region41
    $region40: #{telepath_forward.61} parent=1 // pred_region
      %188 = dma.done [#allocation4], 256
    $region41: #{telepath_forward.61} parent=1 // pred_fallthru
      _
    %189 = vsyncpa [#allocation3], 1
    %190 = vsyncpa [#allocation6], 1
    %191 = vsyncpa [#allocation9], 1
    %192 = vsyncpa [#allocation4], 1

</llo_original>
